<compile_context>
chip_gen: v6e
topology: v6e:2x2x1
jax: 0.10.0
libtpu: 0.0.40
codegen_flags: <defaults>
</compile_context>

<pallas_src>
from functools import partial

import jax
import jax.numpy as jnp
from jax.experimental import pallas as pl
from jax.experimental.pallas import tpu as pltpu

HIDDEN = 128  # fixed by the module (MinkowskiConvolution(*, 128, ...))


def _sparseconvmil_kernel(patches_ref, mask_ref, inv_ref, w1_ref, w2_ref,
                          wc_ref, bc_ref, out_ref, pad_ref, col2_ref,
                          *, G, H, W):
    """One group of G bags per grid step.

    patches_ref: (G, H*W, KPAD)      bf16 conv1 im2col patches (9*Cin lane-padded)
    mask_ref   : (G, H*W, 1)         f32, 1.0 at active (occupied) sites
    inv_ref    : (1, G, 128)         f32, 1/num_active_sites per bag (0 if empty)
    w1_ref     : (KPAD, 128)         bf16 flattened conv1 weights
    w2_ref     : (9*128, 128)        bf16 flattened conv2 weights
    wc_ref     : (128, NCPAD)        bf16 classifier weight (classes lane-padded)
    bc_ref     : (1, NCPAD)          f32 classifier bias
    out_ref    : (1, G, NCPAD)       f32 logits
    pad_ref    : VMEM (G, H+2, W+2, 128) bf16 halo-padded conv1 activations
    col2_ref   : VMEM (G*H*W, 9*128) bf16 conv2 im2col staging (aligned writes)
    """
    HW = H * W
    GHW = G * HW
    KPAD = patches_ref.shape[2]

    # ---- conv1: single im2col matmul (bf16 x bf16 -> f32 acc) + ReLU + mask --
    acc1 = jnp.dot(patches_ref[...].reshape(GHW, KPAD), w1_ref[...],
                   preferred_element_type=jnp.float32)            # (GHW, 128)
    mask = mask_ref[...].reshape(GHW, 1)                           # f32
    h1 = jnp.maximum(acc1, 0.0) * mask                             # (GHW, 128) f32

    # ---- stage h1 (as bf16) into the halo-padded scratch; re-zero borders ----
    zrow = jnp.zeros((G, 1, W + 2, HIDDEN), jnp.bfloat16)
    pad_ref[:, 0:1, :, :] = zrow
    pad_ref[:, H + 1:H + 2, :, :] = zrow
    zcol = jnp.zeros((G, H, 1, HIDDEN), jnp.bfloat16)
    pad_ref[:, 1:H + 1, 0:1, :] = zcol
    pad_ref[:, 1:H + 1, W + 1:W + 2, :] = zcol
    pad_ref[:, 1:H + 1, 1:W + 1, :] = (
        h1.astype(jnp.bfloat16).reshape(G, H, W, HIDDEN))

    # ---- conv2: K-fused im2col, one (GHW, 1152) x (1152, 128) matmul --------
    # bf16 scratch -> the 9 shifted-window copies move half the bytes of the
    # previous f32 version and need no per-tap cast.
    k = 0
    for dy in range(3):
        for dx in range(3):
            col2_ref[:, k * HIDDEN:(k + 1) * HIDDEN] = (
                pad_ref[:, dy:dy + H, dx:dx + W, :].reshape(GHW, HIDDEN))
            k += 1
    acc2 = jnp.dot(col2_ref[...], w2_ref[...],
                   preferred_element_type=jnp.float32)             # (GHW, 128)
    h2 = jnp.maximum(acc2, 0.0) * mask                             # (GHW, 128)

    # ---- MinkowskiGlobalAvgPooling: mean over active sites of each bag ------
    sums = jnp.concatenate(
        [jnp.sum(h2[g * HW:(g + 1) * HW, :], axis=0, keepdims=True)
         for g in range(G)], axis=0)                               # (G, 128)
    pooled = sums * inv_ref[0]                                     # (G, 128)

    # ---- classifier: MinkowskiLinear(128, num_classes) ----------------------
    logits = jnp.dot(pooled.astype(jnp.bfloat16), wc_ref[...],
                     preferred_element_type=jnp.float32) + bc_ref[...]
    out_ref[...] = logits.reshape(1, G, logits.shape[-1])


def sparseconvmil_forward(x_list, tiles_original_locations, params, *,
                          sparse_map_downsample, grid_hw, num_classes,
                          bags_per_step=8):
    """JAX/Pallas equivalent of SparseConvMIL.forward (perf_aug=False path).

    x_list: list of (T_b, nb_layers_in) tile features per bag
    tiles_original_locations: list of (T_b, 2) float tile coordinates per bag
    Returns (logits (B, num_classes), tiles_locations (N, 3) int32).
    """
    H, W = grid_hw
    HW = H * W
    B = len(x_list)
    G = max(1, min(bags_per_step, B))     # bags per grid step
    num_groups = pl.cdiv(B, G)
    Bp = num_groups * G                   # bag count padded to a multiple of G

    feats = jnp.concatenate(x_list, axis=0).astype(jnp.float32)     # (N, Cin)
    cin = feats.shape[1]

    # batched_coordinates([tl / downsample ...]): floor + prepend batch index
    per_bag = []
    for b, tl in enumerate(tiles_original_locations):
        q = jnp.floor(tl.astype(jnp.float32) / sparse_map_downsample)
        q = q.astype(jnp.int32)
        bcol = jnp.full((q.shape[0], 1), b, jnp.int32)
        per_bag.append(jnp.concatenate([bcol, q], axis=1))
    tiles_locations = jnp.concatenate(per_bag, axis=0)              # (N, 3)

    # SparseTensor quantization_mode=UNWEIGHTED_AVERAGE: average duplicates
    bi, yy, xx = (tiles_locations[:, 0], tiles_locations[:, 1],
                  tiles_locations[:, 2])
    sum_grid = jnp.zeros((Bp, H, W, cin), jnp.float32).at[bi, yy, xx].add(feats)
    cnt_grid = jnp.zeros((Bp, H, W), jnp.float32).at[bi, yy, xx].add(1.0)
    dense = sum_grid / jnp.maximum(cnt_grid, 1.0)[..., None]        # (Bp,H,W,C)
    mask_hw = (cnt_grid > 0).astype(jnp.float32)                    # (Bp,H,W)

    # per-bag inverse active-site count (0 for empty/padded bags: no div-by-0)
    cnt_bag = jnp.sum(mask_hw, axis=(1, 2))                         # (Bp,)
    inv_cnt = jnp.where(cnt_bag > 0, 1.0 / jnp.maximum(cnt_bag, 1.0), 0.0)
    inv_b = jnp.broadcast_to(inv_cnt.reshape(num_groups, G, 1),
                             (num_groups, G, HIDDEN)).astype(jnp.float32)

    # conv1 im2col: (Bp, HW, 9*Cin) patches, lane-padded to a multiple of 128
    K1 = 9 * cin
    KPAD = 128 * pl.cdiv(K1, 128)
    dense_p = jnp.pad(dense, ((0, 0), (1, 1), (1, 1), (0, 0)))      # 3x3 halo
    taps = [dense_p[:, dy:dy + H, dx:dx + W, :]
            for dy in range(3) for dx in range(3)]
    patches = jnp.concatenate(taps, axis=-1)                        # (Bp,H,W,9C)
    patches = jnp.pad(patches, ((0, 0), (0, 0), (0, 0), (0, KPAD - K1)))
    patches = patches.reshape(Bp, HW, KPAD).astype(jnp.bfloat16)

    mask_flat = mask_hw.reshape(Bp, HW, 1)

    # weights: flatten taps along K (same row-major (dy, dx) ordering), bf16
    w1, w2, wc, bc = params       # (9,Cin,128), (9,128,128), (128,C), (1,C)
    w1_flat = jnp.pad(w1.reshape(K1, HIDDEN).astype(jnp.float32),
                      ((0, KPAD - K1), (0, 0))).astype(jnp.bfloat16)
    w2_flat = w2.reshape(9 * HIDDEN, HIDDEN).astype(jnp.bfloat16)
    NCPAD = 128 * pl.cdiv(num_classes, 128)
    wc_p = jnp.pad(wc.astype(jnp.float32),
                   ((0, 0), (0, NCPAD - num_classes))).astype(jnp.bfloat16)
    bc_p = jnp.pad(bc.reshape(1, -1).astype(jnp.float32),
                   ((0, 0), (0, NCPAD - num_classes)))

    out = pl.pallas_call(
        partial(_sparseconvmil_kernel, G=G, H=H, W=W),
        out_shape=jax.ShapeDtypeStruct((num_groups, G, NCPAD), jnp.float32),
        grid=(num_groups,),
        in_specs=[
            pl.BlockSpec((G, HW, KPAD), lambda b: (b, 0, 0)),
            pl.BlockSpec((G, HW, 1), lambda b: (b, 0, 0)),
            pl.BlockSpec((1, G, HIDDEN), lambda b: (b, 0, 0)),
            pl.BlockSpec((KPAD, HIDDEN), lambda b: (0, 0)),
            pl.BlockSpec((9 * HIDDEN, HIDDEN), lambda b: (0, 0)),
            pl.BlockSpec((HIDDEN, NCPAD), lambda b: (0, 0)),
            pl.BlockSpec((1, NCPAD), lambda b: (0, 0)),
        ],
        out_specs=pl.BlockSpec((1, G, NCPAD), lambda b: (b, 0, 0)),
        scratch_shapes=[
            pltpu.VMEM((G, H + 2, W + 2, HIDDEN), jnp.bfloat16),
            pltpu.VMEM((G * HW, 9 * HIDDEN), jnp.bfloat16),
        ],
        # NOTE: for much larger grid_hw or bags_per_step, add spatial tiling
        # and set vmem_limit_bytes explicitly (v7x has only 64 MiB physical
        # VMEM; v5e's default scoped limit is 16 MiB).
        compiler_params=pltpu.CompilerParams(
            dimension_semantics=("parallel",)),
    )(patches, mask_flat, inv_b, w1_flat, w2_flat, wc_p, bc_p)

    logits = out.reshape(Bp, NCPAD)[:B, :num_classes]
    return logits, tiles_locations


def _reference_forward(dense, mask_hw, inv_cnt, w1, w2, wc, bc, H, W):
    """Plain-JAX reference using the same bf16-operand / f32-accumulate math."""
    hp = jax.lax.Precision.HIGHEST
    B = dense.shape[0]

    def conv3(xpad_bf16, w_bf16):
        out = jnp.zeros((B, H, W, HIDDEN), jnp.float32)
        k = 0
        for dy in range(3):
            for dx in range(3):
                out = out + jnp.einsum(
                    'bhwc,co->bhwo',
                    xpad_bf16[:, dy:dy + H, dx:dx + W, :].astype(jnp.float32),
                    w_bf16[k].astype(jnp.float32), precision=hp)
                k += 1
        return out

    m = mask_hw[..., None]
    dp = jnp.pad(dense, ((0, 0), (1, 1), (1, 1), (0, 0))).astype(jnp.bfloat16)
    h1 = jnp.maximum(conv3(dp, w1.astype(jnp.bfloat16)), 0.0) * m
    h1p = jnp.pad(h1, ((0, 0), (1, 1), (1, 1), (0, 0))).astype(jnp.bfloat16)
    h2 = jnp.maximum(conv3(h1p, w2.astype(jnp.bfloat16)), 0.0) * m
    pooled = jnp.sum(h2, axis=(1, 2)) * inv_cnt[:, None]
    pooled = pooled.astype(jnp.bfloat16).astype(jnp.float32)
    wcb = wc.astype(jnp.bfloat16).astype(jnp.float32)
    return jnp.einsum('bc,cn->bn', pooled, wcb, precision=hp) + bc.reshape(1, -1)


if __name__ == "__main__":
    # small, deterministic config
    B, T = 2, 8                 # bags, tiles per bag
    NB_LAYERS_IN = 4            # nb_layers_in
    NUM_CLASSES = 3
    DOWNSAMPLE = 2.0
    H = W = 16                  # dense sparse-map grid

    key = jax.random.PRNGKey(0)
    keys = jax.random.split(key, 8)

    # per-bag tile features and original tile coordinates
    x_list = [jax.random.normal(keys[0], (T, NB_LAYERS_IN), jnp.float32),
              jax.random.normal(keys[1], (T, NB_LAYERS_IN), jnp.float32)]
    tiles_original_locations = [
        jax.random.uniform(keys[2], (T, 2), jnp.float32, 0.0, 31.9),
        jax.random.uniform(keys[3], (T, 2), jnp.float32, 0.0, 31.9),
    ]

    # deterministic parameter init (MinkowskiConvolution has no bias;
    # MinkowskiLinear wraps nn.Linear with bias)
    w1 = jax.random.normal(keys[4], (9, NB_LAYERS_IN, HIDDEN),
                           jnp.float32) * (2.0 / (9 * NB_LAYERS_IN)) ** 0.5
    w2 = jax.random.normal(keys[5], (9, HIDDEN, HIDDEN),
                           jnp.float32) * (2.0 / (9 * HIDDEN)) ** 0.5
    wc = jax.random.normal(keys[6], (HIDDEN, NUM_CLASSES),
                           jnp.float32) * (1.0 / HIDDEN) ** 0.5
    bc = jax.random.normal(keys[7], (1, NUM_CLASSES), jnp.float32) * 0.1
    params = (w1, w2, wc, bc)

    result, tiles_locations = sparseconvmil_forward(
        x_list, tiles_original_locations, params,
        sparse_map_downsample=DOWNSAMPLE, grid_hw=(H, W),
        num_classes=NUM_CLASSES)
    result = jax.block_until_ready(result)
    tiles_locations = jax.block_until_ready(tiles_locations)

    # sanity check against a plain-JAX reference with identical semantics
    feats = jnp.concatenate(x_list, axis=0)
    bi = tiles_locations[:, 0]
    yy = tiles_locations[:, 1]
    xx = tiles_locations[:, 2]
    sum_grid = jnp.zeros((B, H, W, NB_LAYERS_IN)).at[bi, yy, xx].add(feats)
    cnt_grid = jnp.zeros((B, H, W)).at[bi, yy, xx].add(1.0)
    dense = sum_grid / jnp.maximum(cnt_grid, 1.0)[..., None]
    mask_hw = (cnt_grid > 0).astype(jnp.float32)
    cnt_bag = jnp.sum(mask_hw, axis=(1, 2))
    inv_cnt = jnp.where(cnt_bag > 0, 1.0 / jnp.maximum(cnt_bag, 1.0), 0.0)
    ref = _reference_forward(dense, mask_hw, inv_cnt, w1, w2, wc, bc, H, W)

    assert result.shape == (B, NUM_CLASSES)
    assert tiles_locations.shape[1] == 3
    assert bool(jnp.all(jnp.isfinite(result)))
    assert bool(jnp.allclose(result, ref, rtol=5e-3, atol=5e-3)), (result, ref)

    print("KERNEL_OK")
</pallas_src>

<mosaic_0001>
module attributes {stable_mosaic.version = 11 : i64} {
  func.func @_sparseconvmil_kernel(%arg0: i32, %arg1: memref<2x256x128xbf16, #tpu.memory_space<vmem>>, %arg2: memref<2x256x1xf32, #tpu.memory_space<vmem>>, %arg3: memref<1x2x128xf32, #tpu.memory_space<vmem>>, %arg4: memref<128x128xbf16, #tpu.memory_space<vmem>>, %arg5: memref<1152x128xbf16, #tpu.memory_space<vmem>>, %arg6: memref<128x128xbf16, #tpu.memory_space<vmem>>, %arg7: memref<1x128xf32, #tpu.memory_space<vmem>>, %arg8: memref<1x2x128xf32, #tpu.memory_space<vmem>>, %arg9: memref<2x18x18x128xbf16, #tpu.memory_space<vmem>>, %arg10: memref<512x1152xbf16, #tpu.memory_space<vmem>>) attributes {dimension_semantics = [#tpu.dimension_semantics<parallel>], iteration_bounds = array<i64: 1>, scalar_prefetch = 0 : i64, scratch_operands = 2 : i64, tpu.core_type = #tpu.core_type<tc>, window_params = [{transform_indices = @transform_0, window_bounds = array<i64: 2, 256, 128>}, {transform_indices = @transform_1, window_bounds = array<i64: 2, 256, 1>}, {transform_indices = @transform_2, window_bounds = array<i64: 1, 2, 128>}, {pipeline_mode = #tpu.pipeline_mode<synchronous>, transform_indices = @transform_3, window_bounds = array<i64: 128, 128>}, {pipeline_mode = #tpu.pipeline_mode<synchronous>, transform_indices = @transform_4, window_bounds = array<i64: 1152, 128>}, {pipeline_mode = #tpu.pipeline_mode<synchronous>, transform_indices = @transform_5, window_bounds = array<i64: 128, 128>}, {pipeline_mode = #tpu.pipeline_mode<synchronous>, transform_indices = @transform_6, window_bounds = array<i64: 1, 128>}, {transform_indices = @transform_7, window_bounds = array<i64: 1, 2, 128>}]} {
    %c0 = arith.constant 0 : index
    %c0_0 = arith.constant 0 : index
    %c0_1 = arith.constant 0 : index
    %0 = vector.load %arg1[%c0, %c0_0, %c0_1] : memref<2x256x128xbf16, #tpu.memory_space<vmem>>, vector<2x256x128xbf16>
    %1 = vector.shape_cast %0 : vector<2x256x128xbf16> to vector<512x128xbf16>
    %c0_2 = arith.constant 0 : index
    %c0_3 = arith.constant 0 : index
    %2 = vector.load %arg4[%c0_2, %c0_3] : memref<128x128xbf16, #tpu.memory_space<vmem>>, vector<128x128xbf16>
    %cst = arith.constant dense<0.000000e+00> : vector<512x128xf32>
    %3 = tpu.matmul %1, %2, %cst {dimension_numbers = #tpu.dot_dimension_numbers<[1], [0], [0], [1], [0, 0, 1, 1], [], []>} : vector<512x128xbf16>, vector<128x128xbf16>, vector<512x128xf32> -> vector<512x128xf32>
    %c0_4 = arith.constant 0 : index
    %c0_5 = arith.constant 0 : index
    %c0_6 = arith.constant 0 : index
    %4 = vector.load %arg2[%c0_4, %c0_5, %c0_6] : memref<2x256x1xf32, #tpu.memory_space<vmem>>, vector<2x256x1xf32>
    %5 = vector.shape_cast %4 : vector<2x256x1xf32> to vector<512x1xf32>
    %cst_7 = arith.constant 0.000000e+00 : f32
    %6 = vector.broadcast %cst_7 : f32 to vector<512x128xf32>
    %7 = arith.maximumf %3, %6 : vector<512x128xf32>
    %8 = vector.broadcast %5 : vector<512x1xf32> to vector<512x128xf32>
    %9 = arith.mulf %7, %8 : vector<512x128xf32>
    %cst_8 = arith.constant 0.000000e+00 : bf16
    %10 = vector.broadcast %cst_8 : bf16 to vector<2x1x18x128xbf16>
    %c0_9 = arith.constant 0 : index
    %c0_10 = arith.constant 0 : index
    %c0_11 = arith.constant 0 : index
    %c0_12 = arith.constant 0 : index
    %11 = vector.load %arg9[%c0_9, %c0_10, %c0_11, %c0_12] : memref<2x18x18x128xbf16, #tpu.memory_space<vmem>>, vector<2x1x18x128xbf16>
    tpu.vector_store %arg9[%c0_9, %c0_10, %c0_11, %c0_12], %10 {strides = array<i32>} : memref<2x18x18x128xbf16, #tpu.memory_space<vmem>>, vector<2x1x18x128xbf16>,
    %c0_13 = arith.constant 0 : index
    %c17 = arith.constant 17 : index
    %c0_14 = arith.constant 0 : index
    %c0_15 = arith.constant 0 : index
    %12 = vector.load %arg9[%c0_13, %c17, %c0_14, %c0_15] : memref<2x18x18x128xbf16, #tpu.memory_space<vmem>>, vector<2x1x18x128xbf16>
    tpu.vector_store %arg9[%c0_13, %c17, %c0_14, %c0_15], %10 {strides = array<i32>} : memref<2x18x18x128xbf16, #tpu.memory_space<vmem>>, vector<2x1x18x128xbf16>,
    %cst_16 = arith.constant 0.000000e+00 : bf16
    %13 = vector.broadcast %cst_16 : bf16 to vector<2x16x1x128xbf16>
    %c0_17 = arith.constant 0 : index
    %c1 = arith.constant 1 : index
    %c0_18 = arith.constant 0 : index
    %c0_19 = arith.constant 0 : index
    %14 = vector.load %arg9[%c0_17, %c1, %c0_18, %c0_19] : memref<2x18x18x128xbf16, #tpu.memory_space<vmem>>, vector<2x16x1x128xbf16>
    tpu.vector_store %arg9[%c0_17, %c1, %c0_18, %c0_19], %13 {strides = array<i32>} : memref<2x18x18x128xbf16, #tpu.memory_space<vmem>>, vector<2x16x1x128xbf16>,
    %c0_20 = arith.constant 0 : index
    %c1_21 = arith.constant 1 : index
    %c17_22 = arith.constant 17 : index
    %c0_23 = arith.constant 0 : index
    %15 = vector.load %arg9[%c0_20, %c1_21, %c17_22, %c0_23] : memref<2x18x18x128xbf16, #tpu.memory_space<vmem>>, vector<2x16x1x128xbf16>
    tpu.vector_store %arg9[%c0_20, %c1_21, %c17_22, %c0_23], %13 {strides = array<i32>} : memref<2x18x18x128xbf16, #tpu.memory_space<vmem>>, vector<2x16x1x128xbf16>,
    %16 = arith.truncf %9 : vector<512x128xf32> to vector<512x128xbf16>
    %17 = vector.shape_cast %16 : vector<512x128xbf16> to vector<2x16x16x128xbf16>
    %c0_24 = arith.constant 0 : index
    %c1_25 = arith.constant 1 : index
    %c1_26 = arith.constant 1 : index
    %c0_27 = arith.constant 0 : index
    %18 = vector.load %arg9[%c0_24, %c1_25, %c1_26, %c0_27] : memref<2x18x18x128xbf16, #tpu.memory_space<vmem>>, vector<2x16x16x128xbf16>
    tpu.vector_store %arg9[%c0_24, %c1_25, %c1_26, %c0_27], %17 {strides = array<i32>} : memref<2x18x18x128xbf16, #tpu.memory_space<vmem>>, vector<2x16x16x128xbf16>,
    %c0_28 = arith.constant 0 : index
    %c0_29 = arith.constant 0 : index
    %c0_30 = arith.constant 0 : index
    %c0_31 = arith.constant 0 : index
    %19 = vector.load %arg9[%c0_28, %c0_29, %c0_30, %c0_31] : memref<2x18x18x128xbf16, #tpu.memory_space<vmem>>, vector<2x16x16x128xbf16>
    %20 = vector.shape_cast %19 : vector<2x16x16x128xbf16> to vector<512x128xbf16>
    %c0_32 = arith.constant 0 : index
    %c0_33 = arith.constant 0 : index
    %21 = vector.load %arg10[%c0_32, %c0_33] : memref<512x1152xbf16, #tpu.memory_space<vmem>>, vector<512x128xbf16>
    tpu.vector_store %arg10[%c0_32, %c0_33], %20 {strides = array<i32>} : memref<512x1152xbf16, #tpu.memory_space<vmem>>, vector<512x128xbf16>,
    %c0_34 = arith.constant 0 : index
    %c0_35 = arith.constant 0 : index
    %c1_36 = arith.constant 1 : index
    %c0_37 = arith.constant 0 : index
    %22 = vector.load %arg9[%c0_34, %c0_35, %c1_36, %c0_37] : memref<2x18x18x128xbf16, #tpu.memory_space<vmem>>, vector<2x16x16x128xbf16>
    %23 = vector.shape_cast %22 : vector<2x16x16x128xbf16> to vector<512x128xbf16>
    %c0_38 = arith.constant 0 : index
    %c128 = arith.constant 128 : index
    %24 = vector.load %arg10[%c0_38, %c128] : memref<512x1152xbf16, #tpu.memory_space<vmem>>, vector<512x128xbf16>
    tpu.vector_store %arg10[%c0_38, %c128], %23 {strides = array<i32>} : memref<512x1152xbf16, #tpu.memory_space<vmem>>, vector<512x128xbf16>,
    %c0_39 = arith.constant 0 : index
    %c0_40 = arith.constant 0 : index
    %c2 = arith.constant 2 : index
    %c0_41 = arith.constant 0 : index
    %25 = vector.load %arg9[%c0_39, %c0_40, %c2, %c0_41] : memref<2x18x18x128xbf16, #tpu.memory_space<vmem>>, vector<2x16x16x128xbf16>
    %26 = vector.shape_cast %25 : vector<2x16x16x128xbf16> to vector<512x128xbf16>
    %c0_42 = arith.constant 0 : index
    %c256 = arith.constant 256 : index
    %27 = vector.load %arg10[%c0_42, %c256] : memref<512x1152xbf16, #tpu.memory_space<vmem>>, vector<512x128xbf16>
    tpu.vector_store %arg10[%c0_42, %c256], %26 {strides = array<i32>} : memref<512x1152xbf16, #tpu.memory_space<vmem>>, vector<512x128xbf16>,
    %c0_43 = arith.constant 0 : index
    %c1_44 = arith.constant 1 : index
    %c0_45 = arith.constant 0 : index
    %c0_46 = arith.constant 0 : index
    %28 = vector.load %arg9[%c0_43, %c1_44, %c0_45, %c0_46] : memref<2x18x18x128xbf16, #tpu.memory_space<vmem>>, vector<2x16x16x128xbf16>
    %29 = vector.shape_cast %28 : vector<2x16x16x128xbf16> to vector<512x128xbf16>
    %c0_47 = arith.constant 0 : index
    %c384 = arith.constant 384 : index
    %30 = vector.load %arg10[%c0_47, %c384] : memref<512x1152xbf16, #tpu.memory_space<vmem>>, vector<512x128xbf16>
    tpu.vector_store %arg10[%c0_47, %c384], %29 {strides = array<i32>} : memref<512x1152xbf16, #tpu.memory_space<vmem>>, vector<512x128xbf16>,
    %c0_48 = arith.constant 0 : index
    %c1_49 = arith.constant 1 : index
    %c1_50 = arith.constant 1 : index
    %c0_51 = arith.constant 0 : index
    %31 = vector.load %arg9[%c0_48, %c1_49, %c1_50, %c0_51] : memref<2x18x18x128xbf16, #tpu.memory_space<vmem>>, vector<2x16x16x128xbf16>
    %32 = vector.shape_cast %31 : vector<2x16x16x128xbf16> to vector<512x128xbf16>
    %c0_52 = arith.constant 0 : index
    %c512 = arith.constant 512 : index
    %33 = vector.load %arg10[%c0_52, %c512] : memref<512x1152xbf16, #tpu.memory_space<vmem>>, vector<512x128xbf16>
    tpu.vector_store %arg10[%c0_52, %c512], %32 {strides = array<i32>} : memref<512x1152xbf16, #tpu.memory_space<vmem>>, vector<512x128xbf16>,
    %c0_53 = arith.constant 0 : index
    %c1_54 = arith.constant 1 : index
    %c2_55 = arith.constant 2 : index
    %c0_56 = arith.constant 0 : index
    %34 = vector.load %arg9[%c0_53, %c1_54, %c2_55, %c0_56] : memref<2x18x18x128xbf16, #tpu.memory_space<vmem>>, vector<2x16x16x128xbf16>
    %35 = vector.shape_cast %34 : vector<2x16x16x128xbf16> to vector<512x128xbf16>
    %c0_57 = arith.constant 0 : index
    %c640 = arith.constant 640 : index
    %36 = vector.load %arg10[%c0_57, %c640] : memref<512x1152xbf16, #tpu.memory_space<vmem>>, vector<512x128xbf16>
    tpu.vector_store %arg10[%c0_57, %c640], %35 {strides = array<i32>} : memref<512x1152xbf16, #tpu.memory_space<vmem>>, vector<512x128xbf16>,
    %c0_58 = arith.constant 0 : index
    %c2_59 = arith.constant 2 : index
    %c0_60 = arith.constant 0 : index
    %c0_61 = arith.constant 0 : index
    %37 = vector.load %arg9[%c0_58, %c2_59, %c0_60, %c0_61] : memref<2x18x18x128xbf16, #tpu.memory_space<vmem>>, vector<2x16x16x128xbf16>
    %38 = vector.shape_cast %37 : vector<2x16x16x128xbf16> to vector<512x128xbf16>
    %c0_62 = arith.constant 0 : index
    %c768 = arith.constant 768 : index
    %39 = vector.load %arg10[%c0_62, %c768] : memref<512x1152xbf16, #tpu.memory_space<vmem>>, vector<512x128xbf16>
    tpu.vector_store %arg10[%c0_62, %c768], %38 {strides = array<i32>} : memref<512x1152xbf16, #tpu.memory_space<vmem>>, vector<512x128xbf16>,
    %c0_63 = arith.constant 0 : index
    %c2_64 = arith.constant 2 : index
    %c1_65 = arith.constant 1 : index
    %c0_66 = arith.constant 0 : index
    %40 = vector.load %arg9[%c0_63, %c2_64, %c1_65, %c0_66] : memref<2x18x18x128xbf16, #tpu.memory_space<vmem>>, vector<2x16x16x128xbf16>
    %41 = vector.shape_cast %40 : vector<2x16x16x128xbf16> to vector<512x128xbf16>
    %c0_67 = arith.constant 0 : index
    %c896 = arith.constant 896 : index
    %42 = vector.load %arg10[%c0_67, %c896] : memref<512x1152xbf16, #tpu.memory_space<vmem>>, vector<512x128xbf16>
    tpu.vector_store %arg10[%c0_67, %c896], %41 {strides = array<i32>} : memref<512x1152xbf16, #tpu.memory_space<vmem>>, vector<512x128xbf16>,
    %c0_68 = arith.constant 0 : index
    %c2_69 = arith.constant 2 : index
    %c2_70 = arith.constant 2 : index
    %c0_71 = arith.constant 0 : index
    %43 = vector.load %arg9[%c0_68, %c2_69, %c2_70, %c0_71] : memref<2x18x18x128xbf16, #tpu.memory_space<vmem>>, vector<2x16x16x128xbf16>
    %44 = vector.shape_cast %43 : vector<2x16x16x128xbf16> to vector<512x128xbf16>
    %c0_72 = arith.constant 0 : index
    %c1024 = arith.constant 1024 : index
    %45 = vector.load %arg10[%c0_72, %c1024] : memref<512x1152xbf16, #tpu.memory_space<vmem>>, vector<512x128xbf16>
    tpu.vector_store %arg10[%c0_72, %c1024], %44 {strides = array<i32>} : memref<512x1152xbf16, #tpu.memory_space<vmem>>, vector<512x128xbf16>,
    %c0_73 = arith.constant 0 : index
    %c0_74 = arith.constant 0 : index
    %46 = vector.load %arg10[%c0_73, %c0_74] : memref<512x1152xbf16, #tpu.memory_space<vmem>>, vector<512x1152xbf16>
    %c0_75 = arith.constant 0 : index
    %c0_76 = arith.constant 0 : index
    %47 = vector.load %arg5[%c0_75, %c0_76] : memref<1152x128xbf16, #tpu.memory_space<vmem>>, vector<1152x128xbf16>
    %cst_77 = arith.constant dense<0.000000e+00> : vector<512x128xf32>
    %48 = tpu.matmul %46, %47, %cst_77 {dimension_numbers = #tpu.dot_dimension_numbers<[1], [0], [0], [1], [0, 0, 1, 1], [], []>} : vector<512x1152xbf16>, vector<1152x128xbf16>, vector<512x128xf32> -> vector<512x128xf32>
    %cst_78 = arith.constant 0.000000e+00 : f32
    %49 = vector.broadcast %cst_78 : f32 to vector<512x128xf32>
    %50 = arith.maximumf %48, %49 : vector<512x128xf32>
    %51 = vector.broadcast %5 : vector<512x1xf32> to vector<512x128xf32>
    %52 = arith.mulf %50, %51 : vector<512x128xf32>
    %53 = vector.extract_strided_slice %52 {offsets = [0, 0], sizes = [256, 128], strides = [1, 1]} : vector<512x128xf32> to vector<256x128xf32>
    %cst_79 = arith.constant dense<0.000000e+00> : vector<128xf32>
    %54 = vector.multi_reduction <add>, %53, %cst_79 [0] : vector<256x128xf32> to vector<128xf32>
    %55 = vector.shape_cast %54 : vector<128xf32> to vector<1x128xf32>
    %56 = vector.extract_strided_slice %52 {offsets = [256, 0], sizes = [256, 128], strides = [1, 1]} : vector<512x128xf32> to vector<256x128xf32>
    %cst_80 = arith.constant dense<0.000000e+00> : vector<128xf32>
    %57 = vector.multi_reduction <add>, %56, %cst_80 [0] : vector<256x128xf32> to vector<128xf32>
    %58 = vector.shape_cast %57 : vector<128xf32> to vector<1x128xf32>
    %59 = tpu.concatenate %55, %58 in 0 : vector<1x128xf32>, vector<1x128xf32> -> vector<2x128xf32>
    %c0_81 = arith.constant 0 : index
    %c0_82 = arith.constant 0 : index
    %c0_83 = arith.constant 0 : index
    %60 = vector.load %arg3[%c0_81, %c0_82, %c0_83] : memref<1x2x128xf32, #tpu.memory_space<vmem>>, vector<1x2x128xf32>
    %61 = vector.shape_cast %60 : vector<1x2x128xf32> to vector<2x128xf32>
    %62 = arith.mulf %59, %61 : vector<2x128xf32>
    %63 = arith.truncf %62 : vector<2x128xf32> to vector<2x128xbf16>
    %c0_84 = arith.constant 0 : index
    %c0_85 = arith.constant 0 : index
    %64 = vector.load %arg6[%c0_84, %c0_85] : memref<128x128xbf16, #tpu.memory_space<vmem>>, vector<128x128xbf16>
    %cst_86 = arith.constant dense<0.000000e+00> : vector<2x128xf32>
    %65 = tpu.matmul %63, %64, %cst_86 {dimension_numbers = #tpu.dot_dimension_numbers<[1], [0], [0], [1], [0, 0, 1, 1], [], []>} : vector<2x128xbf16>, vector<128x128xbf16>, vector<2x128xf32> -> vector<2x128xf32>
    %c0_87 = arith.constant 0 : index
    %c0_88 = arith.constant 0 : index
    %66 = vector.load %arg7[%c0_87, %c0_88] : memref<1x128xf32, #tpu.memory_space<vmem>>, vector<1x128xf32>
    %67 = vector.broadcast %66 : vector<1x128xf32> to vector<2x128xf32>
    %68 = arith.addf %65, %67 : vector<2x128xf32>
    %69 = vector.shape_cast %68 : vector<2x128xf32> to vector<1x2x128xf32>
    %c0_89 = arith.constant 0 : index
    %c0_90 = arith.constant 0 : index
    %c0_91 = arith.constant 0 : index
    %70 = vector.load %arg8[%c0_89, %c0_90, %c0_91] : memref<1x2x128xf32, #tpu.memory_space<vmem>>, vector<1x2x128xf32>
    tpu.vector_store %arg8[%c0_89, %c0_90, %c0_91], %69 {strides = array<i32>} : memref<1x2x128xf32, #tpu.memory_space<vmem>>, vector<1x2x128xf32>,
    return
  }
  func.func @transform_0(%arg0: i32) -> (i32, i32, i32) {
    %c0_i32 = arith.constant 0 : i32
    %c0_i32_0 = arith.constant 0 : i32
    %c0_i32_1 = arith.constant 0 : i32
    return %arg0, %c0_i32, %c0_i32_0 : i32, i32, i32
  }
  func.func @transform_1(%arg0: i32) -> (i32, i32, i32) {
    %c0_i32 = arith.constant 0 : i32
    %c0_i32_0 = arith.constant 0 : i32
    %c0_i32_1 = arith.constant 0 : i32
    return %arg0, %c0_i32, %c0_i32_0 : i32, i32, i32
  }
  func.func @transform_2(%arg0: i32) -> (i32, i32, i32) {
    %c0_i32 = arith.constant 0 : i32
    %c0_i32_0 = arith.constant 0 : i32
    %c0_i32_1 = arith.constant 0 : i32
    return %arg0, %c0_i32, %c0_i32_0 : i32, i32, i32
  }
  func.func @transform_3(%arg0: i32) -> (i32, i32) {
    %c0_i32 = arith.constant 0 : i32
    %c0_i32_0 = arith.constant 0 : i32
    %c0_i32_1 = arith.constant 0 : i32
    return %c0_i32, %c0_i32_0 : i32, i32
  }
  func.func @transform_4(%arg0: i32) -> (i32, i32) {
    %c0_i32 = arith.constant 0 : i32
    %c0_i32_0 = arith.constant 0 : i32
    %c0_i32_1 = arith.constant 0 : i32
    return %c0_i32, %c0_i32_0 : i32, i32
  }
  func.func @transform_5(%arg0: i32) -> (i32, i32) {
    %c0_i32 = arith.constant 0 : i32
    %c0_i32_0 = arith.constant 0 : i32
    %c0_i32_1 = arith.constant 0 : i32
    return %c0_i32, %c0_i32_0 : i32, i32
  }
  func.func @transform_6(%arg0: i32) -> (i32, i32) {
    %c0_i32 = arith.constant 0 : i32
    %c0_i32_0 = arith.constant 0 : i32
    %c0_i32_1 = arith.constant 0 : i32
    return %c0_i32, %c0_i32_0 : i32, i32
  }
  func.func @transform_7(%arg0: i32) -> (i32, i32, i32) {
    %c0_i32 = arith.constant 0 : i32
    %c0_i32_0 = arith.constant 0 : i32
    %c0_i32_1 = arith.constant 0 : i32
    return %arg0, %c0_i32, %c0_i32_0 : i32, i32, i32
  }
}

</mosaic_0001>

<llo_original>
// kernel: tpu_custom_call.1
$region0: #{tpu_custom_call.1}
  #allocation0 [shape = 'u32[]', space=smem, size = 0x4, offset = 0x4, fixed_abs, tag = 'smem constant byte address 0x4 - core index']
  #allocation1 [shape = 'u32[144,128]{1,0:T(1,128)}', space=vmem, size = 0x12000, scoped, tag = 'internal scratch']
  #allocation2 [shape = 'bf16[2,18,18,128]{3,2,1,0:T(8,128)(2,1)}', space=vmem, size = 0x36000, scoped, tag = 'scratch operand']
  #allocation3 [shape = 'bf16[512,1152]{1,0:T(8,128)(2,1)}', space=vmem, size = 0x120000, scoped, tag = 'scratch operand']
  %s0 = inlined_call_operand.vmem [shape: bf16[2,256,128], index: 0, kind: input, shape index: {}]
  %s1 = inlined_call_operand.vmem [shape: f32[2,256,1], index: 1, kind: input, shape index: {}]
  %s2 = inlined_call_operand.vmem [shape: f32[1,2,128], index: 2, kind: input, shape index: {}]
  %s3 = inlined_call_operand.vmem [shape: bf16[128,128], index: 3, kind: input, shape index: {}]
  %s4 = inlined_call_operand.hbm [shape: bf16[1152,128], index: 4, kind: input, shape index: {}]
  %s5 = inlined_call_operand.vmem [shape: bf16[128,128], index: 5, kind: input, shape index: {}]
  %s6 = inlined_call_operand.vmem [shape: f32[1,128], index: 6, kind: input, shape index: {}]
  %s7 = inlined_call_operand.hbm [shape: f32[1,2,128], index: 7, kind: output, shape index: {}]
  %s8 = sld [smem:[#allocation0]]
  $region42: #{tpu_custom_call.1} parent=0
    _
  %s10 = ssub.s32 1, %s8
  %s11 = scalar_select 0, %s10, %s8
  $region1: #{tpu_custom_call.1} parent=0
    #allocation4 [shape = 'u8[294912]{0}', space=vmem, size = 0x48000, scoped, tag = 'input window, operand 4, single buffered']
    #allocation5 [shape = 's32[1]{0}', space=sflag, size = 0x4, scoped, tag = 'scoped memory for tpu_custom_call.1']
    #allocation6 [shape = 's32[1]{0}', space=sflag, size = 0x4, scoped, tag = 'scoped memory for tpu_custom_call.1']
    #allocation7 [shape = 'u8[1024]{0}', space=vmem, size = 0x400, scoped, tag = 'output window, operand 0, single buffered']
    %12 = vsyncpa [#allocation5], 0
    %13 = vsyncpa [#allocation6], 0
    // Predicated region
    $region2: #{tpu_custom_call.1} parent=1 // pred_check
      _
    $region3: #{tpu_custom_call.1} parent=1 // pred_check_branch
      %15 = sbr.rel (0) target = $region5
    $region4: #{tpu_custom_call.1} parent=1 // pred_region
      _
    $region5: #{tpu_custom_call.1} parent=1 // pred_fallthru
      _
    // Predicated region
    $region6: #{tpu_custom_call.1} parent=1 // pred_check
      _
    $region7: #{tpu_custom_call.1} parent=1 // pred_check_branch
      %17 = sbr.rel (0) target = $region9
    $region8: #{tpu_custom_call.1} parent=1 // pred_region
      _
    $region9: #{tpu_custom_call.1} parent=1 // pred_fallthru
      _
    // Predicated region
    $region10: #{tpu_custom_call.1} parent=1 // pred_check
      _
    $region11: #{tpu_custom_call.1} parent=1 // pred_check_branch
      %19 = sbr.rel (0) target = $region13
    $region12: #{tpu_custom_call.1} parent=1 // pred_region
      _
    $region13: #{tpu_custom_call.1} parent=1 // pred_fallthru
      _
    // Predicated region
    $region14: #{tpu_custom_call.1} parent=1 // pred_check
      _
    $region15: #{tpu_custom_call.1} parent=1 // pred_check_branch
      %21 = sbr.rel (0) target = $region17
    $region16: #{tpu_custom_call.1} parent=1 // pred_region
      _
    $region17: #{tpu_custom_call.1} parent=1 // pred_fallthru
      _
    // Predicated region
    $region18: #{tpu_custom_call.1} parent=1 // pred_check
      _
    $region19: #{tpu_custom_call.1} parent=1 // pred_check_branch
      %23 = sbr.rel (0) target = $region21
    $region20: #{tpu_custom_call.1} parent=1 // pred_region
      %s25 = ssub.s32 9216, 9216
      %26 = vsyncadd [#allocation5], %s25
      %s27 = sshll.u32 [#allocation4], 4
      %s28 = int_to_ptr.vmem [resolvable:$true] %s27
      %33 = dma.hbm_to_vmem [thread:$0]  %s4, 9216, %s28, [#allocation5], 64, 64, 4
    $region21: #{tpu_custom_call.1} parent=1 // pred_fallthru
      _
    // Predicated region
    $region22: #{tpu_custom_call.1} parent=1 // pred_check
      _
    $region23: #{tpu_custom_call.1} parent=1 // pred_check_branch
      %35 = sbr.rel (0) target = $region25
    $region24: #{tpu_custom_call.1} parent=1 // pred_region
      _
    $region25: #{tpu_custom_call.1} parent=1 // pred_fallthru
      _
    // Predicated region
    $region26: #{tpu_custom_call.1} parent=1 // pred_check
      _
    $region27: #{tpu_custom_call.1} parent=1 // pred_check_branch
      %37 = sbr.rel (0) target = $region29
    $region28: #{tpu_custom_call.1} parent=1 // pred_region
      _
    $region29: #{tpu_custom_call.1} parent=1 // pred_fallthru
      _
    // Predicated region
    $region30: #{tpu_custom_call.1} parent=1 // pred_check
      _
    $region31: #{tpu_custom_call.1} parent=1 // pred_check_branch
      %39 = sbr.rel (0) target = $region33
    $region32: #{tpu_custom_call.1} parent=1 // pred_region
      %40 = dma.done [#allocation5], 9216
    $region33: #{tpu_custom_call.1} parent=1 // pred_fallthru
      _
    %v42 = vld [vmem:[%s0] sm:$0xf]
    %v43 = vld [vmem:[%s0 + $0x4] sm:$0xf]
    %v44 = vld [vmem:[%s0 + $0x8] sm:$0xf]
    %v45 = vld [vmem:[%s0 + $0xc] sm:$0xf]
    %v46 = vld [vmem:[%s0 + $0x10] sm:$0xf]
    %v47 = vld [vmem:[%s0 + $0x14] sm:$0xf]
    %v48 = vld [vmem:[%s0 + $0x18] sm:$0xf]
    %v49 = vld [vmem:[%s0 + $0x1c] sm:$0xf]
    %v50 = vld [vmem:[%s0 + $0x20] sm:$0xf]
    %v51 = vld [vmem:[%s0 + $0x24] sm:$0xf]
    %v52 = vld [vmem:[%s0 + $0x28] sm:$0xf]
    %v53 = vld [vmem:[%s0 + $0x2c] sm:$0xf]
    %v54 = vld [vmem:[%s0 + $0x30] sm:$0xf]
    %v55 = vld [vmem:[%s0 + $0x34] sm:$0xf]
    %v56 = vld [vmem:[%s0 + $0x38] sm:$0xf]
    %v57 = vld [vmem:[%s0 + $0x3c] sm:$0xf]
    %v58 = vld [vmem:[%s0 + $0x40] sm:$0xf]
    %v59 = vld [vmem:[%s0 + $0x44] sm:$0xf]
    %v60 = vld [vmem:[%s0 + $0x48] sm:$0xf]
    %v61 = vld [vmem:[%s0 + $0x4c] sm:$0xf]
    %v62 = vld [vmem:[%s0 + $0x50] sm:$0xf]
    %v63 = vld [vmem:[%s0 + $0x54] sm:$0xf]
    %v64 = vld [vmem:[%s0 + $0x58] sm:$0xf]
    %v65 = vld [vmem:[%s0 + $0x5c] sm:$0xf]
    %v66 = vld [vmem:[%s0 + $0x60] sm:$0xf]
    %v67 = vld [vmem:[%s0 + $0x64] sm:$0xf]
    %v68 = vld [vmem:[%s0 + $0x68] sm:$0xf]
    %v69 = vld [vmem:[%s0 + $0x6c] sm:$0xf]
    %v70 = vld [vmem:[%s0 + $0x70] sm:$0xf]
    %v71 = vld [vmem:[%s0 + $0x74] sm:$0xf]
    %v72 = vld [vmem:[%s0 + $0x78] sm:$0xf]
    %v73 = vld [vmem:[%s0 + $0x7c] sm:$0xf]
    %v74 = vld [vmem:[%s0 + $0x80] sm:$0xf]
    %v75 = vld [vmem:[%s0 + $0x84] sm:$0xf]
    %v76 = vld [vmem:[%s0 + $0x88] sm:$0xf]
    %v77 = vld [vmem:[%s0 + $0x8c] sm:$0xf]
    %v78 = vld [vmem:[%s0 + $0x90] sm:$0xf]
    %v79 = vld [vmem:[%s0 + $0x94] sm:$0xf]
    %v80 = vld [vmem:[%s0 + $0x98] sm:$0xf]
    %v81 = vld [vmem:[%s0 + $0x9c] sm:$0xf]
    %v82 = vld [vmem:[%s0 + $0xa0] sm:$0xf]
    %v83 = vld [vmem:[%s0 + $0xa4] sm:$0xf]
    %v84 = vld [vmem:[%s0 + $0xa8] sm:$0xf]
    %v85 = vld [vmem:[%s0 + $0xac] sm:$0xf]
    %v86 = vld [vmem:[%s0 + $0xb0] sm:$0xf]
    %v87 = vld [vmem:[%s0 + $0xb4] sm:$0xf]
    %v88 = vld [vmem:[%s0 + $0xb8] sm:$0xf]
    %v89 = vld [vmem:[%s0 + $0xbc] sm:$0xf]
    %v90 = vld [vmem:[%s0 + $0xc0] sm:$0xf]
    %v91 = vld [vmem:[%s0 + $0xc4] sm:$0xf]
    %v92 = vld [vmem:[%s0 + $0xc8] sm:$0xf]
    %v93 = vld [vmem:[%s0 + $0xcc] sm:$0xf]
    %v94 = vld [vmem:[%s0 + $0xd0] sm:$0xf]
    %v95 = vld [vmem:[%s0 + $0xd4] sm:$0xf]
    %v96 = vld [vmem:[%s0 + $0xd8] sm:$0xf]
    %v97 = vld [vmem:[%s0 + $0xdc] sm:$0xf]
    %v98 = vld [vmem:[%s0 + $0xe0] sm:$0xf]
    %v99 = vld [vmem:[%s0 + $0xe4] sm:$0xf]
    %v100 = vld [vmem:[%s0 + $0xe8] sm:$0xf]
    %v101 = vld [vmem:[%s0 + $0xec] sm:$0xf]
    %v102 = vld [vmem:[%s0 + $0xf0] sm:$0xf]
    %v103 = vld [vmem:[%s0 + $0xf4] sm:$0xf]
    %v104 = vld [vmem:[%s0 + $0xf8] sm:$0xf]
    %v105 = vld [vmem:[%s0 + $0xfc] sm:$0xf]
    %v106 = vld [vmem:[%s3] sm:$0xf]
    %v107 = vld [vmem:[%s3 + $0x4] sm:$0xf]
    %v108 = vld [vmem:[%s3 + $0x8] sm:$0xf]
    %v109 = vld [vmem:[%s3 + $0xc] sm:$0xf]
    %v110 = vld [vmem:[%s3 + $0x10] sm:$0xf]
    %v111 = vld [vmem:[%s3 + $0x14] sm:$0xf]
    %v112 = vld [vmem:[%s3 + $0x18] sm:$0xf]
    %v113 = vld [vmem:[%s3 + $0x1c] sm:$0xf]
    %v114 = vld [vmem:[%s3 + $0x20] sm:$0xf]
    %v115 = vld [vmem:[%s3 + $0x24] sm:$0xf]
    %v116 = vld [vmem:[%s3 + $0x28] sm:$0xf]
    %v117 = vld [vmem:[%s3 + $0x2c] sm:$0xf]
    %v118 = vld [vmem:[%s3 + $0x30] sm:$0xf]
    %v119 = vld [vmem:[%s3 + $0x34] sm:$0xf]
    %v120 = vld [vmem:[%s3 + $0x38] sm:$0xf]
    %v121 = vld [vmem:[%s3 + $0x3c] sm:$0xf]
    %v186 = vunpack.c.l.b16 %v42
    %v187 = vunpack.c.l.b16 %v43
    %v188 = vunpack.c.l.b16 %v44
    %v189 = vunpack.c.l.b16 %v45
    %v190 = vunpack.c.l.b16 %v46
    %v191 = vunpack.c.l.b16 %v47
    %v192 = vunpack.c.l.b16 %v48
    %v193 = vunpack.c.l.b16 %v49
    %v194 = vunpack.c.l.b16 %v50
    %v195 = vunpack.c.l.b16 %v51
    %v196 = vunpack.c.l.b16 %v52
    %v197 = vunpack.c.l.b16 %v53
    %v198 = vunpack.c.l.b16 %v54
    %v199 = vunpack.c.l.b16 %v55
    %v200 = vunpack.c.l.b16 %v56
    %v201 = vunpack.c.l.b16 %v57
    %v202 = vunpack.c.l.b16 %v58
    %v203 = vunpack.c.l.b16 %v59
    %v204 = vunpack.c.l.b16 %v60
    %v205 = vunpack.c.l.b16 %v61
    %v206 = vunpack.c.l.b16 %v62
    %v207 = vunpack.c.l.b16 %v63
    %v208 = vunpack.c.l.b16 %v64
    %v209 = vunpack.c.l.b16 %v65
    %v210 = vunpack.c.l.b16 %v66
    %v211 = vunpack.c.l.b16 %v67
    %v212 = vunpack.c.l.b16 %v68
    %v213 = vunpack.c.l.b16 %v69
    %v214 = vunpack.c.l.b16 %v70
    %v215 = vunpack.c.l.b16 %v71
    %v216 = vunpack.c.l.b16 %v72
    %v217 = vunpack.c.l.b16 %v73
    %v218 = vunpack.c.l.b16 %v74
    %v219 = vunpack.c.l.b16 %v75
    %v220 = vunpack.c.l.b16 %v76
    %v221 = vunpack.c.l.b16 %v77
    %v222 = vunpack.c.l.b16 %v78
    %v223 = vunpack.c.l.b16 %v79
    %v224 = vunpack.c.l.b16 %v80
    %v225 = vunpack.c.l.b16 %v81
    %v226 = vunpack.c.l.b16 %v82
    %v227 = vunpack.c.l.b16 %v83
    %v228 = vunpack.c.l.b16 %v84
    %v229 = vunpack.c.l.b16 %v85
    %v230 = vunpack.c.l.b16 %v86
    %v231 = vunpack.c.l.b16 %v87
    %v232 = vunpack.c.l.b16 %v88
    %v233 = vunpack.c.l.b16 %v89
    %v234 = vunpack.c.l.b16 %v90
    %v235 = vunpack.c.l.b16 %v91
    %v236 = vunpack.c.l.b16 %v92
    %v237 = vunpack.c.l.b16 %v93
    %v238 = vunpack.c.l.b16 %v94
    %v239 = vunpack.c.l.b16 %v95
    %v240 = vunpack.c.l.b16 %v96
    %v241 = vunpack.c.l.b16 %v97
    %v242 = vunpack.c.l.b16 %v98
    %v243 = vunpack.c.l.b16 %v99
    %v244 = vunpack.c.l.b16 %v100
    %v245 = vunpack.c.l.b16 %v101
    %v246 = vunpack.c.l.b16 %v102
    %v247 = vunpack.c.l.b16 %v103
    %v248 = vunpack.c.l.b16 %v104
    %v249 = vunpack.c.l.b16 %v105
    %v250 = vpack.c.b16 %v187, %v186
    %v251 = vpack.c.b16 %v189, %v188
    %v252 = vpack.c.b16 %v191, %v190
    %v253 = vpack.c.b16 %v193, %v192
    %v254 = vpack.c.b16 %v195, %v194
    %v255 = vpack.c.b16 %v197, %v196
    %v256 = vpack.c.b16 %v199, %v198
    %v257 = vpack.c.b16 %v201, %v200
    %v258 = vpack.c.b16 %v203, %v202
    %v259 = vpack.c.b16 %v205, %v204
    %v260 = vpack.c.b16 %v207, %v206
    %v261 = vpack.c.b16 %v209, %v208
    %v262 = vpack.c.b16 %v211, %v210
    %v263 = vpack.c.b16 %v213, %v212
    %v264 = vpack.c.b16 %v215, %v214
    %v265 = vpack.c.b16 %v217, %v216
    %v266 = vpack.c.b16 %v219, %v218
    %v267 = vpack.c.b16 %v221, %v220
    %v268 = vpack.c.b16 %v223, %v222
    %v269 = vpack.c.b16 %v225, %v224
    %v270 = vpack.c.b16 %v227, %v226
    %v271 = vpack.c.b16 %v229, %v228
    %v272 = vpack.c.b16 %v231, %v230
    %v273 = vpack.c.b16 %v233, %v232
    %v274 = vpack.c.b16 %v235, %v234
    %v275 = vpack.c.b16 %v237, %v236
    %v276 = vpack.c.b16 %v239, %v238
    %v277 = vpack.c.b16 %v241, %v240
    %v278 = vpack.c.b16 %v243, %v242
    %v279 = vpack.c.b16 %v245, %v244
    %v280 = vpack.c.b16 %v247, %v246
    %v281 = vpack.c.b16 %v249, %v248
    %v330 = vunpack.c.l.b16 %v106
    %v331 = vunpack.c.l.b16 %v107
    %v332 = vunpack.c.l.b16 %v108
    %v333 = vunpack.c.l.b16 %v109
    %v334 = vunpack.c.l.b16 %v110
    %v335 = vunpack.c.l.b16 %v111
    %v336 = vunpack.c.l.b16 %v112
    %v337 = vunpack.c.l.b16 %v113
    %v338 = vunpack.c.l.b16 %v114
    %v339 = vunpack.c.l.b16 %v115
    %v340 = vunpack.c.l.b16 %v116
    %v341 = vunpack.c.l.b16 %v117
    %v342 = vunpack.c.l.b16 %v118
    %v343 = vunpack.c.l.b16 %v119
    %v344 = vunpack.c.l.b16 %v120
    %v345 = vunpack.c.l.b16 %v121
    %v346 = vpack.c.b16 %v331, %v330
    %v347 = vpack.c.b16 %v333, %v332
    %v348 = vpack.c.b16 %v335, %v334
    %v349 = vpack.c.b16 %v337, %v336
    %v350 = vpack.c.b16 %v339, %v338
    %v351 = vpack.c.b16 %v341, %v340
    %v352 = vpack.c.b16 %v343, %v342
    %v353 = vpack.c.b16 %v345, %v344
    %362 = vmatprep.subr.bf16.mxu0 0
    %363 = vmatpush1.bf16.msra.mxu0 %v353
    %364 = vmatprep.subr.bf16.mxu0 0
    %365 = vmatpush1.bf16.msra.mxu0 %v352
    %366 = vmatprep.subr.bf16.mxu0 0
    %367 = vmatpush1.bf16.msra.mxu0 %v351
    %368 = vmatprep.subr.bf16.mxu0 0
    %369 = vmatpush1.bf16.msra.mxu0 %v350
    %370 = vmatprep.subr.bf16.mxu0 0
    %371 = vmatpush1.bf16.msra.mxu0 %v349
    %372 = vmatprep.subr.bf16.mxu0 0
    %373 = vmatpush1.bf16.msra.mxu0 %v348
    %374 = vmatprep.subr.bf16.mxu0 0
    %375 = vmatpush1.bf16.msra.mxu0 %v347
    %376 = vmatprep.subr.bf16.mxu0 0
    %377 = vmatpush1.bf16.msra.mxu0 %v346
    %378 = vmatprep.subr.bf16.mxu0 0
    %379 = vmatpush2.bf16.msra.mxu0 0
    %380 = vmatprep.subr.bf16.mxu0 0
    %381 = vmatpush2.bf16.msra.mxu0 0
    %382 = vmatprep.subr.bf16.mxu0 0
    %383 = vmatpush2.bf16.msra.mxu0 0
    %384 = vmatprep.subr.bf16.mxu0 0
    %385 = vmatpush2.bf16.msra.mxu0 0
    %386 = vmatprep.subr.bf16.mxu0 0
    %387 = vmatpush2.bf16.msra.mxu0 0
    %388 = vmatprep.subr.bf16.mxu0 0
    %389 = vmatpush2.bf16.msra.mxu0 0
    %390 = vmatprep.subr.bf16.mxu0 0
    %391 = vmatpush2.bf16.msra.mxu0 0
    %392 = vmatprep.subr.bf16.mxu0 0
    %393 = vmatpush2.bf16.msra.mxu0 0
    %394 = vmatprep.mubr.bf16.mxu0 0
    %395 = vmatmul.mubr.bf16.gmra.mxu0 %v250
    %v396 = vpop.f32.mrf.mxu0
    %v397 = vadd.f32 0.0, %v396
    %v398 = vpop.f32.mrf.mxu0
    %v399 = vpop.f32.mrf.mxu0
    %v400 = vadd.f32 0.0, %v399
    %v401 = vpop.f32.mrf.mxu0
    %402 = vmatprep.mubr.bf16.mxu0 0
    %403 = vmatmul.mubr.bf16.gmra.mxu0 %v251
    %v404 = vpop.f32.mrf.mxu0
    %v405 = vadd.f32 0.0, %v404
    %v406 = vpop.f32.mrf.mxu0
    %v407 = vpop.f32.mrf.mxu0
    %v408 = vadd.f32 0.0, %v407
    %v409 = vpop.f32.mrf.mxu0
    %410 = vmatprep.mubr.bf16.mxu0 0
    %411 = vmatmul.mubr.bf16.gmra.mxu0 %v252
    %v412 = vpop.f32.mrf.mxu0
    %v413 = vadd.f32 0.0, %v412
    %v414 = vpop.f32.mrf.mxu0
    %v415 = vpop.f32.mrf.mxu0
    %v416 = vadd.f32 0.0, %v415
    %v417 = vpop.f32.mrf.mxu0
    %418 = vmatprep.mubr.bf16.mxu0 0
    %419 = vmatmul.mubr.bf16.gmra.mxu0 %v253
    %v420 = vpop.f32.mrf.mxu0
    %v421 = vadd.f32 0.0, %v420
    %v422 = vpop.f32.mrf.mxu0
    %v423 = vpop.f32.mrf.mxu0
    %v424 = vadd.f32 0.0, %v423
    %v425 = vpop.f32.mrf.mxu0
    %426 = vmatprep.mubr.bf16.mxu0 0
    %427 = vmatmul.mubr.bf16.gmra.mxu0 %v254
    %v428 = vpop.f32.mrf.mxu0
    %v429 = vadd.f32 0.0, %v428
    %v430 = vpop.f32.mrf.mxu0
    %v431 = vpop.f32.mrf.mxu0
    %v432 = vadd.f32 0.0, %v431
    %v433 = vpop.f32.mrf.mxu0
    %434 = vmatprep.mubr.bf16.mxu0 0
    %435 = vmatmul.mubr.bf16.gmra.mxu0 %v255
    %v436 = vpop.f32.mrf.mxu0
    %v437 = vadd.f32 0.0, %v436
    %v438 = vpop.f32.mrf.mxu0
    %v439 = vpop.f32.mrf.mxu0
    %v440 = vadd.f32 0.0, %v439
    %v441 = vpop.f32.mrf.mxu0
    %442 = vmatprep.mubr.bf16.mxu0 0
    %443 = vmatmul.mubr.bf16.gmra.mxu0 %v256
    %v444 = vpop.f32.mrf.mxu0
    %v445 = vadd.f32 0.0, %v444
    %v446 = vpop.f32.mrf.mxu0
    %v447 = vpop.f32.mrf.mxu0
    %v448 = vadd.f32 0.0, %v447
    %v449 = vpop.f32.mrf.mxu0
    %450 = vmatprep.mubr.bf16.mxu0 0
    %451 = vmatmul.mubr.bf16.gmra.mxu0 %v257
    %v452 = vpop.f32.mrf.mxu0
    %v453 = vadd.f32 0.0, %v452
    %v454 = vpop.f32.mrf.mxu0
    %v455 = vpop.f32.mrf.mxu0
    %v456 = vadd.f32 0.0, %v455
    %v457 = vpop.f32.mrf.mxu0
    %458 = vmatprep.mubr.bf16.mxu0 0
    %459 = vmatmul.mubr.bf16.gmra.mxu0 %v258
    %v460 = vpop.f32.mrf.mxu0
    %v461 = vadd.f32 0.0, %v460
    %v462 = vpop.f32.mrf.mxu0
    %v463 = vpop.f32.mrf.mxu0
    %v464 = vadd.f32 0.0, %v463
    %v465 = vpop.f32.mrf.mxu0
    %466 = vmatprep.mubr.bf16.mxu0 0
    %467 = vmatmul.mubr.bf16.gmra.mxu0 %v259
    %v468 = vpop.f32.mrf.mxu0
    %v469 = vadd.f32 0.0, %v468
    %v470 = vpop.f32.mrf.mxu0
    %v471 = vpop.f32.mrf.mxu0
    %v472 = vadd.f32 0.0, %v471
    %v473 = vpop.f32.mrf.mxu0
    %474 = vmatprep.mubr.bf16.mxu0 0
    %475 = vmatmul.mubr.bf16.gmra.mxu0 %v260
    %v476 = vpop.f32.mrf.mxu0
    %v477 = vadd.f32 0.0, %v476
    %v478 = vpop.f32.mrf.mxu0
    %v479 = vpop.f32.mrf.mxu0
    %v480 = vadd.f32 0.0, %v479
    %v481 = vpop.f32.mrf.mxu0
    %482 = vmatprep.mubr.bf16.mxu0 0
    %483 = vmatmul.mubr.bf16.gmra.mxu0 %v261
    %v484 = vpop.f32.mrf.mxu0
    %v485 = vadd.f32 0.0, %v484
    %v486 = vpop.f32.mrf.mxu0
    %v487 = vpop.f32.mrf.mxu0
    %v488 = vadd.f32 0.0, %v487
    %v489 = vpop.f32.mrf.mxu0
    %490 = vmatprep.mubr.bf16.mxu0 0
    %491 = vmatmul.mubr.bf16.gmra.mxu0 %v262
    %v492 = vpop.f32.mrf.mxu0
    %v493 = vadd.f32 0.0, %v492
    %v494 = vpop.f32.mrf.mxu0
    %v495 = vpop.f32.mrf.mxu0
    %v496 = vadd.f32 0.0, %v495
    %v497 = vpop.f32.mrf.mxu0
    %498 = vmatprep.mubr.bf16.mxu0 0
    %499 = vmatmul.mubr.bf16.gmra.mxu0 %v263
    %v500 = vpop.f32.mrf.mxu0
    %v501 = vadd.f32 0.0, %v500
    %v502 = vpop.f32.mrf.mxu0
    %v503 = vpop.f32.mrf.mxu0
    %v504 = vadd.f32 0.0, %v503
    %v505 = vpop.f32.mrf.mxu0
    %506 = vmatprep.mubr.bf16.mxu0 0
    %507 = vmatmul.mubr.bf16.gmra.mxu0 %v264
    %v508 = vpop.f32.mrf.mxu0
    %v509 = vadd.f32 0.0, %v508
    %v510 = vpop.f32.mrf.mxu0
    %v511 = vpop.f32.mrf.mxu0
    %v512 = vadd.f32 0.0, %v511
    %v513 = vpop.f32.mrf.mxu0
    %514 = vmatprep.mubr.bf16.mxu0 0
    %515 = vmatmul.mubr.bf16.gmra.mxu0 %v265
    %v516 = vpop.f32.mrf.mxu0
    %v517 = vadd.f32 0.0, %v516
    %v518 = vpop.f32.mrf.mxu0
    %v519 = vpop.f32.mrf.mxu0
    %v520 = vadd.f32 0.0, %v519
    %v521 = vpop.f32.mrf.mxu0
    %522 = vmatprep.mubr.bf16.mxu0 0
    %523 = vmatmul.mubr.bf16.gmra.mxu0 %v266
    %v524 = vpop.f32.mrf.mxu0
    %v525 = vadd.f32 0.0, %v524
    %v526 = vpop.f32.mrf.mxu0
    %v527 = vpop.f32.mrf.mxu0
    %v528 = vadd.f32 0.0, %v527
    %v529 = vpop.f32.mrf.mxu0
    %530 = vmatprep.mubr.bf16.mxu0 0
    %531 = vmatmul.mubr.bf16.gmra.mxu0 %v267
    %v532 = vpop.f32.mrf.mxu0
    %v533 = vadd.f32 0.0, %v532
    %v534 = vpop.f32.mrf.mxu0
    %v535 = vpop.f32.mrf.mxu0
    %v536 = vadd.f32 0.0, %v535
    %v537 = vpop.f32.mrf.mxu0
    %538 = vmatprep.mubr.bf16.mxu0 0
    %539 = vmatmul.mubr.bf16.gmra.mxu0 %v268
    %v540 = vpop.f32.mrf.mxu0
    %v541 = vadd.f32 0.0, %v540
    %v542 = vpop.f32.mrf.mxu0
    %v543 = vpop.f32.mrf.mxu0
    %v544 = vadd.f32 0.0, %v543
    %v545 = vpop.f32.mrf.mxu0
    %546 = vmatprep.mubr.bf16.mxu0 0
    %547 = vmatmul.mubr.bf16.gmra.mxu0 %v269
    %v548 = vpop.f32.mrf.mxu0
    %v549 = vadd.f32 0.0, %v548
    %v550 = vpop.f32.mrf.mxu0
    %v551 = vpop.f32.mrf.mxu0
    %v552 = vadd.f32 0.0, %v551
    %v553 = vpop.f32.mrf.mxu0
    %554 = vmatprep.mubr.bf16.mxu0 0
    %555 = vmatmul.mubr.bf16.gmra.mxu0 %v270
    %v556 = vpop.f32.mrf.mxu0
    %v557 = vadd.f32 0.0, %v556
    %v558 = vpop.f32.mrf.mxu0
    %v559 = vpop.f32.mrf.mxu0
    %v560 = vadd.f32 0.0, %v559
    %v561 = vpop.f32.mrf.mxu0
    %562 = vmatprep.mubr.bf16.mxu0 0
    %563 = vmatmul.mubr.bf16.gmra.mxu0 %v271
    %v564 = vpop.f32.mrf.mxu0
    %v565 = vadd.f32 0.0, %v564
    %v566 = vpop.f32.mrf.mxu0
    %v567 = vpop.f32.mrf.mxu0
    %v568 = vadd.f32 0.0, %v567
    %v569 = vpop.f32.mrf.mxu0
    %570 = vmatprep.mubr.bf16.mxu0 0
    %571 = vmatmul.mubr.bf16.gmra.mxu0 %v272
    %v572 = vpop.f32.mrf.mxu0
    %v573 = vadd.f32 0.0, %v572
    %v574 = vpop.f32.mrf.mxu0
    %v575 = vpop.f32.mrf.mxu0
    %v576 = vadd.f32 0.0, %v575
    %v577 = vpop.f32.mrf.mxu0
    %578 = vmatprep.mubr.bf16.mxu0 0
    %579 = vmatmul.mubr.bf16.gmra.mxu0 %v273
    %v580 = vpop.f32.mrf.mxu0
    %v581 = vadd.f32 0.0, %v580
    %v582 = vpop.f32.mrf.mxu0
    %v583 = vpop.f32.mrf.mxu0
    %v584 = vadd.f32 0.0, %v583
    %v585 = vpop.f32.mrf.mxu0
    %586 = vmatprep.mubr.bf16.mxu0 0
    %587 = vmatmul.mubr.bf16.gmra.mxu0 %v274
    %v588 = vpop.f32.mrf.mxu0
    %v589 = vadd.f32 0.0, %v588
    %v590 = vpop.f32.mrf.mxu0
    %v591 = vpop.f32.mrf.mxu0
    %v592 = vadd.f32 0.0, %v591
    %v593 = vpop.f32.mrf.mxu0
    %594 = vmatprep.mubr.bf16.mxu0 0
    %595 = vmatmul.mubr.bf16.gmra.mxu0 %v275
    %v596 = vpop.f32.mrf.mxu0
    %v597 = vadd.f32 0.0, %v596
    %v598 = vpop.f32.mrf.mxu0
    %v599 = vpop.f32.mrf.mxu0
    %v600 = vadd.f32 0.0, %v599
    %v601 = vpop.f32.mrf.mxu0
    %602 = vmatprep.mubr.bf16.mxu0 0
    %603 = vmatmul.mubr.bf16.gmra.mxu0 %v276
    %v604 = vpop.f32.mrf.mxu0
    %v605 = vadd.f32 0.0, %v604
    %v606 = vpop.f32.mrf.mxu0
    %v607 = vpop.f32.mrf.mxu0
    %v608 = vadd.f32 0.0, %v607
    %v609 = vpop.f32.mrf.mxu0
    %610 = vmatprep.mubr.bf16.mxu0 0
    %611 = vmatmul.mubr.bf16.gmra.mxu0 %v277
    %v612 = vpop.f32.mrf.mxu0
    %v613 = vadd.f32 0.0, %v612
    %v614 = vpop.f32.mrf.mxu0
    %v615 = vpop.f32.mrf.mxu0
    %v616 = vadd.f32 0.0, %v615
    %v617 = vpop.f32.mrf.mxu0
    %618 = vmatprep.mubr.bf16.mxu0 0
    %619 = vmatmul.mubr.bf16.gmra.mxu0 %v278
    %v620 = vpop.f32.mrf.mxu0
    %v621 = vadd.f32 0.0, %v620
    %v622 = vpop.f32.mrf.mxu0
    %v623 = vpop.f32.mrf.mxu0
    %v624 = vadd.f32 0.0, %v623
    %v625 = vpop.f32.mrf.mxu0
    %626 = vmatprep.mubr.bf16.mxu0 0
    %627 = vmatmul.mubr.bf16.gmra.mxu0 %v279
    %v628 = vpop.f32.mrf.mxu0
    %v629 = vadd.f32 0.0, %v628
    %v630 = vpop.f32.mrf.mxu0
    %v631 = vpop.f32.mrf.mxu0
    %v632 = vadd.f32 0.0, %v631
    %v633 = vpop.f32.mrf.mxu0
    %634 = vmatprep.mubr.bf16.mxu0 0
    %635 = vmatmul.mubr.bf16.gmra.mxu0 %v280
    %v636 = vpop.f32.mrf.mxu0
    %v637 = vadd.f32 0.0, %v636
    %v638 = vpop.f32.mrf.mxu0
    %v639 = vpop.f32.mrf.mxu0
    %v640 = vadd.f32 0.0, %v639
    %v641 = vpop.f32.mrf.mxu0
    %642 = vmatprep.mubr.bf16.mxu0 0
    %643 = vmatmul.mubr.bf16.gmra.mxu0 %v281
    %v644 = vpop.f32.mrf.mxu0
    %v645 = vadd.f32 0.0, %v644
    %v646 = vpop.f32.mrf.mxu0
    %v647 = vpop.f32.mrf.mxu0
    %v648 = vadd.f32 0.0, %v647
    %v649 = vpop.f32.mrf.mxu0
    %650 = vdwg.mxu0
    %v651 = vld [vmem:[%s1] sm:$0xff]
    %v652 = vld [vmem:[%s1 + $0x8] sm:$0xff]
    %v653 = vld [vmem:[%s1 + $0x10] sm:$0xff]
    %v654 = vld [vmem:[%s1 + $0x18] sm:$0xff]
    %v655 = vld [vmem:[%s1 + $0x20] sm:$0xff]
    %v656 = vld [vmem:[%s1 + $0x28] sm:$0xff]
    %v657 = vld [vmem:[%s1 + $0x30] sm:$0xff]
    %v658 = vld [vmem:[%s1 + $0x38] sm:$0xff]
    %v659 = vld [vmem:[%s1 + $0x40] sm:$0xff]
    %v660 = vld [vmem:[%s1 + $0x48] sm:$0xff]
    %v661 = vld [vmem:[%s1 + $0x50] sm:$0xff]
    %v662 = vld [vmem:[%s1 + $0x58] sm:$0xff]
    %v663 = vld [vmem:[%s1 + $0x60] sm:$0xff]
    %v664 = vld [vmem:[%s1 + $0x68] sm:$0xff]
    %v665 = vld [vmem:[%s1 + $0x70] sm:$0xff]
    %v666 = vld [vmem:[%s1 + $0x78] sm:$0xff]
    %v667 = vld [vmem:[%s1 + $0x80] sm:$0xff]
    %v668 = vld [vmem:[%s1 + $0x88] sm:$0xff]
    %v669 = vld [vmem:[%s1 + $0x90] sm:$0xff]
    %v670 = vld [vmem:[%s1 + $0x98] sm:$0xff]
    %v671 = vld [vmem:[%s1 + $0xa0] sm:$0xff]
    %v672 = vld [vmem:[%s1 + $0xa8] sm:$0xff]
    %v673 = vld [vmem:[%s1 + $0xb0] sm:$0xff]
    %v674 = vld [vmem:[%s1 + $0xb8] sm:$0xff]
    %v675 = vld [vmem:[%s1 + $0xc0] sm:$0xff]
    %v676 = vld [vmem:[%s1 + $0xc8] sm:$0xff]
    %v677 = vld [vmem:[%s1 + $0xd0] sm:$0xff]
    %v678 = vld [vmem:[%s1 + $0xd8] sm:$0xff]
    %v679 = vld [vmem:[%s1 + $0xe0] sm:$0xff]
    %v680 = vld [vmem:[%s1 + $0xe8] sm:$0xff]
    %v681 = vld [vmem:[%s1 + $0xf0] sm:$0xff]
    %v682 = vld [vmem:[%s1 + $0xf8] sm:$0xff]
    %v683 = vld [vmem:[%s1 + $0x100] sm:$0xff]
    %v684 = vld [vmem:[%s1 + $0x108] sm:$0xff]
    %v685 = vld [vmem:[%s1 + $0x110] sm:$0xff]
    %v686 = vld [vmem:[%s1 + $0x118] sm:$0xff]
    %v687 = vld [vmem:[%s1 + $0x120] sm:$0xff]
    %v688 = vld [vmem:[%s1 + $0x128] sm:$0xff]
    %v689 = vld [vmem:[%s1 + $0x130] sm:$0xff]
    %v690 = vld [vmem:[%s1 + $0x138] sm:$0xff]
    %v691 = vld [vmem:[%s1 + $0x140] sm:$0xff]
    %v692 = vld [vmem:[%s1 + $0x148] sm:$0xff]
    %v693 = vld [vmem:[%s1 + $0x150] sm:$0xff]
    %v694 = vld [vmem:[%s1 + $0x158] sm:$0xff]
    %v695 = vld [vmem:[%s1 + $0x160] sm:$0xff]
    %v696 = vld [vmem:[%s1 + $0x168] sm:$0xff]
    %v697 = vld [vmem:[%s1 + $0x170] sm:$0xff]
    %v698 = vld [vmem:[%s1 + $0x178] sm:$0xff]
    %v699 = vld [vmem:[%s1 + $0x180] sm:$0xff]
    %v700 = vld [vmem:[%s1 + $0x188] sm:$0xff]
    %v701 = vld [vmem:[%s1 + $0x190] sm:$0xff]
    %v702 = vld [vmem:[%s1 + $0x198] sm:$0xff]
    %v703 = vld [vmem:[%s1 + $0x1a0] sm:$0xff]
    %v704 = vld [vmem:[%s1 + $0x1a8] sm:$0xff]
    %v705 = vld [vmem:[%s1 + $0x1b0] sm:$0xff]
    %v706 = vld [vmem:[%s1 + $0x1b8] sm:$0xff]
    %v707 = vld [vmem:[%s1 + $0x1c0] sm:$0xff]
    %v708 = vld [vmem:[%s1 + $0x1c8] sm:$0xff]
    %v709 = vld [vmem:[%s1 + $0x1d0] sm:$0xff]
    %v710 = vld [vmem:[%s1 + $0x1d8] sm:$0xff]
    %v711 = vld [vmem:[%s1 + $0x1e0] sm:$0xff]
    %v712 = vld [vmem:[%s1 + $0x1e8] sm:$0xff]
    %v713 = vld [vmem:[%s1 + $0x1f0] sm:$0xff]
    %v714 = vld [vmem:[%s1 + $0x1f8] sm:$0xff]
    %v715 = vmax.f32 %v397, 0.0
    %v716 = vmax.f32 %v400, 0.0
    %v717 = vmax.f32 %v405, 0.0
    %v718 = vmax.f32 %v408, 0.0
    %v719 = vmax.f32 %v413, 0.0
    %v720 = vmax.f32 %v416, 0.0
    %v721 = vmax.f32 %v421, 0.0
    %v722 = vmax.f32 %v424, 0.0
    %v723 = vmax.f32 %v429, 0.0
    %v724 = vmax.f32 %v432, 0.0
    %v725 = vmax.f32 %v437, 0.0
    %v726 = vmax.f32 %v440, 0.0
    %v727 = vmax.f32 %v445, 0.0
    %v728 = vmax.f32 %v448, 0.0
    %v729 = vmax.f32 %v453, 0.0
    %v730 = vmax.f32 %v456, 0.0
    %v731 = vmax.f32 %v461, 0.0
    %v732 = vmax.f32 %v464, 0.0
    %v733 = vmax.f32 %v469, 0.0
    %v734 = vmax.f32 %v472, 0.0
    %v735 = vmax.f32 %v477, 0.0
    %v736 = vmax.f32 %v480, 0.0
    %v737 = vmax.f32 %v485, 0.0
    %v738 = vmax.f32 %v488, 0.0
    %v739 = vmax.f32 %v493, 0.0
    %v740 = vmax.f32 %v496, 0.0
    %v741 = vmax.f32 %v501, 0.0
    %v742 = vmax.f32 %v504, 0.0
    %v743 = vmax.f32 %v509, 0.0
    %v744 = vmax.f32 %v512, 0.0
    %v745 = vmax.f32 %v517, 0.0
    %v746 = vmax.f32 %v520, 0.0
    %v747 = vmax.f32 %v525, 0.0
    %v748 = vmax.f32 %v528, 0.0
    %v749 = vmax.f32 %v533, 0.0
    %v750 = vmax.f32 %v536, 0.0
    %v751 = vmax.f32 %v541, 0.0
    %v752 = vmax.f32 %v544, 0.0
    %v753 = vmax.f32 %v549, 0.0
    %v754 = vmax.f32 %v552, 0.0
    %v755 = vmax.f32 %v557, 0.0
    %v756 = vmax.f32 %v560, 0.0
    %v757 = vmax.f32 %v565, 0.0
    %v758 = vmax.f32 %v568, 0.0
    %v759 = vmax.f32 %v573, 0.0
    %v760 = vmax.f32 %v576, 0.0
    %v761 = vmax.f32 %v581, 0.0
    %v762 = vmax.f32 %v584, 0.0
    %v763 = vmax.f32 %v589, 0.0
    %v764 = vmax.f32 %v592, 0.0
    %v765 = vmax.f32 %v597, 0.0
    %v766 = vmax.f32 %v600, 0.0
    %v767 = vmax.f32 %v605, 0.0
    %v768 = vmax.f32 %v608, 0.0
    %v769 = vmax.f32 %v613, 0.0
    %v770 = vmax.f32 %v616, 0.0
    %v771 = vmax.f32 %v621, 0.0
    %v772 = vmax.f32 %v624, 0.0
    %v773 = vmax.f32 %v629, 0.0
    %v774 = vmax.f32 %v632, 0.0
    %v775 = vmax.f32 %v637, 0.0
    %v776 = vmax.f32 %v640, 0.0
    %v777 = vmax.f32 %v645, 0.0
    %v778 = vmax.f32 %v648, 0.0
    %780 = vset.pattern.permute.xlu0 0
    %781 = vperm.xlu0 %780, %v651
    %v782 = vpop.permute.xlu0 %781
    %785 = vset.pattern.permute.xlu0 0
    %786 = vperm.xlu0 %785, %v652
    %v787 = vpop.permute.xlu0 %786
    %790 = vset.pattern.permute.xlu0 0
    %791 = vperm.xlu0 %790, %v653
    %v792 = vpop.permute.xlu0 %791
    %795 = vset.pattern.permute.xlu0 0
    %796 = vperm.xlu0 %795, %v654
    %v797 = vpop.permute.xlu0 %796
    %800 = vset.pattern.permute.xlu0 0
    %801 = vperm.xlu0 %800, %v655
    %v802 = vpop.permute.xlu0 %801
    %805 = vset.pattern.permute.xlu0 0
    %806 = vperm.xlu0 %805, %v656
    %v807 = vpop.permute.xlu0 %806
    %810 = vset.pattern.permute.xlu0 0
    %811 = vperm.xlu0 %810, %v657
    %v812 = vpop.permute.xlu0 %811
    %815 = vset.pattern.permute.xlu0 0
    %816 = vperm.xlu0 %815, %v658
    %v817 = vpop.permute.xlu0 %816
    %820 = vset.pattern.permute.xlu0 0
    %821 = vperm.xlu0 %820, %v659
    %v822 = vpop.permute.xlu0 %821
    %825 = vset.pattern.permute.xlu0 0
    %826 = vperm.xlu0 %825, %v660
    %v827 = vpop.permute.xlu0 %826
    %830 = vset.pattern.permute.xlu0 0
    %831 = vperm.xlu0 %830, %v661
    %v832 = vpop.permute.xlu0 %831
    %835 = vset.pattern.permute.xlu0 0
    %836 = vperm.xlu0 %835, %v662
    %v837 = vpop.permute.xlu0 %836
    %840 = vset.pattern.permute.xlu0 0
    %841 = vperm.xlu0 %840, %v663
    %v842 = vpop.permute.xlu0 %841
    %845 = vset.pattern.permute.xlu0 0
    %846 = vperm.xlu0 %845, %v664
    %v847 = vpop.permute.xlu0 %846
    %850 = vset.pattern.permute.xlu0 0
    %851 = vperm.xlu0 %850, %v665
    %v852 = vpop.permute.xlu0 %851
    %855 = vset.pattern.permute.xlu0 0
    %856 = vperm.xlu0 %855, %v666
    %v857 = vpop.permute.xlu0 %856
    %860 = vset.pattern.permute.xlu0 0
    %861 = vperm.xlu0 %860, %v667
    %v862 = vpop.permute.xlu0 %861
    %865 = vset.pattern.permute.xlu0 0
    %866 = vperm.xlu0 %865, %v668
    %v867 = vpop.permute.xlu0 %866
    %870 = vset.pattern.permute.xlu0 0
    %871 = vperm.xlu0 %870, %v669
    %v872 = vpop.permute.xlu0 %871
    %875 = vset.pattern.permute.xlu0 0
    %876 = vperm.xlu0 %875, %v670
    %v877 = vpop.permute.xlu0 %876
    %880 = vset.pattern.permute.xlu0 0
    %881 = vperm.xlu0 %880, %v671
    %v882 = vpop.permute.xlu0 %881
    %885 = vset.pattern.permute.xlu0 0
    %886 = vperm.xlu0 %885, %v672
    %v887 = vpop.permute.xlu0 %886
    %890 = vset.pattern.permute.xlu0 0
    %891 = vperm.xlu0 %890, %v673
    %v892 = vpop.permute.xlu0 %891
    %895 = vset.pattern.permute.xlu0 0
    %896 = vperm.xlu0 %895, %v674
    %v897 = vpop.permute.xlu0 %896
    %900 = vset.pattern.permute.xlu0 0
    %901 = vperm.xlu0 %900, %v675
    %v902 = vpop.permute.xlu0 %901
    %905 = vset.pattern.permute.xlu0 0
    %906 = vperm.xlu0 %905, %v676
    %v907 = vpop.permute.xlu0 %906
    %910 = vset.pattern.permute.xlu0 0
    %911 = vperm.xlu0 %910, %v677
    %v912 = vpop.permute.xlu0 %911
    %915 = vset.pattern.permute.xlu0 0
    %916 = vperm.xlu0 %915, %v678
    %v917 = vpop.permute.xlu0 %916
    %920 = vset.pattern.permute.xlu0 0
    %921 = vperm.xlu0 %920, %v679
    %v922 = vpop.permute.xlu0 %921
    %925 = vset.pattern.permute.xlu0 0
    %926 = vperm.xlu0 %925, %v680
    %v927 = vpop.permute.xlu0 %926
    %930 = vset.pattern.permute.xlu0 0
    %931 = vperm.xlu0 %930, %v681
    %v932 = vpop.permute.xlu0 %931
    %935 = vset.pattern.permute.xlu0 0
    %936 = vperm.xlu0 %935, %v682
    %v937 = vpop.permute.xlu0 %936
    %940 = vset.pattern.permute.xlu0 0
    %941 = vperm.xlu0 %940, %v683
    %v942 = vpop.permute.xlu0 %941
    %945 = vset.pattern.permute.xlu0 0
    %946 = vperm.xlu0 %945, %v684
    %v947 = vpop.permute.xlu0 %946
    %950 = vset.pattern.permute.xlu0 0
    %951 = vperm.xlu0 %950, %v685
    %v952 = vpop.permute.xlu0 %951
    %955 = vset.pattern.permute.xlu0 0
    %956 = vperm.xlu0 %955, %v686
    %v957 = vpop.permute.xlu0 %956
    %960 = vset.pattern.permute.xlu0 0
    %961 = vperm.xlu0 %960, %v687
    %v962 = vpop.permute.xlu0 %961
    %965 = vset.pattern.permute.xlu0 0
    %966 = vperm.xlu0 %965, %v688
    %v967 = vpop.permute.xlu0 %966
    %970 = vset.pattern.permute.xlu0 0
    %971 = vperm.xlu0 %970, %v689
    %v972 = vpop.permute.xlu0 %971
    %975 = vset.pattern.permute.xlu0 0
    %976 = vperm.xlu0 %975, %v690
    %v977 = vpop.permute.xlu0 %976
    %980 = vset.pattern.permute.xlu0 0
    %981 = vperm.xlu0 %980, %v691
    %v982 = vpop.permute.xlu0 %981
    %985 = vset.pattern.permute.xlu0 0
    %986 = vperm.xlu0 %985, %v692
    %v987 = vpop.permute.xlu0 %986
    %990 = vset.pattern.permute.xlu0 0
    %991 = vperm.xlu0 %990, %v693
    %v992 = vpop.permute.xlu0 %991
    %995 = vset.pattern.permute.xlu0 0
    %996 = vperm.xlu0 %995, %v694
    %v997 = vpop.permute.xlu0 %996
    %1000 = vset.pattern.permute.xlu0 0
    %1001 = vperm.xlu0 %1000, %v695
    %v1002 = vpop.permute.xlu0 %1001
    %1005 = vset.pattern.permute.xlu0 0
    %1006 = vperm.xlu0 %1005, %v696
    %v1007 = vpop.permute.xlu0 %1006
    %1010 = vset.pattern.permute.xlu0 0
    %1011 = vperm.xlu0 %1010, %v697
    %v1012 = vpop.permute.xlu0 %1011
    %1015 = vset.pattern.permute.xlu0 0
    %1016 = vperm.xlu0 %1015, %v698
    %v1017 = vpop.permute.xlu0 %1016
    %1020 = vset.pattern.permute.xlu0 0
    %1021 = vperm.xlu0 %1020, %v699
    %v1022 = vpop.permute.xlu0 %1021
    %1025 = vset.pattern.permute.xlu0 0
    %1026 = vperm.xlu0 %1025, %v700
    %v1027 = vpop.permute.xlu0 %1026
    %1030 = vset.pattern.permute.xlu0 0
    %1031 = vperm.xlu0 %1030, %v701
    %v1032 = vpop.permute.xlu0 %1031
    %1035 = vset.pattern.permute.xlu0 0
    %1036 = vperm.xlu0 %1035, %v702
    %v1037 = vpop.permute.xlu0 %1036
    %1040 = vset.pattern.permute.xlu0 0
    %1041 = vperm.xlu0 %1040, %v703
    %v1042 = vpop.permute.xlu0 %1041
    %1045 = vset.pattern.permute.xlu0 0
    %1046 = vperm.xlu0 %1045, %v704
    %v1047 = vpop.permute.xlu0 %1046
    %1050 = vset.pattern.permute.xlu0 0
    %1051 = vperm.xlu0 %1050, %v705
    %v1052 = vpop.permute.xlu0 %1051
    %1055 = vset.pattern.permute.xlu0 0
    %1056 = vperm.xlu0 %1055, %v706
    %v1057 = vpop.permute.xlu0 %1056
    %1060 = vset.pattern.permute.xlu0 0
    %1061 = vperm.xlu0 %1060, %v707
    %v1062 = vpop.permute.xlu0 %1061
    %1065 = vset.pattern.permute.xlu0 0
    %1066 = vperm.xlu0 %1065, %v708
    %v1067 = vpop.permute.xlu0 %1066
    %1070 = vset.pattern.permute.xlu0 0
    %1071 = vperm.xlu0 %1070, %v709
    %v1072 = vpop.permute.xlu0 %1071
    %1075 = vset.pattern.permute.xlu0 0
    %1076 = vperm.xlu0 %1075, %v710
    %v1077 = vpop.permute.xlu0 %1076
    %1080 = vset.pattern.permute.xlu0 0
    %1081 = vperm.xlu0 %1080, %v711
    %v1082 = vpop.permute.xlu0 %1081
    %1085 = vset.pattern.permute.xlu0 0
    %1086 = vperm.xlu0 %1085, %v712
    %v1087 = vpop.permute.xlu0 %1086
    %1090 = vset.pattern.permute.xlu0 0
    %1091 = vperm.xlu0 %1090, %v713
    %v1092 = vpop.permute.xlu0 %1091
    %1095 = vset.pattern.permute.xlu0 0
    %1096 = vperm.xlu0 %1095, %v714
    %v1097 = vpop.permute.xlu0 %1096
    %v1099 = vmul.f32 %v715, %v782
    %v1100 = vmul.f32 %v716, %v787
    %v1101 = vmul.f32 %v717, %v792
    %v1102 = vmul.f32 %v718, %v797
    %v1103 = vmul.f32 %v719, %v802
    %v1104 = vmul.f32 %v720, %v807
    %v1105 = vmul.f32 %v721, %v812
    %v1106 = vmul.f32 %v722, %v817
    %v1107 = vmul.f32 %v723, %v822
    %v1108 = vmul.f32 %v724, %v827
    %v1109 = vmul.f32 %v725, %v832
    %v1110 = vmul.f32 %v726, %v837
    %v1111 = vmul.f32 %v727, %v842
    %v1112 = vmul.f32 %v728, %v847
    %v1113 = vmul.f32 %v729, %v852
    %v1114 = vmul.f32 %v730, %v857
    %v1115 = vmul.f32 %v731, %v862
    %v1116 = vmul.f32 %v732, %v867
    %v1117 = vmul.f32 %v733, %v872
    %v1118 = vmul.f32 %v734, %v877
    %v1119 = vmul.f32 %v735, %v882
    %v1120 = vmul.f32 %v736, %v887
    %v1121 = vmul.f32 %v737, %v892
    %v1122 = vmul.f32 %v738, %v897
    %v1123 = vmul.f32 %v739, %v902
    %v1124 = vmul.f32 %v740, %v907
    %v1125 = vmul.f32 %v741, %v912
    %v1126 = vmul.f32 %v742, %v917
    %v1127 = vmul.f32 %v743, %v922
    %v1128 = vmul.f32 %v744, %v927
    %v1129 = vmul.f32 %v745, %v932
    %v1130 = vmul.f32 %v746, %v937
    %v1131 = vmul.f32 %v747, %v942
    %v1132 = vmul.f32 %v748, %v947
    %v1133 = vmul.f32 %v749, %v952
    %v1134 = vmul.f32 %v750, %v957
    %v1135 = vmul.f32 %v751, %v962
    %v1136 = vmul.f32 %v752, %v967
    %v1137 = vmul.f32 %v753, %v972
    %v1138 = vmul.f32 %v754, %v977
    %v1139 = vmul.f32 %v755, %v982
    %v1140 = vmul.f32 %v756, %v987
    %v1141 = vmul.f32 %v757, %v992
    %v1142 = vmul.f32 %v758, %v997
    %v1143 = vmul.f32 %v759, %v1002
    %v1144 = vmul.f32 %v760, %v1007
    %v1145 = vmul.f32 %v761, %v1012
    %v1146 = vmul.f32 %v762, %v1017
    %v1147 = vmul.f32 %v763, %v1022
    %v1148 = vmul.f32 %v764, %v1027
    %v1149 = vmul.f32 %v765, %v1032
    %v1150 = vmul.f32 %v766, %v1037
    %v1151 = vmul.f32 %v767, %v1042
    %v1152 = vmul.f32 %v768, %v1047
    %v1153 = vmul.f32 %v769, %v1052
    %v1154 = vmul.f32 %v770, %v1057
    %v1155 = vmul.f32 %v771, %v1062
    %v1156 = vmul.f32 %v772, %v1067
    %v1157 = vmul.f32 %v773, %v1072
    %v1158 = vmul.f32 %v774, %v1077
    %v1159 = vmul.f32 %v775, %v1082
    %v1160 = vmul.f32 %v776, %v1087
    %v1161 = vmul.f32 %v777, %v1092
    %v1162 = vmul.f32 %v778, %v1097
    %1163 = vst [vmem:[#allocation2] sm:$0xf] 0
    %1164 = vst [vmem:[#allocation2 + $0x4] sm:$0xf] 0
    %1165 = vst [vmem:[#allocation2 + $0x8] sm:$0x1] 0
    %1166 = vst [vmem:[#allocation2 + $0xd8] sm:$0xf] 0
    %1167 = vst [vmem:[#allocation2 + $0xdc] sm:$0xf] 0
    %1168 = vst [vmem:[#allocation2 + $0xe0] sm:$0x1] 0
    %s1169 = scalar_lea.vmem [#allocation2], 204
    %1170 = vst [vmem:[%s1169] sm:$0xf] 0
    %1171 = vst [vmem:[%s1169 + $0x4] sm:$0xf] 0
    %1172 = vst [vmem:[%s1169 + $0x8] sm:$0x1] 0
    %1173 = vst [vmem:[%s1169 + $0xd8] sm:$0xf] 0
    %1174 = vst [vmem:[%s1169 + $0xdc] sm:$0xf] 0
    %1175 = vst [vmem:[%s1169 + $0xe0] sm:$0x1] 0
    %s1176 = scalar_lea.vmem [#allocation2], 12
    %vm1177 = vcmask 1040384
    %vm1178 = vsmask.f32 256
    %vm1179 = vmand %vm1177, %vm1178
    %v1180 = vld [vmem:[%s1176] sm:$0x1]
    %v1181 = vsel %vm1179, 0, %v1180
    %1182 = vst [vmem:[%s1176] sm:$0x1] %v1181
    %v1183 = vld [vmem:[%s1176 + $0xc] sm:$0x1]
    %v1184 = vsel %vm1179, 0, %v1183
    %1185 = vst [vmem:[%s1176 + $0xc] sm:$0x1] %v1184
    %v1186 = vld [vmem:[%s1176 + $0x18] sm:$0x1]
    %v1187 = vsel %vm1179, 0, %v1186
    %1188 = vst [vmem:[%s1176 + $0x18] sm:$0x1] %v1187
    %v1189 = vld [vmem:[%s1176 + $0x24] sm:$0x1]
    %v1190 = vsel %vm1179, 0, %v1189
    %1191 = vst [vmem:[%s1176 + $0x24] sm:$0x1] %v1190
    %v1192 = vld [vmem:[%s1176 + $0x30] sm:$0x1]
    %v1193 = vsel %vm1179, 0, %v1192
    %1194 = vst [vmem:[%s1176 + $0x30] sm:$0x1] %v1193
    %v1195 = vld [vmem:[%s1176 + $0x3c] sm:$0x1]
    %v1196 = vsel %vm1179, 0, %v1195
    %1197 = vst [vmem:[%s1176 + $0x3c] sm:$0x1] %v1196
    %v1198 = vld [vmem:[%s1176 + $0x48] sm:$0x1]
    %v1199 = vsel %vm1179, 0, %v1198
    %1200 = vst [vmem:[%s1176 + $0x48] sm:$0x1] %v1199
    %v1201 = vld [vmem:[%s1176 + $0x54] sm:$0x1]
    %v1202 = vsel %vm1179, 0, %v1201
    %1203 = vst [vmem:[%s1176 + $0x54] sm:$0x1] %v1202
    %v1204 = vld [vmem:[%s1176 + $0x60] sm:$0x1]
    %v1205 = vsel %vm1179, 0, %v1204
    %1206 = vst [vmem:[%s1176 + $0x60] sm:$0x1] %v1205
    %v1207 = vld [vmem:[%s1176 + $0x6c] sm:$0x1]
    %v1208 = vsel %vm1179, 0, %v1207
    %1209 = vst [vmem:[%s1176 + $0x6c] sm:$0x1] %v1208
    %v1210 = vld [vmem:[%s1176 + $0x78] sm:$0x1]
    %v1211 = vsel %vm1179, 0, %v1210
    %1212 = vst [vmem:[%s1176 + $0x78] sm:$0x1] %v1211
    %v1213 = vld [vmem:[%s1176 + $0x84] sm:$0x1]
    %v1214 = vsel %vm1179, 0, %v1213
    %1215 = vst [vmem:[%s1176 + $0x84] sm:$0x1] %v1214
    %v1216 = vld [vmem:[%s1176 + $0x90] sm:$0x1]
    %v1217 = vsel %vm1179, 0, %v1216
    %1218 = vst [vmem:[%s1176 + $0x90] sm:$0x1] %v1217
    %v1219 = vld [vmem:[%s1176 + $0x9c] sm:$0x1]
    %v1220 = vsel %vm1179, 0, %v1219
    %1221 = vst [vmem:[%s1176 + $0x9c] sm:$0x1] %v1220
    %v1222 = vld [vmem:[%s1176 + $0xa8] sm:$0x1]
    %v1223 = vsel %vm1179, 0, %v1222
    %1224 = vst [vmem:[%s1176 + $0xa8] sm:$0x1] %v1223
    %v1225 = vld [vmem:[%s1176 + $0xb4] sm:$0x1]
    %v1226 = vsel %vm1179, 0, %v1225
    %1227 = vst [vmem:[%s1176 + $0xb4] sm:$0x1] %v1226
    %v1228 = vld [vmem:[%s1176 + $0xd8] sm:$0x1]
    %v1229 = vsel %vm1179, 0, %v1228
    %1230 = vst [vmem:[%s1176 + $0xd8] sm:$0x1] %v1229
    %v1231 = vld [vmem:[%s1176 + $0xe4] sm:$0x1]
    %v1232 = vsel %vm1179, 0, %v1231
    %1233 = vst [vmem:[%s1176 + $0xe4] sm:$0x1] %v1232
    %v1234 = vld [vmem:[%s1176 + $0xf0] sm:$0x1]
    %v1235 = vsel %vm1179, 0, %v1234
    %1236 = vst [vmem:[%s1176 + $0xf0] sm:$0x1] %v1235
    %v1237 = vld [vmem:[%s1176 + $0xfc] sm:$0x1]
    %v1238 = vsel %vm1179, 0, %v1237
    %1239 = vst [vmem:[%s1176 + $0xfc] sm:$0x1] %v1238
    %v1240 = vld [vmem:[%s1176 + $0x108] sm:$0x1]
    %v1241 = vsel %vm1179, 0, %v1240
    %1242 = vst [vmem:[%s1176 + $0x108] sm:$0x1] %v1241
    %v1243 = vld [vmem:[%s1176 + $0x114] sm:$0x1]
    %v1244 = vsel %vm1179, 0, %v1243
    %1245 = vst [vmem:[%s1176 + $0x114] sm:$0x1] %v1244
    %v1246 = vld [vmem:[%s1176 + $0x120] sm:$0x1]
    %v1247 = vsel %vm1179, 0, %v1246
    %1248 = vst [vmem:[%s1176 + $0x120] sm:$0x1] %v1247
    %v1249 = vld [vmem:[%s1176 + $0x12c] sm:$0x1]
    %v1250 = vsel %vm1179, 0, %v1249
    %1251 = vst [vmem:[%s1176 + $0x12c] sm:$0x1] %v1250
    %v1252 = vld [vmem:[%s1176 + $0x138] sm:$0x1]
    %v1253 = vsel %vm1179, 0, %v1252
    %1254 = vst [vmem:[%s1176 + $0x138] sm:$0x1] %v1253
    %v1255 = vld [vmem:[%s1176 + $0x144] sm:$0x1]
    %v1256 = vsel %vm1179, 0, %v1255
    %1257 = vst [vmem:[%s1176 + $0x144] sm:$0x1] %v1256
    %v1258 = vld [vmem:[%s1176 + $0x150] sm:$0x1]
    %v1259 = vsel %vm1179, 0, %v1258
    %1260 = vst [vmem:[%s1176 + $0x150] sm:$0x1] %v1259
    %v1261 = vld [vmem:[%s1176 + $0x15c] sm:$0x1]
    %v1262 = vsel %vm1179, 0, %v1261
    %1263 = vst [vmem:[%s1176 + $0x15c] sm:$0x1] %v1262
    %v1264 = vld [vmem:[%s1176 + $0x168] sm:$0x1]
    %v1265 = vsel %vm1179, 0, %v1264
    %1266 = vst [vmem:[%s1176 + $0x168] sm:$0x1] %v1265
    %v1267 = vld [vmem:[%s1176 + $0x174] sm:$0x1]
    %v1268 = vsel %vm1179, 0, %v1267
    %1269 = vst [vmem:[%s1176 + $0x174] sm:$0x1] %v1268
    %v1270 = vld [vmem:[%s1176 + $0x180] sm:$0x1]
    %v1271 = vsel %vm1179, 0, %v1270
    %1272 = vst [vmem:[%s1176 + $0x180] sm:$0x1] %v1271
    %v1273 = vld [vmem:[%s1176 + $0x18c] sm:$0x1]
    %v1274 = vsel %vm1179, 0, %v1273
    %1275 = vst [vmem:[%s1176 + $0x18c] sm:$0x1] %v1274
    %vm1276 = vsmask.f32 7938
    %vm1277 = vmand %vm1177, %vm1276
    %v1278 = vld [vmem:[%s1176 + $0x8] sm:$0x1]
    %v1279 = vsel %vm1277, 0, %v1278
    %1280 = vst [vmem:[%s1176 + $0x8] sm:$0x1] %v1279
    %v1281 = vld [vmem:[%s1176 + $0x14] sm:$0x1]
    %v1282 = vsel %vm1277, 0, %v1281
    %1283 = vst [vmem:[%s1176 + $0x14] sm:$0x1] %v1282
    %v1284 = vld [vmem:[%s1176 + $0x20] sm:$0x1]
    %v1285 = vsel %vm1277, 0, %v1284
    %1286 = vst [vmem:[%s1176 + $0x20] sm:$0x1] %v1285
    %v1287 = vld [vmem:[%s1176 + $0x2c] sm:$0x1]
    %v1288 = vsel %vm1277, 0, %v1287
    %1289 = vst [vmem:[%s1176 + $0x2c] sm:$0x1] %v1288
    %v1290 = vld [vmem:[%s1176 + $0x38] sm:$0x1]
    %v1291 = vsel %vm1277, 0, %v1290
    %1292 = vst [vmem:[%s1176 + $0x38] sm:$0x1] %v1291
    %v1293 = vld [vmem:[%s1176 + $0x44] sm:$0x1]
    %v1294 = vsel %vm1277, 0, %v1293
    %1295 = vst [vmem:[%s1176 + $0x44] sm:$0x1] %v1294
    %v1296 = vld [vmem:[%s1176 + $0x50] sm:$0x1]
    %v1297 = vsel %vm1277, 0, %v1296
    %1298 = vst [vmem:[%s1176 + $0x50] sm:$0x1] %v1297
    %v1299 = vld [vmem:[%s1176 + $0x5c] sm:$0x1]
    %v1300 = vsel %vm1277, 0, %v1299
    %1301 = vst [vmem:[%s1176 + $0x5c] sm:$0x1] %v1300
    %v1302 = vld [vmem:[%s1176 + $0x68] sm:$0x1]
    %v1303 = vsel %vm1277, 0, %v1302
    %1304 = vst [vmem:[%s1176 + $0x68] sm:$0x1] %v1303
    %v1305 = vld [vmem:[%s1176 + $0x74] sm:$0x1]
    %v1306 = vsel %vm1277, 0, %v1305
    %1307 = vst [vmem:[%s1176 + $0x74] sm:$0x1] %v1306
    %v1308 = vld [vmem:[%s1176 + $0x80] sm:$0x1]
    %v1309 = vsel %vm1277, 0, %v1308
    %1310 = vst [vmem:[%s1176 + $0x80] sm:$0x1] %v1309
    %v1311 = vld [vmem:[%s1176 + $0x8c] sm:$0x1]
    %v1312 = vsel %vm1277, 0, %v1311
    %1313 = vst [vmem:[%s1176 + $0x8c] sm:$0x1] %v1312
    %v1314 = vld [vmem:[%s1176 + $0x98] sm:$0x1]
    %v1315 = vsel %vm1277, 0, %v1314
    %1316 = vst [vmem:[%s1176 + $0x98] sm:$0x1] %v1315
    %v1317 = vld [vmem:[%s1176 + $0xa4] sm:$0x1]
    %v1318 = vsel %vm1277, 0, %v1317
    %1319 = vst [vmem:[%s1176 + $0xa4] sm:$0x1] %v1318
    %v1320 = vld [vmem:[%s1176 + $0xb0] sm:$0x1]
    %v1321 = vsel %vm1277, 0, %v1320
    %1322 = vst [vmem:[%s1176 + $0xb0] sm:$0x1] %v1321
    %v1323 = vld [vmem:[%s1176 + $0xbc] sm:$0x1]
    %v1324 = vsel %vm1277, 0, %v1323
    %1325 = vst [vmem:[%s1176 + $0xbc] sm:$0x1] %v1324
    %v1326 = vld [vmem:[%s1176 + $0xe0] sm:$0x1]
    %v1327 = vsel %vm1277, 0, %v1326
    %1328 = vst [vmem:[%s1176 + $0xe0] sm:$0x1] %v1327
    %v1329 = vld [vmem:[%s1176 + $0xec] sm:$0x1]
    %v1330 = vsel %vm1277, 0, %v1329
    %1331 = vst [vmem:[%s1176 + $0xec] sm:$0x1] %v1330
    %v1332 = vld [vmem:[%s1176 + $0xf8] sm:$0x1]
    %v1333 = vsel %vm1277, 0, %v1332
    %1334 = vst [vmem:[%s1176 + $0xf8] sm:$0x1] %v1333
    %v1335 = vld [vmem:[%s1176 + $0x104] sm:$0x1]
    %v1336 = vsel %vm1277, 0, %v1335
    %1337 = vst [vmem:[%s1176 + $0x104] sm:$0x1] %v1336
    %v1338 = vld [vmem:[%s1176 + $0x110] sm:$0x1]
    %v1339 = vsel %vm1277, 0, %v1338
    %1340 = vst [vmem:[%s1176 + $0x110] sm:$0x1] %v1339
    %v1341 = vld [vmem:[%s1176 + $0x11c] sm:$0x1]
    %v1342 = vsel %vm1277, 0, %v1341
    %1343 = vst [vmem:[%s1176 + $0x11c] sm:$0x1] %v1342
    %v1344 = vld [vmem:[%s1176 + $0x128] sm:$0x1]
    %v1345 = vsel %vm1277, 0, %v1344
    %1346 = vst [vmem:[%s1176 + $0x128] sm:$0x1] %v1345
    %v1347 = vld [vmem:[%s1176 + $0x134] sm:$0x1]
    %v1348 = vsel %vm1277, 0, %v1347
    %1349 = vst [vmem:[%s1176 + $0x134] sm:$0x1] %v1348
    %v1350 = vld [vmem:[%s1176 + $0x140] sm:$0x1]
    %v1351 = vsel %vm1277, 0, %v1350
    %1352 = vst [vmem:[%s1176 + $0x140] sm:$0x1] %v1351
    %v1353 = vld [vmem:[%s1176 + $0x14c] sm:$0x1]
    %v1354 = vsel %vm1277, 0, %v1353
    %1355 = vst [vmem:[%s1176 + $0x14c] sm:$0x1] %v1354
    %v1356 = vld [vmem:[%s1176 + $0x158] sm:$0x1]
    %v1357 = vsel %vm1277, 0, %v1356
    %1358 = vst [vmem:[%s1176 + $0x158] sm:$0x1] %v1357
    %v1359 = vld [vmem:[%s1176 + $0x164] sm:$0x1]
    %v1360 = vsel %vm1277, 0, %v1359
    %1361 = vst [vmem:[%s1176 + $0x164] sm:$0x1] %v1360
    %v1362 = vld [vmem:[%s1176 + $0x170] sm:$0x1]
    %v1363 = vsel %vm1277, 0, %v1362
    %1364 = vst [vmem:[%s1176 + $0x170] sm:$0x1] %v1363
    %v1365 = vld [vmem:[%s1176 + $0x17c] sm:$0x1]
    %v1366 = vsel %vm1277, 0, %v1365
    %1367 = vst [vmem:[%s1176 + $0x17c] sm:$0x1] %v1366
    %v1368 = vld [vmem:[%s1176 + $0x188] sm:$0x1]
    %v1369 = vsel %vm1277, 0, %v1368
    %1370 = vst [vmem:[%s1176 + $0x188] sm:$0x1] %v1369
    %v1371 = vld [vmem:[%s1176 + $0x194] sm:$0x1]
    %v1372 = vsel %vm1277, 0, %v1371
    %1373 = vst [vmem:[%s1176 + $0x194] sm:$0x1] %v1372
    %v1374 = vpack.c.bf16 %v1100, %v1099
    %v1375 = vpack.c.bf16 %v1102, %v1101
    %v1376 = vpack.c.bf16 %v1104, %v1103
    %v1377 = vpack.c.bf16 %v1106, %v1105
    %v1378 = vpack.c.bf16 %v1108, %v1107
    %v1379 = vpack.c.bf16 %v1110, %v1109
    %v1380 = vpack.c.bf16 %v1112, %v1111
    %v1381 = vpack.c.bf16 %v1114, %v1113
    %v1382 = vpack.c.bf16 %v1116, %v1115
    %v1383 = vpack.c.bf16 %v1118, %v1117
    %v1384 = vpack.c.bf16 %v1120, %v1119
    %v1385 = vpack.c.bf16 %v1122, %v1121
    %v1386 = vpack.c.bf16 %v1124, %v1123
    %v1387 = vpack.c.bf16 %v1126, %v1125
    %v1388 = vpack.c.bf16 %v1128, %v1127
    %v1389 = vpack.c.bf16 %v1130, %v1129
    %v1390 = vpack.c.bf16 %v1132, %v1131
    %v1391 = vpack.c.bf16 %v1134, %v1133
    %v1392 = vpack.c.bf16 %v1136, %v1135
    %v1393 = vpack.c.bf16 %v1138, %v1137
    %v1394 = vpack.c.bf16 %v1140, %v1139
    %v1395 = vpack.c.bf16 %v1142, %v1141
    %v1396 = vpack.c.bf16 %v1144, %v1143
    %v1397 = vpack.c.bf16 %v1146, %v1145
    %v1398 = vpack.c.bf16 %v1148, %v1147
    %v1399 = vpack.c.bf16 %v1150, %v1149
    %v1400 = vpack.c.bf16 %v1152, %v1151
    %v1401 = vpack.c.bf16 %v1154, %v1153
    %v1402 = vpack.c.bf16 %v1156, %v1155
    %v1403 = vpack.c.bf16 %v1158, %v1157
    %v1404 = vpack.c.bf16 %v1160, %v1159
    %v1405 = vpack.c.bf16 %v1162, %v1161
    %v1438 = vunpack.c.l.b16 %v1374
    %v1439 = vunpack.c.h.b16 %v1374
    %v1440 = vunpack.c.l.b16 %v1375
    %v1441 = vunpack.c.h.b16 %v1375
    %v1442 = vunpack.c.l.b16 %v1376
    %v1443 = vunpack.c.h.b16 %v1376
    %v1444 = vunpack.c.l.b16 %v1377
    %v1445 = vunpack.c.h.b16 %v1377
    %v1446 = vunpack.c.l.b16 %v1378
    %v1447 = vunpack.c.h.b16 %v1378
    %v1448 = vunpack.c.l.b16 %v1379
    %v1449 = vunpack.c.h.b16 %v1379
    %v1450 = vunpack.c.l.b16 %v1380
    %v1451 = vunpack.c.h.b16 %v1380
    %v1452 = vunpack.c.l.b16 %v1381
    %v1453 = vunpack.c.h.b16 %v1381
    %v1454 = vunpack.c.l.b16 %v1382
    %v1455 = vunpack.c.h.b16 %v1382
    %v1456 = vunpack.c.l.b16 %v1383
    %v1457 = vunpack.c.h.b16 %v1383
    %v1458 = vunpack.c.l.b16 %v1384
    %v1459 = vunpack.c.h.b16 %v1384
    %v1460 = vunpack.c.l.b16 %v1385
    %v1461 = vunpack.c.h.b16 %v1385
    %v1462 = vunpack.c.l.b16 %v1386
    %v1463 = vunpack.c.h.b16 %v1386
    %v1464 = vunpack.c.l.b16 %v1387
    %v1465 = vunpack.c.h.b16 %v1387
    %v1466 = vunpack.c.l.b16 %v1388
    %v1467 = vunpack.c.h.b16 %v1388
    %v1468 = vunpack.c.l.b16 %v1389
    %v1469 = vunpack.c.h.b16 %v1389
    %v1470 = vunpack.c.l.b16 %v1390
    %v1471 = vunpack.c.h.b16 %v1390
    %v1472 = vunpack.c.l.b16 %v1391
    %v1473 = vunpack.c.h.b16 %v1391
    %v1474 = vunpack.c.l.b16 %v1392
    %v1475 = vunpack.c.h.b16 %v1392
    %v1476 = vunpack.c.l.b16 %v1393
    %v1477 = vunpack.c.h.b16 %v1393
    %v1478 = vunpack.c.l.b16 %v1394
    %v1479 = vunpack.c.h.b16 %v1394
    %v1480 = vunpack.c.l.b16 %v1395
    %v1481 = vunpack.c.h.b16 %v1395
    %v1482 = vunpack.c.l.b16 %v1396
    %v1483 = vunpack.c.h.b16 %v1396
    %v1484 = vunpack.c.l.b16 %v1397
    %v1485 = vunpack.c.h.b16 %v1397
    %v1486 = vunpack.c.l.b16 %v1398
    %v1487 = vunpack.c.h.b16 %v1398
    %v1488 = vunpack.c.l.b16 %v1399
    %v1489 = vunpack.c.h.b16 %v1399
    %v1490 = vunpack.c.l.b16 %v1400
    %v1491 = vunpack.c.h.b16 %v1400
    %v1492 = vunpack.c.l.b16 %v1401
    %v1493 = vunpack.c.h.b16 %v1401
    %v1494 = vunpack.c.l.b16 %v1402
    %v1495 = vunpack.c.h.b16 %v1402
    %v1496 = vunpack.c.l.b16 %v1403
    %v1497 = vunpack.c.h.b16 %v1403
    %v1498 = vunpack.c.l.b16 %v1404
    %v1499 = vunpack.c.h.b16 %v1404
    %v1500 = vunpack.c.l.b16 %v1405
    %v1501 = vunpack.c.h.b16 %v1405
    %v1502 = vpack.c.b16 %v1438, %v1438
    %v1503 = vpack.c.b16 %v1439, %v1439
    %v1504 = vpack.c.b16 %v1440, %v1440
    %v1505 = vpack.c.b16 %v1441, %v1441
    %v1506 = vpack.c.b16 %v1442, %v1442
    %v1507 = vpack.c.b16 %v1443, %v1443
    %v1508 = vpack.c.b16 %v1444, %v1444
    %v1509 = vpack.c.b16 %v1445, %v1445
    %v1510 = vpack.c.b16 %v1446, %v1446
    %v1511 = vpack.c.b16 %v1447, %v1447
    %v1512 = vpack.c.b16 %v1448, %v1448
    %v1513 = vpack.c.b16 %v1449, %v1449
    %v1514 = vpack.c.b16 %v1450, %v1450
    %v1515 = vpack.c.b16 %v1451, %v1451
    %v1516 = vpack.c.b16 %v1452, %v1452
    %v1517 = vpack.c.b16 %v1453, %v1453
    %v1518 = vpack.c.b16 %v1454, %v1454
    %v1519 = vpack.c.b16 %v1455, %v1455
    %v1520 = vpack.c.b16 %v1456, %v1456
    %v1521 = vpack.c.b16 %v1457, %v1457
    %v1522 = vpack.c.b16 %v1458, %v1458
    %v1523 = vpack.c.b16 %v1459, %v1459
    %v1524 = vpack.c.b16 %v1460, %v1460
    %v1525 = vpack.c.b16 %v1461, %v1461
    %v1526 = vpack.c.b16 %v1462, %v1462
    %v1527 = vpack.c.b16 %v1463, %v1463
    %v1528 = vpack.c.b16 %v1464, %v1464
    %v1529 = vpack.c.b16 %v1465, %v1465
    %v1530 = vpack.c.b16 %v1466, %v1466
    %v1531 = vpack.c.b16 %v1467, %v1467
    %v1532 = vpack.c.b16 %v1468, %v1468
    %v1533 = vpack.c.b16 %v1469, %v1469
    %v1534 = vpack.c.b16 %v1470, %v1470
    %v1535 = vpack.c.b16 %v1471, %v1471
    %v1536 = vpack.c.b16 %v1472, %v1472
    %v1537 = vpack.c.b16 %v1473, %v1473
    %v1538 = vpack.c.b16 %v1474, %v1474
    %v1539 = vpack.c.b16 %v1475, %v1475
    %v1540 = vpack.c.b16 %v1476, %v1476
    %v1541 = vpack.c.b16 %v1477, %v1477
    %v1542 = vpack.c.b16 %v1478, %v1478
    %v1543 = vpack.c.b16 %v1479, %v1479
    %v1544 = vpack.c.b16 %v1480, %v1480
    %v1545 = vpack.c.b16 %v1481, %v1481
    %v1546 = vpack.c.b16 %v1482, %v1482
    %v1547 = vpack.c.b16 %v1483, %v1483
    %v1548 = vpack.c.b16 %v1484, %v1484
    %v1549 = vpack.c.b16 %v1485, %v1485
    %v1550 = vpack.c.b16 %v1486, %v1486
    %v1551 = vpack.c.b16 %v1487, %v1487
    %v1552 = vpack.c.b16 %v1488, %v1488
    %v1553 = vpack.c.b16 %v1489, %v1489
    %v1554 = vpack.c.b16 %v1490, %v1490
    %v1555 = vpack.c.b16 %v1491, %v1491
    %v1556 = vpack.c.b16 %v1492, %v1492
    %v1557 = vpack.c.b16 %v1493, %v1493
    %v1558 = vpack.c.b16 %v1494, %v1494
    %v1559 = vpack.c.b16 %v1495, %v1495
    %v1560 = vpack.c.b16 %v1496, %v1496
    %v1561 = vpack.c.b16 %v1497, %v1497
    %v1562 = vpack.c.b16 %v1498, %v1498
    %v1563 = vpack.c.b16 %v1499, %v1499
    %v1564 = vpack.c.b16 %v1500, %v1500
    %v1565 = vpack.c.b16 %v1501, %v1501
    %vm1566 = vsmask.f32 4368
    %vm1567 = vmor %vm1178, %vm1566
    %v1569 = vshrl.u32 %v1502, 16
    %v1571 = vrot.slane %v1569, 7
    %v1572 = vshll.u32 %v1502, 16
    %v1574 = vor.u32 %v1571, %v1572
    %v1575 = vrot.slane %v1571, 4
    %v1577 = vshrl.u32 %v1503, 16
    %v1579 = vrot.slane %v1577, 7
    %v1580 = vshll.u32 %v1503, 16
    %v1582 = vor.u32 %v1579, %v1580
    %v1583 = vsel %vm1567, %v1575, %v1582
    %v1584 = vrot.slane %v1579, 4
    %v1586 = vshrl.u32 %v1504, 16
    %v1588 = vrot.slane %v1586, 7
    %v1589 = vshll.u32 %v1504, 16
    %v1591 = vor.u32 %v1588, %v1589
    %v1592 = vrot.slane %v1588, 4
    %v1594 = vshrl.u32 %v1505, 16
    %v1596 = vrot.slane %v1594, 7
    %v1597 = vshll.u32 %v1505, 16
    %v1599 = vor.u32 %v1596, %v1597
    %v1600 = vsel %vm1567, %v1592, %v1599
    %v1601 = vrot.slane %v1596, 4
    %v1603 = vshrl.u32 %v1506, 16
    %v1605 = vrot.slane %v1603, 7
    %v1606 = vshll.u32 %v1506, 16
    %v1608 = vor.u32 %v1605, %v1606
    %v1609 = vrot.slane %v1605, 4
    %v1611 = vshrl.u32 %v1507, 16
    %v1613 = vrot.slane %v1611, 7
    %v1614 = vshll.u32 %v1507, 16
    %v1616 = vor.u32 %v1613, %v1614
    %v1617 = vsel %vm1567, %v1609, %v1616
    %v1618 = vrot.slane %v1613, 4
    %v1620 = vshrl.u32 %v1508, 16
    %v1622 = vrot.slane %v1620, 7
    %v1623 = vshll.u32 %v1508, 16
    %v1625 = vor.u32 %v1622, %v1623
    %v1626 = vrot.slane %v1622, 4
    %v1628 = vshrl.u32 %v1509, 16
    %v1630 = vrot.slane %v1628, 7
    %v1631 = vshll.u32 %v1509, 16
    %v1633 = vor.u32 %v1630, %v1631
    %v1634 = vsel %vm1567, %v1626, %v1633
    %v1635 = vrot.slane %v1630, 4
    %v1637 = vshrl.u32 %v1510, 16
    %v1639 = vrot.slane %v1637, 7
    %v1640 = vshll.u32 %v1510, 16
    %v1642 = vor.u32 %v1639, %v1640
    %v1643 = vrot.slane %v1639, 4
    %v1645 = vshrl.u32 %v1511, 16
    %v1647 = vrot.slane %v1645, 7
    %v1648 = vshll.u32 %v1511, 16
    %v1650 = vor.u32 %v1647, %v1648
    %v1651 = vsel %vm1567, %v1643, %v1650
    %v1652 = vrot.slane %v1647, 4
    %v1654 = vshrl.u32 %v1512, 16
    %v1656 = vrot.slane %v1654, 7
    %v1657 = vshll.u32 %v1512, 16
    %v1659 = vor.u32 %v1656, %v1657
    %v1660 = vrot.slane %v1656, 4
    %v1662 = vshrl.u32 %v1513, 16
    %v1664 = vrot.slane %v1662, 7
    %v1665 = vshll.u32 %v1513, 16
    %v1667 = vor.u32 %v1664, %v1665
    %v1668 = vsel %vm1567, %v1660, %v1667
    %v1669 = vrot.slane %v1664, 4
    %v1671 = vshrl.u32 %v1514, 16
    %v1673 = vrot.slane %v1671, 7
    %v1674 = vshll.u32 %v1514, 16
    %v1676 = vor.u32 %v1673, %v1674
    %v1677 = vrot.slane %v1673, 4
    %v1679 = vshrl.u32 %v1515, 16
    %v1681 = vrot.slane %v1679, 7
    %v1682 = vshll.u32 %v1515, 16
    %v1684 = vor.u32 %v1681, %v1682
    %v1685 = vsel %vm1567, %v1677, %v1684
    %v1686 = vrot.slane %v1681, 4
    %v1688 = vshrl.u32 %v1516, 16
    %v1690 = vrot.slane %v1688, 7
    %v1691 = vshll.u32 %v1516, 16
    %v1693 = vor.u32 %v1690, %v1691
    %v1694 = vrot.slane %v1690, 4
    %v1696 = vshrl.u32 %v1517, 16
    %v1698 = vrot.slane %v1696, 7
    %v1699 = vshll.u32 %v1517, 16
    %v1701 = vor.u32 %v1698, %v1699
    %v1702 = vsel %vm1567, %v1694, %v1701
    %v1703 = vrot.slane %v1698, 4
    %v1705 = vshrl.u32 %v1518, 16
    %v1707 = vrot.slane %v1705, 7
    %v1708 = vshll.u32 %v1518, 16
    %v1710 = vor.u32 %v1707, %v1708
    %v1711 = vrot.slane %v1707, 4
    %v1713 = vshrl.u32 %v1519, 16
    %v1715 = vrot.slane %v1713, 7
    %v1716 = vshll.u32 %v1519, 16
    %v1718 = vor.u32 %v1715, %v1716
    %v1719 = vsel %vm1567, %v1711, %v1718
    %v1720 = vrot.slane %v1715, 4
    %v1722 = vshrl.u32 %v1520, 16
    %v1724 = vrot.slane %v1722, 7
    %v1725 = vshll.u32 %v1520, 16
    %v1727 = vor.u32 %v1724, %v1725
    %v1728 = vrot.slane %v1724, 4
    %v1730 = vshrl.u32 %v1521, 16
    %v1732 = vrot.slane %v1730, 7
    %v1733 = vshll.u32 %v1521, 16
    %v1735 = vor.u32 %v1732, %v1733
    %v1736 = vsel %vm1567, %v1728, %v1735
    %v1737 = vrot.slane %v1732, 4
    %v1739 = vshrl.u32 %v1522, 16
    %v1741 = vrot.slane %v1739, 7
    %v1742 = vshll.u32 %v1522, 16
    %v1744 = vor.u32 %v1741, %v1742
    %v1745 = vrot.slane %v1741, 4
    %v1747 = vshrl.u32 %v1523, 16
    %v1749 = vrot.slane %v1747, 7
    %v1750 = vshll.u32 %v1523, 16
    %v1752 = vor.u32 %v1749, %v1750
    %v1753 = vsel %vm1567, %v1745, %v1752
    %v1754 = vrot.slane %v1749, 4
    %v1756 = vshrl.u32 %v1524, 16
    %v1758 = vrot.slane %v1756, 7
    %v1759 = vshll.u32 %v1524, 16
    %v1761 = vor.u32 %v1758, %v1759
    %v1762 = vrot.slane %v1758, 4
    %v1764 = vshrl.u32 %v1525, 16
    %v1766 = vrot.slane %v1764, 7
    %v1767 = vshll.u32 %v1525, 16
    %v1769 = vor.u32 %v1766, %v1767
    %v1770 = vsel %vm1567, %v1762, %v1769
    %v1771 = vrot.slane %v1766, 4
    %v1773 = vshrl.u32 %v1526, 16
    %v1775 = vrot.slane %v1773, 7
    %v1776 = vshll.u32 %v1526, 16
    %v1778 = vor.u32 %v1775, %v1776
    %v1779 = vrot.slane %v1775, 4
    %v1781 = vshrl.u32 %v1527, 16
    %v1783 = vrot.slane %v1781, 7
    %v1784 = vshll.u32 %v1527, 16
    %v1786 = vor.u32 %v1783, %v1784
    %v1787 = vsel %vm1567, %v1779, %v1786
    %v1788 = vrot.slane %v1783, 4
    %v1790 = vshrl.u32 %v1528, 16
    %v1792 = vrot.slane %v1790, 7
    %v1793 = vshll.u32 %v1528, 16
    %v1795 = vor.u32 %v1792, %v1793
    %v1796 = vrot.slane %v1792, 4
    %v1798 = vshrl.u32 %v1529, 16
    %v1800 = vrot.slane %v1798, 7
    %v1801 = vshll.u32 %v1529, 16
    %v1803 = vor.u32 %v1800, %v1801
    %v1804 = vsel %vm1567, %v1796, %v1803
    %v1805 = vrot.slane %v1800, 4
    %v1807 = vshrl.u32 %v1530, 16
    %v1809 = vrot.slane %v1807, 7
    %v1810 = vshll.u32 %v1530, 16
    %v1812 = vor.u32 %v1809, %v1810
    %v1813 = vrot.slane %v1809, 4
    %v1815 = vshrl.u32 %v1531, 16
    %v1817 = vrot.slane %v1815, 7
    %v1818 = vshll.u32 %v1531, 16
    %v1820 = vor.u32 %v1817, %v1818
    %v1821 = vsel %vm1567, %v1813, %v1820
    %v1822 = vrot.slane %v1817, 4
    %v1824 = vshrl.u32 %v1532, 16
    %v1826 = vrot.slane %v1824, 7
    %v1827 = vshll.u32 %v1532, 16
    %v1829 = vor.u32 %v1826, %v1827
    %v1830 = vrot.slane %v1826, 4
    %v1832 = vshrl.u32 %v1533, 16
    %v1834 = vrot.slane %v1832, 7
    %v1835 = vshll.u32 %v1533, 16
    %v1837 = vor.u32 %v1834, %v1835
    %v1838 = vsel %vm1567, %v1830, %v1837
    %v1839 = vrot.slane %v1834, 4
    %v1841 = vshrl.u32 %v1534, 16
    %v1843 = vrot.slane %v1841, 7
    %v1844 = vshll.u32 %v1534, 16
    %v1846 = vor.u32 %v1843, %v1844
    %v1847 = vrot.slane %v1843, 4
    %v1849 = vshrl.u32 %v1535, 16
    %v1851 = vrot.slane %v1849, 7
    %v1852 = vshll.u32 %v1535, 16
    %v1854 = vor.u32 %v1851, %v1852
    %v1855 = vsel %vm1567, %v1847, %v1854
    %v1856 = vrot.slane %v1851, 4
    %v1858 = vshrl.u32 %v1536, 16
    %v1860 = vrot.slane %v1858, 7
    %v1861 = vshll.u32 %v1536, 16
    %v1863 = vor.u32 %v1860, %v1861
    %v1864 = vrot.slane %v1860, 4
    %v1866 = vshrl.u32 %v1537, 16
    %v1868 = vrot.slane %v1866, 7
    %v1869 = vshll.u32 %v1537, 16
    %v1871 = vor.u32 %v1868, %v1869
    %v1872 = vsel %vm1567, %v1864, %v1871
    %v1873 = vrot.slane %v1868, 4
    %v1875 = vshrl.u32 %v1538, 16
    %v1877 = vrot.slane %v1875, 7
    %v1878 = vshll.u32 %v1538, 16
    %v1880 = vor.u32 %v1877, %v1878
    %v1881 = vrot.slane %v1877, 4
    %v1883 = vshrl.u32 %v1539, 16
    %v1885 = vrot.slane %v1883, 7
    %v1886 = vshll.u32 %v1539, 16
    %v1888 = vor.u32 %v1885, %v1886
    %v1889 = vsel %vm1567, %v1881, %v1888
    %v1890 = vrot.slane %v1885, 4
    %v1892 = vshrl.u32 %v1540, 16
    %v1894 = vrot.slane %v1892, 7
    %v1895 = vshll.u32 %v1540, 16
    %v1897 = vor.u32 %v1894, %v1895
    %v1898 = vrot.slane %v1894, 4
    %v1900 = vshrl.u32 %v1541, 16
    %v1902 = vrot.slane %v1900, 7
    %v1903 = vshll.u32 %v1541, 16
    %v1905 = vor.u32 %v1902, %v1903
    %v1906 = vsel %vm1567, %v1898, %v1905
    %v1907 = vrot.slane %v1902, 4
    %v1909 = vshrl.u32 %v1542, 16
    %v1911 = vrot.slane %v1909, 7
    %v1912 = vshll.u32 %v1542, 16
    %v1914 = vor.u32 %v1911, %v1912
    %v1915 = vrot.slane %v1911, 4
    %v1917 = vshrl.u32 %v1543, 16
    %v1919 = vrot.slane %v1917, 7
    %v1920 = vshll.u32 %v1543, 16
    %v1922 = vor.u32 %v1919, %v1920
    %v1923 = vsel %vm1567, %v1915, %v1922
    %v1924 = vrot.slane %v1919, 4
    %v1926 = vshrl.u32 %v1544, 16
    %v1928 = vrot.slane %v1926, 7
    %v1929 = vshll.u32 %v1544, 16
    %v1931 = vor.u32 %v1928, %v1929
    %v1932 = vrot.slane %v1928, 4
    %v1934 = vshrl.u32 %v1545, 16
    %v1936 = vrot.slane %v1934, 7
    %v1937 = vshll.u32 %v1545, 16
    %v1939 = vor.u32 %v1936, %v1937
    %v1940 = vsel %vm1567, %v1932, %v1939
    %v1941 = vrot.slane %v1936, 4
    %v1943 = vshrl.u32 %v1546, 16
    %v1945 = vrot.slane %v1943, 7
    %v1946 = vshll.u32 %v1546, 16
    %v1948 = vor.u32 %v1945, %v1946
    %v1949 = vrot.slane %v1945, 4
    %v1951 = vshrl.u32 %v1547, 16
    %v1953 = vrot.slane %v1951, 7
    %v1954 = vshll.u32 %v1547, 16
    %v1956 = vor.u32 %v1953, %v1954
    %v1957 = vsel %vm1567, %v1949, %v1956
    %v1958 = vrot.slane %v1953, 4
    %v1960 = vshrl.u32 %v1548, 16
    %v1962 = vrot.slane %v1960, 7
    %v1963 = vshll.u32 %v1548, 16
    %v1965 = vor.u32 %v1962, %v1963
    %v1966 = vrot.slane %v1962, 4
    %v1968 = vshrl.u32 %v1549, 16
    %v1970 = vrot.slane %v1968, 7
    %v1971 = vshll.u32 %v1549, 16
    %v1973 = vor.u32 %v1970, %v1971
    %v1974 = vsel %vm1567, %v1966, %v1973
    %v1975 = vrot.slane %v1970, 4
    %v1977 = vshrl.u32 %v1550, 16
    %v1979 = vrot.slane %v1977, 7
    %v1980 = vshll.u32 %v1550, 16
    %v1982 = vor.u32 %v1979, %v1980
    %v1983 = vrot.slane %v1979, 4
    %v1985 = vshrl.u32 %v1551, 16
    %v1987 = vrot.slane %v1985, 7
    %v1988 = vshll.u32 %v1551, 16
    %v1990 = vor.u32 %v1987, %v1988
    %v1991 = vsel %vm1567, %v1983, %v1990
    %v1992 = vrot.slane %v1987, 4
    %v1994 = vshrl.u32 %v1552, 16
    %v1996 = vrot.slane %v1994, 7
    %v1997 = vshll.u32 %v1552, 16
    %v1999 = vor.u32 %v1996, %v1997
    %v2000 = vrot.slane %v1996, 4
    %v2002 = vshrl.u32 %v1553, 16
    %v2004 = vrot.slane %v2002, 7
    %v2005 = vshll.u32 %v1553, 16
    %v2007 = vor.u32 %v2004, %v2005
    %v2008 = vsel %vm1567, %v2000, %v2007
    %v2009 = vrot.slane %v2004, 4
    %v2011 = vshrl.u32 %v1554, 16
    %v2013 = vrot.slane %v2011, 7
    %v2014 = vshll.u32 %v1554, 16
    %v2016 = vor.u32 %v2013, %v2014
    %v2017 = vrot.slane %v2013, 4
    %v2019 = vshrl.u32 %v1555, 16
    %v2021 = vrot.slane %v2019, 7
    %v2022 = vshll.u32 %v1555, 16
    %v2024 = vor.u32 %v2021, %v2022
    %v2025 = vsel %vm1567, %v2017, %v2024
    %v2026 = vrot.slane %v2021, 4
    %v2028 = vshrl.u32 %v1556, 16
    %v2030 = vrot.slane %v2028, 7
    %v2031 = vshll.u32 %v1556, 16
    %v2033 = vor.u32 %v2030, %v2031
    %v2034 = vrot.slane %v2030, 4
    %v2036 = vshrl.u32 %v1557, 16
    %v2038 = vrot.slane %v2036, 7
    %v2039 = vshll.u32 %v1557, 16
    %v2041 = vor.u32 %v2038, %v2039
    %v2042 = vsel %vm1567, %v2034, %v2041
    %v2043 = vrot.slane %v2038, 4
    %v2045 = vshrl.u32 %v1558, 16
    %v2047 = vrot.slane %v2045, 7
    %v2048 = vshll.u32 %v1558, 16
    %v2050 = vor.u32 %v2047, %v2048
    %v2051 = vrot.slane %v2047, 4
    %v2053 = vshrl.u32 %v1559, 16
    %v2055 = vrot.slane %v2053, 7
    %v2056 = vshll.u32 %v1559, 16
    %v2058 = vor.u32 %v2055, %v2056
    %v2059 = vsel %vm1567, %v2051, %v2058
    %v2060 = vrot.slane %v2055, 4
    %v2062 = vshrl.u32 %v1560, 16
    %v2064 = vrot.slane %v2062, 7
    %v2065 = vshll.u32 %v1560, 16
    %v2067 = vor.u32 %v2064, %v2065
    %v2068 = vrot.slane %v2064, 4
    %v2070 = vshrl.u32 %v1561, 16
    %v2072 = vrot.slane %v2070, 7
    %v2073 = vshll.u32 %v1561, 16
    %v2075 = vor.u32 %v2072, %v2073
    %v2076 = vsel %vm1567, %v2068, %v2075
    %v2077 = vrot.slane %v2072, 4
    %v2079 = vshrl.u32 %v1562, 16
    %v2081 = vrot.slane %v2079, 7
    %v2082 = vshll.u32 %v1562, 16
    %v2084 = vor.u32 %v2081, %v2082
    %v2085 = vrot.slane %v2081, 4
    %v2087 = vshrl.u32 %v1563, 16
    %v2089 = vrot.slane %v2087, 7
    %v2090 = vshll.u32 %v1563, 16
    %v2092 = vor.u32 %v2089, %v2090
    %v2093 = vsel %vm1567, %v2085, %v2092
    %v2094 = vrot.slane %v2089, 4
    %v2096 = vshrl.u32 %v1564, 16
    %v2098 = vrot.slane %v2096, 7
    %v2099 = vshll.u32 %v1564, 16
    %v2101 = vor.u32 %v2098, %v2099
    %v2102 = vrot.slane %v2098, 4
    %v2104 = vshrl.u32 %v1565, 16
    %v2106 = vrot.slane %v2104, 7
    %v2107 = vshll.u32 %v1565, 16
    %v2109 = vor.u32 %v2106, %v2107
    %v2110 = vsel %vm1567, %v2102, %v2109
    %v2111 = vrot.slane %v2106, 4
    %vm2208 = vcmask 1043456
    %vm2209 = vmand %vm2208, %vm1276
    %v2210 = vld [vmem:[%s1176] sm:$0xf]
    %v2211 = vsel %vm2209, %v1574, %v2210
    %2212 = vst [vmem:[%s1176] sm:$0xf] %v2211
    %2213 = vst [vmem:[%s1176 + $0x4] sm:$0xf] %v1583
    %v2214 = vld [vmem:[%s1176 + $0x8] sm:$0x1]
    %v2215 = vsel %vm1179, %v1584, %v2214
    %2216 = vst [vmem:[%s1176 + $0x8] sm:$0x1] %v2215
    %v2217 = vld [vmem:[%s1176 + $0xc] sm:$0xf]
    %v2218 = vsel %vm2209, %v1591, %v2217
    %2219 = vst [vmem:[%s1176 + $0xc] sm:$0xf] %v2218
    %2220 = vst [vmem:[%s1176 + $0x10] sm:$0xf] %v1600
    %v2221 = vld [vmem:[%s1176 + $0x14] sm:$0x1]
    %v2222 = vsel %vm1179, %v1601, %v2221
    %2223 = vst [vmem:[%s1176 + $0x14] sm:$0x1] %v2222
    %v2224 = vld [vmem:[%s1176 + $0x18] sm:$0xf]
    %v2225 = vsel %vm2209, %v1608, %v2224
    %2226 = vst [vmem:[%s1176 + $0x18] sm:$0xf] %v2225
    %2227 = vst [vmem:[%s1176 + $0x1c] sm:$0xf] %v1617
    %v2228 = vld [vmem:[%s1176 + $0x20] sm:$0x1]
    %v2229 = vsel %vm1179, %v1618, %v2228
    %2230 = vst [vmem:[%s1176 + $0x20] sm:$0x1] %v2229
    %v2231 = vld [vmem:[%s1176 + $0x24] sm:$0xf]
    %v2232 = vsel %vm2209, %v1625, %v2231
    %2233 = vst [vmem:[%s1176 + $0x24] sm:$0xf] %v2232
    %2234 = vst [vmem:[%s1176 + $0x28] sm:$0xf] %v1634
    %v2235 = vld [vmem:[%s1176 + $0x2c] sm:$0x1]
    %v2236 = vsel %vm1179, %v1635, %v2235
    %2237 = vst [vmem:[%s1176 + $0x2c] sm:$0x1] %v2236
    %v2238 = vld [vmem:[%s1176 + $0x30] sm:$0xf]
    %v2239 = vsel %vm2209, %v1642, %v2238
    %2240 = vst [vmem:[%s1176 + $0x30] sm:$0xf] %v2239
    %2241 = vst [vmem:[%s1176 + $0x34] sm:$0xf] %v1651
    %v2242 = vld [vmem:[%s1176 + $0x38] sm:$0x1]
    %v2243 = vsel %vm1179, %v1652, %v2242
    %2244 = vst [vmem:[%s1176 + $0x38] sm:$0x1] %v2243
    %v2245 = vld [vmem:[%s1176 + $0x3c] sm:$0xf]
    %v2246 = vsel %vm2209, %v1659, %v2245
    %2247 = vst [vmem:[%s1176 + $0x3c] sm:$0xf] %v2246
    %2248 = vst [vmem:[%s1176 + $0x40] sm:$0xf] %v1668
    %v2249 = vld [vmem:[%s1176 + $0x44] sm:$0x1]
    %v2250 = vsel %vm1179, %v1669, %v2249
    %2251 = vst [vmem:[%s1176 + $0x44] sm:$0x1] %v2250
    %v2252 = vld [vmem:[%s1176 + $0x48] sm:$0xf]
    %v2253 = vsel %vm2209, %v1676, %v2252
    %2254 = vst [vmem:[%s1176 + $0x48] sm:$0xf] %v2253
    %2255 = vst [vmem:[%s1176 + $0x4c] sm:$0xf] %v1685
    %v2256 = vld [vmem:[%s1176 + $0x50] sm:$0x1]
    %v2257 = vsel %vm1179, %v1686, %v2256
    %2258 = vst [vmem:[%s1176 + $0x50] sm:$0x1] %v2257
    %v2259 = vld [vmem:[%s1176 + $0x54] sm:$0xf]
    %v2260 = vsel %vm2209, %v1693, %v2259
    %2261 = vst [vmem:[%s1176 + $0x54] sm:$0xf] %v2260
    %2262 = vst [vmem:[%s1176 + $0x58] sm:$0xf] %v1702
    %v2263 = vld [vmem:[%s1176 + $0x5c] sm:$0x1]
    %v2264 = vsel %vm1179, %v1703, %v2263
    %2265 = vst [vmem:[%s1176 + $0x5c] sm:$0x1] %v2264
    %v2266 = vld [vmem:[%s1176 + $0x60] sm:$0xf]
    %v2267 = vsel %vm2209, %v1710, %v2266
    %2268 = vst [vmem:[%s1176 + $0x60] sm:$0xf] %v2267
    %2269 = vst [vmem:[%s1176 + $0x64] sm:$0xf] %v1719
    %v2270 = vld [vmem:[%s1176 + $0x68] sm:$0x1]
    %v2271 = vsel %vm1179, %v1720, %v2270
    %2272 = vst [vmem:[%s1176 + $0x68] sm:$0x1] %v2271
    %v2273 = vld [vmem:[%s1176 + $0x6c] sm:$0xf]
    %v2274 = vsel %vm2209, %v1727, %v2273
    %2275 = vst [vmem:[%s1176 + $0x6c] sm:$0xf] %v2274
    %2276 = vst [vmem:[%s1176 + $0x70] sm:$0xf] %v1736
    %v2277 = vld [vmem:[%s1176 + $0x74] sm:$0x1]
    %v2278 = vsel %vm1179, %v1737, %v2277
    %2279 = vst [vmem:[%s1176 + $0x74] sm:$0x1] %v2278
    %v2280 = vld [vmem:[%s1176 + $0x78] sm:$0xf]
    %v2281 = vsel %vm2209, %v1744, %v2280
    %2282 = vst [vmem:[%s1176 + $0x78] sm:$0xf] %v2281
    %2283 = vst [vmem:[%s1176 + $0x7c] sm:$0xf] %v1753
    %v2284 = vld [vmem:[%s1176 + $0x80] sm:$0x1]
    %v2285 = vsel %vm1179, %v1754, %v2284
    %2286 = vst [vmem:[%s1176 + $0x80] sm:$0x1] %v2285
    %v2287 = vld [vmem:[%s1176 + $0x84] sm:$0xf]
    %v2288 = vsel %vm2209, %v1761, %v2287
    %2289 = vst [vmem:[%s1176 + $0x84] sm:$0xf] %v2288
    %2290 = vst [vmem:[%s1176 + $0x88] sm:$0xf] %v1770
    %v2291 = vld [vmem:[%s1176 + $0x8c] sm:$0x1]
    %v2292 = vsel %vm1179, %v1771, %v2291
    %2293 = vst [vmem:[%s1176 + $0x8c] sm:$0x1] %v2292
    %v2294 = vld [vmem:[%s1176 + $0x90] sm:$0xf]
    %v2295 = vsel %vm2209, %v1778, %v2294
    %2296 = vst [vmem:[%s1176 + $0x90] sm:$0xf] %v2295
    %2297 = vst [vmem:[%s1176 + $0x94] sm:$0xf] %v1787
    %v2298 = vld [vmem:[%s1176 + $0x98] sm:$0x1]
    %v2299 = vsel %vm1179, %v1788, %v2298
    %2300 = vst [vmem:[%s1176 + $0x98] sm:$0x1] %v2299
    %v2301 = vld [vmem:[%s1176 + $0x9c] sm:$0xf]
    %v2302 = vsel %vm2209, %v1795, %v2301
    %2303 = vst [vmem:[%s1176 + $0x9c] sm:$0xf] %v2302
    %2304 = vst [vmem:[%s1176 + $0xa0] sm:$0xf] %v1804
    %v2305 = vld [vmem:[%s1176 + $0xa4] sm:$0x1]
    %v2306 = vsel %vm1179, %v1805, %v2305
    %2307 = vst [vmem:[%s1176 + $0xa4] sm:$0x1] %v2306
    %v2308 = vld [vmem:[%s1176 + $0xa8] sm:$0xf]
    %v2309 = vsel %vm2209, %v1812, %v2308
    %2310 = vst [vmem:[%s1176 + $0xa8] sm:$0xf] %v2309
    %2311 = vst [vmem:[%s1176 + $0xac] sm:$0xf] %v1821
    %v2312 = vld [vmem:[%s1176 + $0xb0] sm:$0x1]
    %v2313 = vsel %vm1179, %v1822, %v2312
    %2314 = vst [vmem:[%s1176 + $0xb0] sm:$0x1] %v2313
    %v2315 = vld [vmem:[%s1176 + $0xb4] sm:$0xf]
    %v2316 = vsel %vm2209, %v1829, %v2315
    %2317 = vst [vmem:[%s1176 + $0xb4] sm:$0xf] %v2316
    %2318 = vst [vmem:[%s1176 + $0xb8] sm:$0xf] %v1838
    %v2319 = vld [vmem:[%s1176 + $0xbc] sm:$0x1]
    %v2320 = vsel %vm1179, %v1839, %v2319
    %2321 = vst [vmem:[%s1176 + $0xbc] sm:$0x1] %v2320
    %v2322 = vld [vmem:[%s1176 + $0xd8] sm:$0xf]
    %v2323 = vsel %vm2209, %v1846, %v2322
    %2324 = vst [vmem:[%s1176 + $0xd8] sm:$0xf] %v2323
    %2325 = vst [vmem:[%s1176 + $0xdc] sm:$0xf] %v1855
    %v2326 = vld [vmem:[%s1176 + $0xe0] sm:$0x1]
    %v2327 = vsel %vm1179, %v1856, %v2326
    %2328 = vst [vmem:[%s1176 + $0xe0] sm:$0x1] %v2327
    %v2329 = vld [vmem:[%s1176 + $0xe4] sm:$0xf]
    %v2330 = vsel %vm2209, %v1863, %v2329
    %2331 = vst [vmem:[%s1176 + $0xe4] sm:$0xf] %v2330
    %2332 = vst [vmem:[%s1176 + $0xe8] sm:$0xf] %v1872
    %v2333 = vld [vmem:[%s1176 + $0xec] sm:$0x1]
    %v2334 = vsel %vm1179, %v1873, %v2333
    %2335 = vst [vmem:[%s1176 + $0xec] sm:$0x1] %v2334
    %v2336 = vld [vmem:[%s1176 + $0xf0] sm:$0xf]
    %v2337 = vsel %vm2209, %v1880, %v2336
    %2338 = vst [vmem:[%s1176 + $0xf0] sm:$0xf] %v2337
    %2339 = vst [vmem:[%s1176 + $0xf4] sm:$0xf] %v1889
    %v2340 = vld [vmem:[%s1176 + $0xf8] sm:$0x1]
    %v2341 = vsel %vm1179, %v1890, %v2340
    %2342 = vst [vmem:[%s1176 + $0xf8] sm:$0x1] %v2341
    %v2343 = vld [vmem:[%s1176 + $0xfc] sm:$0xf]
    %v2344 = vsel %vm2209, %v1897, %v2343
    %2345 = vst [vmem:[%s1176 + $0xfc] sm:$0xf] %v2344
    %2346 = vst [vmem:[%s1176 + $0x100] sm:$0xf] %v1906
    %v2347 = vld [vmem:[%s1176 + $0x104] sm:$0x1]
    %v2348 = vsel %vm1179, %v1907, %v2347
    %2349 = vst [vmem:[%s1176 + $0x104] sm:$0x1] %v2348
    %v2350 = vld [vmem:[%s1176 + $0x108] sm:$0xf]
    %v2351 = vsel %vm2209, %v1914, %v2350
    %2352 = vst [vmem:[%s1176 + $0x108] sm:$0xf] %v2351
    %2353 = vst [vmem:[%s1176 + $0x10c] sm:$0xf] %v1923
    %v2354 = vld [vmem:[%s1176 + $0x110] sm:$0x1]
    %v2355 = vsel %vm1179, %v1924, %v2354
    %2356 = vst [vmem:[%s1176 + $0x110] sm:$0x1] %v2355
    %v2357 = vld [vmem:[%s1176 + $0x114] sm:$0xf]
    %v2358 = vsel %vm2209, %v1931, %v2357
    %2359 = vst [vmem:[%s1176 + $0x114] sm:$0xf] %v2358
    %2360 = vst [vmem:[%s1176 + $0x118] sm:$0xf] %v1940
    %v2361 = vld [vmem:[%s1176 + $0x11c] sm:$0x1]
    %v2362 = vsel %vm1179, %v1941, %v2361
    %2363 = vst [vmem:[%s1176 + $0x11c] sm:$0x1] %v2362
    %v2364 = vld [vmem:[%s1176 + $0x120] sm:$0xf]
    %v2365 = vsel %vm2209, %v1948, %v2364
    %2366 = vst [vmem:[%s1176 + $0x120] sm:$0xf] %v2365
    %2367 = vst [vmem:[%s1176 + $0x124] sm:$0xf] %v1957
    %v2368 = vld [vmem:[%s1176 + $0x128] sm:$0x1]
    %v2369 = vsel %vm1179, %v1958, %v2368
    %2370 = vst [vmem:[%s1176 + $0x128] sm:$0x1] %v2369
    %v2371 = vld [vmem:[%s1176 + $0x12c] sm:$0xf]
    %v2372 = vsel %vm2209, %v1965, %v2371
    %2373 = vst [vmem:[%s1176 + $0x12c] sm:$0xf] %v2372
    %2374 = vst [vmem:[%s1176 + $0x130] sm:$0xf] %v1974
    %v2375 = vld [vmem:[%s1176 + $0x134] sm:$0x1]
    %v2376 = vsel %vm1179, %v1975, %v2375
    %2377 = vst [vmem:[%s1176 + $0x134] sm:$0x1] %v2376
    %v2378 = vld [vmem:[%s1176 + $0x138] sm:$0xf]
    %v2379 = vsel %vm2209, %v1982, %v2378
    %2380 = vst [vmem:[%s1176 + $0x138] sm:$0xf] %v2379
    %2381 = vst [vmem:[%s1176 + $0x13c] sm:$0xf] %v1991
    %v2382 = vld [vmem:[%s1176 + $0x140] sm:$0x1]
    %v2383 = vsel %vm1179, %v1992, %v2382
    %2384 = vst [vmem:[%s1176 + $0x140] sm:$0x1] %v2383
    %v2385 = vld [vmem:[%s1176 + $0x144] sm:$0xf]
    %v2386 = vsel %vm2209, %v1999, %v2385
    %2387 = vst [vmem:[%s1176 + $0x144] sm:$0xf] %v2386
    %2388 = vst [vmem:[%s1176 + $0x148] sm:$0xf] %v2008
    %v2389 = vld [vmem:[%s1176 + $0x14c] sm:$0x1]
    %v2390 = vsel %vm1179, %v2009, %v2389
    %2391 = vst [vmem:[%s1176 + $0x14c] sm:$0x1] %v2390
    %v2392 = vld [vmem:[%s1176 + $0x150] sm:$0xf]
    %v2393 = vsel %vm2209, %v2016, %v2392
    %2394 = vst [vmem:[%s1176 + $0x150] sm:$0xf] %v2393
    %2395 = vst [vmem:[%s1176 + $0x154] sm:$0xf] %v2025
    %v2396 = vld [vmem:[%s1176 + $0x158] sm:$0x1]
    %v2397 = vsel %vm1179, %v2026, %v2396
    %2398 = vst [vmem:[%s1176 + $0x158] sm:$0x1] %v2397
    %v2399 = vld [vmem:[%s1176 + $0x15c] sm:$0xf]
    %v2400 = vsel %vm2209, %v2033, %v2399
    %2401 = vst [vmem:[%s1176 + $0x15c] sm:$0xf] %v2400
    %2402 = vst [vmem:[%s1176 + $0x160] sm:$0xf] %v2042
    %v2403 = vld [vmem:[%s1176 + $0x164] sm:$0x1]
    %v2404 = vsel %vm1179, %v2043, %v2403
    %2405 = vst [vmem:[%s1176 + $0x164] sm:$0x1] %v2404
    %v2406 = vld [vmem:[%s1176 + $0x168] sm:$0xf]
    %v2407 = vsel %vm2209, %v2050, %v2406
    %2408 = vst [vmem:[%s1176 + $0x168] sm:$0xf] %v2407
    %2409 = vst [vmem:[%s1176 + $0x16c] sm:$0xf] %v2059
    %v2410 = vld [vmem:[%s1176 + $0x170] sm:$0x1]
    %v2411 = vsel %vm1179, %v2060, %v2410
    %2412 = vst [vmem:[%s1176 + $0x170] sm:$0x1] %v2411
    %v2413 = vld [vmem:[%s1176 + $0x174] sm:$0xf]
    %v2414 = vsel %vm2209, %v2067, %v2413
    %2415 = vst [vmem:[%s1176 + $0x174] sm:$0xf] %v2414
    %2416 = vst [vmem:[%s1176 + $0x178] sm:$0xf] %v2076
    %v2417 = vld [vmem:[%s1176 + $0x17c] sm:$0x1]
    %v2418 = vsel %vm1179, %v2077, %v2417
    %2419 = vst [vmem:[%s1176 + $0x17c] sm:$0x1] %v2418
    %v2420 = vld [vmem:[%s1176 + $0x180] sm:$0xf]
    %v2421 = vsel %vm2209, %v2084, %v2420
    %2422 = vst [vmem:[%s1176 + $0x180] sm:$0xf] %v2421
    %2423 = vst [vmem:[%s1176 + $0x184] sm:$0xf] %v2093
    %v2424 = vld [vmem:[%s1176 + $0x188] sm:$0x1]
    %v2425 = vsel %vm1179, %v2094, %v2424
    %2426 = vst [vmem:[%s1176 + $0x188] sm:$0x1] %v2425
    %v2427 = vld [vmem:[%s1176 + $0x18c] sm:$0xf]
    %v2428 = vsel %vm2209, %v2101, %v2427
    %2429 = vst [vmem:[%s1176 + $0x18c] sm:$0xf] %v2428
    %2430 = vst [vmem:[%s1176 + $0x190] sm:$0xf] %v2110
    %v2431 = vld [vmem:[%s1176 + $0x194] sm:$0x1]
    %v2432 = vsel %vm1179, %v2111, %v2431
    %2433 = vst [vmem:[%s1176 + $0x194] sm:$0x1] %v2432
    %v2434 = vld [vmem:[#allocation2] sm:$0xf]
    %v2435 = vld [vmem:[#allocation2 + $0x4] sm:$0xf]
    %v2436 = vld [vmem:[#allocation2 + $0xc] sm:$0xf]
    %v2437 = vld [vmem:[#allocation2 + $0x10] sm:$0xf]
    %v2438 = vld [vmem:[#allocation2 + $0x18] sm:$0xf]
    %v2439 = vld [vmem:[#allocation2 + $0x1c] sm:$0xf]
    %v2440 = vld [vmem:[#allocation2 + $0x24] sm:$0xf]
    %v2441 = vld [vmem:[#allocation2 + $0x28] sm:$0xf]
    %v2442 = vld [vmem:[#allocation2 + $0x30] sm:$0xf]
    %v2443 = vld [vmem:[#allocation2 + $0x34] sm:$0xf]
    %v2444 = vld [vmem:[#allocation2 + $0x3c] sm:$0xf]
    %v2445 = vld [vmem:[#allocation2 + $0x40] sm:$0xf]
    %v2446 = vld [vmem:[#allocation2 + $0x48] sm:$0xf]
    %v2447 = vld [vmem:[#allocation2 + $0x4c] sm:$0xf]
    %v2448 = vld [vmem:[#allocation2 + $0x54] sm:$0xf]
    %v2449 = vld [vmem:[#allocation2 + $0x58] sm:$0xf]
    %v2450 = vld [vmem:[#allocation2 + $0x60] sm:$0xf]
    %v2451 = vld [vmem:[#allocation2 + $0x64] sm:$0xf]
    %v2452 = vld [vmem:[#allocation2 + $0x6c] sm:$0xf]
    %v2453 = vld [vmem:[#allocation2 + $0x70] sm:$0xf]
    %v2454 = vld [vmem:[#allocation2 + $0x78] sm:$0xf]
    %v2455 = vld [vmem:[#allocation2 + $0x7c] sm:$0xf]
    %v2456 = vld [vmem:[#allocation2 + $0x84] sm:$0xf]
    %v2457 = vld [vmem:[#allocation2 + $0x88] sm:$0xf]
    %v2458 = vld [vmem:[#allocation2 + $0x90] sm:$0xf]
    %v2459 = vld [vmem:[#allocation2 + $0x94] sm:$0xf]
    %v2460 = vld [vmem:[#allocation2 + $0x9c] sm:$0xf]
    %v2461 = vld [vmem:[#allocation2 + $0xa0] sm:$0xf]
    %v2462 = vld [vmem:[#allocation2 + $0xa8] sm:$0xf]
    %v2463 = vld [vmem:[#allocation2 + $0xac] sm:$0xf]
    %v2464 = vld [vmem:[#allocation2 + $0xb4] sm:$0xf]
    %v2465 = vld [vmem:[#allocation2 + $0xb8] sm:$0xf]
    %v2466 = vld [vmem:[#allocation2 + $0xd8] sm:$0xf]
    %v2467 = vld [vmem:[#allocation2 + $0xdc] sm:$0xf]
    %v2468 = vld [vmem:[#allocation2 + $0xe4] sm:$0xf]
    %v2469 = vld [vmem:[#allocation2 + $0xe8] sm:$0xf]
    %v2470 = vld [vmem:[#allocation2 + $0xf0] sm:$0xf]
    %v2471 = vld [vmem:[#allocation2 + $0xf4] sm:$0xf]
    %v2472 = vld [vmem:[#allocation2 + $0xfc] sm:$0xf]
    %v2473 = vld [vmem:[#allocation2 + $0x100] sm:$0xf]
    %v2474 = vld [vmem:[#allocation2 + $0x108] sm:$0xf]
    %v2475 = vld [vmem:[#allocation2 + $0x10c] sm:$0xf]
    %v2476 = vld [vmem:[#allocation2 + $0x114] sm:$0xf]
    %v2477 = vld [vmem:[#allocation2 + $0x118] sm:$0xf]
    %v2478 = vld [vmem:[#allocation2 + $0x120] sm:$0xf]
    %v2479 = vld [vmem:[#allocation2 + $0x124] sm:$0xf]
    %v2480 = vld [vmem:[#allocation2 + $0x12c] sm:$0xf]
    %v2481 = vld [vmem:[#allocation2 + $0x130] sm:$0xf]
    %v2482 = vld [vmem:[#allocation2 + $0x138] sm:$0xf]
    %v2483 = vld [vmem:[#allocation2 + $0x13c] sm:$0xf]
    %v2484 = vld [vmem:[#allocation2 + $0x144] sm:$0xf]
    %v2485 = vld [vmem:[#allocation2 + $0x148] sm:$0xf]
    %v2486 = vld [vmem:[#allocation2 + $0x150] sm:$0xf]
    %v2487 = vld [vmem:[#allocation2 + $0x154] sm:$0xf]
    %v2488 = vld [vmem:[#allocation2 + $0x15c] sm:$0xf]
    %v2489 = vld [vmem:[#allocation2 + $0x160] sm:$0xf]
    %v2490 = vld [vmem:[#allocation2 + $0x168] sm:$0xf]
    %v2491 = vld [vmem:[#allocation2 + $0x16c] sm:$0xf]
    %v2492 = vld [vmem:[#allocation2 + $0x174] sm:$0xf]
    %v2493 = vld [vmem:[#allocation2 + $0x178] sm:$0xf]
    %v2494 = vld [vmem:[#allocation2 + $0x180] sm:$0xf]
    %v2495 = vld [vmem:[#allocation2 + $0x184] sm:$0xf]
    %v2496 = vld [vmem:[#allocation2 + $0x18c] sm:$0xf]
    %v2497 = vld [vmem:[#allocation2 + $0x190] sm:$0xf]
    %2498 = vst [vmem:[#allocation3] sm:$0xf] %v2434
    %2499 = vst [vmem:[#allocation3 + $0x24] sm:$0xf] %v2435
    %2500 = vst [vmem:[#allocation3 + $0x48] sm:$0xf] %v2436
    %2501 = vst [vmem:[#allocation3 + $0x6c] sm:$0xf] %v2437
    %2502 = vst [vmem:[#allocation3 + $0x90] sm:$0xf] %v2438
    %2503 = vst [vmem:[#allocation3 + $0xb4] sm:$0xf] %v2439
    %2504 = vst [vmem:[#allocation3 + $0xd8] sm:$0xf] %v2440
    %2505 = vst [vmem:[#allocation3 + $0xfc] sm:$0xf] %v2441
    %2506 = vst [vmem:[#allocation3 + $0x120] sm:$0xf] %v2442
    %2507 = vst [vmem:[#allocation3 + $0x144] sm:$0xf] %v2443
    %2508 = vst [vmem:[#allocation3 + $0x168] sm:$0xf] %v2444
    %2509 = vst [vmem:[#allocation3 + $0x18c] sm:$0xf] %v2445
    %2510 = vst [vmem:[#allocation3 + $0x1b0] sm:$0xf] %v2446
    %2511 = vst [vmem:[#allocation3 + $0x1d4] sm:$0xf] %v2447
    %2512 = vst [vmem:[#allocation3 + $0x1f8] sm:$0xf] %v2448
    %2513 = vst [vmem:[#allocation3 + $0x21c] sm:$0xf] %v2449
    %2514 = vst [vmem:[#allocation3 + $0x240] sm:$0xf] %v2450
    %2515 = vst [vmem:[#allocation3 + $0x264] sm:$0xf] %v2451
    %2516 = vst [vmem:[#allocation3 + $0x288] sm:$0xf] %v2452
    %2517 = vst [vmem:[#allocation3 + $0x2ac] sm:$0xf] %v2453
    %2518 = vst [vmem:[#allocation3 + $0x2d0] sm:$0xf] %v2454
    %2519 = vst [vmem:[#allocation3 + $0x2f4] sm:$0xf] %v2455
    %2520 = vst [vmem:[#allocation3 + $0x318] sm:$0xf] %v2456
    %2521 = vst [vmem:[#allocation3 + $0x33c] sm:$0xf] %v2457
    %2522 = vst [vmem:[#allocation3 + $0x360] sm:$0xf] %v2458
    %2523 = vst [vmem:[#allocation3 + $0x384] sm:$0xf] %v2459
    %2524 = vst [vmem:[#allocation3 + $0x3a8] sm:$0xf] %v2460
    %2525 = vst [vmem:[#allocation3 + $0x3cc] sm:$0xf] %v2461
    %2526 = vst [vmem:[#allocation3 + $0x3f0] sm:$0xf] %v2462
    %2527 = vst [vmem:[#allocation3 + $0x414] sm:$0xf] %v2463
    %2528 = vst [vmem:[#allocation3 + $0x438] sm:$0xf] %v2464
    %2529 = vst [vmem:[#allocation3 + $0x45c] sm:$0xf] %v2465
    %2530 = vst [vmem:[#allocation3 + $0x480] sm:$0xf] %v2466
    %2531 = vst [vmem:[#allocation3 + $0x4a4] sm:$0xf] %v2467
    %2532 = vst [vmem:[#allocation3 + $0x4c8] sm:$0xf] %v2468
    %2533 = vst [vmem:[#allocation3 + $0x4ec] sm:$0xf] %v2469
    %2534 = vst [vmem:[#allocation3 + $0x510] sm:$0xf] %v2470
    %2535 = vst [vmem:[#allocation3 + $0x534] sm:$0xf] %v2471
    %2536 = vst [vmem:[#allocation3 + $0x558] sm:$0xf] %v2472
    %2537 = vst [vmem:[#allocation3 + $0x57c] sm:$0xf] %v2473
    %2538 = vst [vmem:[#allocation3 + $0x5a0] sm:$0xf] %v2474
    %2539 = vst [vmem:[#allocation3 + $0x5c4] sm:$0xf] %v2475
    %2540 = vst [vmem:[#allocation3 + $0x5e8] sm:$0xf] %v2476
    %2541 = vst [vmem:[#allocation3 + $0x60c] sm:$0xf] %v2477
    %2542 = vst [vmem:[#allocation3 + $0x630] sm:$0xf] %v2478
    %2543 = vst [vmem:[#allocation3 + $0x654] sm:$0xf] %v2479
    %2544 = vst [vmem:[#allocation3 + $0x678] sm:$0xf] %v2480
    %2545 = vst [vmem:[#allocation3 + $0x69c] sm:$0xf] %v2481
    %2546 = vst [vmem:[#allocation3 + $0x6c0] sm:$0xf] %v2482
    %2547 = vst [vmem:[#allocation3 + $0x6e4] sm:$0xf] %v2483
    %2548 = vst [vmem:[#allocation3 + $0x708] sm:$0xf] %v2484
    %2549 = vst [vmem:[#allocation3 + $0x72c] sm:$0xf] %v2485
    %2550 = vst [vmem:[#allocation3 + $0x750] sm:$0xf] %v2486
    %2551 = vst [vmem:[#allocation3 + $0x774] sm:$0xf] %v2487
    %2552 = vst [vmem:[#allocation3 + $0x798] sm:$0xf] %v2488
    %2553 = vst [vmem:[#allocation3 + $0x7bc] sm:$0xf] %v2489
    %2554 = vst [vmem:[#allocation3 + $0x7e0] sm:$0xf] %v2490
    %2555 = vst [vmem:[#allocation3 + $0x804] sm:$0xf] %v2491
    %2556 = vst [vmem:[#allocation3 + $0x828] sm:$0xf] %v2492
    %2557 = vst [vmem:[#allocation3 + $0x84c] sm:$0xf] %v2493
    %2558 = vst [vmem:[#allocation3 + $0x870] sm:$0xf] %v2494
    %2559 = vst [vmem:[#allocation3 + $0x894] sm:$0xf] %v2495
    %2560 = vst [vmem:[#allocation3 + $0x8b8] sm:$0xf] %v2496
    %2561 = vst [vmem:[#allocation3 + $0x8dc] sm:$0xf] %v2497
    %v2562 = vld [vmem:[#allocation2] sm:$0xf]
    %v2563 = vld [vmem:[#allocation2 + $0x4] sm:$0xf]
    %v2564 = vld [vmem:[#allocation2 + $0x8] sm:$0x1]
    %v2565 = vld [vmem:[#allocation2 + $0xc] sm:$0xf]
    %v2566 = vld [vmem:[#allocation2 + $0x10] sm:$0xf]
    %v2567 = vld [vmem:[#allocation2 + $0x14] sm:$0x1]
    %v2568 = vld [vmem:[#allocation2 + $0x18] sm:$0xf]
    %v2569 = vld [vmem:[#allocation2 + $0x1c] sm:$0xf]
    %v2570 = vld [vmem:[#allocation2 + $0x20] sm:$0x1]
    %v2571 = vld [vmem:[#allocation2 + $0x24] sm:$0xf]
    %v2572 = vld [vmem:[#allocation2 + $0x28] sm:$0xf]
    %v2573 = vld [vmem:[#allocation2 + $0x2c] sm:$0x1]
    %v2574 = vld [vmem:[#allocation2 + $0x30] sm:$0xf]
    %v2575 = vld [vmem:[#allocation2 + $0x34] sm:$0xf]
    %v2576 = vld [vmem:[#allocation2 + $0x38] sm:$0x1]
    %v2577 = vld [vmem:[#allocation2 + $0x3c] sm:$0xf]
    %v2578 = vld [vmem:[#allocation2 + $0x40] sm:$0xf]
    %v2579 = vld [vmem:[#allocation2 + $0x44] sm:$0x1]
    %v2580 = vld [vmem:[#allocation2 + $0x48] sm:$0xf]
    %v2581 = vld [vmem:[#allocation2 + $0x4c] sm:$0xf]
    %v2582 = vld [vmem:[#allocation2 + $0x50] sm:$0x1]
    %v2583 = vld [vmem:[#allocation2 + $0x54] sm:$0xf]
    %v2584 = vld [vmem:[#allocation2 + $0x58] sm:$0xf]
    %v2585 = vld [vmem:[#allocation2 + $0x5c] sm:$0x1]
    %v2586 = vld [vmem:[#allocation2 + $0x60] sm:$0xf]
    %v2587 = vld [vmem:[#allocation2 + $0x64] sm:$0xf]
    %v2588 = vld [vmem:[#allocation2 + $0x68] sm:$0x1]
    %v2589 = vld [vmem:[#allocation2 + $0x6c] sm:$0xf]
    %v2590 = vld [vmem:[#allocation2 + $0x70] sm:$0xf]
    %v2591 = vld [vmem:[#allocation2 + $0x74] sm:$0x1]
    %v2592 = vld [vmem:[#allocation2 + $0x78] sm:$0xf]
    %v2593 = vld [vmem:[#allocation2 + $0x7c] sm:$0xf]
    %v2594 = vld [vmem:[#allocation2 + $0x80] sm:$0x1]
    %v2595 = vld [vmem:[#allocation2 + $0x84] sm:$0xf]
    %v2596 = vld [vmem:[#allocation2 + $0x88] sm:$0xf]
    %v2597 = vld [vmem:[#allocation2 + $0x8c] sm:$0x1]
    %v2598 = vld [vmem:[#allocation2 + $0x90] sm:$0xf]
    %v2599 = vld [vmem:[#allocation2 + $0x94] sm:$0xf]
    %v2600 = vld [vmem:[#allocation2 + $0x98] sm:$0x1]
    %v2601 = vld [vmem:[#allocation2 + $0x9c] sm:$0xf]
    %v2602 = vld [vmem:[#allocation2 + $0xa0] sm:$0xf]
    %v2603 = vld [vmem:[#allocation2 + $0xa4] sm:$0x1]
    %v2604 = vld [vmem:[#allocation2 + $0xa8] sm:$0xf]
    %v2605 = vld [vmem:[#allocation2 + $0xac] sm:$0xf]
    %v2606 = vld [vmem:[#allocation2 + $0xb0] sm:$0x1]
    %v2607 = vld [vmem:[#allocation2 + $0xb4] sm:$0xf]
    %v2608 = vld [vmem:[#allocation2 + $0xb8] sm:$0xf]
    %v2609 = vld [vmem:[#allocation2 + $0xbc] sm:$0x1]
    %v2610 = vld [vmem:[#allocation2 + $0xd8] sm:$0xf]
    %v2611 = vld [vmem:[#allocation2 + $0xdc] sm:$0xf]
    %v2612 = vld [vmem:[#allocation2 + $0xe0] sm:$0x1]
    %v2613 = vld [vmem:[#allocation2 + $0xe4] sm:$0xf]
    %v2614 = vld [vmem:[#allocation2 + $0xe8] sm:$0xf]
    %v2615 = vld [vmem:[#allocation2 + $0xec] sm:$0x1]
    %v2616 = vld [vmem:[#allocation2 + $0xf0] sm:$0xf]
    %v2617 = vld [vmem:[#allocation2 + $0xf4] sm:$0xf]
    %v2618 = vld [vmem:[#allocation2 + $0xf8] sm:$0x1]
    %v2619 = vld [vmem:[#allocation2 + $0xfc] sm:$0xf]
    %v2620 = vld [vmem:[#allocation2 + $0x100] sm:$0xf]
    %v2621 = vld [vmem:[#allocation2 + $0x104] sm:$0x1]
    %v2622 = vld [vmem:[#allocation2 + $0x108] sm:$0xf]
    %v2623 = vld [vmem:[#allocation2 + $0x10c] sm:$0xf]
    %v2624 = vld [vmem:[#allocation2 + $0x110] sm:$0x1]
    %v2625 = vld [vmem:[#allocation2 + $0x114] sm:$0xf]
    %v2626 = vld [vmem:[#allocation2 + $0x118] sm:$0xf]
    %v2627 = vld [vmem:[#allocation2 + $0x11c] sm:$0x1]
    %v2628 = vld [vmem:[#allocation2 + $0x120] sm:$0xf]
    %v2629 = vld [vmem:[#allocation2 + $0x124] sm:$0xf]
    %v2630 = vld [vmem:[#allocation2 + $0x128] sm:$0x1]
    %v2631 = vld [vmem:[#allocation2 + $0x12c] sm:$0xf]
    %v2632 = vld [vmem:[#allocation2 + $0x130] sm:$0xf]
    %v2633 = vld [vmem:[#allocation2 + $0x134] sm:$0x1]
    %v2634 = vld [vmem:[#allocation2 + $0x138] sm:$0xf]
    %v2635 = vld [vmem:[#allocation2 + $0x13c] sm:$0xf]
    %v2636 = vld [vmem:[#allocation2 + $0x140] sm:$0x1]
    %v2637 = vld [vmem:[#allocation2 + $0x144] sm:$0xf]
    %v2638 = vld [vmem:[#allocation2 + $0x148] sm:$0xf]
    %v2639 = vld [vmem:[#allocation2 + $0x14c] sm:$0x1]
    %v2640 = vld [vmem:[#allocation2 + $0x150] sm:$0xf]
    %v2641 = vld [vmem:[#allocation2 + $0x154] sm:$0xf]
    %v2642 = vld [vmem:[#allocation2 + $0x158] sm:$0x1]
    %v2643 = vld [vmem:[#allocation2 + $0x15c] sm:$0xf]
    %v2644 = vld [vmem:[#allocation2 + $0x160] sm:$0xf]
    %v2645 = vld [vmem:[#allocation2 + $0x164] sm:$0x1]
    %v2646 = vld [vmem:[#allocation2 + $0x168] sm:$0xf]
    %v2647 = vld [vmem:[#allocation2 + $0x16c] sm:$0xf]
    %v2648 = vld [vmem:[#allocation2 + $0x170] sm:$0x1]
    %v2649 = vld [vmem:[#allocation2 + $0x174] sm:$0xf]
    %v2650 = vld [vmem:[#allocation2 + $0x178] sm:$0xf]
    %v2651 = vld [vmem:[#allocation2 + $0x17c] sm:$0x1]
    %v2652 = vld [vmem:[#allocation2 + $0x180] sm:$0xf]
    %v2653 = vld [vmem:[#allocation2 + $0x184] sm:$0xf]
    %v2654 = vld [vmem:[#allocation2 + $0x188] sm:$0x1]
    %v2655 = vld [vmem:[#allocation2 + $0x18c] sm:$0xf]
    %v2656 = vld [vmem:[#allocation2 + $0x190] sm:$0xf]
    %v2657 = vld [vmem:[#allocation2 + $0x194] sm:$0x1]
    %vm2658 = vsmask.f32 3328
    %vm2659 = vsmask.f32 7440
    %vm2660 = vmor %vm2658, %vm2659
    %v2662 = vshrl.u32 %v2562, 16
    %v2664 = vrot.slane %v2662, 4
    %v2665 = vshll.u32 %v2562, 16
    %v2667 = vrot.slane %v2665, 5
    %v2668 = vor.u32 %v2664, %v2667
    %v2669 = vrot.slane %v2668, 4
    %v2671 = vshll.u32 %v2563, 16
    %v2673 = vrot.slane %v2671, 5
    %v2674 = vsel %vm2660, %v2669, %v2673
    %v2675 = vshrl.u32 %v2563, 16
    %v2677 = vrot.slane %v2675, 4
    %v2678 = vor.u32 %v2677, %v2673
    %v2679 = vrot.slane %v2678, 4
    %v2681 = vshll.u32 %v2564, 16
    %v2683 = vrot.slane %v2681, 5
    %v2684 = vsel %vm2660, %v2679, %v2683
    %v2686 = vshrl.u32 %v2565, 16
    %v2688 = vrot.slane %v2686, 4
    %v2689 = vshll.u32 %v2565, 16
    %v2691 = vrot.slane %v2689, 5
    %v2692 = vor.u32 %v2688, %v2691
    %v2693 = vrot.slane %v2692, 4
    %v2695 = vshll.u32 %v2566, 16
    %v2697 = vrot.slane %v2695, 5
    %v2698 = vsel %vm2660, %v2693, %v2697
    %v2699 = vshrl.u32 %v2566, 16
    %v2701 = vrot.slane %v2699, 4
    %v2702 = vor.u32 %v2701, %v2697
    %v2703 = vrot.slane %v2702, 4
    %v2705 = vshll.u32 %v2567, 16
    %v2707 = vrot.slane %v2705, 5
    %v2708 = vsel %vm2660, %v2703, %v2707
    %v2710 = vshrl.u32 %v2568, 16
    %v2712 = vrot.slane %v2710, 4
    %v2713 = vshll.u32 %v2568, 16
    %v2715 = vrot.slane %v2713, 5
    %v2716 = vor.u32 %v2712, %v2715
    %v2717 = vrot.slane %v2716, 4
    %v2719 = vshll.u32 %v2569, 16
    %v2721 = vrot.slane %v2719, 5
    %v2722 = vsel %vm2660, %v2717, %v2721
    %v2723 = vshrl.u32 %v2569, 16
    %v2725 = vrot.slane %v2723, 4
    %v2726 = vor.u32 %v2725, %v2721
    %v2727 = vrot.slane %v2726, 4
    %v2729 = vshll.u32 %v2570, 16
    %v2731 = vrot.slane %v2729, 5
    %v2732 = vsel %vm2660, %v2727, %v2731
    %v2734 = vshrl.u32 %v2571, 16
    %v2736 = vrot.slane %v2734, 4
    %v2737 = vshll.u32 %v2571, 16
    %v2739 = vrot.slane %v2737, 5
    %v2740 = vor.u32 %v2736, %v2739
    %v2741 = vrot.slane %v2740, 4
    %v2743 = vshll.u32 %v2572, 16
    %v2745 = vrot.slane %v2743, 5
    %v2746 = vsel %vm2660, %v2741, %v2745
    %v2747 = vshrl.u32 %v2572, 16
    %v2749 = vrot.slane %v2747, 4
    %v2750 = vor.u32 %v2749, %v2745
    %v2751 = vrot.slane %v2750, 4
    %v2753 = vshll.u32 %v2573, 16
    %v2755 = vrot.slane %v2753, 5
    %v2756 = vsel %vm2660, %v2751, %v2755
    %v2758 = vshrl.u32 %v2574, 16
    %v2760 = vrot.slane %v2758, 4
    %v2761 = vshll.u32 %v2574, 16
    %v2763 = vrot.slane %v2761, 5
    %v2764 = vor.u32 %v2760, %v2763
    %v2765 = vrot.slane %v2764, 4
    %v2767 = vshll.u32 %v2575, 16
    %v2769 = vrot.slane %v2767, 5
    %v2770 = vsel %vm2660, %v2765, %v2769
    %v2771 = vshrl.u32 %v2575, 16
    %v2773 = vrot.slane %v2771, 4
    %v2774 = vor.u32 %v2773, %v2769
    %v2775 = vrot.slane %v2774, 4
    %v2777 = vshll.u32 %v2576, 16
    %v2779 = vrot.slane %v2777, 5
    %v2780 = vsel %vm2660, %v2775, %v2779
    %v2782 = vshrl.u32 %v2577, 16
    %v2784 = vrot.slane %v2782, 4
    %v2785 = vshll.u32 %v2577, 16
    %v2787 = vrot.slane %v2785, 5
    %v2788 = vor.u32 %v2784, %v2787
    %v2789 = vrot.slane %v2788, 4
    %v2791 = vshll.u32 %v2578, 16
    %v2793 = vrot.slane %v2791, 5
    %v2794 = vsel %vm2660, %v2789, %v2793
    %v2795 = vshrl.u32 %v2578, 16
    %v2797 = vrot.slane %v2795, 4
    %v2798 = vor.u32 %v2797, %v2793
    %v2799 = vrot.slane %v2798, 4
    %v2801 = vshll.u32 %v2579, 16
    %v2803 = vrot.slane %v2801, 5
    %v2804 = vsel %vm2660, %v2799, %v2803
    %v2806 = vshrl.u32 %v2580, 16
    %v2808 = vrot.slane %v2806, 4
    %v2809 = vshll.u32 %v2580, 16
    %v2811 = vrot.slane %v2809, 5
    %v2812 = vor.u32 %v2808, %v2811
    %v2813 = vrot.slane %v2812, 4
    %v2815 = vshll.u32 %v2581, 16
    %v2817 = vrot.slane %v2815, 5
    %v2818 = vsel %vm2660, %v2813, %v2817
    %v2819 = vshrl.u32 %v2581, 16
    %v2821 = vrot.slane %v2819, 4
    %v2822 = vor.u32 %v2821, %v2817
    %v2823 = vrot.slane %v2822, 4
    %v2825 = vshll.u32 %v2582, 16
    %v2827 = vrot.slane %v2825, 5
    %v2828 = vsel %vm2660, %v2823, %v2827
    %v2830 = vshrl.u32 %v2583, 16
    %v2832 = vrot.slane %v2830, 4
    %v2833 = vshll.u32 %v2583, 16
    %v2835 = vrot.slane %v2833, 5
    %v2836 = vor.u32 %v2832, %v2835
    %v2837 = vrot.slane %v2836, 4
    %v2839 = vshll.u32 %v2584, 16
    %v2841 = vrot.slane %v2839, 5
    %v2842 = vsel %vm2660, %v2837, %v2841
    %v2843 = vshrl.u32 %v2584, 16
    %v2845 = vrot.slane %v2843, 4
    %v2846 = vor.u32 %v2845, %v2841
    %v2847 = vrot.slane %v2846, 4
    %v2849 = vshll.u32 %v2585, 16
    %v2851 = vrot.slane %v2849, 5
    %v2852 = vsel %vm2660, %v2847, %v2851
    %v2854 = vshrl.u32 %v2586, 16
    %v2856 = vrot.slane %v2854, 4
    %v2857 = vshll.u32 %v2586, 16
    %v2859 = vrot.slane %v2857, 5
    %v2860 = vor.u32 %v2856, %v2859
    %v2861 = vrot.slane %v2860, 4
    %v2863 = vshll.u32 %v2587, 16
    %v2865 = vrot.slane %v2863, 5
    %v2866 = vsel %vm2660, %v2861, %v2865
    %v2867 = vshrl.u32 %v2587, 16
    %v2869 = vrot.slane %v2867, 4
    %v2870 = vor.u32 %v2869, %v2865
    %v2871 = vrot.slane %v2870, 4
    %v2873 = vshll.u32 %v2588, 16
    %v2875 = vrot.slane %v2873, 5
    %v2876 = vsel %vm2660, %v2871, %v2875
    %v2878 = vshrl.u32 %v2589, 16
    %v2880 = vrot.slane %v2878, 4
    %v2881 = vshll.u32 %v2589, 16
    %v2883 = vrot.slane %v2881, 5
    %v2884 = vor.u32 %v2880, %v2883
    %v2885 = vrot.slane %v2884, 4
    %v2887 = vshll.u32 %v2590, 16
    %v2889 = vrot.slane %v2887, 5
    %v2890 = vsel %vm2660, %v2885, %v2889
    %v2891 = vshrl.u32 %v2590, 16
    %v2893 = vrot.slane %v2891, 4
    %v2894 = vor.u32 %v2893, %v2889
    %v2895 = vrot.slane %v2894, 4
    %v2897 = vshll.u32 %v2591, 16
    %v2899 = vrot.slane %v2897, 5
    %v2900 = vsel %vm2660, %v2895, %v2899
    %v2902 = vshrl.u32 %v2592, 16
    %v2904 = vrot.slane %v2902, 4
    %v2905 = vshll.u32 %v2592, 16
    %v2907 = vrot.slane %v2905, 5
    %v2908 = vor.u32 %v2904, %v2907
    %v2909 = vrot.slane %v2908, 4
    %v2911 = vshll.u32 %v2593, 16
    %v2913 = vrot.slane %v2911, 5
    %v2914 = vsel %vm2660, %v2909, %v2913
    %v2915 = vshrl.u32 %v2593, 16
    %v2917 = vrot.slane %v2915, 4
    %v2918 = vor.u32 %v2917, %v2913
    %v2919 = vrot.slane %v2918, 4
    %v2921 = vshll.u32 %v2594, 16
    %v2923 = vrot.slane %v2921, 5
    %v2924 = vsel %vm2660, %v2919, %v2923
    %v2926 = vshrl.u32 %v2595, 16
    %v2928 = vrot.slane %v2926, 4
    %v2929 = vshll.u32 %v2595, 16
    %v2931 = vrot.slane %v2929, 5
    %v2932 = vor.u32 %v2928, %v2931
    %v2933 = vrot.slane %v2932, 4
    %v2935 = vshll.u32 %v2596, 16
    %v2937 = vrot.slane %v2935, 5
    %v2938 = vsel %vm2660, %v2933, %v2937
    %v2939 = vshrl.u32 %v2596, 16
    %v2941 = vrot.slane %v2939, 4
    %v2942 = vor.u32 %v2941, %v2937
    %v2943 = vrot.slane %v2942, 4
    %v2945 = vshll.u32 %v2597, 16
    %v2947 = vrot.slane %v2945, 5
    %v2948 = vsel %vm2660, %v2943, %v2947
    %v2950 = vshrl.u32 %v2598, 16
    %v2952 = vrot.slane %v2950, 4
    %v2953 = vshll.u32 %v2598, 16
    %v2955 = vrot.slane %v2953, 5
    %v2956 = vor.u32 %v2952, %v2955
    %v2957 = vrot.slane %v2956, 4
    %v2959 = vshll.u32 %v2599, 16
    %v2961 = vrot.slane %v2959, 5
    %v2962 = vsel %vm2660, %v2957, %v2961
    %v2963 = vshrl.u32 %v2599, 16
    %v2965 = vrot.slane %v2963, 4
    %v2966 = vor.u32 %v2965, %v2961
    %v2967 = vrot.slane %v2966, 4
    %v2969 = vshll.u32 %v2600, 16
    %v2971 = vrot.slane %v2969, 5
    %v2972 = vsel %vm2660, %v2967, %v2971
    %v2974 = vshrl.u32 %v2601, 16
    %v2976 = vrot.slane %v2974, 4
    %v2977 = vshll.u32 %v2601, 16
    %v2979 = vrot.slane %v2977, 5
    %v2980 = vor.u32 %v2976, %v2979
    %v2981 = vrot.slane %v2980, 4
    %v2983 = vshll.u32 %v2602, 16
    %v2985 = vrot.slane %v2983, 5
    %v2986 = vsel %vm2660, %v2981, %v2985
    %v2987 = vshrl.u32 %v2602, 16
    %v2989 = vrot.slane %v2987, 4
    %v2990 = vor.u32 %v2989, %v2985
    %v2991 = vrot.slane %v2990, 4
    %v2993 = vshll.u32 %v2603, 16
    %v2995 = vrot.slane %v2993, 5
    %v2996 = vsel %vm2660, %v2991, %v2995
    %v2998 = vshrl.u32 %v2604, 16
    %v3000 = vrot.slane %v2998, 4
    %v3001 = vshll.u32 %v2604, 16
    %v3003 = vrot.slane %v3001, 5
    %v3004 = vor.u32 %v3000, %v3003
    %v3005 = vrot.slane %v3004, 4
    %v3007 = vshll.u32 %v2605, 16
    %v3009 = vrot.slane %v3007, 5
    %v3010 = vsel %vm2660, %v3005, %v3009
    %v3011 = vshrl.u32 %v2605, 16
    %v3013 = vrot.slane %v3011, 4
    %v3014 = vor.u32 %v3013, %v3009
    %v3015 = vrot.slane %v3014, 4
    %v3017 = vshll.u32 %v2606, 16
    %v3019 = vrot.slane %v3017, 5
    %v3020 = vsel %vm2660, %v3015, %v3019
    %v3022 = vshrl.u32 %v2607, 16
    %v3024 = vrot.slane %v3022, 4
    %v3025 = vshll.u32 %v2607, 16
    %v3027 = vrot.slane %v3025, 5
    %v3028 = vor.u32 %v3024, %v3027
    %v3029 = vrot.slane %v3028, 4
    %v3031 = vshll.u32 %v2608, 16
    %v3033 = vrot.slane %v3031, 5
    %v3034 = vsel %vm2660, %v3029, %v3033
    %v3035 = vshrl.u32 %v2608, 16
    %v3037 = vrot.slane %v3035, 4
    %v3038 = vor.u32 %v3037, %v3033
    %v3039 = vrot.slane %v3038, 4
    %v3041 = vshll.u32 %v2609, 16
    %v3043 = vrot.slane %v3041, 5
    %v3044 = vsel %vm2660, %v3039, %v3043
    %v3046 = vshrl.u32 %v2610, 16
    %v3048 = vrot.slane %v3046, 4
    %v3049 = vshll.u32 %v2610, 16
    %v3051 = vrot.slane %v3049, 5
    %v3052 = vor.u32 %v3048, %v3051
    %v3053 = vrot.slane %v3052, 4
    %v3055 = vshll.u32 %v2611, 16
    %v3057 = vrot.slane %v3055, 5
    %v3058 = vsel %vm2660, %v3053, %v3057
    %v3059 = vshrl.u32 %v2611, 16
    %v3061 = vrot.slane %v3059, 4
    %v3062 = vor.u32 %v3061, %v3057
    %v3063 = vrot.slane %v3062, 4
    %v3065 = vshll.u32 %v2612, 16
    %v3067 = vrot.slane %v3065, 5
    %v3068 = vsel %vm2660, %v3063, %v3067
    %v3070 = vshrl.u32 %v2613, 16
    %v3072 = vrot.slane %v3070, 4
    %v3073 = vshll.u32 %v2613, 16
    %v3075 = vrot.slane %v3073, 5
    %v3076 = vor.u32 %v3072, %v3075
    %v3077 = vrot.slane %v3076, 4
    %v3079 = vshll.u32 %v2614, 16
    %v3081 = vrot.slane %v3079, 5
    %v3082 = vsel %vm2660, %v3077, %v3081
    %v3083 = vshrl.u32 %v2614, 16
    %v3085 = vrot.slane %v3083, 4
    %v3086 = vor.u32 %v3085, %v3081
    %v3087 = vrot.slane %v3086, 4
    %v3089 = vshll.u32 %v2615, 16
    %v3091 = vrot.slane %v3089, 5
    %v3092 = vsel %vm2660, %v3087, %v3091
    %v3094 = vshrl.u32 %v2616, 16
    %v3096 = vrot.slane %v3094, 4
    %v3097 = vshll.u32 %v2616, 16
    %v3099 = vrot.slane %v3097, 5
    %v3100 = vor.u32 %v3096, %v3099
    %v3101 = vrot.slane %v3100, 4
    %v3103 = vshll.u32 %v2617, 16
    %v3105 = vrot.slane %v3103, 5
    %v3106 = vsel %vm2660, %v3101, %v3105
    %v3107 = vshrl.u32 %v2617, 16
    %v3109 = vrot.slane %v3107, 4
    %v3110 = vor.u32 %v3109, %v3105
    %v3111 = vrot.slane %v3110, 4
    %v3113 = vshll.u32 %v2618, 16
    %v3115 = vrot.slane %v3113, 5
    %v3116 = vsel %vm2660, %v3111, %v3115
    %v3118 = vshrl.u32 %v2619, 16
    %v3120 = vrot.slane %v3118, 4
    %v3121 = vshll.u32 %v2619, 16
    %v3123 = vrot.slane %v3121, 5
    %v3124 = vor.u32 %v3120, %v3123
    %v3125 = vrot.slane %v3124, 4
    %v3127 = vshll.u32 %v2620, 16
    %v3129 = vrot.slane %v3127, 5
    %v3130 = vsel %vm2660, %v3125, %v3129
    %v3131 = vshrl.u32 %v2620, 16
    %v3133 = vrot.slane %v3131, 4
    %v3134 = vor.u32 %v3133, %v3129
    %v3135 = vrot.slane %v3134, 4
    %v3137 = vshll.u32 %v2621, 16
    %v3139 = vrot.slane %v3137, 5
    %v3140 = vsel %vm2660, %v3135, %v3139
    %v3142 = vshrl.u32 %v2622, 16
    %v3144 = vrot.slane %v3142, 4
    %v3145 = vshll.u32 %v2622, 16
    %v3147 = vrot.slane %v3145, 5
    %v3148 = vor.u32 %v3144, %v3147
    %v3149 = vrot.slane %v3148, 4
    %v3151 = vshll.u32 %v2623, 16
    %v3153 = vrot.slane %v3151, 5
    %v3154 = vsel %vm2660, %v3149, %v3153
    %v3155 = vshrl.u32 %v2623, 16
    %v3157 = vrot.slane %v3155, 4
    %v3158 = vor.u32 %v3157, %v3153
    %v3159 = vrot.slane %v3158, 4
    %v3161 = vshll.u32 %v2624, 16
    %v3163 = vrot.slane %v3161, 5
    %v3164 = vsel %vm2660, %v3159, %v3163
    %v3166 = vshrl.u32 %v2625, 16
    %v3168 = vrot.slane %v3166, 4
    %v3169 = vshll.u32 %v2625, 16
    %v3171 = vrot.slane %v3169, 5
    %v3172 = vor.u32 %v3168, %v3171
    %v3173 = vrot.slane %v3172, 4
    %v3175 = vshll.u32 %v2626, 16
    %v3177 = vrot.slane %v3175, 5
    %v3178 = vsel %vm2660, %v3173, %v3177
    %v3179 = vshrl.u32 %v2626, 16
    %v3181 = vrot.slane %v3179, 4
    %v3182 = vor.u32 %v3181, %v3177
    %v3183 = vrot.slane %v3182, 4
    %v3185 = vshll.u32 %v2627, 16
    %v3187 = vrot.slane %v3185, 5
    %v3188 = vsel %vm2660, %v3183, %v3187
    %v3190 = vshrl.u32 %v2628, 16
    %v3192 = vrot.slane %v3190, 4
    %v3193 = vshll.u32 %v2628, 16
    %v3195 = vrot.slane %v3193, 5
    %v3196 = vor.u32 %v3192, %v3195
    %v3197 = vrot.slane %v3196, 4
    %v3199 = vshll.u32 %v2629, 16
    %v3201 = vrot.slane %v3199, 5
    %v3202 = vsel %vm2660, %v3197, %v3201
    %v3203 = vshrl.u32 %v2629, 16
    %v3205 = vrot.slane %v3203, 4
    %v3206 = vor.u32 %v3205, %v3201
    %v3207 = vrot.slane %v3206, 4
    %v3209 = vshll.u32 %v2630, 16
    %v3211 = vrot.slane %v3209, 5
    %v3212 = vsel %vm2660, %v3207, %v3211
    %v3214 = vshrl.u32 %v2631, 16
    %v3216 = vrot.slane %v3214, 4
    %v3217 = vshll.u32 %v2631, 16
    %v3219 = vrot.slane %v3217, 5
    %v3220 = vor.u32 %v3216, %v3219
    %v3221 = vrot.slane %v3220, 4
    %v3223 = vshll.u32 %v2632, 16
    %v3225 = vrot.slane %v3223, 5
    %v3226 = vsel %vm2660, %v3221, %v3225
    %v3227 = vshrl.u32 %v2632, 16
    %v3229 = vrot.slane %v3227, 4
    %v3230 = vor.u32 %v3229, %v3225
    %v3231 = vrot.slane %v3230, 4
    %v3233 = vshll.u32 %v2633, 16
    %v3235 = vrot.slane %v3233, 5
    %v3236 = vsel %vm2660, %v3231, %v3235
    %v3238 = vshrl.u32 %v2634, 16
    %v3240 = vrot.slane %v3238, 4
    %v3241 = vshll.u32 %v2634, 16
    %v3243 = vrot.slane %v3241, 5
    %v3244 = vor.u32 %v3240, %v3243
    %v3245 = vrot.slane %v3244, 4
    %v3247 = vshll.u32 %v2635, 16
    %v3249 = vrot.slane %v3247, 5
    %v3250 = vsel %vm2660, %v3245, %v3249
    %v3251 = vshrl.u32 %v2635, 16
    %v3253 = vrot.slane %v3251, 4
    %v3254 = vor.u32 %v3253, %v3249
    %v3255 = vrot.slane %v3254, 4
    %v3257 = vshll.u32 %v2636, 16
    %v3259 = vrot.slane %v3257, 5
    %v3260 = vsel %vm2660, %v3255, %v3259
    %v3262 = vshrl.u32 %v2637, 16
    %v3264 = vrot.slane %v3262, 4
    %v3265 = vshll.u32 %v2637, 16
    %v3267 = vrot.slane %v3265, 5
    %v3268 = vor.u32 %v3264, %v3267
    %v3269 = vrot.slane %v3268, 4
    %v3271 = vshll.u32 %v2638, 16
    %v3273 = vrot.slane %v3271, 5
    %v3274 = vsel %vm2660, %v3269, %v3273
    %v3275 = vshrl.u32 %v2638, 16
    %v3277 = vrot.slane %v3275, 4
    %v3278 = vor.u32 %v3277, %v3273
    %v3279 = vrot.slane %v3278, 4
    %v3281 = vshll.u32 %v2639, 16
    %v3283 = vrot.slane %v3281, 5
    %v3284 = vsel %vm2660, %v3279, %v3283
    %v3286 = vshrl.u32 %v2640, 16
    %v3288 = vrot.slane %v3286, 4
    %v3289 = vshll.u32 %v2640, 16
    %v3291 = vrot.slane %v3289, 5
    %v3292 = vor.u32 %v3288, %v3291
    %v3293 = vrot.slane %v3292, 4
    %v3295 = vshll.u32 %v2641, 16
    %v3297 = vrot.slane %v3295, 5
    %v3298 = vsel %vm2660, %v3293, %v3297
    %v3299 = vshrl.u32 %v2641, 16
    %v3301 = vrot.slane %v3299, 4
    %v3302 = vor.u32 %v3301, %v3297
    %v3303 = vrot.slane %v3302, 4
    %v3305 = vshll.u32 %v2642, 16
    %v3307 = vrot.slane %v3305, 5
    %v3308 = vsel %vm2660, %v3303, %v3307
    %v3310 = vshrl.u32 %v2643, 16
    %v3312 = vrot.slane %v3310, 4
    %v3313 = vshll.u32 %v2643, 16
    %v3315 = vrot.slane %v3313, 5
    %v3316 = vor.u32 %v3312, %v3315
    %v3317 = vrot.slane %v3316, 4
    %v3319 = vshll.u32 %v2644, 16
    %v3321 = vrot.slane %v3319, 5
    %v3322 = vsel %vm2660, %v3317, %v3321
    %v3323 = vshrl.u32 %v2644, 16
    %v3325 = vrot.slane %v3323, 4
    %v3326 = vor.u32 %v3325, %v3321
    %v3327 = vrot.slane %v3326, 4
    %v3329 = vshll.u32 %v2645, 16
    %v3331 = vrot.slane %v3329, 5
    %v3332 = vsel %vm2660, %v3327, %v3331
    %v3334 = vshrl.u32 %v2646, 16
    %v3336 = vrot.slane %v3334, 4
    %v3337 = vshll.u32 %v2646, 16
    %v3339 = vrot.slane %v3337, 5
    %v3340 = vor.u32 %v3336, %v3339
    %v3341 = vrot.slane %v3340, 4
    %v3343 = vshll.u32 %v2647, 16
    %v3345 = vrot.slane %v3343, 5
    %v3346 = vsel %vm2660, %v3341, %v3345
    %v3347 = vshrl.u32 %v2647, 16
    %v3349 = vrot.slane %v3347, 4
    %v3350 = vor.u32 %v3349, %v3345
    %v3351 = vrot.slane %v3350, 4
    %v3353 = vshll.u32 %v2648, 16
    %v3355 = vrot.slane %v3353, 5
    %v3356 = vsel %vm2660, %v3351, %v3355
    %v3358 = vshrl.u32 %v2649, 16
    %v3360 = vrot.slane %v3358, 4
    %v3361 = vshll.u32 %v2649, 16
    %v3363 = vrot.slane %v3361, 5
    %v3364 = vor.u32 %v3360, %v3363
    %v3365 = vrot.slane %v3364, 4
    %v3367 = vshll.u32 %v2650, 16
    %v3369 = vrot.slane %v3367, 5
    %v3370 = vsel %vm2660, %v3365, %v3369
    %v3371 = vshrl.u32 %v2650, 16
    %v3373 = vrot.slane %v3371, 4
    %v3374 = vor.u32 %v3373, %v3369
    %v3375 = vrot.slane %v3374, 4
    %v3377 = vshll.u32 %v2651, 16
    %v3379 = vrot.slane %v3377, 5
    %v3380 = vsel %vm2660, %v3375, %v3379
    %v3382 = vshrl.u32 %v2652, 16
    %v3384 = vrot.slane %v3382, 4
    %v3385 = vshll.u32 %v2652, 16
    %v3387 = vrot.slane %v3385, 5
    %v3388 = vor.u32 %v3384, %v3387
    %v3389 = vrot.slane %v3388, 4
    %v3391 = vshll.u32 %v2653, 16
    %v3393 = vrot.slane %v3391, 5
    %v3394 = vsel %vm2660, %v3389, %v3393
    %v3395 = vshrl.u32 %v2653, 16
    %v3397 = vrot.slane %v3395, 4
    %v3398 = vor.u32 %v3397, %v3393
    %v3399 = vrot.slane %v3398, 4
    %v3401 = vshll.u32 %v2654, 16
    %v3403 = vrot.slane %v3401, 5
    %v3404 = vsel %vm2660, %v3399, %v3403
    %v3406 = vshrl.u32 %v2655, 16
    %v3408 = vrot.slane %v3406, 4
    %v3409 = vshll.u32 %v2655, 16
    %v3411 = vrot.slane %v3409, 5
    %v3412 = vor.u32 %v3408, %v3411
    %v3413 = vrot.slane %v3412, 4
    %v3415 = vshll.u32 %v2656, 16
    %v3417 = vrot.slane %v3415, 5
    %v3418 = vsel %vm2660, %v3413, %v3417
    %v3419 = vshrl.u32 %v2656, 16
    %v3421 = vrot.slane %v3419, 4
    %v3422 = vor.u32 %v3421, %v3417
    %v3423 = vrot.slane %v3422, 4
    %v3425 = vshll.u32 %v2657, 16
    %v3427 = vrot.slane %v3425, 5
    %v3428 = vsel %vm2660, %v3423, %v3427
    %3493 = vst [vmem:[#allocation3 + $0x4] sm:$0xf] %v2674
    %3494 = vst [vmem:[#allocation3 + $0x28] sm:$0xf] %v2684
    %3495 = vst [vmem:[#allocation3 + $0x4c] sm:$0xf] %v2698
    %3496 = vst [vmem:[#allocation3 + $0x70] sm:$0xf] %v2708
    %3497 = vst [vmem:[#allocation3 + $0x94] sm:$0xf] %v2722
    %3498 = vst [vmem:[#allocation3 + $0xb8] sm:$0xf] %v2732
    %3499 = vst [vmem:[#allocation3 + $0xdc] sm:$0xf] %v2746
    %3500 = vst [vmem:[#allocation3 + $0x100] sm:$0xf] %v2756
    %3501 = vst [vmem:[#allocation3 + $0x124] sm:$0xf] %v2770
    %3502 = vst [vmem:[#allocation3 + $0x148] sm:$0xf] %v2780
    %3503 = vst [vmem:[#allocation3 + $0x16c] sm:$0xf] %v2794
    %3504 = vst [vmem:[#allocation3 + $0x190] sm:$0xf] %v2804
    %3505 = vst [vmem:[#allocation3 + $0x1b4] sm:$0xf] %v2818
    %3506 = vst [vmem:[#allocation3 + $0x1d8] sm:$0xf] %v2828
    %3507 = vst [vmem:[#allocation3 + $0x1fc] sm:$0xf] %v2842
    %3508 = vst [vmem:[#allocation3 + $0x220] sm:$0xf] %v2852
    %3509 = vst [vmem:[#allocation3 + $0x244] sm:$0xf] %v2866
    %3510 = vst [vmem:[#allocation3 + $0x268] sm:$0xf] %v2876
    %3511 = vst [vmem:[#allocation3 + $0x28c] sm:$0xf] %v2890
    %3512 = vst [vmem:[#allocation3 + $0x2b0] sm:$0xf] %v2900
    %3513 = vst [vmem:[#allocation3 + $0x2d4] sm:$0xf] %v2914
    %3514 = vst [vmem:[#allocation3 + $0x2f8] sm:$0xf] %v2924
    %3515 = vst [vmem:[#allocation3 + $0x31c] sm:$0xf] %v2938
    %3516 = vst [vmem:[#allocation3 + $0x340] sm:$0xf] %v2948
    %3517 = vst [vmem:[#allocation3 + $0x364] sm:$0xf] %v2962
    %3518 = vst [vmem:[#allocation3 + $0x388] sm:$0xf] %v2972
    %3519 = vst [vmem:[#allocation3 + $0x3ac] sm:$0xf] %v2986
    %3520 = vst [vmem:[#allocation3 + $0x3d0] sm:$0xf] %v2996
    %3521 = vst [vmem:[#allocation3 + $0x3f4] sm:$0xf] %v3010
    %3522 = vst [vmem:[#allocation3 + $0x418] sm:$0xf] %v3020
    %3523 = vst [vmem:[#allocation3 + $0x43c] sm:$0xf] %v3034
    %3524 = vst [vmem:[#allocation3 + $0x460] sm:$0xf] %v3044
    %3525 = vst [vmem:[#allocation3 + $0x484] sm:$0xf] %v3058
    %3526 = vst [vmem:[#allocation3 + $0x4a8] sm:$0xf] %v3068
    %3527 = vst [vmem:[#allocation3 + $0x4cc] sm:$0xf] %v3082
    %3528 = vst [vmem:[#allocation3 + $0x4f0] sm:$0xf] %v3092
    %3529 = vst [vmem:[#allocation3 + $0x514] sm:$0xf] %v3106
    %3530 = vst [vmem:[#allocation3 + $0x538] sm:$0xf] %v3116
    %3531 = vst [vmem:[#allocation3 + $0x55c] sm:$0xf] %v3130
    %3532 = vst [vmem:[#allocation3 + $0x580] sm:$0xf] %v3140
    %3533 = vst [vmem:[#allocation3 + $0x5a4] sm:$0xf] %v3154
    %3534 = vst [vmem:[#allocation3 + $0x5c8] sm:$0xf] %v3164
    %3535 = vst [vmem:[#allocation3 + $0x5ec] sm:$0xf] %v3178
    %3536 = vst [vmem:[#allocation3 + $0x610] sm:$0xf] %v3188
    %3537 = vst [vmem:[#allocation3 + $0x634] sm:$0xf] %v3202
    %3538 = vst [vmem:[#allocation3 + $0x658] sm:$0xf] %v3212
    %3539 = vst [vmem:[#allocation3 + $0x67c] sm:$0xf] %v3226
    %3540 = vst [vmem:[#allocation3 + $0x6a0] sm:$0xf] %v3236
    %3541 = vst [vmem:[#allocation3 + $0x6c4] sm:$0xf] %v3250
    %3542 = vst [vmem:[#allocation3 + $0x6e8] sm:$0xf] %v3260
    %3543 = vst [vmem:[#allocation3 + $0x70c] sm:$0xf] %v3274
    %3544 = vst [vmem:[#allocation3 + $0x730] sm:$0xf] %v3284
    %3545 = vst [vmem:[#allocation3 + $0x754] sm:$0xf] %v3298
    %3546 = vst [vmem:[#allocation3 + $0x778] sm:$0xf] %v3308
    %3547 = vst [vmem:[#allocation3 + $0x79c] sm:$0xf] %v3322
    %3548 = vst [vmem:[#allocation3 + $0x7c0] sm:$0xf] %v3332
    %3549 = vst [vmem:[#allocation3 + $0x7e4] sm:$0xf] %v3346
    %3550 = vst [vmem:[#allocation3 + $0x808] sm:$0xf] %v3356
    %3551 = vst [vmem:[#allocation3 + $0x82c] sm:$0xf] %v3370
    %3552 = vst [vmem:[#allocation3 + $0x850] sm:$0xf] %v3380
    %3553 = vst [vmem:[#allocation3 + $0x874] sm:$0xf] %v3394
    %3554 = vst [vmem:[#allocation3 + $0x898] sm:$0xf] %v3404
    %3555 = vst [vmem:[#allocation3 + $0x8bc] sm:$0xf] %v3418
    %3556 = vst [vmem:[#allocation3 + $0x8e0] sm:$0xf] %v3428
    %v3557 = vld [vmem:[#allocation2] sm:$0xe]
    %v3558 = vld [vmem:[#allocation2 + $0x4] sm:$0xf]
    %v3559 = vld [vmem:[#allocation2 + $0x8] sm:$0x1]
    %v3560 = vld [vmem:[#allocation2 + $0xc] sm:$0xe]
    %v3561 = vld [vmem:[#allocation2 + $0x10] sm:$0xf]
    %v3562 = vld [vmem:[#allocation2 + $0x14] sm:$0x1]
    %v3563 = vld [vmem:[#allocation2 + $0x18] sm:$0xe]
    %v3564 = vld [vmem:[#allocation2 + $0x1c] sm:$0xf]
    %v3565 = vld [vmem:[#allocation2 + $0x20] sm:$0x1]
    %v3566 = vld [vmem:[#allocation2 + $0x24] sm:$0xe]
    %v3567 = vld [vmem:[#allocation2 + $0x28] sm:$0xf]
    %v3568 = vld [vmem:[#allocation2 + $0x2c] sm:$0x1]
    %v3569 = vld [vmem:[#allocation2 + $0x30] sm:$0xe]
    %v3570 = vld [vmem:[#allocation2 + $0x34] sm:$0xf]
    %v3571 = vld [vmem:[#allocation2 + $0x38] sm:$0x1]
    %v3572 = vld [vmem:[#allocation2 + $0x3c] sm:$0xe]
    %v3573 = vld [vmem:[#allocation2 + $0x40] sm:$0xf]
    %v3574 = vld [vmem:[#allocation2 + $0x44] sm:$0x1]
    %v3575 = vld [vmem:[#allocation2 + $0x48] sm:$0xe]
    %v3576 = vld [vmem:[#allocation2 + $0x4c] sm:$0xf]
    %v3577 = vld [vmem:[#allocation2 + $0x50] sm:$0x1]
    %v3578 = vld [vmem:[#allocation2 + $0x54] sm:$0xe]
    %v3579 = vld [vmem:[#allocation2 + $0x58] sm:$0xf]
    %v3580 = vld [vmem:[#allocation2 + $0x5c] sm:$0x1]
    %v3581 = vld [vmem:[#allocation2 + $0x60] sm:$0xe]
    %v3582 = vld [vmem:[#allocation2 + $0x64] sm:$0xf]
    %v3583 = vld [vmem:[#allocation2 + $0x68] sm:$0x1]
    %v3584 = vld [vmem:[#allocation2 + $0x6c] sm:$0xe]
    %v3585 = vld [vmem:[#allocation2 + $0x70] sm:$0xf]
    %v3586 = vld [vmem:[#allocation2 + $0x74] sm:$0x1]
    %v3587 = vld [vmem:[#allocation2 + $0x78] sm:$0xe]
    %v3588 = vld [vmem:[#allocation2 + $0x7c] sm:$0xf]
    %v3589 = vld [vmem:[#allocation2 + $0x80] sm:$0x1]
    %v3590 = vld [vmem:[#allocation2 + $0x84] sm:$0xe]
    %v3591 = vld [vmem:[#allocation2 + $0x88] sm:$0xf]
    %v3592 = vld [vmem:[#allocation2 + $0x8c] sm:$0x1]
    %v3593 = vld [vmem:[#allocation2 + $0x90] sm:$0xe]
    %v3594 = vld [vmem:[#allocation2 + $0x94] sm:$0xf]
    %v3595 = vld [vmem:[#allocation2 + $0x98] sm:$0x1]
    %v3596 = vld [vmem:[#allocation2 + $0x9c] sm:$0xe]
    %v3597 = vld [vmem:[#allocation2 + $0xa0] sm:$0xf]
    %v3598 = vld [vmem:[#allocation2 + $0xa4] sm:$0x1]
    %v3599 = vld [vmem:[#allocation2 + $0xa8] sm:$0xe]
    %v3600 = vld [vmem:[#allocation2 + $0xac] sm:$0xf]
    %v3601 = vld [vmem:[#allocation2 + $0xb0] sm:$0x1]
    %v3602 = vld [vmem:[#allocation2 + $0xb4] sm:$0xe]
    %v3603 = vld [vmem:[#allocation2 + $0xb8] sm:$0xf]
    %v3604 = vld [vmem:[#allocation2 + $0xbc] sm:$0x1]
    %v3605 = vld [vmem:[#allocation2 + $0xd8] sm:$0xe]
    %v3606 = vld [vmem:[#allocation2 + $0xdc] sm:$0xf]
    %v3607 = vld [vmem:[#allocation2 + $0xe0] sm:$0x1]
    %v3608 = vld [vmem:[#allocation2 + $0xe4] sm:$0xe]
    %v3609 = vld [vmem:[#allocation2 + $0xe8] sm:$0xf]
    %v3610 = vld [vmem:[#allocation2 + $0xec] sm:$0x1]
    %v3611 = vld [vmem:[#allocation2 + $0xf0] sm:$0xe]
    %v3612 = vld [vmem:[#allocation2 + $0xf4] sm:$0xf]
    %v3613 = vld [vmem:[#allocation2 + $0xf8] sm:$0x1]
    %v3614 = vld [vmem:[#allocation2 + $0xfc] sm:$0xe]
    %v3615 = vld [vmem:[#allocation2 + $0x100] sm:$0xf]
    %v3616 = vld [vmem:[#allocation2 + $0x104] sm:$0x1]
    %v3617 = vld [vmem:[#allocation2 + $0x108] sm:$0xe]
    %v3618 = vld [vmem:[#allocation2 + $0x10c] sm:$0xf]
    %v3619 = vld [vmem:[#allocation2 + $0x110] sm:$0x1]
    %v3620 = vld [vmem:[#allocation2 + $0x114] sm:$0xe]
    %v3621 = vld [vmem:[#allocation2 + $0x118] sm:$0xf]
    %v3622 = vld [vmem:[#allocation2 + $0x11c] sm:$0x1]
    %v3623 = vld [vmem:[#allocation2 + $0x120] sm:$0xe]
    %v3624 = vld [vmem:[#allocation2 + $0x124] sm:$0xf]
    %v3625 = vld [vmem:[#allocation2 + $0x128] sm:$0x1]
    %v3626 = vld [vmem:[#allocation2 + $0x12c] sm:$0xe]
    %v3627 = vld [vmem:[#allocation2 + $0x130] sm:$0xf]
    %v3628 = vld [vmem:[#allocation2 + $0x134] sm:$0x1]
    %v3629 = vld [vmem:[#allocation2 + $0x138] sm:$0xe]
    %v3630 = vld [vmem:[#allocation2 + $0x13c] sm:$0xf]
    %v3631 = vld [vmem:[#allocation2 + $0x140] sm:$0x1]
    %v3632 = vld [vmem:[#allocation2 + $0x144] sm:$0xe]
    %v3633 = vld [vmem:[#allocation2 + $0x148] sm:$0xf]
    %v3634 = vld [vmem:[#allocation2 + $0x14c] sm:$0x1]
    %v3635 = vld [vmem:[#allocation2 + $0x150] sm:$0xe]
    %v3636 = vld [vmem:[#allocation2 + $0x154] sm:$0xf]
    %v3637 = vld [vmem:[#allocation2 + $0x158] sm:$0x1]
    %v3638 = vld [vmem:[#allocation2 + $0x15c] sm:$0xe]
    %v3639 = vld [vmem:[#allocation2 + $0x160] sm:$0xf]
    %v3640 = vld [vmem:[#allocation2 + $0x164] sm:$0x1]
    %v3641 = vld [vmem:[#allocation2 + $0x168] sm:$0xe]
    %v3642 = vld [vmem:[#allocation2 + $0x16c] sm:$0xf]
    %v3643 = vld [vmem:[#allocation2 + $0x170] sm:$0x1]
    %v3644 = vld [vmem:[#allocation2 + $0x174] sm:$0xe]
    %v3645 = vld [vmem:[#allocation2 + $0x178] sm:$0xf]
    %v3646 = vld [vmem:[#allocation2 + $0x17c] sm:$0x1]
    %v3647 = vld [vmem:[#allocation2 + $0x180] sm:$0xe]
    %v3648 = vld [vmem:[#allocation2 + $0x184] sm:$0xf]
    %v3649 = vld [vmem:[#allocation2 + $0x188] sm:$0x1]
    %v3650 = vld [vmem:[#allocation2 + $0x18c] sm:$0xe]
    %v3651 = vld [vmem:[#allocation2 + $0x190] sm:$0xf]
    %v3652 = vld [vmem:[#allocation2 + $0x194] sm:$0x1]
    %vm3749 = vcmask 1042432
    %vm3750 = vcmask 1046532
    %vm3751 = vmor %vm3749, %vm3750
    %v3752 = vrot.slane %v3557, 5
    %v3753 = vrot.slane %v3752, 4
    %v3754 = vrot.slane %v3558, 5
    %v3755 = vsel %vm3751, %v3753, %v3754
    %v3756 = vrot.slane %v3754, 4
    %v3757 = vrot.slane %v3559, 5
    %v3758 = vsel %vm3751, %v3756, %v3757
    %v3759 = vrot.slane %v3560, 5
    %v3760 = vrot.slane %v3759, 4
    %v3761 = vrot.slane %v3561, 5
    %v3762 = vsel %vm3751, %v3760, %v3761
    %v3763 = vrot.slane %v3761, 4
    %v3764 = vrot.slane %v3562, 5
    %v3765 = vsel %vm3751, %v3763, %v3764
    %v3766 = vrot.slane %v3563, 5
    %v3767 = vrot.slane %v3766, 4
    %v3768 = vrot.slane %v3564, 5
    %v3769 = vsel %vm3751, %v3767, %v3768
    %v3770 = vrot.slane %v3768, 4
    %v3771 = vrot.slane %v3565, 5
    %v3772 = vsel %vm3751, %v3770, %v3771
    %v3773 = vrot.slane %v3566, 5
    %v3774 = vrot.slane %v3773, 4
    %v3775 = vrot.slane %v3567, 5
    %v3776 = vsel %vm3751, %v3774, %v3775
    %v3777 = vrot.slane %v3775, 4
    %v3778 = vrot.slane %v3568, 5
    %v3779 = vsel %vm3751, %v3777, %v3778
    %v3780 = vrot.slane %v3569, 5
    %v3781 = vrot.slane %v3780, 4
    %v3782 = vrot.slane %v3570, 5
    %v3783 = vsel %vm3751, %v3781, %v3782
    %v3784 = vrot.slane %v3782, 4
    %v3785 = vrot.slane %v3571, 5
    %v3786 = vsel %vm3751, %v3784, %v3785
    %v3787 = vrot.slane %v3572, 5
    %v3788 = vrot.slane %v3787, 4
    %v3789 = vrot.slane %v3573, 5
    %v3790 = vsel %vm3751, %v3788, %v3789
    %v3791 = vrot.slane %v3789, 4
    %v3792 = vrot.slane %v3574, 5
    %v3793 = vsel %vm3751, %v3791, %v3792
    %v3794 = vrot.slane %v3575, 5
    %v3795 = vrot.slane %v3794, 4
    %v3796 = vrot.slane %v3576, 5
    %v3797 = vsel %vm3751, %v3795, %v3796
    %v3798 = vrot.slane %v3796, 4
    %v3799 = vrot.slane %v3577, 5
    %v3800 = vsel %vm3751, %v3798, %v3799
    %v3801 = vrot.slane %v3578, 5
    %v3802 = vrot.slane %v3801, 4
    %v3803 = vrot.slane %v3579, 5
    %v3804 = vsel %vm3751, %v3802, %v3803
    %v3805 = vrot.slane %v3803, 4
    %v3806 = vrot.slane %v3580, 5
    %v3807 = vsel %vm3751, %v3805, %v3806
    %v3808 = vrot.slane %v3581, 5
    %v3809 = vrot.slane %v3808, 4
    %v3810 = vrot.slane %v3582, 5
    %v3811 = vsel %vm3751, %v3809, %v3810
    %v3812 = vrot.slane %v3810, 4
    %v3813 = vrot.slane %v3583, 5
    %v3814 = vsel %vm3751, %v3812, %v3813
    %v3815 = vrot.slane %v3584, 5
    %v3816 = vrot.slane %v3815, 4
    %v3817 = vrot.slane %v3585, 5
    %v3818 = vsel %vm3751, %v3816, %v3817
    %v3819 = vrot.slane %v3817, 4
    %v3820 = vrot.slane %v3586, 5
    %v3821 = vsel %vm3751, %v3819, %v3820
    %v3822 = vrot.slane %v3587, 5
    %v3823 = vrot.slane %v3822, 4
    %v3824 = vrot.slane %v3588, 5
    %v3825 = vsel %vm3751, %v3823, %v3824
    %v3826 = vrot.slane %v3824, 4
    %v3827 = vrot.slane %v3589, 5
    %v3828 = vsel %vm3751, %v3826, %v3827
    %v3829 = vrot.slane %v3590, 5
    %v3830 = vrot.slane %v3829, 4
    %v3831 = vrot.slane %v3591, 5
    %v3832 = vsel %vm3751, %v3830, %v3831
    %v3833 = vrot.slane %v3831, 4
    %v3834 = vrot.slane %v3592, 5
    %v3835 = vsel %vm3751, %v3833, %v3834
    %v3836 = vrot.slane %v3593, 5
    %v3837 = vrot.slane %v3836, 4
    %v3838 = vrot.slane %v3594, 5
    %v3839 = vsel %vm3751, %v3837, %v3838
    %v3840 = vrot.slane %v3838, 4
    %v3841 = vrot.slane %v3595, 5
    %v3842 = vsel %vm3751, %v3840, %v3841
    %v3843 = vrot.slane %v3596, 5
    %v3844 = vrot.slane %v3843, 4
    %v3845 = vrot.slane %v3597, 5
    %v3846 = vsel %vm3751, %v3844, %v3845
    %v3847 = vrot.slane %v3845, 4
    %v3848 = vrot.slane %v3598, 5
    %v3849 = vsel %vm3751, %v3847, %v3848
    %v3850 = vrot.slane %v3599, 5
    %v3851 = vrot.slane %v3850, 4
    %v3852 = vrot.slane %v3600, 5
    %v3853 = vsel %vm3751, %v3851, %v3852
    %v3854 = vrot.slane %v3852, 4
    %v3855 = vrot.slane %v3601, 5
    %v3856 = vsel %vm3751, %v3854, %v3855
    %v3857 = vrot.slane %v3602, 5
    %v3858 = vrot.slane %v3857, 4
    %v3859 = vrot.slane %v3603, 5
    %v3860 = vsel %vm3751, %v3858, %v3859
    %v3861 = vrot.slane %v3859, 4
    %v3862 = vrot.slane %v3604, 5
    %v3863 = vsel %vm3751, %v3861, %v3862
    %v3864 = vrot.slane %v3605, 5
    %v3865 = vrot.slane %v3864, 4
    %v3866 = vrot.slane %v3606, 5
    %v3867 = vsel %vm3751, %v3865, %v3866
    %v3868 = vrot.slane %v3866, 4
    %v3869 = vrot.slane %v3607, 5
    %v3870 = vsel %vm3751, %v3868, %v3869
    %v3871 = vrot.slane %v3608, 5
    %v3872 = vrot.slane %v3871, 4
    %v3873 = vrot.slane %v3609, 5
    %v3874 = vsel %vm3751, %v3872, %v3873
    %v3875 = vrot.slane %v3873, 4
    %v3876 = vrot.slane %v3610, 5
    %v3877 = vsel %vm3751, %v3875, %v3876
    %v3878 = vrot.slane %v3611, 5
    %v3879 = vrot.slane %v3878, 4
    %v3880 = vrot.slane %v3612, 5
    %v3881 = vsel %vm3751, %v3879, %v3880
    %v3882 = vrot.slane %v3880, 4
    %v3883 = vrot.slane %v3613, 5
    %v3884 = vsel %vm3751, %v3882, %v3883
    %v3885 = vrot.slane %v3614, 5
    %v3886 = vrot.slane %v3885, 4
    %v3887 = vrot.slane %v3615, 5
    %v3888 = vsel %vm3751, %v3886, %v3887
    %v3889 = vrot.slane %v3887, 4
    %v3890 = vrot.slane %v3616, 5
    %v3891 = vsel %vm3751, %v3889, %v3890
    %v3892 = vrot.slane %v3617, 5
    %v3893 = vrot.slane %v3892, 4
    %v3894 = vrot.slane %v3618, 5
    %v3895 = vsel %vm3751, %v3893, %v3894
    %v3896 = vrot.slane %v3894, 4
    %v3897 = vrot.slane %v3619, 5
    %v3898 = vsel %vm3751, %v3896, %v3897
    %v3899 = vrot.slane %v3620, 5
    %v3900 = vrot.slane %v3899, 4
    %v3901 = vrot.slane %v3621, 5
    %v3902 = vsel %vm3751, %v3900, %v3901
    %v3903 = vrot.slane %v3901, 4
    %v3904 = vrot.slane %v3622, 5
    %v3905 = vsel %vm3751, %v3903, %v3904
    %v3906 = vrot.slane %v3623, 5
    %v3907 = vrot.slane %v3906, 4
    %v3908 = vrot.slane %v3624, 5
    %v3909 = vsel %vm3751, %v3907, %v3908
    %v3910 = vrot.slane %v3908, 4
    %v3911 = vrot.slane %v3625, 5
    %v3912 = vsel %vm3751, %v3910, %v3911
    %v3913 = vrot.slane %v3626, 5
    %v3914 = vrot.slane %v3913, 4
    %v3915 = vrot.slane %v3627, 5
    %v3916 = vsel %vm3751, %v3914, %v3915
    %v3917 = vrot.slane %v3915, 4
    %v3918 = vrot.slane %v3628, 5
    %v3919 = vsel %vm3751, %v3917, %v3918
    %v3920 = vrot.slane %v3629, 5
    %v3921 = vrot.slane %v3920, 4
    %v3922 = vrot.slane %v3630, 5
    %v3923 = vsel %vm3751, %v3921, %v3922
    %v3924 = vrot.slane %v3922, 4
    %v3925 = vrot.slane %v3631, 5
    %v3926 = vsel %vm3751, %v3924, %v3925
    %v3927 = vrot.slane %v3632, 5
    %v3928 = vrot.slane %v3927, 4
    %v3929 = vrot.slane %v3633, 5
    %v3930 = vsel %vm3751, %v3928, %v3929
    %v3931 = vrot.slane %v3929, 4
    %v3932 = vrot.slane %v3634, 5
    %v3933 = vsel %vm3751, %v3931, %v3932
    %v3934 = vrot.slane %v3635, 5
    %v3935 = vrot.slane %v3934, 4
    %v3936 = vrot.slane %v3636, 5
    %v3937 = vsel %vm3751, %v3935, %v3936
    %v3938 = vrot.slane %v3936, 4
    %v3939 = vrot.slane %v3637, 5
    %v3940 = vsel %vm3751, %v3938, %v3939
    %v3941 = vrot.slane %v3638, 5
    %v3942 = vrot.slane %v3941, 4
    %v3943 = vrot.slane %v3639, 5
    %v3944 = vsel %vm3751, %v3942, %v3943
    %v3945 = vrot.slane %v3943, 4
    %v3946 = vrot.slane %v3640, 5
    %v3947 = vsel %vm3751, %v3945, %v3946
    %v3948 = vrot.slane %v3641, 5
    %v3949 = vrot.slane %v3948, 4
    %v3950 = vrot.slane %v3642, 5
    %v3951 = vsel %vm3751, %v3949, %v3950
    %v3952 = vrot.slane %v3950, 4
    %v3953 = vrot.slane %v3643, 5
    %v3954 = vsel %vm3751, %v3952, %v3953
    %v3955 = vrot.slane %v3644, 5
    %v3956 = vrot.slane %v3955, 4
    %v3957 = vrot.slane %v3645, 5
    %v3958 = vsel %vm3751, %v3956, %v3957
    %v3959 = vrot.slane %v3957, 4
    %v3960 = vrot.slane %v3646, 5
    %v3961 = vsel %vm3751, %v3959, %v3960
    %v3962 = vrot.slane %v3647, 5
    %v3963 = vrot.slane %v3962, 4
    %v3964 = vrot.slane %v3648, 5
    %v3965 = vsel %vm3751, %v3963, %v3964
    %v3966 = vrot.slane %v3964, 4
    %v3967 = vrot.slane %v3649, 5
    %v3968 = vsel %vm3751, %v3966, %v3967
    %v3969 = vrot.slane %v3650, 5
    %v3970 = vrot.slane %v3969, 4
    %v3971 = vrot.slane %v3651, 5
    %v3972 = vsel %vm3751, %v3970, %v3971
    %v3973 = vrot.slane %v3971, 4
    %v3974 = vrot.slane %v3652, 5
    %v3975 = vsel %vm3751, %v3973, %v3974
    %4040 = vst [vmem:[#allocation3 + $0x8] sm:$0xf] %v3755
    %4041 = vst [vmem:[#allocation3 + $0x2c] sm:$0xf] %v3758
    %4042 = vst [vmem:[#allocation3 + $0x50] sm:$0xf] %v3762
    %4043 = vst [vmem:[#allocation3 + $0x74] sm:$0xf] %v3765
    %4044 = vst [vmem:[#allocation3 + $0x98] sm:$0xf] %v3769
    %4045 = vst [vmem:[#allocation3 + $0xbc] sm:$0xf] %v3772
    %4046 = vst [vmem:[#allocation3 + $0xe0] sm:$0xf] %v3776
    %4047 = vst [vmem:[#allocation3 + $0x104] sm:$0xf] %v3779
    %4048 = vst [vmem:[#allocation3 + $0x128] sm:$0xf] %v3783
    %4049 = vst [vmem:[#allocation3 + $0x14c] sm:$0xf] %v3786
    %4050 = vst [vmem:[#allocation3 + $0x170] sm:$0xf] %v3790
    %4051 = vst [vmem:[#allocation3 + $0x194] sm:$0xf] %v3793
    %4052 = vst [vmem:[#allocation3 + $0x1b8] sm:$0xf] %v3797
    %4053 = vst [vmem:[#allocation3 + $0x1dc] sm:$0xf] %v3800
    %4054 = vst [vmem:[#allocation3 + $0x200] sm:$0xf] %v3804
    %4055 = vst [vmem:[#allocation3 + $0x224] sm:$0xf] %v3807
    %4056 = vst [vmem:[#allocation3 + $0x248] sm:$0xf] %v3811
    %4057 = vst [vmem:[#allocation3 + $0x26c] sm:$0xf] %v3814
    %4058 = vst [vmem:[#allocation3 + $0x290] sm:$0xf] %v3818
    %4059 = vst [vmem:[#allocation3 + $0x2b4] sm:$0xf] %v3821
    %4060 = vst [vmem:[#allocation3 + $0x2d8] sm:$0xf] %v3825
    %4061 = vst [vmem:[#allocation3 + $0x2fc] sm:$0xf] %v3828
    %4062 = vst [vmem:[#allocation3 + $0x320] sm:$0xf] %v3832
    %4063 = vst [vmem:[#allocation3 + $0x344] sm:$0xf] %v3835
    %4064 = vst [vmem:[#allocation3 + $0x368] sm:$0xf] %v3839
    %4065 = vst [vmem:[#allocation3 + $0x38c] sm:$0xf] %v3842
    %4066 = vst [vmem:[#allocation3 + $0x3b0] sm:$0xf] %v3846
    %4067 = vst [vmem:[#allocation3 + $0x3d4] sm:$0xf] %v3849
    %4068 = vst [vmem:[#allocation3 + $0x3f8] sm:$0xf] %v3853
    %4069 = vst [vmem:[#allocation3 + $0x41c] sm:$0xf] %v3856
    %4070 = vst [vmem:[#allocation3 + $0x440] sm:$0xf] %v3860
    %4071 = vst [vmem:[#allocation3 + $0x464] sm:$0xf] %v3863
    %4072 = vst [vmem:[#allocation3 + $0x488] sm:$0xf] %v3867
    %4073 = vst [vmem:[#allocation3 + $0x4ac] sm:$0xf] %v3870
    %4074 = vst [vmem:[#allocation3 + $0x4d0] sm:$0xf] %v3874
    %4075 = vst [vmem:[#allocation3 + $0x4f4] sm:$0xf] %v3877
    %4076 = vst [vmem:[#allocation3 + $0x518] sm:$0xf] %v3881
    %4077 = vst [vmem:[#allocation3 + $0x53c] sm:$0xf] %v3884
    %4078 = vst [vmem:[#allocation3 + $0x560] sm:$0xf] %v3888
    %4079 = vst [vmem:[#allocation3 + $0x584] sm:$0xf] %v3891
    %4080 = vst [vmem:[#allocation3 + $0x5a8] sm:$0xf] %v3895
    %4081 = vst [vmem:[#allocation3 + $0x5cc] sm:$0xf] %v3898
    %4082 = vst [vmem:[#allocation3 + $0x5f0] sm:$0xf] %v3902
    %4083 = vst [vmem:[#allocation3 + $0x614] sm:$0xf] %v3905
    %4084 = vst [vmem:[#allocation3 + $0x638] sm:$0xf] %v3909
    %4085 = vst [vmem:[#allocation3 + $0x65c] sm:$0xf] %v3912
    %4086 = vst [vmem:[#allocation3 + $0x680] sm:$0xf] %v3916
    %4087 = vst [vmem:[#allocation3 + $0x6a4] sm:$0xf] %v3919
    %4088 = vst [vmem:[#allocation3 + $0x6c8] sm:$0xf] %v3923
    %4089 = vst [vmem:[#allocation3 + $0x6ec] sm:$0xf] %v3926
    %4090 = vst [vmem:[#allocation3 + $0x710] sm:$0xf] %v3930
    %4091 = vst [vmem:[#allocation3 + $0x734] sm:$0xf] %v3933
    %4092 = vst [vmem:[#allocation3 + $0x758] sm:$0xf] %v3937
    %4093 = vst [vmem:[#allocation3 + $0x77c] sm:$0xf] %v3940
    %4094 = vst [vmem:[#allocation3 + $0x7a0] sm:$0xf] %v3944
    %4095 = vst [vmem:[#allocation3 + $0x7c4] sm:$0xf] %v3947
    %4096 = vst [vmem:[#allocation3 + $0x7e8] sm:$0xf] %v3951
    %4097 = vst [vmem:[#allocation3 + $0x80c] sm:$0xf] %v3954
    %4098 = vst [vmem:[#allocation3 + $0x830] sm:$0xf] %v3958
    %4099 = vst [vmem:[#allocation3 + $0x854] sm:$0xf] %v3961
    %4100 = vst [vmem:[#allocation3 + $0x878] sm:$0xf] %v3965
    %4101 = vst [vmem:[#allocation3 + $0x89c] sm:$0xf] %v3968
    %4102 = vst [vmem:[#allocation3 + $0x8c0] sm:$0xf] %v3972
    %4103 = vst [vmem:[#allocation3 + $0x8e4] sm:$0xf] %v3975
    %v4104 = vld [vmem:[%s1176] sm:$0xf]
    %v4105 = vld [vmem:[%s1176 + $0x4] sm:$0xf]
    %v4106 = vld [vmem:[%s1176 + $0xc] sm:$0xf]
    %v4107 = vld [vmem:[%s1176 + $0x10] sm:$0xf]
    %v4108 = vld [vmem:[%s1176 + $0x18] sm:$0xf]
    %v4109 = vld [vmem:[%s1176 + $0x1c] sm:$0xf]
    %v4110 = vld [vmem:[%s1176 + $0x24] sm:$0xf]
    %v4111 = vld [vmem:[%s1176 + $0x28] sm:$0xf]
    %v4112 = vld [vmem:[%s1176 + $0x30] sm:$0xf]
    %v4113 = vld [vmem:[%s1176 + $0x34] sm:$0xf]
    %v4114 = vld [vmem:[%s1176 + $0x3c] sm:$0xf]
    %v4115 = vld [vmem:[%s1176 + $0x40] sm:$0xf]
    %v4116 = vld [vmem:[%s1176 + $0x48] sm:$0xf]
    %v4117 = vld [vmem:[%s1176 + $0x4c] sm:$0xf]
    %v4118 = vld [vmem:[%s1176 + $0x54] sm:$0xf]
    %v4119 = vld [vmem:[%s1176 + $0x58] sm:$0xf]
    %v4120 = vld [vmem:[%s1176 + $0x60] sm:$0xf]
    %v4121 = vld [vmem:[%s1176 + $0x64] sm:$0xf]
    %v4122 = vld [vmem:[%s1176 + $0x6c] sm:$0xf]
    %v4123 = vld [vmem:[%s1176 + $0x70] sm:$0xf]
    %v4124 = vld [vmem:[%s1176 + $0x78] sm:$0xf]
    %v4125 = vld [vmem:[%s1176 + $0x7c] sm:$0xf]
    %v4126 = vld [vmem:[%s1176 + $0x84] sm:$0xf]
    %v4127 = vld [vmem:[%s1176 + $0x88] sm:$0xf]
    %v4128 = vld [vmem:[%s1176 + $0x90] sm:$0xf]
    %v4129 = vld [vmem:[%s1176 + $0x94] sm:$0xf]
    %v4130 = vld [vmem:[%s1176 + $0x9c] sm:$0xf]
    %v4131 = vld [vmem:[%s1176 + $0xa0] sm:$0xf]
    %v4132 = vld [vmem:[%s1176 + $0xa8] sm:$0xf]
    %v4133 = vld [vmem:[%s1176 + $0xac] sm:$0xf]
    %v4134 = vld [vmem:[%s1176 + $0xb4] sm:$0xf]
    %v4135 = vld [vmem:[%s1176 + $0xb8] sm:$0xf]
    %v4136 = vld [vmem:[%s1176 + $0xd8] sm:$0xf]
    %v4137 = vld [vmem:[%s1176 + $0xdc] sm:$0xf]
    %v4138 = vld [vmem:[%s1176 + $0xe4] sm:$0xf]
    %v4139 = vld [vmem:[%s1176 + $0xe8] sm:$0xf]
    %v4140 = vld [vmem:[%s1176 + $0xf0] sm:$0xf]
    %v4141 = vld [vmem:[%s1176 + $0xf4] sm:$0xf]
    %v4142 = vld [vmem:[%s1176 + $0xfc] sm:$0xf]
    %v4143 = vld [vmem:[%s1176 + $0x100] sm:$0xf]
    %v4144 = vld [vmem:[%s1176 + $0x108] sm:$0xf]
    %v4145 = vld [vmem:[%s1176 + $0x10c] sm:$0xf]
    %v4146 = vld [vmem:[%s1176 + $0x114] sm:$0xf]
    %v4147 = vld [vmem:[%s1176 + $0x118] sm:$0xf]
    %v4148 = vld [vmem:[%s1176 + $0x120] sm:$0xf]
    %v4149 = vld [vmem:[%s1176 + $0x124] sm:$0xf]
    %v4150 = vld [vmem:[%s1176 + $0x12c] sm:$0xf]
    %v4151 = vld [vmem:[%s1176 + $0x130] sm:$0xf]
    %v4152 = vld [vmem:[%s1176 + $0x138] sm:$0xf]
    %v4153 = vld [vmem:[%s1176 + $0x13c] sm:$0xf]
    %v4154 = vld [vmem:[%s1176 + $0x144] sm:$0xf]
    %v4155 = vld [vmem:[%s1176 + $0x148] sm:$0xf]
    %v4156 = vld [vmem:[%s1176 + $0x150] sm:$0xf]
    %v4157 = vld [vmem:[%s1176 + $0x154] sm:$0xf]
    %v4158 = vld [vmem:[%s1176 + $0x15c] sm:$0xf]
    %v4159 = vld [vmem:[%s1176 + $0x160] sm:$0xf]
    %v4160 = vld [vmem:[%s1176 + $0x168] sm:$0xf]
    %v4161 = vld [vmem:[%s1176 + $0x16c] sm:$0xf]
    %v4162 = vld [vmem:[%s1176 + $0x174] sm:$0xf]
    %v4163 = vld [vmem:[%s1176 + $0x178] sm:$0xf]
    %v4164 = vld [vmem:[%s1176 + $0x180] sm:$0xf]
    %v4165 = vld [vmem:[%s1176 + $0x184] sm:$0xf]
    %v4166 = vld [vmem:[%s1176 + $0x18c] sm:$0xf]
    %v4167 = vld [vmem:[%s1176 + $0x190] sm:$0xf]
    %4168 = vst [vmem:[#allocation3 + $0xc] sm:$0xf] %v4104
    %4169 = vst [vmem:[#allocation3 + $0x30] sm:$0xf] %v4105
    %4170 = vst [vmem:[#allocation3 + $0x54] sm:$0xf] %v4106
    %4171 = vst [vmem:[#allocation3 + $0x78] sm:$0xf] %v4107
    %4172 = vst [vmem:[#allocation3 + $0x9c] sm:$0xf] %v4108
    %4173 = vst [vmem:[#allocation3 + $0xc0] sm:$0xf] %v4109
    %4174 = vst [vmem:[#allocation3 + $0xe4] sm:$0xf] %v4110
    %4175 = vst [vmem:[#allocation3 + $0x108] sm:$0xf] %v4111
    %4176 = vst [vmem:[#allocation3 + $0x12c] sm:$0xf] %v4112
    %4177 = vst [vmem:[#allocation3 + $0x150] sm:$0xf] %v4113
    %4178 = vst [vmem:[#allocation3 + $0x174] sm:$0xf] %v4114
    %4179 = vst [vmem:[#allocation3 + $0x198] sm:$0xf] %v4115
    %4180 = vst [vmem:[#allocation3 + $0x1bc] sm:$0xf] %v4116
    %4181 = vst [vmem:[#allocation3 + $0x1e0] sm:$0xf] %v4117
    %4182 = vst [vmem:[#allocation3 + $0x204] sm:$0xf] %v4118
    %4183 = vst [vmem:[#allocation3 + $0x228] sm:$0xf] %v4119
    %4184 = vst [vmem:[#allocation3 + $0x24c] sm:$0xf] %v4120
    %4185 = vst [vmem:[#allocation3 + $0x270] sm:$0xf] %v4121
    %4186 = vst [vmem:[#allocation3 + $0x294] sm:$0xf] %v4122
    %4187 = vst [vmem:[#allocation3 + $0x2b8] sm:$0xf] %v4123
    %4188 = vst [vmem:[#allocation3 + $0x2dc] sm:$0xf] %v4124
    %4189 = vst [vmem:[#allocation3 + $0x300] sm:$0xf] %v4125
    %4190 = vst [vmem:[#allocation3 + $0x324] sm:$0xf] %v4126
    %4191 = vst [vmem:[#allocation3 + $0x348] sm:$0xf] %v4127
    %4192 = vst [vmem:[#allocation3 + $0x36c] sm:$0xf] %v4128
    %4193 = vst [vmem:[#allocation3 + $0x390] sm:$0xf] %v4129
    %4194 = vst [vmem:[#allocation3 + $0x3b4] sm:$0xf] %v4130
    %4195 = vst [vmem:[#allocation3 + $0x3d8] sm:$0xf] %v4131
    %4196 = vst [vmem:[#allocation3 + $0x3fc] sm:$0xf] %v4132
    %4197 = vst [vmem:[#allocation3 + $0x420] sm:$0xf] %v4133
    %4198 = vst [vmem:[#allocation3 + $0x444] sm:$0xf] %v4134
    %4199 = vst [vmem:[#allocation3 + $0x468] sm:$0xf] %v4135
    %4200 = vst [vmem:[#allocation3 + $0x48c] sm:$0xf] %v4136
    %4201 = vst [vmem:[#allocation3 + $0x4b0] sm:$0xf] %v4137
    %4202 = vst [vmem:[#allocation3 + $0x4d4] sm:$0xf] %v4138
    %4203 = vst [vmem:[#allocation3 + $0x4f8] sm:$0xf] %v4139
    %4204 = vst [vmem:[#allocation3 + $0x51c] sm:$0xf] %v4140
    %4205 = vst [vmem:[#allocation3 + $0x540] sm:$0xf] %v4141
    %4206 = vst [vmem:[#allocation3 + $0x564] sm:$0xf] %v4142
    %4207 = vst [vmem:[#allocation3 + $0x588] sm:$0xf] %v4143
    %4208 = vst [vmem:[#allocation3 + $0x5ac] sm:$0xf] %v4144
    %4209 = vst [vmem:[#allocation3 + $0x5d0] sm:$0xf] %v4145
    %4210 = vst [vmem:[#allocation3 + $0x5f4] sm:$0xf] %v4146
    %4211 = vst [vmem:[#allocation3 + $0x618] sm:$0xf] %v4147
    %4212 = vst [vmem:[#allocation3 + $0x63c] sm:$0xf] %v4148
    %4213 = vst [vmem:[#allocation3 + $0x660] sm:$0xf] %v4149
    %4214 = vst [vmem:[#allocation3 + $0x684] sm:$0xf] %v4150
    %4215 = vst [vmem:[#allocation3 + $0x6a8] sm:$0xf] %v4151
    %4216 = vst [vmem:[#allocation3 + $0x6cc] sm:$0xf] %v4152
    %4217 = vst [vmem:[#allocation3 + $0x6f0] sm:$0xf] %v4153
    %4218 = vst [vmem:[#allocation3 + $0x714] sm:$0xf] %v4154
    %4219 = vst [vmem:[#allocation3 + $0x738] sm:$0xf] %v4155
    %4220 = vst [vmem:[#allocation3 + $0x75c] sm:$0xf] %v4156
    %4221 = vst [vmem:[#allocation3 + $0x780] sm:$0xf] %v4157
    %4222 = vst [vmem:[#allocation3 + $0x7a4] sm:$0xf] %v4158
    %4223 = vst [vmem:[#allocation3 + $0x7c8] sm:$0xf] %v4159
    %4224 = vst [vmem:[#allocation3 + $0x7ec] sm:$0xf] %v4160
    %4225 = vst [vmem:[#allocation3 + $0x810] sm:$0xf] %v4161
    %4226 = vst [vmem:[#allocation3 + $0x834] sm:$0xf] %v4162
    %4227 = vst [vmem:[#allocation3 + $0x858] sm:$0xf] %v4163
    %4228 = vst [vmem:[#allocation3 + $0x87c] sm:$0xf] %v4164
    %4229 = vst [vmem:[#allocation3 + $0x8a0] sm:$0xf] %v4165
    %4230 = vst [vmem:[#allocation3 + $0x8c4] sm:$0xf] %v4166
    %4231 = vst [vmem:[#allocation3 + $0x8e8] sm:$0xf] %v4167
    %v4232 = vld [vmem:[%s1176] sm:$0xf]
    %v4233 = vld [vmem:[%s1176 + $0x4] sm:$0xf]
    %v4234 = vld [vmem:[%s1176 + $0x8] sm:$0x1]
    %v4235 = vld [vmem:[%s1176 + $0xc] sm:$0xf]
    %v4236 = vld [vmem:[%s1176 + $0x10] sm:$0xf]
    %v4237 = vld [vmem:[%s1176 + $0x14] sm:$0x1]
    %v4238 = vld [vmem:[%s1176 + $0x18] sm:$0xf]
    %v4239 = vld [vmem:[%s1176 + $0x1c] sm:$0xf]
    %v4240 = vld [vmem:[%s1176 + $0x20] sm:$0x1]
    %v4241 = vld [vmem:[%s1176 + $0x24] sm:$0xf]
    %v4242 = vld [vmem:[%s1176 + $0x28] sm:$0xf]
    %v4243 = vld [vmem:[%s1176 + $0x2c] sm:$0x1]
    %v4244 = vld [vmem:[%s1176 + $0x30] sm:$0xf]
    %v4245 = vld [vmem:[%s1176 + $0x34] sm:$0xf]
    %v4246 = vld [vmem:[%s1176 + $0x38] sm:$0x1]
    %v4247 = vld [vmem:[%s1176 + $0x3c] sm:$0xf]
    %v4248 = vld [vmem:[%s1176 + $0x40] sm:$0xf]
    %v4249 = vld [vmem:[%s1176 + $0x44] sm:$0x1]
    %v4250 = vld [vmem:[%s1176 + $0x48] sm:$0xf]
    %v4251 = vld [vmem:[%s1176 + $0x4c] sm:$0xf]
    %v4252 = vld [vmem:[%s1176 + $0x50] sm:$0x1]
    %v4253 = vld [vmem:[%s1176 + $0x54] sm:$0xf]
    %v4254 = vld [vmem:[%s1176 + $0x58] sm:$0xf]
    %v4255 = vld [vmem:[%s1176 + $0x5c] sm:$0x1]
    %v4256 = vld [vmem:[%s1176 + $0x60] sm:$0xf]
    %v4257 = vld [vmem:[%s1176 + $0x64] sm:$0xf]
    %v4258 = vld [vmem:[%s1176 + $0x68] sm:$0x1]
    %v4259 = vld [vmem:[%s1176 + $0x6c] sm:$0xf]
    %v4260 = vld [vmem:[%s1176 + $0x70] sm:$0xf]
    %v4261 = vld [vmem:[%s1176 + $0x74] sm:$0x1]
    %v4262 = vld [vmem:[%s1176 + $0x78] sm:$0xf]
    %v4263 = vld [vmem:[%s1176 + $0x7c] sm:$0xf]
    %v4264 = vld [vmem:[%s1176 + $0x80] sm:$0x1]
    %v4265 = vld [vmem:[%s1176 + $0x84] sm:$0xf]
    %v4266 = vld [vmem:[%s1176 + $0x88] sm:$0xf]
    %v4267 = vld [vmem:[%s1176 + $0x8c] sm:$0x1]
    %v4268 = vld [vmem:[%s1176 + $0x90] sm:$0xf]
    %v4269 = vld [vmem:[%s1176 + $0x94] sm:$0xf]
    %v4270 = vld [vmem:[%s1176 + $0x98] sm:$0x1]
    %v4271 = vld [vmem:[%s1176 + $0x9c] sm:$0xf]
    %v4272 = vld [vmem:[%s1176 + $0xa0] sm:$0xf]
    %v4273 = vld [vmem:[%s1176 + $0xa4] sm:$0x1]
    %v4274 = vld [vmem:[%s1176 + $0xa8] sm:$0xf]
    %v4275 = vld [vmem:[%s1176 + $0xac] sm:$0xf]
    %v4276 = vld [vmem:[%s1176 + $0xb0] sm:$0x1]
    %v4277 = vld [vmem:[%s1176 + $0xb4] sm:$0xf]
    %v4278 = vld [vmem:[%s1176 + $0xb8] sm:$0xf]
    %v4279 = vld [vmem:[%s1176 + $0xbc] sm:$0x1]
    %v4280 = vld [vmem:[%s1176 + $0xd8] sm:$0xf]
    %v4281 = vld [vmem:[%s1176 + $0xdc] sm:$0xf]
    %v4282 = vld [vmem:[%s1176 + $0xe0] sm:$0x1]
    %v4283 = vld [vmem:[%s1176 + $0xe4] sm:$0xf]
    %v4284 = vld [vmem:[%s1176 + $0xe8] sm:$0xf]
    %v4285 = vld [vmem:[%s1176 + $0xec] sm:$0x1]
    %v4286 = vld [vmem:[%s1176 + $0xf0] sm:$0xf]
    %v4287 = vld [vmem:[%s1176 + $0xf4] sm:$0xf]
    %v4288 = vld [vmem:[%s1176 + $0xf8] sm:$0x1]
    %v4289 = vld [vmem:[%s1176 + $0xfc] sm:$0xf]
    %v4290 = vld [vmem:[%s1176 + $0x100] sm:$0xf]
    %v4291 = vld [vmem:[%s1176 + $0x104] sm:$0x1]
    %v4292 = vld [vmem:[%s1176 + $0x108] sm:$0xf]
    %v4293 = vld [vmem:[%s1176 + $0x10c] sm:$0xf]
    %v4294 = vld [vmem:[%s1176 + $0x110] sm:$0x1]
    %v4295 = vld [vmem:[%s1176 + $0x114] sm:$0xf]
    %v4296 = vld [vmem:[%s1176 + $0x118] sm:$0xf]
    %v4297 = vld [vmem:[%s1176 + $0x11c] sm:$0x1]
    %v4298 = vld [vmem:[%s1176 + $0x120] sm:$0xf]
    %v4299 = vld [vmem:[%s1176 + $0x124] sm:$0xf]
    %v4300 = vld [vmem:[%s1176 + $0x128] sm:$0x1]
    %v4301 = vld [vmem:[%s1176 + $0x12c] sm:$0xf]
    %v4302 = vld [vmem:[%s1176 + $0x130] sm:$0xf]
    %v4303 = vld [vmem:[%s1176 + $0x134] sm:$0x1]
    %v4304 = vld [vmem:[%s1176 + $0x138] sm:$0xf]
    %v4305 = vld [vmem:[%s1176 + $0x13c] sm:$0xf]
    %v4306 = vld [vmem:[%s1176 + $0x140] sm:$0x1]
    %v4307 = vld [vmem:[%s1176 + $0x144] sm:$0xf]
    %v4308 = vld [vmem:[%s1176 + $0x148] sm:$0xf]
    %v4309 = vld [vmem:[%s1176 + $0x14c] sm:$0x1]
    %v4310 = vld [vmem:[%s1176 + $0x150] sm:$0xf]
    %v4311 = vld [vmem:[%s1176 + $0x154] sm:$0xf]
    %v4312 = vld [vmem:[%s1176 + $0x158] sm:$0x1]
    %v4313 = vld [vmem:[%s1176 + $0x15c] sm:$0xf]
    %v4314 = vld [vmem:[%s1176 + $0x160] sm:$0xf]
    %v4315 = vld [vmem:[%s1176 + $0x164] sm:$0x1]
    %v4316 = vld [vmem:[%s1176 + $0x168] sm:$0xf]
    %v4317 = vld [vmem:[%s1176 + $0x16c] sm:$0xf]
    %v4318 = vld [vmem:[%s1176 + $0x170] sm:$0x1]
    %v4319 = vld [vmem:[%s1176 + $0x174] sm:$0xf]
    %v4320 = vld [vmem:[%s1176 + $0x178] sm:$0xf]
    %v4321 = vld [vmem:[%s1176 + $0x17c] sm:$0x1]
    %v4322 = vld [vmem:[%s1176 + $0x180] sm:$0xf]
    %v4323 = vld [vmem:[%s1176 + $0x184] sm:$0xf]
    %v4324 = vld [vmem:[%s1176 + $0x188] sm:$0x1]
    %v4325 = vld [vmem:[%s1176 + $0x18c] sm:$0xf]
    %v4326 = vld [vmem:[%s1176 + $0x190] sm:$0xf]
    %v4327 = vld [vmem:[%s1176 + $0x194] sm:$0x1]
    %v4329 = vshrl.u32 %v4232, 16
    %v4331 = vrot.slane %v4329, 4
    %v4332 = vshll.u32 %v4232, 16
    %v4334 = vrot.slane %v4332, 5
    %v4335 = vor.u32 %v4331, %v4334
    %v4336 = vrot.slane %v4335, 4
    %v4338 = vshll.u32 %v4233, 16
    %v4340 = vrot.slane %v4338, 5
    %v4341 = vsel %vm2660, %v4336, %v4340
    %v4342 = vshrl.u32 %v4233, 16
    %v4344 = vrot.slane %v4342, 4
    %v4345 = vor.u32 %v4344, %v4340
    %v4346 = vrot.slane %v4345, 4
    %v4348 = vshll.u32 %v4234, 16
    %v4350 = vrot.slane %v4348, 5
    %v4351 = vsel %vm2660, %v4346, %v4350
    %v4353 = vshrl.u32 %v4235, 16
    %v4355 = vrot.slane %v4353, 4
    %v4356 = vshll.u32 %v4235, 16
    %v4358 = vrot.slane %v4356, 5
    %v4359 = vor.u32 %v4355, %v4358
    %v4360 = vrot.slane %v4359, 4
    %v4362 = vshll.u32 %v4236, 16
    %v4364 = vrot.slane %v4362, 5
    %v4365 = vsel %vm2660, %v4360, %v4364
    %v4366 = vshrl.u32 %v4236, 16
    %v4368 = vrot.slane %v4366, 4
    %v4369 = vor.u32 %v4368, %v4364
    %v4370 = vrot.slane %v4369, 4
    %v4372 = vshll.u32 %v4237, 16
    %v4374 = vrot.slane %v4372, 5
    %v4375 = vsel %vm2660, %v4370, %v4374
    %v4377 = vshrl.u32 %v4238, 16
    %v4379 = vrot.slane %v4377, 4
    %v4380 = vshll.u32 %v4238, 16
    %v4382 = vrot.slane %v4380, 5
    %v4383 = vor.u32 %v4379, %v4382
    %v4384 = vrot.slane %v4383, 4
    %v4386 = vshll.u32 %v4239, 16
    %v4388 = vrot.slane %v4386, 5
    %v4389 = vsel %vm2660, %v4384, %v4388
    %v4390 = vshrl.u32 %v4239, 16
    %v4392 = vrot.slane %v4390, 4
    %v4393 = vor.u32 %v4392, %v4388
    %v4394 = vrot.slane %v4393, 4
    %v4396 = vshll.u32 %v4240, 16
    %v4398 = vrot.slane %v4396, 5
    %v4399 = vsel %vm2660, %v4394, %v4398
    %v4401 = vshrl.u32 %v4241, 16
    %v4403 = vrot.slane %v4401, 4
    %v4404 = vshll.u32 %v4241, 16
    %v4406 = vrot.slane %v4404, 5
    %v4407 = vor.u32 %v4403, %v4406
    %v4408 = vrot.slane %v4407, 4
    %v4410 = vshll.u32 %v4242, 16
    %v4412 = vrot.slane %v4410, 5
    %v4413 = vsel %vm2660, %v4408, %v4412
    %v4414 = vshrl.u32 %v4242, 16
    %v4416 = vrot.slane %v4414, 4
    %v4417 = vor.u32 %v4416, %v4412
    %v4418 = vrot.slane %v4417, 4
    %v4420 = vshll.u32 %v4243, 16
    %v4422 = vrot.slane %v4420, 5
    %v4423 = vsel %vm2660, %v4418, %v4422
    %v4425 = vshrl.u32 %v4244, 16
    %v4427 = vrot.slane %v4425, 4
    %v4428 = vshll.u32 %v4244, 16
    %v4430 = vrot.slane %v4428, 5
    %v4431 = vor.u32 %v4427, %v4430
    %v4432 = vrot.slane %v4431, 4
    %v4434 = vshll.u32 %v4245, 16
    %v4436 = vrot.slane %v4434, 5
    %v4437 = vsel %vm2660, %v4432, %v4436
    %v4438 = vshrl.u32 %v4245, 16
    %v4440 = vrot.slane %v4438, 4
    %v4441 = vor.u32 %v4440, %v4436
    %v4442 = vrot.slane %v4441, 4
    %v4444 = vshll.u32 %v4246, 16
    %v4446 = vrot.slane %v4444, 5
    %v4447 = vsel %vm2660, %v4442, %v4446
    %v4449 = vshrl.u32 %v4247, 16
    %v4451 = vrot.slane %v4449, 4
    %v4452 = vshll.u32 %v4247, 16
    %v4454 = vrot.slane %v4452, 5
    %v4455 = vor.u32 %v4451, %v4454
    %v4456 = vrot.slane %v4455, 4
    %v4458 = vshll.u32 %v4248, 16
    %v4460 = vrot.slane %v4458, 5
    %v4461 = vsel %vm2660, %v4456, %v4460
    %v4462 = vshrl.u32 %v4248, 16
    %v4464 = vrot.slane %v4462, 4
    %v4465 = vor.u32 %v4464, %v4460
    %v4466 = vrot.slane %v4465, 4
    %v4468 = vshll.u32 %v4249, 16
    %v4470 = vrot.slane %v4468, 5
    %v4471 = vsel %vm2660, %v4466, %v4470
    %v4473 = vshrl.u32 %v4250, 16
    %v4475 = vrot.slane %v4473, 4
    %v4476 = vshll.u32 %v4250, 16
    %v4478 = vrot.slane %v4476, 5
    %v4479 = vor.u32 %v4475, %v4478
    %v4480 = vrot.slane %v4479, 4
    %v4482 = vshll.u32 %v4251, 16
    %v4484 = vrot.slane %v4482, 5
    %v4485 = vsel %vm2660, %v4480, %v4484
    %v4486 = vshrl.u32 %v4251, 16
    %v4488 = vrot.slane %v4486, 4
    %v4489 = vor.u32 %v4488, %v4484
    %v4490 = vrot.slane %v4489, 4
    %v4492 = vshll.u32 %v4252, 16
    %v4494 = vrot.slane %v4492, 5
    %v4495 = vsel %vm2660, %v4490, %v4494
    %v4497 = vshrl.u32 %v4253, 16
    %v4499 = vrot.slane %v4497, 4
    %v4500 = vshll.u32 %v4253, 16
    %v4502 = vrot.slane %v4500, 5
    %v4503 = vor.u32 %v4499, %v4502
    %v4504 = vrot.slane %v4503, 4
    %v4506 = vshll.u32 %v4254, 16
    %v4508 = vrot.slane %v4506, 5
    %v4509 = vsel %vm2660, %v4504, %v4508
    %v4510 = vshrl.u32 %v4254, 16
    %v4512 = vrot.slane %v4510, 4
    %v4513 = vor.u32 %v4512, %v4508
    %v4514 = vrot.slane %v4513, 4
    %v4516 = vshll.u32 %v4255, 16
    %v4518 = vrot.slane %v4516, 5
    %v4519 = vsel %vm2660, %v4514, %v4518
    %v4521 = vshrl.u32 %v4256, 16
    %v4523 = vrot.slane %v4521, 4
    %v4524 = vshll.u32 %v4256, 16
    %v4526 = vrot.slane %v4524, 5
    %v4527 = vor.u32 %v4523, %v4526
    %v4528 = vrot.slane %v4527, 4
    %v4530 = vshll.u32 %v4257, 16
    %v4532 = vrot.slane %v4530, 5
    %v4533 = vsel %vm2660, %v4528, %v4532
    %v4534 = vshrl.u32 %v4257, 16
    %v4536 = vrot.slane %v4534, 4
    %v4537 = vor.u32 %v4536, %v4532
    %v4538 = vrot.slane %v4537, 4
    %v4540 = vshll.u32 %v4258, 16
    %v4542 = vrot.slane %v4540, 5
    %v4543 = vsel %vm2660, %v4538, %v4542
    %v4545 = vshrl.u32 %v4259, 16
    %v4547 = vrot.slane %v4545, 4
    %v4548 = vshll.u32 %v4259, 16
    %v4550 = vrot.slane %v4548, 5
    %v4551 = vor.u32 %v4547, %v4550
    %v4552 = vrot.slane %v4551, 4
    %v4554 = vshll.u32 %v4260, 16
    %v4556 = vrot.slane %v4554, 5
    %v4557 = vsel %vm2660, %v4552, %v4556
    %v4558 = vshrl.u32 %v4260, 16
    %v4560 = vrot.slane %v4558, 4
    %v4561 = vor.u32 %v4560, %v4556
    %v4562 = vrot.slane %v4561, 4
    %v4564 = vshll.u32 %v4261, 16
    %v4566 = vrot.slane %v4564, 5
    %v4567 = vsel %vm2660, %v4562, %v4566
    %v4569 = vshrl.u32 %v4262, 16
    %v4571 = vrot.slane %v4569, 4
    %v4572 = vshll.u32 %v4262, 16
    %v4574 = vrot.slane %v4572, 5
    %v4575 = vor.u32 %v4571, %v4574
    %v4576 = vrot.slane %v4575, 4
    %v4578 = vshll.u32 %v4263, 16
    %v4580 = vrot.slane %v4578, 5
    %v4581 = vsel %vm2660, %v4576, %v4580
    %v4582 = vshrl.u32 %v4263, 16
    %v4584 = vrot.slane %v4582, 4
    %v4585 = vor.u32 %v4584, %v4580
    %v4586 = vrot.slane %v4585, 4
    %v4588 = vshll.u32 %v4264, 16
    %v4590 = vrot.slane %v4588, 5
    %v4591 = vsel %vm2660, %v4586, %v4590
    %v4593 = vshrl.u32 %v4265, 16
    %v4595 = vrot.slane %v4593, 4
    %v4596 = vshll.u32 %v4265, 16
    %v4598 = vrot.slane %v4596, 5
    %v4599 = vor.u32 %v4595, %v4598
    %v4600 = vrot.slane %v4599, 4
    %v4602 = vshll.u32 %v4266, 16
    %v4604 = vrot.slane %v4602, 5
    %v4605 = vsel %vm2660, %v4600, %v4604
    %v4606 = vshrl.u32 %v4266, 16
    %v4608 = vrot.slane %v4606, 4
    %v4609 = vor.u32 %v4608, %v4604
    %v4610 = vrot.slane %v4609, 4
    %v4612 = vshll.u32 %v4267, 16
    %v4614 = vrot.slane %v4612, 5
    %v4615 = vsel %vm2660, %v4610, %v4614
    %v4617 = vshrl.u32 %v4268, 16
    %v4619 = vrot.slane %v4617, 4
    %v4620 = vshll.u32 %v4268, 16
    %v4622 = vrot.slane %v4620, 5
    %v4623 = vor.u32 %v4619, %v4622
    %v4624 = vrot.slane %v4623, 4
    %v4626 = vshll.u32 %v4269, 16
    %v4628 = vrot.slane %v4626, 5
    %v4629 = vsel %vm2660, %v4624, %v4628
    %v4630 = vshrl.u32 %v4269, 16
    %v4632 = vrot.slane %v4630, 4
    %v4633 = vor.u32 %v4632, %v4628
    %v4634 = vrot.slane %v4633, 4
    %v4636 = vshll.u32 %v4270, 16
    %v4638 = vrot.slane %v4636, 5
    %v4639 = vsel %vm2660, %v4634, %v4638
    %v4641 = vshrl.u32 %v4271, 16
    %v4643 = vrot.slane %v4641, 4
    %v4644 = vshll.u32 %v4271, 16
    %v4646 = vrot.slane %v4644, 5
    %v4647 = vor.u32 %v4643, %v4646
    %v4648 = vrot.slane %v4647, 4
    %v4650 = vshll.u32 %v4272, 16
    %v4652 = vrot.slane %v4650, 5
    %v4653 = vsel %vm2660, %v4648, %v4652
    %v4654 = vshrl.u32 %v4272, 16
    %v4656 = vrot.slane %v4654, 4
    %v4657 = vor.u32 %v4656, %v4652
    %v4658 = vrot.slane %v4657, 4
    %v4660 = vshll.u32 %v4273, 16
    %v4662 = vrot.slane %v4660, 5
    %v4663 = vsel %vm2660, %v4658, %v4662
    %v4665 = vshrl.u32 %v4274, 16
    %v4667 = vrot.slane %v4665, 4
    %v4668 = vshll.u32 %v4274, 16
    %v4670 = vrot.slane %v4668, 5
    %v4671 = vor.u32 %v4667, %v4670
    %v4672 = vrot.slane %v4671, 4
    %v4674 = vshll.u32 %v4275, 16
    %v4676 = vrot.slane %v4674, 5
    %v4677 = vsel %vm2660, %v4672, %v4676
    %v4678 = vshrl.u32 %v4275, 16
    %v4680 = vrot.slane %v4678, 4
    %v4681 = vor.u32 %v4680, %v4676
    %v4682 = vrot.slane %v4681, 4
    %v4684 = vshll.u32 %v4276, 16
    %v4686 = vrot.slane %v4684, 5
    %v4687 = vsel %vm2660, %v4682, %v4686
    %v4689 = vshrl.u32 %v4277, 16
    %v4691 = vrot.slane %v4689, 4
    %v4692 = vshll.u32 %v4277, 16
    %v4694 = vrot.slane %v4692, 5
    %v4695 = vor.u32 %v4691, %v4694
    %v4696 = vrot.slane %v4695, 4
    %v4698 = vshll.u32 %v4278, 16
    %v4700 = vrot.slane %v4698, 5
    %v4701 = vsel %vm2660, %v4696, %v4700
    %v4702 = vshrl.u32 %v4278, 16
    %v4704 = vrot.slane %v4702, 4
    %v4705 = vor.u32 %v4704, %v4700
    %v4706 = vrot.slane %v4705, 4
    %v4708 = vshll.u32 %v4279, 16
    %v4710 = vrot.slane %v4708, 5
    %v4711 = vsel %vm2660, %v4706, %v4710
    %v4713 = vshrl.u32 %v4280, 16
    %v4715 = vrot.slane %v4713, 4
    %v4716 = vshll.u32 %v4280, 16
    %v4718 = vrot.slane %v4716, 5
    %v4719 = vor.u32 %v4715, %v4718
    %v4720 = vrot.slane %v4719, 4
    %v4722 = vshll.u32 %v4281, 16
    %v4724 = vrot.slane %v4722, 5
    %v4725 = vsel %vm2660, %v4720, %v4724
    %v4726 = vshrl.u32 %v4281, 16
    %v4728 = vrot.slane %v4726, 4
    %v4729 = vor.u32 %v4728, %v4724
    %v4730 = vrot.slane %v4729, 4
    %v4732 = vshll.u32 %v4282, 16
    %v4734 = vrot.slane %v4732, 5
    %v4735 = vsel %vm2660, %v4730, %v4734
    %v4737 = vshrl.u32 %v4283, 16
    %v4739 = vrot.slane %v4737, 4
    %v4740 = vshll.u32 %v4283, 16
    %v4742 = vrot.slane %v4740, 5
    %v4743 = vor.u32 %v4739, %v4742
    %v4744 = vrot.slane %v4743, 4
    %v4746 = vshll.u32 %v4284, 16
    %v4748 = vrot.slane %v4746, 5
    %v4749 = vsel %vm2660, %v4744, %v4748
    %v4750 = vshrl.u32 %v4284, 16
    %v4752 = vrot.slane %v4750, 4
    %v4753 = vor.u32 %v4752, %v4748
    %v4754 = vrot.slane %v4753, 4
    %v4756 = vshll.u32 %v4285, 16
    %v4758 = vrot.slane %v4756, 5
    %v4759 = vsel %vm2660, %v4754, %v4758
    %v4761 = vshrl.u32 %v4286, 16
    %v4763 = vrot.slane %v4761, 4
    %v4764 = vshll.u32 %v4286, 16
    %v4766 = vrot.slane %v4764, 5
    %v4767 = vor.u32 %v4763, %v4766
    %v4768 = vrot.slane %v4767, 4
    %v4770 = vshll.u32 %v4287, 16
    %v4772 = vrot.slane %v4770, 5
    %v4773 = vsel %vm2660, %v4768, %v4772
    %v4774 = vshrl.u32 %v4287, 16
    %v4776 = vrot.slane %v4774, 4
    %v4777 = vor.u32 %v4776, %v4772
    %v4778 = vrot.slane %v4777, 4
    %v4780 = vshll.u32 %v4288, 16
    %v4782 = vrot.slane %v4780, 5
    %v4783 = vsel %vm2660, %v4778, %v4782
    %v4785 = vshrl.u32 %v4289, 16
    %v4787 = vrot.slane %v4785, 4
    %v4788 = vshll.u32 %v4289, 16
    %v4790 = vrot.slane %v4788, 5
    %v4791 = vor.u32 %v4787, %v4790
    %v4792 = vrot.slane %v4791, 4
    %v4794 = vshll.u32 %v4290, 16
    %v4796 = vrot.slane %v4794, 5
    %v4797 = vsel %vm2660, %v4792, %v4796
    %v4798 = vshrl.u32 %v4290, 16
    %v4800 = vrot.slane %v4798, 4
    %v4801 = vor.u32 %v4800, %v4796
    %v4802 = vrot.slane %v4801, 4
    %v4804 = vshll.u32 %v4291, 16
    %v4806 = vrot.slane %v4804, 5
    %v4807 = vsel %vm2660, %v4802, %v4806
    %v4809 = vshrl.u32 %v4292, 16
    %v4811 = vrot.slane %v4809, 4
    %v4812 = vshll.u32 %v4292, 16
    %v4814 = vrot.slane %v4812, 5
    %v4815 = vor.u32 %v4811, %v4814
    %v4816 = vrot.slane %v4815, 4
    %v4818 = vshll.u32 %v4293, 16
    %v4820 = vrot.slane %v4818, 5
    %v4821 = vsel %vm2660, %v4816, %v4820
    %v4822 = vshrl.u32 %v4293, 16
    %v4824 = vrot.slane %v4822, 4
    %v4825 = vor.u32 %v4824, %v4820
    %v4826 = vrot.slane %v4825, 4
    %v4828 = vshll.u32 %v4294, 16
    %v4830 = vrot.slane %v4828, 5
    %v4831 = vsel %vm2660, %v4826, %v4830
    %v4833 = vshrl.u32 %v4295, 16
    %v4835 = vrot.slane %v4833, 4
    %v4836 = vshll.u32 %v4295, 16
    %v4838 = vrot.slane %v4836, 5
    %v4839 = vor.u32 %v4835, %v4838
    %v4840 = vrot.slane %v4839, 4
    %v4842 = vshll.u32 %v4296, 16
    %v4844 = vrot.slane %v4842, 5
    %v4845 = vsel %vm2660, %v4840, %v4844
    %v4846 = vshrl.u32 %v4296, 16
    %v4848 = vrot.slane %v4846, 4
    %v4849 = vor.u32 %v4848, %v4844
    %v4850 = vrot.slane %v4849, 4
    %v4852 = vshll.u32 %v4297, 16
    %v4854 = vrot.slane %v4852, 5
    %v4855 = vsel %vm2660, %v4850, %v4854
    %v4857 = vshrl.u32 %v4298, 16
    %v4859 = vrot.slane %v4857, 4
    %v4860 = vshll.u32 %v4298, 16
    %v4862 = vrot.slane %v4860, 5
    %v4863 = vor.u32 %v4859, %v4862
    %v4864 = vrot.slane %v4863, 4
    %v4866 = vshll.u32 %v4299, 16
    %v4868 = vrot.slane %v4866, 5
    %v4869 = vsel %vm2660, %v4864, %v4868
    %v4870 = vshrl.u32 %v4299, 16
    %v4872 = vrot.slane %v4870, 4
    %v4873 = vor.u32 %v4872, %v4868
    %v4874 = vrot.slane %v4873, 4
    %v4876 = vshll.u32 %v4300, 16
    %v4878 = vrot.slane %v4876, 5
    %v4879 = vsel %vm2660, %v4874, %v4878
    %v4881 = vshrl.u32 %v4301, 16
    %v4883 = vrot.slane %v4881, 4
    %v4884 = vshll.u32 %v4301, 16
    %v4886 = vrot.slane %v4884, 5
    %v4887 = vor.u32 %v4883, %v4886
    %v4888 = vrot.slane %v4887, 4
    %v4890 = vshll.u32 %v4302, 16
    %v4892 = vrot.slane %v4890, 5
    %v4893 = vsel %vm2660, %v4888, %v4892
    %v4894 = vshrl.u32 %v4302, 16
    %v4896 = vrot.slane %v4894, 4
    %v4897 = vor.u32 %v4896, %v4892
    %v4898 = vrot.slane %v4897, 4
    %v4900 = vshll.u32 %v4303, 16
    %v4902 = vrot.slane %v4900, 5
    %v4903 = vsel %vm2660, %v4898, %v4902
    %v4905 = vshrl.u32 %v4304, 16
    %v4907 = vrot.slane %v4905, 4
    %v4908 = vshll.u32 %v4304, 16
    %v4910 = vrot.slane %v4908, 5
    %v4911 = vor.u32 %v4907, %v4910
    %v4912 = vrot.slane %v4911, 4
    %v4914 = vshll.u32 %v4305, 16
    %v4916 = vrot.slane %v4914, 5
    %v4917 = vsel %vm2660, %v4912, %v4916
    %v4918 = vshrl.u32 %v4305, 16
    %v4920 = vrot.slane %v4918, 4
    %v4921 = vor.u32 %v4920, %v4916
    %v4922 = vrot.slane %v4921, 4
    %v4924 = vshll.u32 %v4306, 16
    %v4926 = vrot.slane %v4924, 5
    %v4927 = vsel %vm2660, %v4922, %v4926
    %v4929 = vshrl.u32 %v4307, 16
    %v4931 = vrot.slane %v4929, 4
    %v4932 = vshll.u32 %v4307, 16
    %v4934 = vrot.slane %v4932, 5
    %v4935 = vor.u32 %v4931, %v4934
    %v4936 = vrot.slane %v4935, 4
    %v4938 = vshll.u32 %v4308, 16
    %v4940 = vrot.slane %v4938, 5
    %v4941 = vsel %vm2660, %v4936, %v4940
    %v4942 = vshrl.u32 %v4308, 16
    %v4944 = vrot.slane %v4942, 4
    %v4945 = vor.u32 %v4944, %v4940
    %v4946 = vrot.slane %v4945, 4
    %v4948 = vshll.u32 %v4309, 16
    %v4950 = vrot.slane %v4948, 5
    %v4951 = vsel %vm2660, %v4946, %v4950
    %v4953 = vshrl.u32 %v4310, 16
    %v4955 = vrot.slane %v4953, 4
    %v4956 = vshll.u32 %v4310, 16
    %v4958 = vrot.slane %v4956, 5
    %v4959 = vor.u32 %v4955, %v4958
    %v4960 = vrot.slane %v4959, 4
    %v4962 = vshll.u32 %v4311, 16
    %v4964 = vrot.slane %v4962, 5
    %v4965 = vsel %vm2660, %v4960, %v4964
    %v4966 = vshrl.u32 %v4311, 16
    %v4968 = vrot.slane %v4966, 4
    %v4969 = vor.u32 %v4968, %v4964
    %v4970 = vrot.slane %v4969, 4
    %v4972 = vshll.u32 %v4312, 16
    %v4974 = vrot.slane %v4972, 5
    %v4975 = vsel %vm2660, %v4970, %v4974
    %v4977 = vshrl.u32 %v4313, 16
    %v4979 = vrot.slane %v4977, 4
    %v4980 = vshll.u32 %v4313, 16
    %v4982 = vrot.slane %v4980, 5
    %v4983 = vor.u32 %v4979, %v4982
    %v4984 = vrot.slane %v4983, 4
    %v4986 = vshll.u32 %v4314, 16
    %v4988 = vrot.slane %v4986, 5
    %v4989 = vsel %vm2660, %v4984, %v4988
    %v4990 = vshrl.u32 %v4314, 16
    %v4992 = vrot.slane %v4990, 4
    %v4993 = vor.u32 %v4992, %v4988
    %v4994 = vrot.slane %v4993, 4
    %v4996 = vshll.u32 %v4315, 16
    %v4998 = vrot.slane %v4996, 5
    %v4999 = vsel %vm2660, %v4994, %v4998
    %v5001 = vshrl.u32 %v4316, 16
    %v5003 = vrot.slane %v5001, 4
    %v5004 = vshll.u32 %v4316, 16
    %v5006 = vrot.slane %v5004, 5
    %v5007 = vor.u32 %v5003, %v5006
    %v5008 = vrot.slane %v5007, 4
    %v5010 = vshll.u32 %v4317, 16
    %v5012 = vrot.slane %v5010, 5
    %v5013 = vsel %vm2660, %v5008, %v5012
    %v5014 = vshrl.u32 %v4317, 16
    %v5016 = vrot.slane %v5014, 4
    %v5017 = vor.u32 %v5016, %v5012
    %v5018 = vrot.slane %v5017, 4
    %v5020 = vshll.u32 %v4318, 16
    %v5022 = vrot.slane %v5020, 5
    %v5023 = vsel %vm2660, %v5018, %v5022
    %v5025 = vshrl.u32 %v4319, 16
    %v5027 = vrot.slane %v5025, 4
    %v5028 = vshll.u32 %v4319, 16
    %v5030 = vrot.slane %v5028, 5
    %v5031 = vor.u32 %v5027, %v5030
    %v5032 = vrot.slane %v5031, 4
    %v5034 = vshll.u32 %v4320, 16
    %v5036 = vrot.slane %v5034, 5
    %v5037 = vsel %vm2660, %v5032, %v5036
    %v5038 = vshrl.u32 %v4320, 16
    %v5040 = vrot.slane %v5038, 4
    %v5041 = vor.u32 %v5040, %v5036
    %v5042 = vrot.slane %v5041, 4
    %v5044 = vshll.u32 %v4321, 16
    %v5046 = vrot.slane %v5044, 5
    %v5047 = vsel %vm2660, %v5042, %v5046
    %v5049 = vshrl.u32 %v4322, 16
    %v5051 = vrot.slane %v5049, 4
    %v5052 = vshll.u32 %v4322, 16
    %v5054 = vrot.slane %v5052, 5
    %v5055 = vor.u32 %v5051, %v5054
    %v5056 = vrot.slane %v5055, 4
    %v5058 = vshll.u32 %v4323, 16
    %v5060 = vrot.slane %v5058, 5
    %v5061 = vsel %vm2660, %v5056, %v5060
    %v5062 = vshrl.u32 %v4323, 16
    %v5064 = vrot.slane %v5062, 4
    %v5065 = vor.u32 %v5064, %v5060
    %v5066 = vrot.slane %v5065, 4
    %v5068 = vshll.u32 %v4324, 16
    %v5070 = vrot.slane %v5068, 5
    %v5071 = vsel %vm2660, %v5066, %v5070
    %v5073 = vshrl.u32 %v4325, 16
    %v5075 = vrot.slane %v5073, 4
    %v5076 = vshll.u32 %v4325, 16
    %v5078 = vrot.slane %v5076, 5
    %v5079 = vor.u32 %v5075, %v5078
    %v5080 = vrot.slane %v5079, 4
    %v5082 = vshll.u32 %v4326, 16
    %v5084 = vrot.slane %v5082, 5
    %v5085 = vsel %vm2660, %v5080, %v5084
    %v5086 = vshrl.u32 %v4326, 16
    %v5088 = vrot.slane %v5086, 4
    %v5089 = vor.u32 %v5088, %v5084
    %v5090 = vrot.slane %v5089, 4
    %v5092 = vshll.u32 %v4327, 16
    %v5094 = vrot.slane %v5092, 5
    %v5095 = vsel %vm2660, %v5090, %v5094
    %5160 = vst [vmem:[#allocation3 + $0x10] sm:$0xf] %v4341
    %5161 = vst [vmem:[#allocation3 + $0x34] sm:$0xf] %v4351
    %5162 = vst [vmem:[#allocation3 + $0x58] sm:$0xf] %v4365
    %5163 = vst [vmem:[#allocation3 + $0x7c] sm:$0xf] %v4375
    %5164 = vst [vmem:[#allocation3 + $0xa0] sm:$0xf] %v4389
    %5165 = vst [vmem:[#allocation3 + $0xc4] sm:$0xf] %v4399
    %5166 = vst [vmem:[#allocation3 + $0xe8] sm:$0xf] %v4413
    %5167 = vst [vmem:[#allocation3 + $0x10c] sm:$0xf] %v4423
    %5168 = vst [vmem:[#allocation3 + $0x130] sm:$0xf] %v4437
    %5169 = vst [vmem:[#allocation3 + $0x154] sm:$0xf] %v4447
    %5170 = vst [vmem:[#allocation3 + $0x178] sm:$0xf] %v4461
    %5171 = vst [vmem:[#allocation3 + $0x19c] sm:$0xf] %v4471
    %5172 = vst [vmem:[#allocation3 + $0x1c0] sm:$0xf] %v4485
    %5173 = vst [vmem:[#allocation3 + $0x1e4] sm:$0xf] %v4495
    %5174 = vst [vmem:[#allocation3 + $0x208] sm:$0xf] %v4509
    %5175 = vst [vmem:[#allocation3 + $0x22c] sm:$0xf] %v4519
    %5176 = vst [vmem:[#allocation3 + $0x250] sm:$0xf] %v4533
    %5177 = vst [vmem:[#allocation3 + $0x274] sm:$0xf] %v4543
    %5178 = vst [vmem:[#allocation3 + $0x298] sm:$0xf] %v4557
    %5179 = vst [vmem:[#allocation3 + $0x2bc] sm:$0xf] %v4567
    %5180 = vst [vmem:[#allocation3 + $0x2e0] sm:$0xf] %v4581
    %5181 = vst [vmem:[#allocation3 + $0x304] sm:$0xf] %v4591
    %5182 = vst [vmem:[#allocation3 + $0x328] sm:$0xf] %v4605
    %5183 = vst [vmem:[#allocation3 + $0x34c] sm:$0xf] %v4615
    %5184 = vst [vmem:[#allocation3 + $0x370] sm:$0xf] %v4629
    %5185 = vst [vmem:[#allocation3 + $0x394] sm:$0xf] %v4639
    %5186 = vst [vmem:[#allocation3 + $0x3b8] sm:$0xf] %v4653
    %5187 = vst [vmem:[#allocation3 + $0x3dc] sm:$0xf] %v4663
    %5188 = vst [vmem:[#allocation3 + $0x400] sm:$0xf] %v4677
    %5189 = vst [vmem:[#allocation3 + $0x424] sm:$0xf] %v4687
    %5190 = vst [vmem:[#allocation3 + $0x448] sm:$0xf] %v4701
    %5191 = vst [vmem:[#allocation3 + $0x46c] sm:$0xf] %v4711
    %5192 = vst [vmem:[#allocation3 + $0x490] sm:$0xf] %v4725
    %5193 = vst [vmem:[#allocation3 + $0x4b4] sm:$0xf] %v4735
    %5194 = vst [vmem:[#allocation3 + $0x4d8] sm:$0xf] %v4749
    %5195 = vst [vmem:[#allocation3 + $0x4fc] sm:$0xf] %v4759
    %5196 = vst [vmem:[#allocation3 + $0x520] sm:$0xf] %v4773
    %5197 = vst [vmem:[#allocation3 + $0x544] sm:$0xf] %v4783
    %5198 = vst [vmem:[#allocation3 + $0x568] sm:$0xf] %v4797
    %5199 = vst [vmem:[#allocation3 + $0x58c] sm:$0xf] %v4807
    %5200 = vst [vmem:[#allocation3 + $0x5b0] sm:$0xf] %v4821
    %5201 = vst [vmem:[#allocation3 + $0x5d4] sm:$0xf] %v4831
    %5202 = vst [vmem:[#allocation3 + $0x5f8] sm:$0xf] %v4845
    %5203 = vst [vmem:[#allocation3 + $0x61c] sm:$0xf] %v4855
    %5204 = vst [vmem:[#allocation3 + $0x640] sm:$0xf] %v4869
    %5205 = vst [vmem:[#allocation3 + $0x664] sm:$0xf] %v4879
    %5206 = vst [vmem:[#allocation3 + $0x688] sm:$0xf] %v4893
    %5207 = vst [vmem:[#allocation3 + $0x6ac] sm:$0xf] %v4903
    %5208 = vst [vmem:[#allocation3 + $0x6d0] sm:$0xf] %v4917
    %5209 = vst [vmem:[#allocation3 + $0x6f4] sm:$0xf] %v4927
    %5210 = vst [vmem:[#allocation3 + $0x718] sm:$0xf] %v4941
    %5211 = vst [vmem:[#allocation3 + $0x73c] sm:$0xf] %v4951
    %5212 = vst [vmem:[#allocation3 + $0x760] sm:$0xf] %v4965
    %5213 = vst [vmem:[#allocation3 + $0x784] sm:$0xf] %v4975
    %5214 = vst [vmem:[#allocation3 + $0x7a8] sm:$0xf] %v4989
    %5215 = vst [vmem:[#allocation3 + $0x7cc] sm:$0xf] %v4999
    %5216 = vst [vmem:[#allocation3 + $0x7f0] sm:$0xf] %v5013
    %5217 = vst [vmem:[#allocation3 + $0x814] sm:$0xf] %v5023
    %5218 = vst [vmem:[#allocation3 + $0x838] sm:$0xf] %v5037
    %5219 = vst [vmem:[#allocation3 + $0x85c] sm:$0xf] %v5047
    %5220 = vst [vmem:[#allocation3 + $0x880] sm:$0xf] %v5061
    %5221 = vst [vmem:[#allocation3 + $0x8a4] sm:$0xf] %v5071
    %5222 = vst [vmem:[#allocation3 + $0x8c8] sm:$0xf] %v5085
    %5223 = vst [vmem:[#allocation3 + $0x8ec] sm:$0xf] %v5095
    %v5224 = vld [vmem:[%s1176] sm:$0xe]
    %v5225 = vld [vmem:[%s1176 + $0x4] sm:$0xf]
    %v5226 = vld [vmem:[%s1176 + $0x8] sm:$0x1]
    %v5227 = vld [vmem:[%s1176 + $0xc] sm:$0xe]
    %v5228 = vld [vmem:[%s1176 + $0x10] sm:$0xf]
    %v5229 = vld [vmem:[%s1176 + $0x14] sm:$0x1]
    %v5230 = vld [vmem:[%s1176 + $0x18] sm:$0xe]
    %v5231 = vld [vmem:[%s1176 + $0x1c] sm:$0xf]
    %v5232 = vld [vmem:[%s1176 + $0x20] sm:$0x1]
    %v5233 = vld [vmem:[%s1176 + $0x24] sm:$0xe]
    %v5234 = vld [vmem:[%s1176 + $0x28] sm:$0xf]
    %v5235 = vld [vmem:[%s1176 + $0x2c] sm:$0x1]
    %v5236 = vld [vmem:[%s1176 + $0x30] sm:$0xe]
    %v5237 = vld [vmem:[%s1176 + $0x34] sm:$0xf]
    %v5238 = vld [vmem:[%s1176 + $0x38] sm:$0x1]
    %v5239 = vld [vmem:[%s1176 + $0x3c] sm:$0xe]
    %v5240 = vld [vmem:[%s1176 + $0x40] sm:$0xf]
    %v5241 = vld [vmem:[%s1176 + $0x44] sm:$0x1]
    %v5242 = vld [vmem:[%s1176 + $0x48] sm:$0xe]
    %v5243 = vld [vmem:[%s1176 + $0x4c] sm:$0xf]
    %v5244 = vld [vmem:[%s1176 + $0x50] sm:$0x1]
    %v5245 = vld [vmem:[%s1176 + $0x54] sm:$0xe]
    %v5246 = vld [vmem:[%s1176 + $0x58] sm:$0xf]
    %v5247 = vld [vmem:[%s1176 + $0x5c] sm:$0x1]
    %v5248 = vld [vmem:[%s1176 + $0x60] sm:$0xe]
    %v5249 = vld [vmem:[%s1176 + $0x64] sm:$0xf]
    %v5250 = vld [vmem:[%s1176 + $0x68] sm:$0x1]
    %v5251 = vld [vmem:[%s1176 + $0x6c] sm:$0xe]
    %v5252 = vld [vmem:[%s1176 + $0x70] sm:$0xf]
    %v5253 = vld [vmem:[%s1176 + $0x74] sm:$0x1]
    %v5254 = vld [vmem:[%s1176 + $0x78] sm:$0xe]
    %v5255 = vld [vmem:[%s1176 + $0x7c] sm:$0xf]
    %v5256 = vld [vmem:[%s1176 + $0x80] sm:$0x1]
    %v5257 = vld [vmem:[%s1176 + $0x84] sm:$0xe]
    %v5258 = vld [vmem:[%s1176 + $0x88] sm:$0xf]
    %v5259 = vld [vmem:[%s1176 + $0x8c] sm:$0x1]
    %v5260 = vld [vmem:[%s1176 + $0x90] sm:$0xe]
    %v5261 = vld [vmem:[%s1176 + $0x94] sm:$0xf]
    %v5262 = vld [vmem:[%s1176 + $0x98] sm:$0x1]
    %v5263 = vld [vmem:[%s1176 + $0x9c] sm:$0xe]
    %v5264 = vld [vmem:[%s1176 + $0xa0] sm:$0xf]
    %v5265 = vld [vmem:[%s1176 + $0xa4] sm:$0x1]
    %v5266 = vld [vmem:[%s1176 + $0xa8] sm:$0xe]
    %v5267 = vld [vmem:[%s1176 + $0xac] sm:$0xf]
    %v5268 = vld [vmem:[%s1176 + $0xb0] sm:$0x1]
    %v5269 = vld [vmem:[%s1176 + $0xb4] sm:$0xe]
    %v5270 = vld [vmem:[%s1176 + $0xb8] sm:$0xf]
    %v5271 = vld [vmem:[%s1176 + $0xbc] sm:$0x1]
    %v5272 = vld [vmem:[%s1176 + $0xd8] sm:$0xe]
    %v5273 = vld [vmem:[%s1176 + $0xdc] sm:$0xf]
    %v5274 = vld [vmem:[%s1176 + $0xe0] sm:$0x1]
    %v5275 = vld [vmem:[%s1176 + $0xe4] sm:$0xe]
    %v5276 = vld [vmem:[%s1176 + $0xe8] sm:$0xf]
    %v5277 = vld [vmem:[%s1176 + $0xec] sm:$0x1]
    %v5278 = vld [vmem:[%s1176 + $0xf0] sm:$0xe]
    %v5279 = vld [vmem:[%s1176 + $0xf4] sm:$0xf]
    %v5280 = vld [vmem:[%s1176 + $0xf8] sm:$0x1]
    %v5281 = vld [vmem:[%s1176 + $0xfc] sm:$0xe]
    %v5282 = vld [vmem:[%s1176 + $0x100] sm:$0xf]
    %v5283 = vld [vmem:[%s1176 + $0x104] sm:$0x1]
    %v5284 = vld [vmem:[%s1176 + $0x108] sm:$0xe]
    %v5285 = vld [vmem:[%s1176 + $0x10c] sm:$0xf]
    %v5286 = vld [vmem:[%s1176 + $0x110] sm:$0x1]
    %v5287 = vld [vmem:[%s1176 + $0x114] sm:$0xe]
    %v5288 = vld [vmem:[%s1176 + $0x118] sm:$0xf]
    %v5289 = vld [vmem:[%s1176 + $0x11c] sm:$0x1]
    %v5290 = vld [vmem:[%s1176 + $0x120] sm:$0xe]
    %v5291 = vld [vmem:[%s1176 + $0x124] sm:$0xf]
    %v5292 = vld [vmem:[%s1176 + $0x128] sm:$0x1]
    %v5293 = vld [vmem:[%s1176 + $0x12c] sm:$0xe]
    %v5294 = vld [vmem:[%s1176 + $0x130] sm:$0xf]
    %v5295 = vld [vmem:[%s1176 + $0x134] sm:$0x1]
    %v5296 = vld [vmem:[%s1176 + $0x138] sm:$0xe]
    %v5297 = vld [vmem:[%s1176 + $0x13c] sm:$0xf]
    %v5298 = vld [vmem:[%s1176 + $0x140] sm:$0x1]
    %v5299 = vld [vmem:[%s1176 + $0x144] sm:$0xe]
    %v5300 = vld [vmem:[%s1176 + $0x148] sm:$0xf]
    %v5301 = vld [vmem:[%s1176 + $0x14c] sm:$0x1]
    %v5302 = vld [vmem:[%s1176 + $0x150] sm:$0xe]
    %v5303 = vld [vmem:[%s1176 + $0x154] sm:$0xf]
    %v5304 = vld [vmem:[%s1176 + $0x158] sm:$0x1]
    %v5305 = vld [vmem:[%s1176 + $0x15c] sm:$0xe]
    %v5306 = vld [vmem:[%s1176 + $0x160] sm:$0xf]
    %v5307 = vld [vmem:[%s1176 + $0x164] sm:$0x1]
    %v5308 = vld [vmem:[%s1176 + $0x168] sm:$0xe]
    %v5309 = vld [vmem:[%s1176 + $0x16c] sm:$0xf]
    %v5310 = vld [vmem:[%s1176 + $0x170] sm:$0x1]
    %v5311 = vld [vmem:[%s1176 + $0x174] sm:$0xe]
    %v5312 = vld [vmem:[%s1176 + $0x178] sm:$0xf]
    %v5313 = vld [vmem:[%s1176 + $0x17c] sm:$0x1]
    %v5314 = vld [vmem:[%s1176 + $0x180] sm:$0xe]
    %v5315 = vld [vmem:[%s1176 + $0x184] sm:$0xf]
    %v5316 = vld [vmem:[%s1176 + $0x188] sm:$0x1]
    %v5317 = vld [vmem:[%s1176 + $0x18c] sm:$0xe]
    %v5318 = vld [vmem:[%s1176 + $0x190] sm:$0xf]
    %v5319 = vld [vmem:[%s1176 + $0x194] sm:$0x1]
    %v5416 = vrot.slane %v5224, 5
    %v5417 = vrot.slane %v5416, 4
    %v5418 = vrot.slane %v5225, 5
    %v5419 = vsel %vm3751, %v5417, %v5418
    %v5420 = vrot.slane %v5418, 4
    %v5421 = vrot.slane %v5226, 5
    %v5422 = vsel %vm3751, %v5420, %v5421
    %v5423 = vrot.slane %v5227, 5
    %v5424 = vrot.slane %v5423, 4
    %v5425 = vrot.slane %v5228, 5
    %v5426 = vsel %vm3751, %v5424, %v5425
    %v5427 = vrot.slane %v5425, 4
    %v5428 = vrot.slane %v5229, 5
    %v5429 = vsel %vm3751, %v5427, %v5428
    %v5430 = vrot.slane %v5230, 5
    %v5431 = vrot.slane %v5430, 4
    %v5432 = vrot.slane %v5231, 5
    %v5433 = vsel %vm3751, %v5431, %v5432
    %v5434 = vrot.slane %v5432, 4
    %v5435 = vrot.slane %v5232, 5
    %v5436 = vsel %vm3751, %v5434, %v5435
    %v5437 = vrot.slane %v5233, 5
    %v5438 = vrot.slane %v5437, 4
    %v5439 = vrot.slane %v5234, 5
    %v5440 = vsel %vm3751, %v5438, %v5439
    %v5441 = vrot.slane %v5439, 4
    %v5442 = vrot.slane %v5235, 5
    %v5443 = vsel %vm3751, %v5441, %v5442
    %v5444 = vrot.slane %v5236, 5
    %v5445 = vrot.slane %v5444, 4
    %v5446 = vrot.slane %v5237, 5
    %v5447 = vsel %vm3751, %v5445, %v5446
    %v5448 = vrot.slane %v5446, 4
    %v5449 = vrot.slane %v5238, 5
    %v5450 = vsel %vm3751, %v5448, %v5449
    %v5451 = vrot.slane %v5239, 5
    %v5452 = vrot.slane %v5451, 4
    %v5453 = vrot.slane %v5240, 5
    %v5454 = vsel %vm3751, %v5452, %v5453
    %v5455 = vrot.slane %v5453, 4
    %v5456 = vrot.slane %v5241, 5
    %v5457 = vsel %vm3751, %v5455, %v5456
    %v5458 = vrot.slane %v5242, 5
    %v5459 = vrot.slane %v5458, 4
    %v5460 = vrot.slane %v5243, 5
    %v5461 = vsel %vm3751, %v5459, %v5460
    %v5462 = vrot.slane %v5460, 4
    %v5463 = vrot.slane %v5244, 5
    %v5464 = vsel %vm3751, %v5462, %v5463
    %v5465 = vrot.slane %v5245, 5
    %v5466 = vrot.slane %v5465, 4
    %v5467 = vrot.slane %v5246, 5
    %v5468 = vsel %vm3751, %v5466, %v5467
    %v5469 = vrot.slane %v5467, 4
    %v5470 = vrot.slane %v5247, 5
    %v5471 = vsel %vm3751, %v5469, %v5470
    %v5472 = vrot.slane %v5248, 5
    %v5473 = vrot.slane %v5472, 4
    %v5474 = vrot.slane %v5249, 5
    %v5475 = vsel %vm3751, %v5473, %v5474
    %v5476 = vrot.slane %v5474, 4
    %v5477 = vrot.slane %v5250, 5
    %v5478 = vsel %vm3751, %v5476, %v5477
    %v5479 = vrot.slane %v5251, 5
    %v5480 = vrot.slane %v5479, 4
    %v5481 = vrot.slane %v5252, 5
    %v5482 = vsel %vm3751, %v5480, %v5481
    %v5483 = vrot.slane %v5481, 4
    %v5484 = vrot.slane %v5253, 5
    %v5485 = vsel %vm3751, %v5483, %v5484
    %v5486 = vrot.slane %v5254, 5
    %v5487 = vrot.slane %v5486, 4
    %v5488 = vrot.slane %v5255, 5
    %v5489 = vsel %vm3751, %v5487, %v5488
    %v5490 = vrot.slane %v5488, 4
    %v5491 = vrot.slane %v5256, 5
    %v5492 = vsel %vm3751, %v5490, %v5491
    %v5493 = vrot.slane %v5257, 5
    %v5494 = vrot.slane %v5493, 4
    %v5495 = vrot.slane %v5258, 5
    %v5496 = vsel %vm3751, %v5494, %v5495
    %v5497 = vrot.slane %v5495, 4
    %v5498 = vrot.slane %v5259, 5
    %v5499 = vsel %vm3751, %v5497, %v5498
    %v5500 = vrot.slane %v5260, 5
    %v5501 = vrot.slane %v5500, 4
    %v5502 = vrot.slane %v5261, 5
    %v5503 = vsel %vm3751, %v5501, %v5502
    %v5504 = vrot.slane %v5502, 4
    %v5505 = vrot.slane %v5262, 5
    %v5506 = vsel %vm3751, %v5504, %v5505
    %v5507 = vrot.slane %v5263, 5
    %v5508 = vrot.slane %v5507, 4
    %v5509 = vrot.slane %v5264, 5
    %v5510 = vsel %vm3751, %v5508, %v5509
    %v5511 = vrot.slane %v5509, 4
    %v5512 = vrot.slane %v5265, 5
    %v5513 = vsel %vm3751, %v5511, %v5512
    %v5514 = vrot.slane %v5266, 5
    %v5515 = vrot.slane %v5514, 4
    %v5516 = vrot.slane %v5267, 5
    %v5517 = vsel %vm3751, %v5515, %v5516
    %v5518 = vrot.slane %v5516, 4
    %v5519 = vrot.slane %v5268, 5
    %v5520 = vsel %vm3751, %v5518, %v5519
    %v5521 = vrot.slane %v5269, 5
    %v5522 = vrot.slane %v5521, 4
    %v5523 = vrot.slane %v5270, 5
    %v5524 = vsel %vm3751, %v5522, %v5523
    %v5525 = vrot.slane %v5523, 4
    %v5526 = vrot.slane %v5271, 5
    %v5527 = vsel %vm3751, %v5525, %v5526
    %v5528 = vrot.slane %v5272, 5
    %v5529 = vrot.slane %v5528, 4
    %v5530 = vrot.slane %v5273, 5
    %v5531 = vsel %vm3751, %v5529, %v5530
    %v5532 = vrot.slane %v5530, 4
    %v5533 = vrot.slane %v5274, 5
    %v5534 = vsel %vm3751, %v5532, %v5533
    %v5535 = vrot.slane %v5275, 5
    %v5536 = vrot.slane %v5535, 4
    %v5537 = vrot.slane %v5276, 5
    %v5538 = vsel %vm3751, %v5536, %v5537
    %v5539 = vrot.slane %v5537, 4
    %v5540 = vrot.slane %v5277, 5
    %v5541 = vsel %vm3751, %v5539, %v5540
    %v5542 = vrot.slane %v5278, 5
    %v5543 = vrot.slane %v5542, 4
    %v5544 = vrot.slane %v5279, 5
    %v5545 = vsel %vm3751, %v5543, %v5544
    %v5546 = vrot.slane %v5544, 4
    %v5547 = vrot.slane %v5280, 5
    %v5548 = vsel %vm3751, %v5546, %v5547
    %v5549 = vrot.slane %v5281, 5
    %v5550 = vrot.slane %v5549, 4
    %v5551 = vrot.slane %v5282, 5
    %v5552 = vsel %vm3751, %v5550, %v5551
    %v5553 = vrot.slane %v5551, 4
    %v5554 = vrot.slane %v5283, 5
    %v5555 = vsel %vm3751, %v5553, %v5554
    %v5556 = vrot.slane %v5284, 5
    %v5557 = vrot.slane %v5556, 4
    %v5558 = vrot.slane %v5285, 5
    %v5559 = vsel %vm3751, %v5557, %v5558
    %v5560 = vrot.slane %v5558, 4
    %v5561 = vrot.slane %v5286, 5
    %v5562 = vsel %vm3751, %v5560, %v5561
    %v5563 = vrot.slane %v5287, 5
    %v5564 = vrot.slane %v5563, 4
    %v5565 = vrot.slane %v5288, 5
    %v5566 = vsel %vm3751, %v5564, %v5565
    %v5567 = vrot.slane %v5565, 4
    %v5568 = vrot.slane %v5289, 5
    %v5569 = vsel %vm3751, %v5567, %v5568
    %v5570 = vrot.slane %v5290, 5
    %v5571 = vrot.slane %v5570, 4
    %v5572 = vrot.slane %v5291, 5
    %v5573 = vsel %vm3751, %v5571, %v5572
    %v5574 = vrot.slane %v5572, 4
    %v5575 = vrot.slane %v5292, 5
    %v5576 = vsel %vm3751, %v5574, %v5575
    %v5577 = vrot.slane %v5293, 5
    %v5578 = vrot.slane %v5577, 4
    %v5579 = vrot.slane %v5294, 5
    %v5580 = vsel %vm3751, %v5578, %v5579
    %v5581 = vrot.slane %v5579, 4
    %v5582 = vrot.slane %v5295, 5
    %v5583 = vsel %vm3751, %v5581, %v5582
    %v5584 = vrot.slane %v5296, 5
    %v5585 = vrot.slane %v5584, 4
    %v5586 = vrot.slane %v5297, 5
    %v5587 = vsel %vm3751, %v5585, %v5586
    %v5588 = vrot.slane %v5586, 4
    %v5589 = vrot.slane %v5298, 5
    %v5590 = vsel %vm3751, %v5588, %v5589
    %v5591 = vrot.slane %v5299, 5
    %v5592 = vrot.slane %v5591, 4
    %v5593 = vrot.slane %v5300, 5
    %v5594 = vsel %vm3751, %v5592, %v5593
    %v5595 = vrot.slane %v5593, 4
    %v5596 = vrot.slane %v5301, 5
    %v5597 = vsel %vm3751, %v5595, %v5596
    %v5598 = vrot.slane %v5302, 5
    %v5599 = vrot.slane %v5598, 4
    %v5600 = vrot.slane %v5303, 5
    %v5601 = vsel %vm3751, %v5599, %v5600
    %v5602 = vrot.slane %v5600, 4
    %v5603 = vrot.slane %v5304, 5
    %v5604 = vsel %vm3751, %v5602, %v5603
    %v5605 = vrot.slane %v5305, 5
    %v5606 = vrot.slane %v5605, 4
    %v5607 = vrot.slane %v5306, 5
    %v5608 = vsel %vm3751, %v5606, %v5607
    %v5609 = vrot.slane %v5607, 4
    %v5610 = vrot.slane %v5307, 5
    %v5611 = vsel %vm3751, %v5609, %v5610
    %v5612 = vrot.slane %v5308, 5
    %v5613 = vrot.slane %v5612, 4
    %v5614 = vrot.slane %v5309, 5
    %v5615 = vsel %vm3751, %v5613, %v5614
    %v5616 = vrot.slane %v5614, 4
    %v5617 = vrot.slane %v5310, 5
    %v5618 = vsel %vm3751, %v5616, %v5617
    %v5619 = vrot.slane %v5311, 5
    %v5620 = vrot.slane %v5619, 4
    %v5621 = vrot.slane %v5312, 5
    %v5622 = vsel %vm3751, %v5620, %v5621
    %v5623 = vrot.slane %v5621, 4
    %v5624 = vrot.slane %v5313, 5
    %v5625 = vsel %vm3751, %v5623, %v5624
    %v5626 = vrot.slane %v5314, 5
    %v5627 = vrot.slane %v5626, 4
    %v5628 = vrot.slane %v5315, 5
    %v5629 = vsel %vm3751, %v5627, %v5628
    %v5630 = vrot.slane %v5628, 4
    %v5631 = vrot.slane %v5316, 5
    %v5632 = vsel %vm3751, %v5630, %v5631
    %v5633 = vrot.slane %v5317, 5
    %v5634 = vrot.slane %v5633, 4
    %v5635 = vrot.slane %v5318, 5
    %v5636 = vsel %vm3751, %v5634, %v5635
    %v5637 = vrot.slane %v5635, 4
    %v5638 = vrot.slane %v5319, 5
    %v5639 = vsel %vm3751, %v5637, %v5638
    %5704 = vst [vmem:[#allocation3 + $0x14] sm:$0xf] %v5419
    %5705 = vst [vmem:[#allocation3 + $0x38] sm:$0xf] %v5422
    %5706 = vst [vmem:[#allocation3 + $0x5c] sm:$0xf] %v5426
    %5707 = vst [vmem:[#allocation3 + $0x80] sm:$0xf] %v5429
    %5708 = vst [vmem:[#allocation3 + $0xa4] sm:$0xf] %v5433
    %5709 = vst [vmem:[#allocation3 + $0xc8] sm:$0xf] %v5436
    %5710 = vst [vmem:[#allocation3 + $0xec] sm:$0xf] %v5440
    %5711 = vst [vmem:[#allocation3 + $0x110] sm:$0xf] %v5443
    %5712 = vst [vmem:[#allocation3 + $0x134] sm:$0xf] %v5447
    %5713 = vst [vmem:[#allocation3 + $0x158] sm:$0xf] %v5450
    %5714 = vst [vmem:[#allocation3 + $0x17c] sm:$0xf] %v5454
    %5715 = vst [vmem:[#allocation3 + $0x1a0] sm:$0xf] %v5457
    %5716 = vst [vmem:[#allocation3 + $0x1c4] sm:$0xf] %v5461
    %5717 = vst [vmem:[#allocation3 + $0x1e8] sm:$0xf] %v5464
    %5718 = vst [vmem:[#allocation3 + $0x20c] sm:$0xf] %v5468
    %5719 = vst [vmem:[#allocation3 + $0x230] sm:$0xf] %v5471
    %5720 = vst [vmem:[#allocation3 + $0x254] sm:$0xf] %v5475
    %5721 = vst [vmem:[#allocation3 + $0x278] sm:$0xf] %v5478
    %5722 = vst [vmem:[#allocation3 + $0x29c] sm:$0xf] %v5482
    %5723 = vst [vmem:[#allocation3 + $0x2c0] sm:$0xf] %v5485
    %5724 = vst [vmem:[#allocation3 + $0x2e4] sm:$0xf] %v5489
    %5725 = vst [vmem:[#allocation3 + $0x308] sm:$0xf] %v5492
    %5726 = vst [vmem:[#allocation3 + $0x32c] sm:$0xf] %v5496
    %5727 = vst [vmem:[#allocation3 + $0x350] sm:$0xf] %v5499
    %5728 = vst [vmem:[#allocation3 + $0x374] sm:$0xf] %v5503
    %5729 = vst [vmem:[#allocation3 + $0x398] sm:$0xf] %v5506
    %5730 = vst [vmem:[#allocation3 + $0x3bc] sm:$0xf] %v5510
    %5731 = vst [vmem:[#allocation3 + $0x3e0] sm:$0xf] %v5513
    %5732 = vst [vmem:[#allocation3 + $0x404] sm:$0xf] %v5517
    %5733 = vst [vmem:[#allocation3 + $0x428] sm:$0xf] %v5520
    %5734 = vst [vmem:[#allocation3 + $0x44c] sm:$0xf] %v5524
    %5735 = vst [vmem:[#allocation3 + $0x470] sm:$0xf] %v5527
    %5736 = vst [vmem:[#allocation3 + $0x494] sm:$0xf] %v5531
    %5737 = vst [vmem:[#allocation3 + $0x4b8] sm:$0xf] %v5534
    %5738 = vst [vmem:[#allocation3 + $0x4dc] sm:$0xf] %v5538
    %5739 = vst [vmem:[#allocation3 + $0x500] sm:$0xf] %v5541
    %5740 = vst [vmem:[#allocation3 + $0x524] sm:$0xf] %v5545
    %5741 = vst [vmem:[#allocation3 + $0x548] sm:$0xf] %v5548
    %5742 = vst [vmem:[#allocation3 + $0x56c] sm:$0xf] %v5552
    %5743 = vst [vmem:[#allocation3 + $0x590] sm:$0xf] %v5555
    %5744 = vst [vmem:[#allocation3 + $0x5b4] sm:$0xf] %v5559
    %5745 = vst [vmem:[#allocation3 + $0x5d8] sm:$0xf] %v5562
    %5746 = vst [vmem:[#allocation3 + $0x5fc] sm:$0xf] %v5566
    %5747 = vst [vmem:[#allocation3 + $0x620] sm:$0xf] %v5569
    %5748 = vst [vmem:[#allocation3 + $0x644] sm:$0xf] %v5573
    %5749 = vst [vmem:[#allocation3 + $0x668] sm:$0xf] %v5576
    %5750 = vst [vmem:[#allocation3 + $0x68c] sm:$0xf] %v5580
    %5751 = vst [vmem:[#allocation3 + $0x6b0] sm:$0xf] %v5583
    %5752 = vst [vmem:[#allocation3 + $0x6d4] sm:$0xf] %v5587
    %5753 = vst [vmem:[#allocation3 + $0x6f8] sm:$0xf] %v5590
    %5754 = vst [vmem:[#allocation3 + $0x71c] sm:$0xf] %v5594
    %5755 = vst [vmem:[#allocation3 + $0x740] sm:$0xf] %v5597
    %5756 = vst [vmem:[#allocation3 + $0x764] sm:$0xf] %v5601
    %5757 = vst [vmem:[#allocation3 + $0x788] sm:$0xf] %v5604
    %5758 = vst [vmem:[#allocation3 + $0x7ac] sm:$0xf] %v5608
    %5759 = vst [vmem:[#allocation3 + $0x7d0] sm:$0xf] %v5611
    %5760 = vst [vmem:[#allocation3 + $0x7f4] sm:$0xf] %v5615
    %5761 = vst [vmem:[#allocation3 + $0x818] sm:$0xf] %v5618
    %5762 = vst [vmem:[#allocation3 + $0x83c] sm:$0xf] %v5622
    %5763 = vst [vmem:[#allocation3 + $0x860] sm:$0xf] %v5625
    %5764 = vst [vmem:[#allocation3 + $0x884] sm:$0xf] %v5629
    %5765 = vst [vmem:[#allocation3 + $0x8a8] sm:$0xf] %v5632
    %5766 = vst [vmem:[#allocation3 + $0x8cc] sm:$0xf] %v5636
    %5767 = vst [vmem:[#allocation3 + $0x8f0] sm:$0xf] %v5639
    %s5768 = scalar_lea.vmem [#allocation2], 24
    %v5769 = vld [vmem:[%s5768] sm:$0xf]
    %v5770 = vld [vmem:[%s5768 + $0x4] sm:$0xf]
    %v5771 = vld [vmem:[%s5768 + $0xc] sm:$0xf]
    %v5772 = vld [vmem:[%s5768 + $0x10] sm:$0xf]
    %v5773 = vld [vmem:[%s5768 + $0x18] sm:$0xf]
    %v5774 = vld [vmem:[%s5768 + $0x1c] sm:$0xf]
    %v5775 = vld [vmem:[%s5768 + $0x24] sm:$0xf]
    %v5776 = vld [vmem:[%s5768 + $0x28] sm:$0xf]
    %v5777 = vld [vmem:[%s5768 + $0x30] sm:$0xf]
    %v5778 = vld [vmem:[%s5768 + $0x34] sm:$0xf]
    %v5779 = vld [vmem:[%s5768 + $0x3c] sm:$0xf]
    %v5780 = vld [vmem:[%s5768 + $0x40] sm:$0xf]
    %v5781 = vld [vmem:[%s5768 + $0x48] sm:$0xf]
    %v5782 = vld [vmem:[%s5768 + $0x4c] sm:$0xf]
    %v5783 = vld [vmem:[%s5768 + $0x54] sm:$0xf]
    %v5784 = vld [vmem:[%s5768 + $0x58] sm:$0xf]
    %v5785 = vld [vmem:[%s5768 + $0x60] sm:$0xf]
    %v5786 = vld [vmem:[%s5768 + $0x64] sm:$0xf]
    %v5787 = vld [vmem:[%s5768 + $0x6c] sm:$0xf]
    %v5788 = vld [vmem:[%s5768 + $0x70] sm:$0xf]
    %v5789 = vld [vmem:[%s5768 + $0x78] sm:$0xf]
    %v5790 = vld [vmem:[%s5768 + $0x7c] sm:$0xf]
    %v5791 = vld [vmem:[%s5768 + $0x84] sm:$0xf]
    %v5792 = vld [vmem:[%s5768 + $0x88] sm:$0xf]
    %v5793 = vld [vmem:[%s5768 + $0x90] sm:$0xf]
    %v5794 = vld [vmem:[%s5768 + $0x94] sm:$0xf]
    %v5795 = vld [vmem:[%s5768 + $0x9c] sm:$0xf]
    %v5796 = vld [vmem:[%s5768 + $0xa0] sm:$0xf]
    %v5797 = vld [vmem:[%s5768 + $0xa8] sm:$0xf]
    %v5798 = vld [vmem:[%s5768 + $0xac] sm:$0xf]
    %v5799 = vld [vmem:[%s5768 + $0xb4] sm:$0xf]
    %v5800 = vld [vmem:[%s5768 + $0xb8] sm:$0xf]
    %v5801 = vld [vmem:[%s5768 + $0xd8] sm:$0xf]
    %v5802 = vld [vmem:[%s5768 + $0xdc] sm:$0xf]
    %v5803 = vld [vmem:[%s5768 + $0xe4] sm:$0xf]
    %v5804 = vld [vmem:[%s5768 + $0xe8] sm:$0xf]
    %v5805 = vld [vmem:[%s5768 + $0xf0] sm:$0xf]
    %v5806 = vld [vmem:[%s5768 + $0xf4] sm:$0xf]
    %v5807 = vld [vmem:[%s5768 + $0xfc] sm:$0xf]
    %v5808 = vld [vmem:[%s5768 + $0x100] sm:$0xf]
    %v5809 = vld [vmem:[%s5768 + $0x108] sm:$0xf]
    %v5810 = vld [vmem:[%s5768 + $0x10c] sm:$0xf]
    %v5811 = vld [vmem:[%s5768 + $0x114] sm:$0xf]
    %v5812 = vld [vmem:[%s5768 + $0x118] sm:$0xf]
    %v5813 = vld [vmem:[%s5768 + $0x120] sm:$0xf]
    %v5814 = vld [vmem:[%s5768 + $0x124] sm:$0xf]
    %v5815 = vld [vmem:[%s5768 + $0x12c] sm:$0xf]
    %v5816 = vld [vmem:[%s5768 + $0x130] sm:$0xf]
    %v5817 = vld [vmem:[%s5768 + $0x138] sm:$0xf]
    %v5818 = vld [vmem:[%s5768 + $0x13c] sm:$0xf]
    %v5819 = vld [vmem:[%s5768 + $0x144] sm:$0xf]
    %v5820 = vld [vmem:[%s5768 + $0x148] sm:$0xf]
    %v5821 = vld [vmem:[%s5768 + $0x150] sm:$0xf]
    %v5822 = vld [vmem:[%s5768 + $0x154] sm:$0xf]
    %v5823 = vld [vmem:[%s5768 + $0x15c] sm:$0xf]
    %v5824 = vld [vmem:[%s5768 + $0x160] sm:$0xf]
    %v5825 = vld [vmem:[%s5768 + $0x168] sm:$0xf]
    %v5826 = vld [vmem:[%s5768 + $0x16c] sm:$0xf]
    %v5827 = vld [vmem:[%s5768 + $0x174] sm:$0xf]
    %v5828 = vld [vmem:[%s5768 + $0x178] sm:$0xf]
    %v5829 = vld [vmem:[%s5768 + $0x180] sm:$0xf]
    %v5830 = vld [vmem:[%s5768 + $0x184] sm:$0xf]
    %v5831 = vld [vmem:[%s5768 + $0x18c] sm:$0xf]
    %v5832 = vld [vmem:[%s5768 + $0x190] sm:$0xf]
    %5833 = vst [vmem:[#allocation3 + $0x18] sm:$0xf] %v5769
    %5834 = vst [vmem:[#allocation3 + $0x3c] sm:$0xf] %v5770
    %5835 = vst [vmem:[#allocation3 + $0x60] sm:$0xf] %v5771
    %5836 = vst [vmem:[#allocation3 + $0x84] sm:$0xf] %v5772
    %5837 = vst [vmem:[#allocation3 + $0xa8] sm:$0xf] %v5773
    %5838 = vst [vmem:[#allocation3 + $0xcc] sm:$0xf] %v5774
    %5839 = vst [vmem:[#allocation3 + $0xf0] sm:$0xf] %v5775
    %5840 = vst [vmem:[#allocation3 + $0x114] sm:$0xf] %v5776
    %5841 = vst [vmem:[#allocation3 + $0x138] sm:$0xf] %v5777
    %5842 = vst [vmem:[#allocation3 + $0x15c] sm:$0xf] %v5778
    %5843 = vst [vmem:[#allocation3 + $0x180] sm:$0xf] %v5779
    %5844 = vst [vmem:[#allocation3 + $0x1a4] sm:$0xf] %v5780
    %5845 = vst [vmem:[#allocation3 + $0x1c8] sm:$0xf] %v5781
    %5846 = vst [vmem:[#allocation3 + $0x1ec] sm:$0xf] %v5782
    %5847 = vst [vmem:[#allocation3 + $0x210] sm:$0xf] %v5783
    %5848 = vst [vmem:[#allocation3 + $0x234] sm:$0xf] %v5784
    %5849 = vst [vmem:[#allocation3 + $0x258] sm:$0xf] %v5785
    %5850 = vst [vmem:[#allocation3 + $0x27c] sm:$0xf] %v5786
    %5851 = vst [vmem:[#allocation3 + $0x2a0] sm:$0xf] %v5787
    %5852 = vst [vmem:[#allocation3 + $0x2c4] sm:$0xf] %v5788
    %5853 = vst [vmem:[#allocation3 + $0x2e8] sm:$0xf] %v5789
    %5854 = vst [vmem:[#allocation3 + $0x30c] sm:$0xf] %v5790
    %5855 = vst [vmem:[#allocation3 + $0x330] sm:$0xf] %v5791
    %5856 = vst [vmem:[#allocation3 + $0x354] sm:$0xf] %v5792
    %5857 = vst [vmem:[#allocation3 + $0x378] sm:$0xf] %v5793
    %5858 = vst [vmem:[#allocation3 + $0x39c] sm:$0xf] %v5794
    %5859 = vst [vmem:[#allocation3 + $0x3c0] sm:$0xf] %v5795
    %5860 = vst [vmem:[#allocation3 + $0x3e4] sm:$0xf] %v5796
    %5861 = vst [vmem:[#allocation3 + $0x408] sm:$0xf] %v5797
    %5862 = vst [vmem:[#allocation3 + $0x42c] sm:$0xf] %v5798
    %5863 = vst [vmem:[#allocation3 + $0x450] sm:$0xf] %v5799
    %5864 = vst [vmem:[#allocation3 + $0x474] sm:$0xf] %v5800
    %5865 = vst [vmem:[#allocation3 + $0x498] sm:$0xf] %v5801
    %5866 = vst [vmem:[#allocation3 + $0x4bc] sm:$0xf] %v5802
    %5867 = vst [vmem:[#allocation3 + $0x4e0] sm:$0xf] %v5803
    %5868 = vst [vmem:[#allocation3 + $0x504] sm:$0xf] %v5804
    %5869 = vst [vmem:[#allocation3 + $0x528] sm:$0xf] %v5805
    %5870 = vst [vmem:[#allocation3 + $0x54c] sm:$0xf] %v5806
    %5871 = vst [vmem:[#allocation3 + $0x570] sm:$0xf] %v5807
    %5872 = vst [vmem:[#allocation3 + $0x594] sm:$0xf] %v5808
    %5873 = vst [vmem:[#allocation3 + $0x5b8] sm:$0xf] %v5809
    %5874 = vst [vmem:[#allocation3 + $0x5dc] sm:$0xf] %v5810
    %5875 = vst [vmem:[#allocation3 + $0x600] sm:$0xf] %v5811
    %5876 = vst [vmem:[#allocation3 + $0x624] sm:$0xf] %v5812
    %5877 = vst [vmem:[#allocation3 + $0x648] sm:$0xf] %v5813
    %5878 = vst [vmem:[#allocation3 + $0x66c] sm:$0xf] %v5814
    %5879 = vst [vmem:[#allocation3 + $0x690] sm:$0xf] %v5815
    %5880 = vst [vmem:[#allocation3 + $0x6b4] sm:$0xf] %v5816
    %5881 = vst [vmem:[#allocation3 + $0x6d8] sm:$0xf] %v5817
    %5882 = vst [vmem:[#allocation3 + $0x6fc] sm:$0xf] %v5818
    %5883 = vst [vmem:[#allocation3 + $0x720] sm:$0xf] %v5819
    %5884 = vst [vmem:[#allocation3 + $0x744] sm:$0xf] %v5820
    %5885 = vst [vmem:[#allocation3 + $0x768] sm:$0xf] %v5821
    %5886 = vst [vmem:[#allocation3 + $0x78c] sm:$0xf] %v5822
    %5887 = vst [vmem:[#allocation3 + $0x7b0] sm:$0xf] %v5823
    %5888 = vst [vmem:[#allocation3 + $0x7d4] sm:$0xf] %v5824
    %5889 = vst [vmem:[#allocation3 + $0x7f8] sm:$0xf] %v5825
    %5890 = vst [vmem:[#allocation3 + $0x81c] sm:$0xf] %v5826
    %5891 = vst [vmem:[#allocation3 + $0x840] sm:$0xf] %v5827
    %5892 = vst [vmem:[#allocation3 + $0x864] sm:$0xf] %v5828
    %5893 = vst [vmem:[#allocation3 + $0x888] sm:$0xf] %v5829
    %5894 = vst [vmem:[#allocation3 + $0x8ac] sm:$0xf] %v5830
    %5895 = vst [vmem:[#allocation3 + $0x8d0] sm:$0xf] %v5831
    %5896 = vst [vmem:[#allocation3 + $0x8f4] sm:$0xf] %v5832
    %v5897 = vld [vmem:[%s5768] sm:$0xf]
    %v5898 = vld [vmem:[%s5768 + $0x4] sm:$0xf]
    %v5899 = vld [vmem:[%s5768 + $0x8] sm:$0x1]
    %v5900 = vld [vmem:[%s5768 + $0xc] sm:$0xf]
    %v5901 = vld [vmem:[%s5768 + $0x10] sm:$0xf]
    %v5902 = vld [vmem:[%s5768 + $0x14] sm:$0x1]
    %v5903 = vld [vmem:[%s5768 + $0x18] sm:$0xf]
    %v5904 = vld [vmem:[%s5768 + $0x1c] sm:$0xf]
    %v5905 = vld [vmem:[%s5768 + $0x20] sm:$0x1]
    %v5906 = vld [vmem:[%s5768 + $0x24] sm:$0xf]
    %v5907 = vld [vmem:[%s5768 + $0x28] sm:$0xf]
    %v5908 = vld [vmem:[%s5768 + $0x2c] sm:$0x1]
    %v5909 = vld [vmem:[%s5768 + $0x30] sm:$0xf]
    %v5910 = vld [vmem:[%s5768 + $0x34] sm:$0xf]
    %v5911 = vld [vmem:[%s5768 + $0x38] sm:$0x1]
    %v5912 = vld [vmem:[%s5768 + $0x3c] sm:$0xf]
    %v5913 = vld [vmem:[%s5768 + $0x40] sm:$0xf]
    %v5914 = vld [vmem:[%s5768 + $0x44] sm:$0x1]
    %v5915 = vld [vmem:[%s5768 + $0x48] sm:$0xf]
    %v5916 = vld [vmem:[%s5768 + $0x4c] sm:$0xf]
    %v5917 = vld [vmem:[%s5768 + $0x50] sm:$0x1]
    %v5918 = vld [vmem:[%s5768 + $0x54] sm:$0xf]
    %v5919 = vld [vmem:[%s5768 + $0x58] sm:$0xf]
    %v5920 = vld [vmem:[%s5768 + $0x5c] sm:$0x1]
    %v5921 = vld [vmem:[%s5768 + $0x60] sm:$0xf]
    %v5922 = vld [vmem:[%s5768 + $0x64] sm:$0xf]
    %v5923 = vld [vmem:[%s5768 + $0x68] sm:$0x1]
    %v5924 = vld [vmem:[%s5768 + $0x6c] sm:$0xf]
    %v5925 = vld [vmem:[%s5768 + $0x70] sm:$0xf]
    %v5926 = vld [vmem:[%s5768 + $0x74] sm:$0x1]
    %v5927 = vld [vmem:[%s5768 + $0x78] sm:$0xf]
    %v5928 = vld [vmem:[%s5768 + $0x7c] sm:$0xf]
    %v5929 = vld [vmem:[%s5768 + $0x80] sm:$0x1]
    %v5930 = vld [vmem:[%s5768 + $0x84] sm:$0xf]
    %v5931 = vld [vmem:[%s5768 + $0x88] sm:$0xf]
    %v5932 = vld [vmem:[%s5768 + $0x8c] sm:$0x1]
    %v5933 = vld [vmem:[%s5768 + $0x90] sm:$0xf]
    %v5934 = vld [vmem:[%s5768 + $0x94] sm:$0xf]
    %v5935 = vld [vmem:[%s5768 + $0x98] sm:$0x1]
    %v5936 = vld [vmem:[%s5768 + $0x9c] sm:$0xf]
    %v5937 = vld [vmem:[%s5768 + $0xa0] sm:$0xf]
    %v5938 = vld [vmem:[%s5768 + $0xa4] sm:$0x1]
    %v5939 = vld [vmem:[%s5768 + $0xa8] sm:$0xf]
    %v5940 = vld [vmem:[%s5768 + $0xac] sm:$0xf]
    %v5941 = vld [vmem:[%s5768 + $0xb0] sm:$0x1]
    %v5942 = vld [vmem:[%s5768 + $0xb4] sm:$0xf]
    %v5943 = vld [vmem:[%s5768 + $0xb8] sm:$0xf]
    %v5944 = vld [vmem:[%s5768 + $0xbc] sm:$0x1]
    %v5945 = vld [vmem:[%s5768 + $0xd8] sm:$0xf]
    %v5946 = vld [vmem:[%s5768 + $0xdc] sm:$0xf]
    %v5947 = vld [vmem:[%s5768 + $0xe0] sm:$0x1]
    %v5948 = vld [vmem:[%s5768 + $0xe4] sm:$0xf]
    %v5949 = vld [vmem:[%s5768 + $0xe8] sm:$0xf]
    %v5950 = vld [vmem:[%s5768 + $0xec] sm:$0x1]
    %v5951 = vld [vmem:[%s5768 + $0xf0] sm:$0xf]
    %v5952 = vld [vmem:[%s5768 + $0xf4] sm:$0xf]
    %v5953 = vld [vmem:[%s5768 + $0xf8] sm:$0x1]
    %v5954 = vld [vmem:[%s5768 + $0xfc] sm:$0xf]
    %v5955 = vld [vmem:[%s5768 + $0x100] sm:$0xf]
    %v5956 = vld [vmem:[%s5768 + $0x104] sm:$0x1]
    %v5957 = vld [vmem:[%s5768 + $0x108] sm:$0xf]
    %v5958 = vld [vmem:[%s5768 + $0x10c] sm:$0xf]
    %v5959 = vld [vmem:[%s5768 + $0x110] sm:$0x1]
    %v5960 = vld [vmem:[%s5768 + $0x114] sm:$0xf]
    %v5961 = vld [vmem:[%s5768 + $0x118] sm:$0xf]
    %v5962 = vld [vmem:[%s5768 + $0x11c] sm:$0x1]
    %v5963 = vld [vmem:[%s5768 + $0x120] sm:$0xf]
    %v5964 = vld [vmem:[%s5768 + $0x124] sm:$0xf]
    %v5965 = vld [vmem:[%s5768 + $0x128] sm:$0x1]
    %v5966 = vld [vmem:[%s5768 + $0x12c] sm:$0xf]
    %v5967 = vld [vmem:[%s5768 + $0x130] sm:$0xf]
    %v5968 = vld [vmem:[%s5768 + $0x134] sm:$0x1]
    %v5969 = vld [vmem:[%s5768 + $0x138] sm:$0xf]
    %v5970 = vld [vmem:[%s5768 + $0x13c] sm:$0xf]
    %v5971 = vld [vmem:[%s5768 + $0x140] sm:$0x1]
    %v5972 = vld [vmem:[%s5768 + $0x144] sm:$0xf]
    %v5973 = vld [vmem:[%s5768 + $0x148] sm:$0xf]
    %v5974 = vld [vmem:[%s5768 + $0x14c] sm:$0x1]
    %v5975 = vld [vmem:[%s5768 + $0x150] sm:$0xf]
    %v5976 = vld [vmem:[%s5768 + $0x154] sm:$0xf]
    %v5977 = vld [vmem:[%s5768 + $0x158] sm:$0x1]
    %v5978 = vld [vmem:[%s5768 + $0x15c] sm:$0xf]
    %v5979 = vld [vmem:[%s5768 + $0x160] sm:$0xf]
    %v5980 = vld [vmem:[%s5768 + $0x164] sm:$0x1]
    %v5981 = vld [vmem:[%s5768 + $0x168] sm:$0xf]
    %v5982 = vld [vmem:[%s5768 + $0x16c] sm:$0xf]
    %v5983 = vld [vmem:[%s5768 + $0x170] sm:$0x1]
    %v5984 = vld [vmem:[%s5768 + $0x174] sm:$0xf]
    %v5985 = vld [vmem:[%s5768 + $0x178] sm:$0xf]
    %v5986 = vld [vmem:[%s5768 + $0x17c] sm:$0x1]
    %v5987 = vld [vmem:[%s5768 + $0x180] sm:$0xf]
    %v5988 = vld [vmem:[%s5768 + $0x184] sm:$0xf]
    %v5989 = vld [vmem:[%s5768 + $0x188] sm:$0x1]
    %v5990 = vld [vmem:[%s5768 + $0x18c] sm:$0xf]
    %v5991 = vld [vmem:[%s5768 + $0x190] sm:$0xf]
    %v5992 = vld [vmem:[%s5768 + $0x194] sm:$0x1]
    %v5994 = vshrl.u32 %v5897, 16
    %v5996 = vrot.slane %v5994, 4
    %v5997 = vshll.u32 %v5897, 16
    %v5999 = vrot.slane %v5997, 5
    %v6000 = vor.u32 %v5996, %v5999
    %v6001 = vrot.slane %v6000, 4
    %v6003 = vshll.u32 %v5898, 16
    %v6005 = vrot.slane %v6003, 5
    %v6006 = vsel %vm2660, %v6001, %v6005
    %v6007 = vshrl.u32 %v5898, 16
    %v6009 = vrot.slane %v6007, 4
    %v6010 = vor.u32 %v6009, %v6005
    %v6011 = vrot.slane %v6010, 4
    %v6013 = vshll.u32 %v5899, 16
    %v6015 = vrot.slane %v6013, 5
    %v6016 = vsel %vm2660, %v6011, %v6015
    %v6018 = vshrl.u32 %v5900, 16
    %v6020 = vrot.slane %v6018, 4
    %v6021 = vshll.u32 %v5900, 16
    %v6023 = vrot.slane %v6021, 5
    %v6024 = vor.u32 %v6020, %v6023
    %v6025 = vrot.slane %v6024, 4
    %v6027 = vshll.u32 %v5901, 16
    %v6029 = vrot.slane %v6027, 5
    %v6030 = vsel %vm2660, %v6025, %v6029
    %v6031 = vshrl.u32 %v5901, 16
    %v6033 = vrot.slane %v6031, 4
    %v6034 = vor.u32 %v6033, %v6029
    %v6035 = vrot.slane %v6034, 4
    %v6037 = vshll.u32 %v5902, 16
    %v6039 = vrot.slane %v6037, 5
    %v6040 = vsel %vm2660, %v6035, %v6039
    %v6042 = vshrl.u32 %v5903, 16
    %v6044 = vrot.slane %v6042, 4
    %v6045 = vshll.u32 %v5903, 16
    %v6047 = vrot.slane %v6045, 5
    %v6048 = vor.u32 %v6044, %v6047
    %v6049 = vrot.slane %v6048, 4
    %v6051 = vshll.u32 %v5904, 16
    %v6053 = vrot.slane %v6051, 5
    %v6054 = vsel %vm2660, %v6049, %v6053
    %v6055 = vshrl.u32 %v5904, 16
    %v6057 = vrot.slane %v6055, 4
    %v6058 = vor.u32 %v6057, %v6053
    %v6059 = vrot.slane %v6058, 4
    %v6061 = vshll.u32 %v5905, 16
    %v6063 = vrot.slane %v6061, 5
    %v6064 = vsel %vm2660, %v6059, %v6063
    %v6066 = vshrl.u32 %v5906, 16
    %v6068 = vrot.slane %v6066, 4
    %v6069 = vshll.u32 %v5906, 16
    %v6071 = vrot.slane %v6069, 5
    %v6072 = vor.u32 %v6068, %v6071
    %v6073 = vrot.slane %v6072, 4
    %v6075 = vshll.u32 %v5907, 16
    %v6077 = vrot.slane %v6075, 5
    %v6078 = vsel %vm2660, %v6073, %v6077
    %v6079 = vshrl.u32 %v5907, 16
    %v6081 = vrot.slane %v6079, 4
    %v6082 = vor.u32 %v6081, %v6077
    %v6083 = vrot.slane %v6082, 4
    %v6085 = vshll.u32 %v5908, 16
    %v6087 = vrot.slane %v6085, 5
    %v6088 = vsel %vm2660, %v6083, %v6087
    %v6090 = vshrl.u32 %v5909, 16
    %v6092 = vrot.slane %v6090, 4
    %v6093 = vshll.u32 %v5909, 16
    %v6095 = vrot.slane %v6093, 5
    %v6096 = vor.u32 %v6092, %v6095
    %v6097 = vrot.slane %v6096, 4
    %v6099 = vshll.u32 %v5910, 16
    %v6101 = vrot.slane %v6099, 5
    %v6102 = vsel %vm2660, %v6097, %v6101
    %v6103 = vshrl.u32 %v5910, 16
    %v6105 = vrot.slane %v6103, 4
    %v6106 = vor.u32 %v6105, %v6101
    %v6107 = vrot.slane %v6106, 4
    %v6109 = vshll.u32 %v5911, 16
    %v6111 = vrot.slane %v6109, 5
    %v6112 = vsel %vm2660, %v6107, %v6111
    %v6114 = vshrl.u32 %v5912, 16
    %v6116 = vrot.slane %v6114, 4
    %v6117 = vshll.u32 %v5912, 16
    %v6119 = vrot.slane %v6117, 5
    %v6120 = vor.u32 %v6116, %v6119
    %v6121 = vrot.slane %v6120, 4
    %v6123 = vshll.u32 %v5913, 16
    %v6125 = vrot.slane %v6123, 5
    %v6126 = vsel %vm2660, %v6121, %v6125
    %v6127 = vshrl.u32 %v5913, 16
    %v6129 = vrot.slane %v6127, 4
    %v6130 = vor.u32 %v6129, %v6125
    %v6131 = vrot.slane %v6130, 4
    %v6133 = vshll.u32 %v5914, 16
    %v6135 = vrot.slane %v6133, 5
    %v6136 = vsel %vm2660, %v6131, %v6135
    %v6138 = vshrl.u32 %v5915, 16
    %v6140 = vrot.slane %v6138, 4
    %v6141 = vshll.u32 %v5915, 16
    %v6143 = vrot.slane %v6141, 5
    %v6144 = vor.u32 %v6140, %v6143
    %v6145 = vrot.slane %v6144, 4
    %v6147 = vshll.u32 %v5916, 16
    %v6149 = vrot.slane %v6147, 5
    %v6150 = vsel %vm2660, %v6145, %v6149
    %v6151 = vshrl.u32 %v5916, 16
    %v6153 = vrot.slane %v6151, 4
    %v6154 = vor.u32 %v6153, %v6149
    %v6155 = vrot.slane %v6154, 4
    %v6157 = vshll.u32 %v5917, 16
    %v6159 = vrot.slane %v6157, 5
    %v6160 = vsel %vm2660, %v6155, %v6159
    %v6162 = vshrl.u32 %v5918, 16
    %v6164 = vrot.slane %v6162, 4
    %v6165 = vshll.u32 %v5918, 16
    %v6167 = vrot.slane %v6165, 5
    %v6168 = vor.u32 %v6164, %v6167
    %v6169 = vrot.slane %v6168, 4
    %v6171 = vshll.u32 %v5919, 16
    %v6173 = vrot.slane %v6171, 5
    %v6174 = vsel %vm2660, %v6169, %v6173
    %v6175 = vshrl.u32 %v5919, 16
    %v6177 = vrot.slane %v6175, 4
    %v6178 = vor.u32 %v6177, %v6173
    %v6179 = vrot.slane %v6178, 4
    %v6181 = vshll.u32 %v5920, 16
    %v6183 = vrot.slane %v6181, 5
    %v6184 = vsel %vm2660, %v6179, %v6183
    %v6186 = vshrl.u32 %v5921, 16
    %v6188 = vrot.slane %v6186, 4
    %v6189 = vshll.u32 %v5921, 16
    %v6191 = vrot.slane %v6189, 5
    %v6192 = vor.u32 %v6188, %v6191
    %v6193 = vrot.slane %v6192, 4
    %v6195 = vshll.u32 %v5922, 16
    %v6197 = vrot.slane %v6195, 5
    %v6198 = vsel %vm2660, %v6193, %v6197
    %v6199 = vshrl.u32 %v5922, 16
    %v6201 = vrot.slane %v6199, 4
    %v6202 = vor.u32 %v6201, %v6197
    %v6203 = vrot.slane %v6202, 4
    %v6205 = vshll.u32 %v5923, 16
    %v6207 = vrot.slane %v6205, 5
    %v6208 = vsel %vm2660, %v6203, %v6207
    %v6210 = vshrl.u32 %v5924, 16
    %v6212 = vrot.slane %v6210, 4
    %v6213 = vshll.u32 %v5924, 16
    %v6215 = vrot.slane %v6213, 5
    %v6216 = vor.u32 %v6212, %v6215
    %v6217 = vrot.slane %v6216, 4
    %v6219 = vshll.u32 %v5925, 16
    %v6221 = vrot.slane %v6219, 5
    %v6222 = vsel %vm2660, %v6217, %v6221
    %v6223 = vshrl.u32 %v5925, 16
    %v6225 = vrot.slane %v6223, 4
    %v6226 = vor.u32 %v6225, %v6221
    %v6227 = vrot.slane %v6226, 4
    %v6229 = vshll.u32 %v5926, 16
    %v6231 = vrot.slane %v6229, 5
    %v6232 = vsel %vm2660, %v6227, %v6231
    %v6234 = vshrl.u32 %v5927, 16
    %v6236 = vrot.slane %v6234, 4
    %v6237 = vshll.u32 %v5927, 16
    %v6239 = vrot.slane %v6237, 5
    %v6240 = vor.u32 %v6236, %v6239
    %v6241 = vrot.slane %v6240, 4
    %v6243 = vshll.u32 %v5928, 16
    %v6245 = vrot.slane %v6243, 5
    %v6246 = vsel %vm2660, %v6241, %v6245
    %v6247 = vshrl.u32 %v5928, 16
    %v6249 = vrot.slane %v6247, 4
    %v6250 = vor.u32 %v6249, %v6245
    %v6251 = vrot.slane %v6250, 4
    %v6253 = vshll.u32 %v5929, 16
    %v6255 = vrot.slane %v6253, 5
    %v6256 = vsel %vm2660, %v6251, %v6255
    %v6258 = vshrl.u32 %v5930, 16
    %v6260 = vrot.slane %v6258, 4
    %v6261 = vshll.u32 %v5930, 16
    %v6263 = vrot.slane %v6261, 5
    %v6264 = vor.u32 %v6260, %v6263
    %v6265 = vrot.slane %v6264, 4
    %v6267 = vshll.u32 %v5931, 16
    %v6269 = vrot.slane %v6267, 5
    %v6270 = vsel %vm2660, %v6265, %v6269
    %v6271 = vshrl.u32 %v5931, 16
    %v6273 = vrot.slane %v6271, 4
    %v6274 = vor.u32 %v6273, %v6269
    %v6275 = vrot.slane %v6274, 4
    %v6277 = vshll.u32 %v5932, 16
    %v6279 = vrot.slane %v6277, 5
    %v6280 = vsel %vm2660, %v6275, %v6279
    %v6282 = vshrl.u32 %v5933, 16
    %v6284 = vrot.slane %v6282, 4
    %v6285 = vshll.u32 %v5933, 16
    %v6287 = vrot.slane %v6285, 5
    %v6288 = vor.u32 %v6284, %v6287
    %v6289 = vrot.slane %v6288, 4
    %v6291 = vshll.u32 %v5934, 16
    %v6293 = vrot.slane %v6291, 5
    %v6294 = vsel %vm2660, %v6289, %v6293
    %v6295 = vshrl.u32 %v5934, 16
    %v6297 = vrot.slane %v6295, 4
    %v6298 = vor.u32 %v6297, %v6293
    %v6299 = vrot.slane %v6298, 4
    %v6301 = vshll.u32 %v5935, 16
    %v6303 = vrot.slane %v6301, 5
    %v6304 = vsel %vm2660, %v6299, %v6303
    %v6306 = vshrl.u32 %v5936, 16
    %v6308 = vrot.slane %v6306, 4
    %v6309 = vshll.u32 %v5936, 16
    %v6311 = vrot.slane %v6309, 5
    %v6312 = vor.u32 %v6308, %v6311
    %v6313 = vrot.slane %v6312, 4
    %v6315 = vshll.u32 %v5937, 16
    %v6317 = vrot.slane %v6315, 5
    %v6318 = vsel %vm2660, %v6313, %v6317
    %v6319 = vshrl.u32 %v5937, 16
    %v6321 = vrot.slane %v6319, 4
    %v6322 = vor.u32 %v6321, %v6317
    %v6323 = vrot.slane %v6322, 4
    %v6325 = vshll.u32 %v5938, 16
    %v6327 = vrot.slane %v6325, 5
    %v6328 = vsel %vm2660, %v6323, %v6327
    %v6330 = vshrl.u32 %v5939, 16
    %v6332 = vrot.slane %v6330, 4
    %v6333 = vshll.u32 %v5939, 16
    %v6335 = vrot.slane %v6333, 5
    %v6336 = vor.u32 %v6332, %v6335
    %v6337 = vrot.slane %v6336, 4
    %v6339 = vshll.u32 %v5940, 16
    %v6341 = vrot.slane %v6339, 5
    %v6342 = vsel %vm2660, %v6337, %v6341
    %v6343 = vshrl.u32 %v5940, 16
    %v6345 = vrot.slane %v6343, 4
    %v6346 = vor.u32 %v6345, %v6341
    %v6347 = vrot.slane %v6346, 4
    %v6349 = vshll.u32 %v5941, 16
    %v6351 = vrot.slane %v6349, 5
    %v6352 = vsel %vm2660, %v6347, %v6351
    %v6354 = vshrl.u32 %v5942, 16
    %v6356 = vrot.slane %v6354, 4
    %v6357 = vshll.u32 %v5942, 16
    %v6359 = vrot.slane %v6357, 5
    %v6360 = vor.u32 %v6356, %v6359
    %v6361 = vrot.slane %v6360, 4
    %v6363 = vshll.u32 %v5943, 16
    %v6365 = vrot.slane %v6363, 5
    %v6366 = vsel %vm2660, %v6361, %v6365
    %v6367 = vshrl.u32 %v5943, 16
    %v6369 = vrot.slane %v6367, 4
    %v6370 = vor.u32 %v6369, %v6365
    %v6371 = vrot.slane %v6370, 4
    %v6373 = vshll.u32 %v5944, 16
    %v6375 = vrot.slane %v6373, 5
    %v6376 = vsel %vm2660, %v6371, %v6375
    %v6378 = vshrl.u32 %v5945, 16
    %v6380 = vrot.slane %v6378, 4
    %v6381 = vshll.u32 %v5945, 16
    %v6383 = vrot.slane %v6381, 5
    %v6384 = vor.u32 %v6380, %v6383
    %v6385 = vrot.slane %v6384, 4
    %v6387 = vshll.u32 %v5946, 16
    %v6389 = vrot.slane %v6387, 5
    %v6390 = vsel %vm2660, %v6385, %v6389
    %v6391 = vshrl.u32 %v5946, 16
    %v6393 = vrot.slane %v6391, 4
    %v6394 = vor.u32 %v6393, %v6389
    %v6395 = vrot.slane %v6394, 4
    %v6397 = vshll.u32 %v5947, 16
    %v6399 = vrot.slane %v6397, 5
    %v6400 = vsel %vm2660, %v6395, %v6399
    %v6402 = vshrl.u32 %v5948, 16
    %v6404 = vrot.slane %v6402, 4
    %v6405 = vshll.u32 %v5948, 16
    %v6407 = vrot.slane %v6405, 5
    %v6408 = vor.u32 %v6404, %v6407
    %v6409 = vrot.slane %v6408, 4
    %v6411 = vshll.u32 %v5949, 16
    %v6413 = vrot.slane %v6411, 5
    %v6414 = vsel %vm2660, %v6409, %v6413
    %v6415 = vshrl.u32 %v5949, 16
    %v6417 = vrot.slane %v6415, 4
    %v6418 = vor.u32 %v6417, %v6413
    %v6419 = vrot.slane %v6418, 4
    %v6421 = vshll.u32 %v5950, 16
    %v6423 = vrot.slane %v6421, 5
    %v6424 = vsel %vm2660, %v6419, %v6423
    %v6426 = vshrl.u32 %v5951, 16
    %v6428 = vrot.slane %v6426, 4
    %v6429 = vshll.u32 %v5951, 16
    %v6431 = vrot.slane %v6429, 5
    %v6432 = vor.u32 %v6428, %v6431
    %v6433 = vrot.slane %v6432, 4
    %v6435 = vshll.u32 %v5952, 16
    %v6437 = vrot.slane %v6435, 5
    %v6438 = vsel %vm2660, %v6433, %v6437
    %v6439 = vshrl.u32 %v5952, 16
    %v6441 = vrot.slane %v6439, 4
    %v6442 = vor.u32 %v6441, %v6437
    %v6443 = vrot.slane %v6442, 4
    %v6445 = vshll.u32 %v5953, 16
    %v6447 = vrot.slane %v6445, 5
    %v6448 = vsel %vm2660, %v6443, %v6447
    %v6450 = vshrl.u32 %v5954, 16
    %v6452 = vrot.slane %v6450, 4
    %v6453 = vshll.u32 %v5954, 16
    %v6455 = vrot.slane %v6453, 5
    %v6456 = vor.u32 %v6452, %v6455
    %v6457 = vrot.slane %v6456, 4
    %v6459 = vshll.u32 %v5955, 16
    %v6461 = vrot.slane %v6459, 5
    %v6462 = vsel %vm2660, %v6457, %v6461
    %v6463 = vshrl.u32 %v5955, 16
    %v6465 = vrot.slane %v6463, 4
    %v6466 = vor.u32 %v6465, %v6461
    %v6467 = vrot.slane %v6466, 4
    %v6469 = vshll.u32 %v5956, 16
    %v6471 = vrot.slane %v6469, 5
    %v6472 = vsel %vm2660, %v6467, %v6471
    %v6474 = vshrl.u32 %v5957, 16
    %v6476 = vrot.slane %v6474, 4
    %v6477 = vshll.u32 %v5957, 16
    %v6479 = vrot.slane %v6477, 5
    %v6480 = vor.u32 %v6476, %v6479
    %v6481 = vrot.slane %v6480, 4
    %v6483 = vshll.u32 %v5958, 16
    %v6485 = vrot.slane %v6483, 5
    %v6486 = vsel %vm2660, %v6481, %v6485
    %v6487 = vshrl.u32 %v5958, 16
    %v6489 = vrot.slane %v6487, 4
    %v6490 = vor.u32 %v6489, %v6485
    %v6491 = vrot.slane %v6490, 4
    %v6493 = vshll.u32 %v5959, 16
    %v6495 = vrot.slane %v6493, 5
    %v6496 = vsel %vm2660, %v6491, %v6495
    %v6498 = vshrl.u32 %v5960, 16
    %v6500 = vrot.slane %v6498, 4
    %v6501 = vshll.u32 %v5960, 16
    %v6503 = vrot.slane %v6501, 5
    %v6504 = vor.u32 %v6500, %v6503
    %v6505 = vrot.slane %v6504, 4
    %v6507 = vshll.u32 %v5961, 16
    %v6509 = vrot.slane %v6507, 5
    %v6510 = vsel %vm2660, %v6505, %v6509
    %v6511 = vshrl.u32 %v5961, 16
    %v6513 = vrot.slane %v6511, 4
    %v6514 = vor.u32 %v6513, %v6509
    %v6515 = vrot.slane %v6514, 4
    %v6517 = vshll.u32 %v5962, 16
    %v6519 = vrot.slane %v6517, 5
    %v6520 = vsel %vm2660, %v6515, %v6519
    %v6522 = vshrl.u32 %v5963, 16
    %v6524 = vrot.slane %v6522, 4
    %v6525 = vshll.u32 %v5963, 16
    %v6527 = vrot.slane %v6525, 5
    %v6528 = vor.u32 %v6524, %v6527
    %v6529 = vrot.slane %v6528, 4
    %v6531 = vshll.u32 %v5964, 16
    %v6533 = vrot.slane %v6531, 5
    %v6534 = vsel %vm2660, %v6529, %v6533
    %v6535 = vshrl.u32 %v5964, 16
    %v6537 = vrot.slane %v6535, 4
    %v6538 = vor.u32 %v6537, %v6533
    %v6539 = vrot.slane %v6538, 4
    %v6541 = vshll.u32 %v5965, 16
    %v6543 = vrot.slane %v6541, 5
    %v6544 = vsel %vm2660, %v6539, %v6543
    %v6546 = vshrl.u32 %v5966, 16
    %v6548 = vrot.slane %v6546, 4
    %v6549 = vshll.u32 %v5966, 16
    %v6551 = vrot.slane %v6549, 5
    %v6552 = vor.u32 %v6548, %v6551
    %v6553 = vrot.slane %v6552, 4
    %v6555 = vshll.u32 %v5967, 16
    %v6557 = vrot.slane %v6555, 5
    %v6558 = vsel %vm2660, %v6553, %v6557
    %v6559 = vshrl.u32 %v5967, 16
    %v6561 = vrot.slane %v6559, 4
    %v6562 = vor.u32 %v6561, %v6557
    %v6563 = vrot.slane %v6562, 4
    %v6565 = vshll.u32 %v5968, 16
    %v6567 = vrot.slane %v6565, 5
    %v6568 = vsel %vm2660, %v6563, %v6567
    %v6570 = vshrl.u32 %v5969, 16
    %v6572 = vrot.slane %v6570, 4
    %v6573 = vshll.u32 %v5969, 16
    %v6575 = vrot.slane %v6573, 5
    %v6576 = vor.u32 %v6572, %v6575
    %v6577 = vrot.slane %v6576, 4
    %v6579 = vshll.u32 %v5970, 16
    %v6581 = vrot.slane %v6579, 5
    %v6582 = vsel %vm2660, %v6577, %v6581
    %v6583 = vshrl.u32 %v5970, 16
    %v6585 = vrot.slane %v6583, 4
    %v6586 = vor.u32 %v6585, %v6581
    %v6587 = vrot.slane %v6586, 4
    %v6589 = vshll.u32 %v5971, 16
    %v6591 = vrot.slane %v6589, 5
    %v6592 = vsel %vm2660, %v6587, %v6591
    %v6594 = vshrl.u32 %v5972, 16
    %v6596 = vrot.slane %v6594, 4
    %v6597 = vshll.u32 %v5972, 16
    %v6599 = vrot.slane %v6597, 5
    %v6600 = vor.u32 %v6596, %v6599
    %v6601 = vrot.slane %v6600, 4
    %v6603 = vshll.u32 %v5973, 16
    %v6605 = vrot.slane %v6603, 5
    %v6606 = vsel %vm2660, %v6601, %v6605
    %v6607 = vshrl.u32 %v5973, 16
    %v6609 = vrot.slane %v6607, 4
    %v6610 = vor.u32 %v6609, %v6605
    %v6611 = vrot.slane %v6610, 4
    %v6613 = vshll.u32 %v5974, 16
    %v6615 = vrot.slane %v6613, 5
    %v6616 = vsel %vm2660, %v6611, %v6615
    %v6618 = vshrl.u32 %v5975, 16
    %v6620 = vrot.slane %v6618, 4
    %v6621 = vshll.u32 %v5975, 16
    %v6623 = vrot.slane %v6621, 5
    %v6624 = vor.u32 %v6620, %v6623
    %v6625 = vrot.slane %v6624, 4
    %v6627 = vshll.u32 %v5976, 16
    %v6629 = vrot.slane %v6627, 5
    %v6630 = vsel %vm2660, %v6625, %v6629
    %v6631 = vshrl.u32 %v5976, 16
    %v6633 = vrot.slane %v6631, 4
    %v6634 = vor.u32 %v6633, %v6629
    %v6635 = vrot.slane %v6634, 4
    %v6637 = vshll.u32 %v5977, 16
    %v6639 = vrot.slane %v6637, 5
    %v6640 = vsel %vm2660, %v6635, %v6639
    %v6642 = vshrl.u32 %v5978, 16
    %v6644 = vrot.slane %v6642, 4
    %v6645 = vshll.u32 %v5978, 16
    %v6647 = vrot.slane %v6645, 5
    %v6648 = vor.u32 %v6644, %v6647
    %v6649 = vrot.slane %v6648, 4
    %v6651 = vshll.u32 %v5979, 16
    %v6653 = vrot.slane %v6651, 5
    %v6654 = vsel %vm2660, %v6649, %v6653
    %v6655 = vshrl.u32 %v5979, 16
    %v6657 = vrot.slane %v6655, 4
    %v6658 = vor.u32 %v6657, %v6653
    %v6659 = vrot.slane %v6658, 4
    %v6661 = vshll.u32 %v5980, 16
    %v6663 = vrot.slane %v6661, 5
    %v6664 = vsel %vm2660, %v6659, %v6663
    %v6666 = vshrl.u32 %v5981, 16
    %v6668 = vrot.slane %v6666, 4
    %v6669 = vshll.u32 %v5981, 16
    %v6671 = vrot.slane %v6669, 5
    %v6672 = vor.u32 %v6668, %v6671
    %v6673 = vrot.slane %v6672, 4
    %v6675 = vshll.u32 %v5982, 16
    %v6677 = vrot.slane %v6675, 5
    %v6678 = vsel %vm2660, %v6673, %v6677
    %v6679 = vshrl.u32 %v5982, 16
    %v6681 = vrot.slane %v6679, 4
    %v6682 = vor.u32 %v6681, %v6677
    %v6683 = vrot.slane %v6682, 4
    %v6685 = vshll.u32 %v5983, 16
    %v6687 = vrot.slane %v6685, 5
    %v6688 = vsel %vm2660, %v6683, %v6687
    %v6690 = vshrl.u32 %v5984, 16
    %v6692 = vrot.slane %v6690, 4
    %v6693 = vshll.u32 %v5984, 16
    %v6695 = vrot.slane %v6693, 5
    %v6696 = vor.u32 %v6692, %v6695
    %v6697 = vrot.slane %v6696, 4
    %v6699 = vshll.u32 %v5985, 16
    %v6701 = vrot.slane %v6699, 5
    %v6702 = vsel %vm2660, %v6697, %v6701
    %v6703 = vshrl.u32 %v5985, 16
    %v6705 = vrot.slane %v6703, 4
    %v6706 = vor.u32 %v6705, %v6701
    %v6707 = vrot.slane %v6706, 4
    %v6709 = vshll.u32 %v5986, 16
    %v6711 = vrot.slane %v6709, 5
    %v6712 = vsel %vm2660, %v6707, %v6711
    %v6714 = vshrl.u32 %v5987, 16
    %v6716 = vrot.slane %v6714, 4
    %v6717 = vshll.u32 %v5987, 16
    %v6719 = vrot.slane %v6717, 5
    %v6720 = vor.u32 %v6716, %v6719
    %v6721 = vrot.slane %v6720, 4
    %v6723 = vshll.u32 %v5988, 16
    %v6725 = vrot.slane %v6723, 5
    %v6726 = vsel %vm2660, %v6721, %v6725
    %v6727 = vshrl.u32 %v5988, 16
    %v6729 = vrot.slane %v6727, 4
    %v6730 = vor.u32 %v6729, %v6725
    %v6731 = vrot.slane %v6730, 4
    %v6733 = vshll.u32 %v5989, 16
    %v6735 = vrot.slane %v6733, 5
    %v6736 = vsel %vm2660, %v6731, %v6735
    %v6738 = vshrl.u32 %v5990, 16
    %v6740 = vrot.slane %v6738, 4
    %v6741 = vshll.u32 %v5990, 16
    %v6743 = vrot.slane %v6741, 5
    %v6744 = vor.u32 %v6740, %v6743
    %v6745 = vrot.slane %v6744, 4
    %v6747 = vshll.u32 %v5991, 16
    %v6749 = vrot.slane %v6747, 5
    %v6750 = vsel %vm2660, %v6745, %v6749
    %v6751 = vshrl.u32 %v5991, 16
    %v6753 = vrot.slane %v6751, 4
    %v6754 = vor.u32 %v6753, %v6749
    %v6755 = vrot.slane %v6754, 4
    %v6757 = vshll.u32 %v5992, 16
    %v6759 = vrot.slane %v6757, 5
    %v6760 = vsel %vm2660, %v6755, %v6759
    %6825 = vst [vmem:[#allocation3 + $0x1c] sm:$0xf] %v6006
    %6826 = vst [vmem:[#allocation3 + $0x40] sm:$0xf] %v6016
    %6827 = vst [vmem:[#allocation3 + $0x64] sm:$0xf] %v6030
    %6828 = vst [vmem:[#allocation3 + $0x88] sm:$0xf] %v6040
    %6829 = vst [vmem:[#allocation3 + $0xac] sm:$0xf] %v6054
    %6830 = vst [vmem:[#allocation3 + $0xd0] sm:$0xf] %v6064
    %6831 = vst [vmem:[#allocation3 + $0xf4] sm:$0xf] %v6078
    %6832 = vst [vmem:[#allocation3 + $0x118] sm:$0xf] %v6088
    %6833 = vst [vmem:[#allocation3 + $0x13c] sm:$0xf] %v6102
    %6834 = vst [vmem:[#allocation3 + $0x160] sm:$0xf] %v6112
    %6835 = vst [vmem:[#allocation3 + $0x184] sm:$0xf] %v6126
    %6836 = vst [vmem:[#allocation3 + $0x1a8] sm:$0xf] %v6136
    %6837 = vst [vmem:[#allocation3 + $0x1cc] sm:$0xf] %v6150
    %6838 = vst [vmem:[#allocation3 + $0x1f0] sm:$0xf] %v6160
    %6839 = vst [vmem:[#allocation3 + $0x214] sm:$0xf] %v6174
    %6840 = vst [vmem:[#allocation3 + $0x238] sm:$0xf] %v6184
    %6841 = vst [vmem:[#allocation3 + $0x25c] sm:$0xf] %v6198
    %6842 = vst [vmem:[#allocation3 + $0x280] sm:$0xf] %v6208
    %6843 = vst [vmem:[#allocation3 + $0x2a4] sm:$0xf] %v6222
    %6844 = vst [vmem:[#allocation3 + $0x2c8] sm:$0xf] %v6232
    %6845 = vst [vmem:[#allocation3 + $0x2ec] sm:$0xf] %v6246
    %6846 = vst [vmem:[#allocation3 + $0x310] sm:$0xf] %v6256
    %6847 = vst [vmem:[#allocation3 + $0x334] sm:$0xf] %v6270
    %6848 = vst [vmem:[#allocation3 + $0x358] sm:$0xf] %v6280
    %6849 = vst [vmem:[#allocation3 + $0x37c] sm:$0xf] %v6294
    %6850 = vst [vmem:[#allocation3 + $0x3a0] sm:$0xf] %v6304
    %6851 = vst [vmem:[#allocation3 + $0x3c4] sm:$0xf] %v6318
    %6852 = vst [vmem:[#allocation3 + $0x3e8] sm:$0xf] %v6328
    %6853 = vst [vmem:[#allocation3 + $0x40c] sm:$0xf] %v6342
    %6854 = vst [vmem:[#allocation3 + $0x430] sm:$0xf] %v6352
    %6855 = vst [vmem:[#allocation3 + $0x454] sm:$0xf] %v6366
    %6856 = vst [vmem:[#allocation3 + $0x478] sm:$0xf] %v6376
    %6857 = vst [vmem:[#allocation3 + $0x49c] sm:$0xf] %v6390
    %6858 = vst [vmem:[#allocation3 + $0x4c0] sm:$0xf] %v6400
    %6859 = vst [vmem:[#allocation3 + $0x4e4] sm:$0xf] %v6414
    %6860 = vst [vmem:[#allocation3 + $0x508] sm:$0xf] %v6424
    %6861 = vst [vmem:[#allocation3 + $0x52c] sm:$0xf] %v6438
    %6862 = vst [vmem:[#allocation3 + $0x550] sm:$0xf] %v6448
    %6863 = vst [vmem:[#allocation3 + $0x574] sm:$0xf] %v6462
    %6864 = vst [vmem:[#allocation3 + $0x598] sm:$0xf] %v6472
    %6865 = vst [vmem:[#allocation3 + $0x5bc] sm:$0xf] %v6486
    %6866 = vst [vmem:[#allocation3 + $0x5e0] sm:$0xf] %v6496
    %6867 = vst [vmem:[#allocation3 + $0x604] sm:$0xf] %v6510
    %6868 = vst [vmem:[#allocation3 + $0x628] sm:$0xf] %v6520
    %6869 = vst [vmem:[#allocation3 + $0x64c] sm:$0xf] %v6534
    %6870 = vst [vmem:[#allocation3 + $0x670] sm:$0xf] %v6544
    %6871 = vst [vmem:[#allocation3 + $0x694] sm:$0xf] %v6558
    %6872 = vst [vmem:[#allocation3 + $0x6b8] sm:$0xf] %v6568
    %6873 = vst [vmem:[#allocation3 + $0x6dc] sm:$0xf] %v6582
    %6874 = vst [vmem:[#allocation3 + $0x700] sm:$0xf] %v6592
    %6875 = vst [vmem:[#allocation3 + $0x724] sm:$0xf] %v6606
    %6876 = vst [vmem:[#allocation3 + $0x748] sm:$0xf] %v6616
    %6877 = vst [vmem:[#allocation3 + $0x76c] sm:$0xf] %v6630
    %6878 = vst [vmem:[#allocation3 + $0x790] sm:$0xf] %v6640
    %6879 = vst [vmem:[#allocation3 + $0x7b4] sm:$0xf] %v6654
    %6880 = vst [vmem:[#allocation3 + $0x7d8] sm:$0xf] %v6664
    %6881 = vst [vmem:[#allocation3 + $0x7fc] sm:$0xf] %v6678
    %6882 = vst [vmem:[#allocation3 + $0x820] sm:$0xf] %v6688
    %6883 = vst [vmem:[#allocation3 + $0x844] sm:$0xf] %v6702
    %6884 = vst [vmem:[#allocation3 + $0x868] sm:$0xf] %v6712
    %6885 = vst [vmem:[#allocation3 + $0x88c] sm:$0xf] %v6726
    %6886 = vst [vmem:[#allocation3 + $0x8b0] sm:$0xf] %v6736
    %6887 = vst [vmem:[#allocation3 + $0x8d4] sm:$0xf] %v6750
    %6888 = vst [vmem:[#allocation3 + $0x8f8] sm:$0xf] %v6760
    %v6889 = vld [vmem:[%s5768] sm:$0xe]
    %v6890 = vld [vmem:[%s5768 + $0x4] sm:$0xf]
    %v6891 = vld [vmem:[%s5768 + $0x8] sm:$0x1]
    %v6892 = vld [vmem:[%s5768 + $0xc] sm:$0xe]
    %v6893 = vld [vmem:[%s5768 + $0x10] sm:$0xf]
    %v6894 = vld [vmem:[%s5768 + $0x14] sm:$0x1]
    %v6895 = vld [vmem:[%s5768 + $0x18] sm:$0xe]
    %v6896 = vld [vmem:[%s5768 + $0x1c] sm:$0xf]
    %v6897 = vld [vmem:[%s5768 + $0x20] sm:$0x1]
    %v6898 = vld [vmem:[%s5768 + $0x24] sm:$0xe]
    %v6899 = vld [vmem:[%s5768 + $0x28] sm:$0xf]
    %v6900 = vld [vmem:[%s5768 + $0x2c] sm:$0x1]
    %v6901 = vld [vmem:[%s5768 + $0x30] sm:$0xe]
    %v6902 = vld [vmem:[%s5768 + $0x34] sm:$0xf]
    %v6903 = vld [vmem:[%s5768 + $0x38] sm:$0x1]
    %v6904 = vld [vmem:[%s5768 + $0x3c] sm:$0xe]
    %v6905 = vld [vmem:[%s5768 + $0x40] sm:$0xf]
    %v6906 = vld [vmem:[%s5768 + $0x44] sm:$0x1]
    %v6907 = vld [vmem:[%s5768 + $0x48] sm:$0xe]
    %v6908 = vld [vmem:[%s5768 + $0x4c] sm:$0xf]
    %v6909 = vld [vmem:[%s5768 + $0x50] sm:$0x1]
    %v6910 = vld [vmem:[%s5768 + $0x54] sm:$0xe]
    %v6911 = vld [vmem:[%s5768 + $0x58] sm:$0xf]
    %v6912 = vld [vmem:[%s5768 + $0x5c] sm:$0x1]
    %v6913 = vld [vmem:[%s5768 + $0x60] sm:$0xe]
    %v6914 = vld [vmem:[%s5768 + $0x64] sm:$0xf]
    %v6915 = vld [vmem:[%s5768 + $0x68] sm:$0x1]
    %v6916 = vld [vmem:[%s5768 + $0x6c] sm:$0xe]
    %v6917 = vld [vmem:[%s5768 + $0x70] sm:$0xf]
    %v6918 = vld [vmem:[%s5768 + $0x74] sm:$0x1]
    %v6919 = vld [vmem:[%s5768 + $0x78] sm:$0xe]
    %v6920 = vld [vmem:[%s5768 + $0x7c] sm:$0xf]
    %v6921 = vld [vmem:[%s5768 + $0x80] sm:$0x1]
    %v6922 = vld [vmem:[%s5768 + $0x84] sm:$0xe]
    %v6923 = vld [vmem:[%s5768 + $0x88] sm:$0xf]
    %v6924 = vld [vmem:[%s5768 + $0x8c] sm:$0x1]
    %v6925 = vld [vmem:[%s5768 + $0x90] sm:$0xe]
    %v6926 = vld [vmem:[%s5768 + $0x94] sm:$0xf]
    %v6927 = vld [vmem:[%s5768 + $0x98] sm:$0x1]
    %v6928 = vld [vmem:[%s5768 + $0x9c] sm:$0xe]
    %v6929 = vld [vmem:[%s5768 + $0xa0] sm:$0xf]
    %v6930 = vld [vmem:[%s5768 + $0xa4] sm:$0x1]
    %v6931 = vld [vmem:[%s5768 + $0xa8] sm:$0xe]
    %v6932 = vld [vmem:[%s5768 + $0xac] sm:$0xf]
    %v6933 = vld [vmem:[%s5768 + $0xb0] sm:$0x1]
    %v6934 = vld [vmem:[%s5768 + $0xb4] sm:$0xe]
    %v6935 = vld [vmem:[%s5768 + $0xb8] sm:$0xf]
    %v6936 = vld [vmem:[%s5768 + $0xbc] sm:$0x1]
    %v6937 = vld [vmem:[%s5768 + $0xd8] sm:$0xe]
    %v6938 = vld [vmem:[%s5768 + $0xdc] sm:$0xf]
    %v6939 = vld [vmem:[%s5768 + $0xe0] sm:$0x1]
    %v6940 = vld [vmem:[%s5768 + $0xe4] sm:$0xe]
    %v6941 = vld [vmem:[%s5768 + $0xe8] sm:$0xf]
    %v6942 = vld [vmem:[%s5768 + $0xec] sm:$0x1]
    %v6943 = vld [vmem:[%s5768 + $0xf0] sm:$0xe]
    %v6944 = vld [vmem:[%s5768 + $0xf4] sm:$0xf]
    %v6945 = vld [vmem:[%s5768 + $0xf8] sm:$0x1]
    %v6946 = vld [vmem:[%s5768 + $0xfc] sm:$0xe]
    %v6947 = vld [vmem:[%s5768 + $0x100] sm:$0xf]
    %v6948 = vld [vmem:[%s5768 + $0x104] sm:$0x1]
    %v6949 = vld [vmem:[%s5768 + $0x108] sm:$0xe]
    %v6950 = vld [vmem:[%s5768 + $0x10c] sm:$0xf]
    %v6951 = vld [vmem:[%s5768 + $0x110] sm:$0x1]
    %v6952 = vld [vmem:[%s5768 + $0x114] sm:$0xe]
    %v6953 = vld [vmem:[%s5768 + $0x118] sm:$0xf]
    %v6954 = vld [vmem:[%s5768 + $0x11c] sm:$0x1]
    %v6955 = vld [vmem:[%s5768 + $0x120] sm:$0xe]
    %v6956 = vld [vmem:[%s5768 + $0x124] sm:$0xf]
    %v6957 = vld [vmem:[%s5768 + $0x128] sm:$0x1]
    %v6958 = vld [vmem:[%s5768 + $0x12c] sm:$0xe]
    %v6959 = vld [vmem:[%s5768 + $0x130] sm:$0xf]
    %v6960 = vld [vmem:[%s5768 + $0x134] sm:$0x1]
    %v6961 = vld [vmem:[%s5768 + $0x138] sm:$0xe]
    %v6962 = vld [vmem:[%s5768 + $0x13c] sm:$0xf]
    %v6963 = vld [vmem:[%s5768 + $0x140] sm:$0x1]
    %v6964 = vld [vmem:[%s5768 + $0x144] sm:$0xe]
    %v6965 = vld [vmem:[%s5768 + $0x148] sm:$0xf]
    %v6966 = vld [vmem:[%s5768 + $0x14c] sm:$0x1]
    %v6967 = vld [vmem:[%s5768 + $0x150] sm:$0xe]
    %v6968 = vld [vmem:[%s5768 + $0x154] sm:$0xf]
    %v6969 = vld [vmem:[%s5768 + $0x158] sm:$0x1]
    %v6970 = vld [vmem:[%s5768 + $0x15c] sm:$0xe]
    %v6971 = vld [vmem:[%s5768 + $0x160] sm:$0xf]
    %v6972 = vld [vmem:[%s5768 + $0x164] sm:$0x1]
    %v6973 = vld [vmem:[%s5768 + $0x168] sm:$0xe]
    %v6974 = vld [vmem:[%s5768 + $0x16c] sm:$0xf]
    %v6975 = vld [vmem:[%s5768 + $0x170] sm:$0x1]
    %v6976 = vld [vmem:[%s5768 + $0x174] sm:$0xe]
    %v6977 = vld [vmem:[%s5768 + $0x178] sm:$0xf]
    %v6978 = vld [vmem:[%s5768 + $0x17c] sm:$0x1]
    %v6979 = vld [vmem:[%s5768 + $0x180] sm:$0xe]
    %v6980 = vld [vmem:[%s5768 + $0x184] sm:$0xf]
    %v6981 = vld [vmem:[%s5768 + $0x188] sm:$0x1]
    %v6982 = vld [vmem:[%s5768 + $0x18c] sm:$0xe]
    %v6983 = vld [vmem:[%s5768 + $0x190] sm:$0xf]
    %v6984 = vld [vmem:[%s5768 + $0x194] sm:$0x1]
    %v7081 = vrot.slane %v6889, 5
    %v7082 = vrot.slane %v7081, 4
    %v7083 = vrot.slane %v6890, 5
    %v7084 = vsel %vm3751, %v7082, %v7083
    %v7085 = vrot.slane %v7083, 4
    %v7086 = vrot.slane %v6891, 5
    %v7087 = vsel %vm3751, %v7085, %v7086
    %v7088 = vrot.slane %v6892, 5
    %v7089 = vrot.slane %v7088, 4
    %v7090 = vrot.slane %v6893, 5
    %v7091 = vsel %vm3751, %v7089, %v7090
    %v7092 = vrot.slane %v7090, 4
    %v7093 = vrot.slane %v6894, 5
    %v7094 = vsel %vm3751, %v7092, %v7093
    %v7095 = vrot.slane %v6895, 5
    %v7096 = vrot.slane %v7095, 4
    %v7097 = vrot.slane %v6896, 5
    %v7098 = vsel %vm3751, %v7096, %v7097
    %v7099 = vrot.slane %v7097, 4
    %v7100 = vrot.slane %v6897, 5
    %v7101 = vsel %vm3751, %v7099, %v7100
    %v7102 = vrot.slane %v6898, 5
    %v7103 = vrot.slane %v7102, 4
    %v7104 = vrot.slane %v6899, 5
    %v7105 = vsel %vm3751, %v7103, %v7104
    %v7106 = vrot.slane %v7104, 4
    %v7107 = vrot.slane %v6900, 5
    %v7108 = vsel %vm3751, %v7106, %v7107
    %v7109 = vrot.slane %v6901, 5
    %v7110 = vrot.slane %v7109, 4
    %v7111 = vrot.slane %v6902, 5
    %v7112 = vsel %vm3751, %v7110, %v7111
    %v7113 = vrot.slane %v7111, 4
    %v7114 = vrot.slane %v6903, 5
    %v7115 = vsel %vm3751, %v7113, %v7114
    %v7116 = vrot.slane %v6904, 5
    %v7117 = vrot.slane %v7116, 4
    %v7118 = vrot.slane %v6905, 5
    %v7119 = vsel %vm3751, %v7117, %v7118
    %v7120 = vrot.slane %v7118, 4
    %v7121 = vrot.slane %v6906, 5
    %v7122 = vsel %vm3751, %v7120, %v7121
    %v7123 = vrot.slane %v6907, 5
    %v7124 = vrot.slane %v7123, 4
    %v7125 = vrot.slane %v6908, 5
    %v7126 = vsel %vm3751, %v7124, %v7125
    %v7127 = vrot.slane %v7125, 4
    %v7128 = vrot.slane %v6909, 5
    %v7129 = vsel %vm3751, %v7127, %v7128
    %v7130 = vrot.slane %v6910, 5
    %v7131 = vrot.slane %v7130, 4
    %v7132 = vrot.slane %v6911, 5
    %v7133 = vsel %vm3751, %v7131, %v7132
    %v7134 = vrot.slane %v7132, 4
    %v7135 = vrot.slane %v6912, 5
    %v7136 = vsel %vm3751, %v7134, %v7135
    %v7137 = vrot.slane %v6913, 5
    %v7138 = vrot.slane %v7137, 4
    %v7139 = vrot.slane %v6914, 5
    %v7140 = vsel %vm3751, %v7138, %v7139
    %v7141 = vrot.slane %v7139, 4
    %v7142 = vrot.slane %v6915, 5
    %v7143 = vsel %vm3751, %v7141, %v7142
    %v7144 = vrot.slane %v6916, 5
    %v7145 = vrot.slane %v7144, 4
    %v7146 = vrot.slane %v6917, 5
    %v7147 = vsel %vm3751, %v7145, %v7146
    %v7148 = vrot.slane %v7146, 4
    %v7149 = vrot.slane %v6918, 5
    %v7150 = vsel %vm3751, %v7148, %v7149
    %v7151 = vrot.slane %v6919, 5
    %v7152 = vrot.slane %v7151, 4
    %v7153 = vrot.slane %v6920, 5
    %v7154 = vsel %vm3751, %v7152, %v7153
    %v7155 = vrot.slane %v7153, 4
    %v7156 = vrot.slane %v6921, 5
    %v7157 = vsel %vm3751, %v7155, %v7156
    %v7158 = vrot.slane %v6922, 5
    %v7159 = vrot.slane %v7158, 4
    %v7160 = vrot.slane %v6923, 5
    %v7161 = vsel %vm3751, %v7159, %v7160
    %v7162 = vrot.slane %v7160, 4
    %v7163 = vrot.slane %v6924, 5
    %v7164 = vsel %vm3751, %v7162, %v7163
    %v7165 = vrot.slane %v6925, 5
    %v7166 = vrot.slane %v7165, 4
    %v7167 = vrot.slane %v6926, 5
    %v7168 = vsel %vm3751, %v7166, %v7167
    %v7169 = vrot.slane %v7167, 4
    %v7170 = vrot.slane %v6927, 5
    %v7171 = vsel %vm3751, %v7169, %v7170
    %v7172 = vrot.slane %v6928, 5
    %v7173 = vrot.slane %v7172, 4
    %v7174 = vrot.slane %v6929, 5
    %v7175 = vsel %vm3751, %v7173, %v7174
    %v7176 = vrot.slane %v7174, 4
    %v7177 = vrot.slane %v6930, 5
    %v7178 = vsel %vm3751, %v7176, %v7177
    %v7179 = vrot.slane %v6931, 5
    %v7180 = vrot.slane %v7179, 4
    %v7181 = vrot.slane %v6932, 5
    %v7182 = vsel %vm3751, %v7180, %v7181
    %v7183 = vrot.slane %v7181, 4
    %v7184 = vrot.slane %v6933, 5
    %v7185 = vsel %vm3751, %v7183, %v7184
    %v7186 = vrot.slane %v6934, 5
    %v7187 = vrot.slane %v7186, 4
    %v7188 = vrot.slane %v6935, 5
    %v7189 = vsel %vm3751, %v7187, %v7188
    %v7190 = vrot.slane %v7188, 4
    %v7191 = vrot.slane %v6936, 5
    %v7192 = vsel %vm3751, %v7190, %v7191
    %v7193 = vrot.slane %v6937, 5
    %v7194 = vrot.slane %v7193, 4
    %v7195 = vrot.slane %v6938, 5
    %v7196 = vsel %vm3751, %v7194, %v7195
    %v7197 = vrot.slane %v7195, 4
    %v7198 = vrot.slane %v6939, 5
    %v7199 = vsel %vm3751, %v7197, %v7198
    %v7200 = vrot.slane %v6940, 5
    %v7201 = vrot.slane %v7200, 4
    %v7202 = vrot.slane %v6941, 5
    %v7203 = vsel %vm3751, %v7201, %v7202
    %v7204 = vrot.slane %v7202, 4
    %v7205 = vrot.slane %v6942, 5
    %v7206 = vsel %vm3751, %v7204, %v7205
    %v7207 = vrot.slane %v6943, 5
    %v7208 = vrot.slane %v7207, 4
    %v7209 = vrot.slane %v6944, 5
    %v7210 = vsel %vm3751, %v7208, %v7209
    %v7211 = vrot.slane %v7209, 4
    %v7212 = vrot.slane %v6945, 5
    %v7213 = vsel %vm3751, %v7211, %v7212
    %v7214 = vrot.slane %v6946, 5
    %v7215 = vrot.slane %v7214, 4
    %v7216 = vrot.slane %v6947, 5
    %v7217 = vsel %vm3751, %v7215, %v7216
    %v7218 = vrot.slane %v7216, 4
    %v7219 = vrot.slane %v6948, 5
    %v7220 = vsel %vm3751, %v7218, %v7219
    %v7221 = vrot.slane %v6949, 5
    %v7222 = vrot.slane %v7221, 4
    %v7223 = vrot.slane %v6950, 5
    %v7224 = vsel %vm3751, %v7222, %v7223
    %v7225 = vrot.slane %v7223, 4
    %v7226 = vrot.slane %v6951, 5
    %v7227 = vsel %vm3751, %v7225, %v7226
    %v7228 = vrot.slane %v6952, 5
    %v7229 = vrot.slane %v7228, 4
    %v7230 = vrot.slane %v6953, 5
    %v7231 = vsel %vm3751, %v7229, %v7230
    %v7232 = vrot.slane %v7230, 4
    %v7233 = vrot.slane %v6954, 5
    %v7234 = vsel %vm3751, %v7232, %v7233
    %v7235 = vrot.slane %v6955, 5
    %v7236 = vrot.slane %v7235, 4
    %v7237 = vrot.slane %v6956, 5
    %v7238 = vsel %vm3751, %v7236, %v7237
    %v7239 = vrot.slane %v7237, 4
    %v7240 = vrot.slane %v6957, 5
    %v7241 = vsel %vm3751, %v7239, %v7240
    %v7242 = vrot.slane %v6958, 5
    %v7243 = vrot.slane %v7242, 4
    %v7244 = vrot.slane %v6959, 5
    %v7245 = vsel %vm3751, %v7243, %v7244
    %v7246 = vrot.slane %v7244, 4
    %v7247 = vrot.slane %v6960, 5
    %v7248 = vsel %vm3751, %v7246, %v7247
    %v7249 = vrot.slane %v6961, 5
    %v7250 = vrot.slane %v7249, 4
    %v7251 = vrot.slane %v6962, 5
    %v7252 = vsel %vm3751, %v7250, %v7251
    %v7253 = vrot.slane %v7251, 4
    %v7254 = vrot.slane %v6963, 5
    %v7255 = vsel %vm3751, %v7253, %v7254
    %v7256 = vrot.slane %v6964, 5
    %v7257 = vrot.slane %v7256, 4
    %v7258 = vrot.slane %v6965, 5
    %v7259 = vsel %vm3751, %v7257, %v7258
    %v7260 = vrot.slane %v7258, 4
    %v7261 = vrot.slane %v6966, 5
    %v7262 = vsel %vm3751, %v7260, %v7261
    %v7263 = vrot.slane %v6967, 5
    %v7264 = vrot.slane %v7263, 4
    %v7265 = vrot.slane %v6968, 5
    %v7266 = vsel %vm3751, %v7264, %v7265
    %v7267 = vrot.slane %v7265, 4
    %v7268 = vrot.slane %v6969, 5
    %v7269 = vsel %vm3751, %v7267, %v7268
    %v7270 = vrot.slane %v6970, 5
    %v7271 = vrot.slane %v7270, 4
    %v7272 = vrot.slane %v6971, 5
    %v7273 = vsel %vm3751, %v7271, %v7272
    %v7274 = vrot.slane %v7272, 4
    %v7275 = vrot.slane %v6972, 5
    %v7276 = vsel %vm3751, %v7274, %v7275
    %v7277 = vrot.slane %v6973, 5
    %v7278 = vrot.slane %v7277, 4
    %v7279 = vrot.slane %v6974, 5
    %v7280 = vsel %vm3751, %v7278, %v7279
    %v7281 = vrot.slane %v7279, 4
    %v7282 = vrot.slane %v6975, 5
    %v7283 = vsel %vm3751, %v7281, %v7282
    %v7284 = vrot.slane %v6976, 5
    %v7285 = vrot.slane %v7284, 4
    %v7286 = vrot.slane %v6977, 5
    %v7287 = vsel %vm3751, %v7285, %v7286
    %v7288 = vrot.slane %v7286, 4
    %v7289 = vrot.slane %v6978, 5
    %v7290 = vsel %vm3751, %v7288, %v7289
    %v7291 = vrot.slane %v6979, 5
    %v7292 = vrot.slane %v7291, 4
    %v7293 = vrot.slane %v6980, 5
    %v7294 = vsel %vm3751, %v7292, %v7293
    %v7295 = vrot.slane %v7293, 4
    %v7296 = vrot.slane %v6981, 5
    %v7297 = vsel %vm3751, %v7295, %v7296
    %v7298 = vrot.slane %v6982, 5
    %v7299 = vrot.slane %v7298, 4
    %v7300 = vrot.slane %v6983, 5
    %v7301 = vsel %vm3751, %v7299, %v7300
    %v7302 = vrot.slane %v7300, 4
    %v7303 = vrot.slane %v6984, 5
    %v7304 = vsel %vm3751, %v7302, %v7303
    %7369 = vst [vmem:[#allocation3 + $0x20] sm:$0xf] %v7084
    %7370 = vst [vmem:[#allocation3 + $0x44] sm:$0xf] %v7087
    %7371 = vst [vmem:[#allocation3 + $0x68] sm:$0xf] %v7091
    %7372 = vst [vmem:[#allocation3 + $0x8c] sm:$0xf] %v7094
    %7373 = vst [vmem:[#allocation3 + $0xb0] sm:$0xf] %v7098
    %7374 = vst [vmem:[#allocation3 + $0xd4] sm:$0xf] %v7101
    %7375 = vst [vmem:[#allocation3 + $0xf8] sm:$0xf] %v7105
    %7376 = vst [vmem:[#allocation3 + $0x11c] sm:$0xf] %v7108
    %7377 = vst [vmem:[#allocation3 + $0x140] sm:$0xf] %v7112
    %7378 = vst [vmem:[#allocation3 + $0x164] sm:$0xf] %v7115
    %7379 = vst [vmem:[#allocation3 + $0x188] sm:$0xf] %v7119
    %7380 = vst [vmem:[#allocation3 + $0x1ac] sm:$0xf] %v7122
    %7381 = vst [vmem:[#allocation3 + $0x1d0] sm:$0xf] %v7126
    %7382 = vst [vmem:[#allocation3 + $0x1f4] sm:$0xf] %v7129
    %7383 = vst [vmem:[#allocation3 + $0x218] sm:$0xf] %v7133
    %7384 = vst [vmem:[#allocation3 + $0x23c] sm:$0xf] %v7136
    %7385 = vst [vmem:[#allocation3 + $0x260] sm:$0xf] %v7140
    %7386 = vst [vmem:[#allocation3 + $0x284] sm:$0xf] %v7143
    %7387 = vst [vmem:[#allocation3 + $0x2a8] sm:$0xf] %v7147
    %7388 = vst [vmem:[#allocation3 + $0x2cc] sm:$0xf] %v7150
    %7389 = vst [vmem:[#allocation3 + $0x2f0] sm:$0xf] %v7154
    %7390 = vst [vmem:[#allocation3 + $0x314] sm:$0xf] %v7157
    %7391 = vst [vmem:[#allocation3 + $0x338] sm:$0xf] %v7161
    %7392 = vst [vmem:[#allocation3 + $0x35c] sm:$0xf] %v7164
    %7393 = vst [vmem:[#allocation3 + $0x380] sm:$0xf] %v7168
    %7394 = vst [vmem:[#allocation3 + $0x3a4] sm:$0xf] %v7171
    %7395 = vst [vmem:[#allocation3 + $0x3c8] sm:$0xf] %v7175
    %7396 = vst [vmem:[#allocation3 + $0x3ec] sm:$0xf] %v7178
    %7397 = vst [vmem:[#allocation3 + $0x410] sm:$0xf] %v7182
    %7398 = vst [vmem:[#allocation3 + $0x434] sm:$0xf] %v7185
    %7399 = vst [vmem:[#allocation3 + $0x458] sm:$0xf] %v7189
    %7400 = vst [vmem:[#allocation3 + $0x47c] sm:$0xf] %v7192
    %7401 = vst [vmem:[#allocation3 + $0x4a0] sm:$0xf] %v7196
    %7402 = vst [vmem:[#allocation3 + $0x4c4] sm:$0xf] %v7199
    %7403 = vst [vmem:[#allocation3 + $0x4e8] sm:$0xf] %v7203
    %7404 = vst [vmem:[#allocation3 + $0x50c] sm:$0xf] %v7206
    %7405 = vst [vmem:[#allocation3 + $0x530] sm:$0xf] %v7210
    %7406 = vst [vmem:[#allocation3 + $0x554] sm:$0xf] %v7213
    %7407 = vst [vmem:[#allocation3 + $0x578] sm:$0xf] %v7217
    %7408 = vst [vmem:[#allocation3 + $0x59c] sm:$0xf] %v7220
    %7409 = vst [vmem:[#allocation3 + $0x5c0] sm:$0xf] %v7224
    %7410 = vst [vmem:[#allocation3 + $0x5e4] sm:$0xf] %v7227
    %7411 = vst [vmem:[#allocation3 + $0x608] sm:$0xf] %v7231
    %7412 = vst [vmem:[#allocation3 + $0x62c] sm:$0xf] %v7234
    %7413 = vst [vmem:[#allocation3 + $0x650] sm:$0xf] %v7238
    %7414 = vst [vmem:[#allocation3 + $0x674] sm:$0xf] %v7241
    %7415 = vst [vmem:[#allocation3 + $0x698] sm:$0xf] %v7245
    %7416 = vst [vmem:[#allocation3 + $0x6bc] sm:$0xf] %v7248
    %7417 = vst [vmem:[#allocation3 + $0x6e0] sm:$0xf] %v7252
    %7418 = vst [vmem:[#allocation3 + $0x704] sm:$0xf] %v7255
    %7419 = vst [vmem:[#allocation3 + $0x728] sm:$0xf] %v7259
    %7420 = vst [vmem:[#allocation3 + $0x74c] sm:$0xf] %v7262
    %7421 = vst [vmem:[#allocation3 + $0x770] sm:$0xf] %v7266
    %7422 = vst [vmem:[#allocation3 + $0x794] sm:$0xf] %v7269
    %7423 = vst [vmem:[#allocation3 + $0x7b8] sm:$0xf] %v7273
    %7424 = vst [vmem:[#allocation3 + $0x7dc] sm:$0xf] %v7276
    %7425 = vst [vmem:[#allocation3 + $0x800] sm:$0xf] %v7280
    %7426 = vst [vmem:[#allocation3 + $0x824] sm:$0xf] %v7283
    %7427 = vst [vmem:[#allocation3 + $0x848] sm:$0xf] %v7287
    %7428 = vst [vmem:[#allocation3 + $0x86c] sm:$0xf] %v7290
    %7429 = vst [vmem:[#allocation3 + $0x890] sm:$0xf] %v7294
    %7430 = vst [vmem:[#allocation3 + $0x8b4] sm:$0xf] %v7297
    %7431 = vst [vmem:[#allocation3 + $0x8d8] sm:$0xf] %v7301
    %7432 = vst [vmem:[#allocation3 + $0x8fc] sm:$0xf] %v7304
    %v7433 = vld [vmem:[#allocation3] sm:$0xff]
    %v7434 = vld [vmem:[#allocation3 + $0x8] sm:$0xff]
    %v7435 = vld [vmem:[#allocation3 + $0x10] sm:$0xff]
    %v7436 = vld [vmem:[#allocation3 + $0x18] sm:$0xff]
    %v7437 = vld [vmem:[#allocation3 + $0x20] sm:$0xf]
    %v7438 = vld [vmem:[#allocation3 + $0x24] sm:$0xff]
    %v7439 = vld [vmem:[#allocation3 + $0x2c] sm:$0xff]
    %v7440 = vld [vmem:[#allocation3 + $0x34] sm:$0xff]
    %v7441 = vld [vmem:[#allocation3 + $0x3c] sm:$0xff]
    %v7442 = vld [vmem:[#allocation3 + $0x44] sm:$0xf]
    %v7443 = vld [vmem:[#allocation3 + $0x48] sm:$0xff]
    %v7444 = vld [vmem:[#allocation3 + $0x50] sm:$0xff]
    %v7445 = vld [vmem:[#allocation3 + $0x58] sm:$0xff]
    %v7446 = vld [vmem:[#allocation3 + $0x60] sm:$0xff]
    %v7447 = vld [vmem:[#allocation3 + $0x68] sm:$0xf]
    %v7448 = vld [vmem:[#allocation3 + $0x6c] sm:$0xff]
    %v7449 = vld [vmem:[#allocation3 + $0x74] sm:$0xff]
    %v7450 = vld [vmem:[#allocation3 + $0x7c] sm:$0xff]
    %v7451 = vld [vmem:[#allocation3 + $0x84] sm:$0xff]
    %v7452 = vld [vmem:[#allocation3 + $0x8c] sm:$0xf]
    %v7453 = vld [vmem:[#allocation3 + $0x90] sm:$0xff]
    %v7454 = vld [vmem:[#allocation3 + $0x98] sm:$0xff]
    %v7455 = vld [vmem:[#allocation3 + $0xa0] sm:$0xff]
    %v7456 = vld [vmem:[#allocation3 + $0xa8] sm:$0xff]
    %v7457 = vld [vmem:[#allocation3 + $0xb0] sm:$0xf]
    %v7458 = vld [vmem:[#allocation3 + $0xb4] sm:$0xff]
    %v7459 = vld [vmem:[#allocation3 + $0xbc] sm:$0xff]
    %v7460 = vld [vmem:[#allocation3 + $0xc4] sm:$0xff]
    %v7461 = vld [vmem:[#allocation3 + $0xcc] sm:$0xff]
    %v7462 = vld [vmem:[#allocation3 + $0xd4] sm:$0xf]
    %v7463 = vld [vmem:[#allocation3 + $0xd8] sm:$0xff]
    %v7464 = vld [vmem:[#allocation3 + $0xe0] sm:$0xff]
    %v7465 = vld [vmem:[#allocation3 + $0xe8] sm:$0xff]
    %v7466 = vld [vmem:[#allocation3 + $0xf0] sm:$0xff]
    %v7467 = vld [vmem:[#allocation3 + $0xf8] sm:$0xf]
    %v7468 = vld [vmem:[#allocation3 + $0xfc] sm:$0xff]
    %v7469 = vld [vmem:[#allocation3 + $0x104] sm:$0xff]
    %v7470 = vld [vmem:[#allocation3 + $0x10c] sm:$0xff]
    %v7471 = vld [vmem:[#allocation3 + $0x114] sm:$0xff]
    %v7472 = vld [vmem:[#allocation3 + $0x11c] sm:$0xf]
    %v7473 = vld [vmem:[#allocation3 + $0x120] sm:$0xff]
    %v7474 = vld [vmem:[#allocation3 + $0x128] sm:$0xff]
    %v7475 = vld [vmem:[#allocation3 + $0x130] sm:$0xff]
    %v7476 = vld [vmem:[#allocation3 + $0x138] sm:$0xff]
    %v7477 = vld [vmem:[#allocation3 + $0x140] sm:$0xf]
    %v7478 = vld [vmem:[#allocation3 + $0x144] sm:$0xff]
    %v7479 = vld [vmem:[#allocation3 + $0x14c] sm:$0xff]
    %v7480 = vld [vmem:[#allocation3 + $0x154] sm:$0xff]
    %v7481 = vld [vmem:[#allocation3 + $0x15c] sm:$0xff]
    %v7482 = vld [vmem:[#allocation3 + $0x164] sm:$0xf]
    %v7483 = vld [vmem:[#allocation3 + $0x168] sm:$0xff]
    %v7484 = vld [vmem:[#allocation3 + $0x170] sm:$0xff]
    %v7485 = vld [vmem:[#allocation3 + $0x178] sm:$0xff]
    %v7486 = vld [vmem:[#allocation3 + $0x180] sm:$0xff]
    %v7487 = vld [vmem:[#allocation3 + $0x188] sm:$0xf]
    %v7488 = vld [vmem:[#allocation3 + $0x18c] sm:$0xff]
    %v7489 = vld [vmem:[#allocation3 + $0x194] sm:$0xff]
    %v7490 = vld [vmem:[#allocation3 + $0x19c] sm:$0xff]
    %v7491 = vld [vmem:[#allocation3 + $0x1a4] sm:$0xff]
    %v7492 = vld [vmem:[#allocation3 + $0x1ac] sm:$0xf]
    %v7493 = vld [vmem:[#allocation3 + $0x1b0] sm:$0xff]
    %v7494 = vld [vmem:[#allocation3 + $0x1b8] sm:$0xff]
    %v7495 = vld [vmem:[#allocation3 + $0x1c0] sm:$0xff]
    %v7496 = vld [vmem:[#allocation3 + $0x1c8] sm:$0xff]
    %v7497 = vld [vmem:[#allocation3 + $0x1d0] sm:$0xf]
    %v7498 = vld [vmem:[#allocation3 + $0x1d4] sm:$0xff]
    %v7499 = vld [vmem:[#allocation3 + $0x1dc] sm:$0xff]
    %v7500 = vld [vmem:[#allocation3 + $0x1e4] sm:$0xff]
    %v7501 = vld [vmem:[#allocation3 + $0x1ec] sm:$0xff]
    %v7502 = vld [vmem:[#allocation3 + $0x1f4] sm:$0xf]
    %v7503 = vld [vmem:[#allocation3 + $0x1f8] sm:$0xff]
    %v7504 = vld [vmem:[#allocation3 + $0x200] sm:$0xff]
    %v7505 = vld [vmem:[#allocation3 + $0x208] sm:$0xff]
    %v7506 = vld [vmem:[#allocation3 + $0x210] sm:$0xff]
    %v7507 = vld [vmem:[#allocation3 + $0x218] sm:$0xf]
    %v7508 = vld [vmem:[#allocation3 + $0x21c] sm:$0xff]
    %v7509 = vld [vmem:[#allocation3 + $0x224] sm:$0xff]
    %v7510 = vld [vmem:[#allocation3 + $0x22c] sm:$0xff]
    %v7511 = vld [vmem:[#allocation3 + $0x234] sm:$0xff]
    %v7512 = vld [vmem:[#allocation3 + $0x23c] sm:$0xf]
    %v7513 = vld [vmem:[#allocation3 + $0x240] sm:$0xff]
    %v7514 = vld [vmem:[#allocation3 + $0x248] sm:$0xff]
    %v7515 = vld [vmem:[#allocation3 + $0x250] sm:$0xff]
    %v7516 = vld [vmem:[#allocation3 + $0x258] sm:$0xff]
    %v7517 = vld [vmem:[#allocation3 + $0x260] sm:$0xf]
    %v7518 = vld [vmem:[#allocation3 + $0x264] sm:$0xff]
    %v7519 = vld [vmem:[#allocation3 + $0x26c] sm:$0xff]
    %v7520 = vld [vmem:[#allocation3 + $0x274] sm:$0xff]
    %v7521 = vld [vmem:[#allocation3 + $0x27c] sm:$0xff]
    %v7522 = vld [vmem:[#allocation3 + $0x284] sm:$0xf]
    %v7523 = vld [vmem:[#allocation3 + $0x288] sm:$0xff]
    %v7524 = vld [vmem:[#allocation3 + $0x290] sm:$0xff]
    %v7525 = vld [vmem:[#allocation3 + $0x298] sm:$0xff]
    %v7526 = vld [vmem:[#allocation3 + $0x2a0] sm:$0xff]
    %v7527 = vld [vmem:[#allocation3 + $0x2a8] sm:$0xf]
    %v7528 = vld [vmem:[#allocation3 + $0x2ac] sm:$0xff]
    %v7529 = vld [vmem:[#allocation3 + $0x2b4] sm:$0xff]
    %v7530 = vld [vmem:[#allocation3 + $0x2bc] sm:$0xff]
    %v7531 = vld [vmem:[#allocation3 + $0x2c4] sm:$0xff]
    %v7532 = vld [vmem:[#allocation3 + $0x2cc] sm:$0xf]
    %v7533 = vld [vmem:[#allocation3 + $0x2d0] sm:$0xff]
    %v7534 = vld [vmem:[#allocation3 + $0x2d8] sm:$0xff]
    %v7535 = vld [vmem:[#allocation3 + $0x2e0] sm:$0xff]
    %v7536 = vld [vmem:[#allocation3 + $0x2e8] sm:$0xff]
    %v7537 = vld [vmem:[#allocation3 + $0x2f0] sm:$0xf]
    %v7538 = vld [vmem:[#allocation3 + $0x2f4] sm:$0xff]
    %v7539 = vld [vmem:[#allocation3 + $0x2fc] sm:$0xff]
    %v7540 = vld [vmem:[#allocation3 + $0x304] sm:$0xff]
    %v7541 = vld [vmem:[#allocation3 + $0x30c] sm:$0xff]
    %v7542 = vld [vmem:[#allocation3 + $0x314] sm:$0xf]
    %v7543 = vld [vmem:[#allocation3 + $0x318] sm:$0xff]
    %v7544 = vld [vmem:[#allocation3 + $0x320] sm:$0xff]
    %v7545 = vld [vmem:[#allocation3 + $0x328] sm:$0xff]
    %v7546 = vld [vmem:[#allocation3 + $0x330] sm:$0xff]
    %v7547 = vld [vmem:[#allocation3 + $0x338] sm:$0xf]
    %v7548 = vld [vmem:[#allocation3 + $0x33c] sm:$0xff]
    %v7549 = vld [vmem:[#allocation3 + $0x344] sm:$0xff]
    %v7550 = vld [vmem:[#allocation3 + $0x34c] sm:$0xff]
    %v7551 = vld [vmem:[#allocation3 + $0x354] sm:$0xff]
    %v7552 = vld [vmem:[#allocation3 + $0x35c] sm:$0xf]
    %v7553 = vld [vmem:[#allocation3 + $0x360] sm:$0xff]
    %v7554 = vld [vmem:[#allocation3 + $0x368] sm:$0xff]
    %v7555 = vld [vmem:[#allocation3 + $0x370] sm:$0xff]
    %v7556 = vld [vmem:[#allocation3 + $0x378] sm:$0xff]
    %v7557 = vld [vmem:[#allocation3 + $0x380] sm:$0xf]
    %v7558 = vld [vmem:[#allocation3 + $0x384] sm:$0xff]
    %v7559 = vld [vmem:[#allocation3 + $0x38c] sm:$0xff]
    %v7560 = vld [vmem:[#allocation3 + $0x394] sm:$0xff]
    %v7561 = vld [vmem:[#allocation3 + $0x39c] sm:$0xff]
    %v7562 = vld [vmem:[#allocation3 + $0x3a4] sm:$0xf]
    %v7563 = vld [vmem:[#allocation3 + $0x3a8] sm:$0xff]
    %v7564 = vld [vmem:[#allocation3 + $0x3b0] sm:$0xff]
    %v7565 = vld [vmem:[#allocation3 + $0x3b8] sm:$0xff]
    %v7566 = vld [vmem:[#allocation3 + $0x3c0] sm:$0xff]
    %v7567 = vld [vmem:[#allocation3 + $0x3c8] sm:$0xf]
    %v7568 = vld [vmem:[#allocation3 + $0x3cc] sm:$0xff]
    %v7569 = vld [vmem:[#allocation3 + $0x3d4] sm:$0xff]
    %v7570 = vld [vmem:[#allocation3 + $0x3dc] sm:$0xff]
    %v7571 = vld [vmem:[#allocation3 + $0x3e4] sm:$0xff]
    %v7572 = vld [vmem:[#allocation3 + $0x3ec] sm:$0xf]
    %v7573 = vld [vmem:[#allocation3 + $0x3f0] sm:$0xff]
    %v7574 = vld [vmem:[#allocation3 + $0x3f8] sm:$0xff]
    %v7575 = vld [vmem:[#allocation3 + $0x400] sm:$0xff]
    %v7576 = vld [vmem:[#allocation3 + $0x408] sm:$0xff]
    %v7577 = vld [vmem:[#allocation3 + $0x410] sm:$0xf]
    %v7578 = vld [vmem:[#allocation3 + $0x414] sm:$0xff]
    %v7579 = vld [vmem:[#allocation3 + $0x41c] sm:$0xff]
    %v7580 = vld [vmem:[#allocation3 + $0x424] sm:$0xff]
    %v7581 = vld [vmem:[#allocation3 + $0x42c] sm:$0xff]
    %v7582 = vld [vmem:[#allocation3 + $0x434] sm:$0xf]
    %v7583 = vld [vmem:[#allocation3 + $0x438] sm:$0xff]
    %v7584 = vld [vmem:[#allocation3 + $0x440] sm:$0xff]
    %v7585 = vld [vmem:[#allocation3 + $0x448] sm:$0xff]
    %v7586 = vld [vmem:[#allocation3 + $0x450] sm:$0xff]
    %v7587 = vld [vmem:[#allocation3 + $0x458] sm:$0xf]
    %v7588 = vld [vmem:[#allocation3 + $0x45c] sm:$0xff]
    %v7589 = vld [vmem:[#allocation3 + $0x464] sm:$0xff]
    %v7590 = vld [vmem:[#allocation3 + $0x46c] sm:$0xff]
    %v7591 = vld [vmem:[#allocation3 + $0x474] sm:$0xff]
    %v7592 = vld [vmem:[#allocation3 + $0x47c] sm:$0xf]
    %v7593 = vld [vmem:[#allocation3 + $0x480] sm:$0xff]
    %v7594 = vld [vmem:[#allocation3 + $0x488] sm:$0xff]
    %v7595 = vld [vmem:[#allocation3 + $0x490] sm:$0xff]
    %v7596 = vld [vmem:[#allocation3 + $0x498] sm:$0xff]
    %v7597 = vld [vmem:[#allocation3 + $0x4a0] sm:$0xf]
    %v7598 = vld [vmem:[#allocation3 + $0x4a4] sm:$0xff]
    %v7599 = vld [vmem:[#allocation3 + $0x4ac] sm:$0xff]
    %v7600 = vld [vmem:[#allocation3 + $0x4b4] sm:$0xff]
    %v7601 = vld [vmem:[#allocation3 + $0x4bc] sm:$0xff]
    %v7602 = vld [vmem:[#allocation3 + $0x4c4] sm:$0xf]
    %v7603 = vld [vmem:[#allocation3 + $0x4c8] sm:$0xff]
    %v7604 = vld [vmem:[#allocation3 + $0x4d0] sm:$0xff]
    %v7605 = vld [vmem:[#allocation3 + $0x4d8] sm:$0xff]
    %v7606 = vld [vmem:[#allocation3 + $0x4e0] sm:$0xff]
    %v7607 = vld [vmem:[#allocation3 + $0x4e8] sm:$0xf]
    %v7608 = vld [vmem:[#allocation3 + $0x4ec] sm:$0xff]
    %v7609 = vld [vmem:[#allocation3 + $0x4f4] sm:$0xff]
    %v7610 = vld [vmem:[#allocation3 + $0x4fc] sm:$0xff]
    %v7611 = vld [vmem:[#allocation3 + $0x504] sm:$0xff]
    %v7612 = vld [vmem:[#allocation3 + $0x50c] sm:$0xf]
    %v7613 = vld [vmem:[#allocation3 + $0x510] sm:$0xff]
    %v7614 = vld [vmem:[#allocation3 + $0x518] sm:$0xff]
    %v7615 = vld [vmem:[#allocation3 + $0x520] sm:$0xff]
    %v7616 = vld [vmem:[#allocation3 + $0x528] sm:$0xff]
    %v7617 = vld [vmem:[#allocation3 + $0x530] sm:$0xf]
    %v7618 = vld [vmem:[#allocation3 + $0x534] sm:$0xff]
    %v7619 = vld [vmem:[#allocation3 + $0x53c] sm:$0xff]
    %v7620 = vld [vmem:[#allocation3 + $0x544] sm:$0xff]
    %v7621 = vld [vmem:[#allocation3 + $0x54c] sm:$0xff]
    %v7622 = vld [vmem:[#allocation3 + $0x554] sm:$0xf]
    %v7623 = vld [vmem:[#allocation3 + $0x558] sm:$0xff]
    %v7624 = vld [vmem:[#allocation3 + $0x560] sm:$0xff]
    %v7625 = vld [vmem:[#allocation3 + $0x568] sm:$0xff]
    %v7626 = vld [vmem:[#allocation3 + $0x570] sm:$0xff]
    %v7627 = vld [vmem:[#allocation3 + $0x578] sm:$0xf]
    %v7628 = vld [vmem:[#allocation3 + $0x57c] sm:$0xff]
    %v7629 = vld [vmem:[#allocation3 + $0x584] sm:$0xff]
    %v7630 = vld [vmem:[#allocation3 + $0x58c] sm:$0xff]
    %v7631 = vld [vmem:[#allocation3 + $0x594] sm:$0xff]
    %v7632 = vld [vmem:[#allocation3 + $0x59c] sm:$0xf]
    %v7633 = vld [vmem:[#allocation3 + $0x5a0] sm:$0xff]
    %v7634 = vld [vmem:[#allocation3 + $0x5a8] sm:$0xff]
    %v7635 = vld [vmem:[#allocation3 + $0x5b0] sm:$0xff]
    %v7636 = vld [vmem:[#allocation3 + $0x5b8] sm:$0xff]
    %v7637 = vld [vmem:[#allocation3 + $0x5c0] sm:$0xf]
    %v7638 = vld [vmem:[#allocation3 + $0x5c4] sm:$0xff]
    %v7639 = vld [vmem:[#allocation3 + $0x5cc] sm:$0xff]
    %v7640 = vld [vmem:[#allocation3 + $0x5d4] sm:$0xff]
    %v7641 = vld [vmem:[#allocation3 + $0x5dc] sm:$0xff]
    %v7642 = vld [vmem:[#allocation3 + $0x5e4] sm:$0xf]
    %v7643 = vld [vmem:[#allocation3 + $0x5e8] sm:$0xff]
    %v7644 = vld [vmem:[#allocation3 + $0x5f0] sm:$0xff]
    %v7645 = vld [vmem:[#allocation3 + $0x5f8] sm:$0xff]
    %v7646 = vld [vmem:[#allocation3 + $0x600] sm:$0xff]
    %v7647 = vld [vmem:[#allocation3 + $0x608] sm:$0xf]
    %v7648 = vld [vmem:[#allocation3 + $0x60c] sm:$0xff]
    %v7649 = vld [vmem:[#allocation3 + $0x614] sm:$0xff]
    %v7650 = vld [vmem:[#allocation3 + $0x61c] sm:$0xff]
    %v7651 = vld [vmem:[#allocation3 + $0x624] sm:$0xff]
    %v7652 = vld [vmem:[#allocation3 + $0x62c] sm:$0xf]
    %v7653 = vld [vmem:[#allocation3 + $0x630] sm:$0xff]
    %v7654 = vld [vmem:[#allocation3 + $0x638] sm:$0xff]
    %v7655 = vld [vmem:[#allocation3 + $0x640] sm:$0xff]
    %v7656 = vld [vmem:[#allocation3 + $0x648] sm:$0xff]
    %v7657 = vld [vmem:[#allocation3 + $0x650] sm:$0xf]
    %v7658 = vld [vmem:[#allocation3 + $0x654] sm:$0xff]
    %v7659 = vld [vmem:[#allocation3 + $0x65c] sm:$0xff]
    %v7660 = vld [vmem:[#allocation3 + $0x664] sm:$0xff]
    %v7661 = vld [vmem:[#allocation3 + $0x66c] sm:$0xff]
    %v7662 = vld [vmem:[#allocation3 + $0x674] sm:$0xf]
    %v7663 = vld [vmem:[#allocation3 + $0x678] sm:$0xff]
    %v7664 = vld [vmem:[#allocation3 + $0x680] sm:$0xff]
    %v7665 = vld [vmem:[#allocation3 + $0x688] sm:$0xff]
    %v7666 = vld [vmem:[#allocation3 + $0x690] sm:$0xff]
    %v7667 = vld [vmem:[#allocation3 + $0x698] sm:$0xf]
    %v7668 = vld [vmem:[#allocation3 + $0x69c] sm:$0xff]
    %v7669 = vld [vmem:[#allocation3 + $0x6a4] sm:$0xff]
    %v7670 = vld [vmem:[#allocation3 + $0x6ac] sm:$0xff]
    %v7671 = vld [vmem:[#allocation3 + $0x6b4] sm:$0xff]
    %v7672 = vld [vmem:[#allocation3 + $0x6bc] sm:$0xf]
    %v7673 = vld [vmem:[#allocation3 + $0x6c0] sm:$0xff]
    %v7674 = vld [vmem:[#allocation3 + $0x6c8] sm:$0xff]
    %v7675 = vld [vmem:[#allocation3 + $0x6d0] sm:$0xff]
    %v7676 = vld [vmem:[#allocation3 + $0x6d8] sm:$0xff]
    %v7677 = vld [vmem:[#allocation3 + $0x6e0] sm:$0xf]
    %v7678 = vld [vmem:[#allocation3 + $0x6e4] sm:$0xff]
    %v7679 = vld [vmem:[#allocation3 + $0x6ec] sm:$0xff]
    %v7680 = vld [vmem:[#allocation3 + $0x6f4] sm:$0xff]
    %v7681 = vld [vmem:[#allocation3 + $0x6fc] sm:$0xff]
    %v7682 = vld [vmem:[#allocation3 + $0x704] sm:$0xf]
    %v7683 = vld [vmem:[#allocation3 + $0x708] sm:$0xff]
    %v7684 = vld [vmem:[#allocation3 + $0x710] sm:$0xff]
    %v7685 = vld [vmem:[#allocation3 + $0x718] sm:$0xff]
    %v7686 = vld [vmem:[#allocation3 + $0x720] sm:$0xff]
    %v7687 = vld [vmem:[#allocation3 + $0x728] sm:$0xf]
    %v7688 = vld [vmem:[#allocation3 + $0x72c] sm:$0xff]
    %v7689 = vld [vmem:[#allocation3 + $0x734] sm:$0xff]
    %v7690 = vld [vmem:[#allocation3 + $0x73c] sm:$0xff]
    %v7691 = vld [vmem:[#allocation3 + $0x744] sm:$0xff]
    %v7692 = vld [vmem:[#allocation3 + $0x74c] sm:$0xf]
    %v7693 = vld [vmem:[#allocation3 + $0x750] sm:$0xff]
    %v7694 = vld [vmem:[#allocation3 + $0x758] sm:$0xff]
    %v7695 = vld [vmem:[#allocation3 + $0x760] sm:$0xff]
    %v7696 = vld [vmem:[#allocation3 + $0x768] sm:$0xff]
    %v7697 = vld [vmem:[#allocation3 + $0x770] sm:$0xf]
    %v7698 = vld [vmem:[#allocation3 + $0x774] sm:$0xff]
    %v7699 = vld [vmem:[#allocation3 + $0x77c] sm:$0xff]
    %v7700 = vld [vmem:[#allocation3 + $0x784] sm:$0xff]
    %v7701 = vld [vmem:[#allocation3 + $0x78c] sm:$0xff]
    %v7702 = vld [vmem:[#allocation3 + $0x794] sm:$0xf]
    %v7703 = vld [vmem:[#allocation3 + $0x798] sm:$0xff]
    %v7704 = vld [vmem:[#allocation3 + $0x7a0] sm:$0xff]
    %v7705 = vld [vmem:[#allocation3 + $0x7a8] sm:$0xff]
    %v7706 = vld [vmem:[#allocation3 + $0x7b0] sm:$0xff]
    %v7707 = vld [vmem:[#allocation3 + $0x7b8] sm:$0xf]
    %v7708 = vld [vmem:[#allocation3 + $0x7bc] sm:$0xff]
    %v7709 = vld [vmem:[#allocation3 + $0x7c4] sm:$0xff]
    %v7710 = vld [vmem:[#allocation3 + $0x7cc] sm:$0xff]
    %v7711 = vld [vmem:[#allocation3 + $0x7d4] sm:$0xff]
    %v7712 = vld [vmem:[#allocation3 + $0x7dc] sm:$0xf]
    %v7713 = vld [vmem:[#allocation3 + $0x7e0] sm:$0xff]
    %v7714 = vld [vmem:[#allocation3 + $0x7e8] sm:$0xff]
    %v7715 = vld [vmem:[#allocation3 + $0x7f0] sm:$0xff]
    %v7716 = vld [vmem:[#allocation3 + $0x7f8] sm:$0xff]
    %v7717 = vld [vmem:[#allocation3 + $0x800] sm:$0xf]
    %v7718 = vld [vmem:[#allocation3 + $0x804] sm:$0xff]
    %v7719 = vld [vmem:[#allocation3 + $0x80c] sm:$0xff]
    %v7720 = vld [vmem:[#allocation3 + $0x814] sm:$0xff]
    %v7721 = vld [vmem:[#allocation3 + $0x81c] sm:$0xff]
    %v7722 = vld [vmem:[#allocation3 + $0x824] sm:$0xf]
    %v7723 = vld [vmem:[#allocation3 + $0x828] sm:$0xff]
    %v7724 = vld [vmem:[#allocation3 + $0x830] sm:$0xff]
    %v7725 = vld [vmem:[#allocation3 + $0x838] sm:$0xff]
    %v7726 = vld [vmem:[#allocation3 + $0x840] sm:$0xff]
    %v7727 = vld [vmem:[#allocation3 + $0x848] sm:$0xf]
    %v7728 = vld [vmem:[#allocation3 + $0x84c] sm:$0xff]
    %v7729 = vld [vmem:[#allocation3 + $0x854] sm:$0xff]
    %v7730 = vld [vmem:[#allocation3 + $0x85c] sm:$0xff]
    %v7731 = vld [vmem:[#allocation3 + $0x864] sm:$0xff]
    %v7732 = vld [vmem:[#allocation3 + $0x86c] sm:$0xf]
    %v7733 = vld [vmem:[#allocation3 + $0x870] sm:$0xff]
    %v7734 = vld [vmem:[#allocation3 + $0x878] sm:$0xff]
    %v7735 = vld [vmem:[#allocation3 + $0x880] sm:$0xff]
    %v7736 = vld [vmem:[#allocation3 + $0x888] sm:$0xff]
    %v7737 = vld [vmem:[#allocation3 + $0x890] sm:$0xf]
    %v7738 = vld [vmem:[#allocation3 + $0x894] sm:$0xff]
    %v7739 = vld [vmem:[#allocation3 + $0x89c] sm:$0xff]
    %v7740 = vld [vmem:[#allocation3 + $0x8a4] sm:$0xff]
    %v7741 = vld [vmem:[#allocation3 + $0x8ac] sm:$0xff]
    %v7742 = vld [vmem:[#allocation3 + $0x8b4] sm:$0xf]
    %v7743 = vld [vmem:[#allocation3 + $0x8b8] sm:$0xff]
    %v7744 = vld [vmem:[#allocation3 + $0x8c0] sm:$0xff]
    %v7745 = vld [vmem:[#allocation3 + $0x8c8] sm:$0xff]
    %v7746 = vld [vmem:[#allocation3 + $0x8d0] sm:$0xff]
    %v7747 = vld [vmem:[#allocation3 + $0x8d8] sm:$0xf]
    %v7748 = vld [vmem:[#allocation3 + $0x8dc] sm:$0xff]
    %v7749 = vld [vmem:[#allocation3 + $0x8e4] sm:$0xff]
    %v7750 = vld [vmem:[#allocation3 + $0x8ec] sm:$0xff]
    %v7751 = vld [vmem:[#allocation3 + $0x8f4] sm:$0xff]
    %v7752 = vld [vmem:[#allocation3 + $0x8fc] sm:$0xf]
    %v7753 = vld [vmem:[#allocation4] sm:$0xf]
    %v7754 = vld [vmem:[#allocation4 + $0x4] sm:$0xf]
    %v7755 = vld [vmem:[#allocation4 + $0x8] sm:$0xf]
    %v7756 = vld [vmem:[#allocation4 + $0xc] sm:$0xf]
    %v7757 = vld [vmem:[#allocation4 + $0x10] sm:$0xf]
    %v7758 = vld [vmem:[#allocation4 + $0x14] sm:$0xf]
    %v7759 = vld [vmem:[#allocation4 + $0x18] sm:$0xf]
    %v7760 = vld [vmem:[#allocation4 + $0x1c] sm:$0xf]
    %v7761 = vld [vmem:[#allocation4 + $0x20] sm:$0xf]
    %v7762 = vld [vmem:[#allocation4 + $0x24] sm:$0xf]
    %v7763 = vld [vmem:[#allocation4 + $0x28] sm:$0xf]
    %v7764 = vld [vmem:[#allocation4 + $0x2c] sm:$0xf]
    %v7765 = vld [vmem:[#allocation4 + $0x30] sm:$0xf]
    %v7766 = vld [vmem:[#allocation4 + $0x34] sm:$0xf]
    %v7767 = vld [vmem:[#allocation4 + $0x38] sm:$0xf]
    %v7768 = vld [vmem:[#allocation4 + $0x3c] sm:$0xf]
    %v7769 = vld [vmem:[#allocation4 + $0x40] sm:$0xf]
    %v7770 = vld [vmem:[#allocation4 + $0x44] sm:$0xf]
    %v7771 = vld [vmem:[#allocation4 + $0x48] sm:$0xf]
    %v7772 = vld [vmem:[#allocation4 + $0x4c] sm:$0xf]
    %v7773 = vld [vmem:[#allocation4 + $0x50] sm:$0xf]
    %v7774 = vld [vmem:[#allocation4 + $0x54] sm:$0xf]
    %v7775 = vld [vmem:[#allocation4 + $0x58] sm:$0xf]
    %v7776 = vld [vmem:[#allocation4 + $0x5c] sm:$0xf]
    %v7777 = vld [vmem:[#allocation4 + $0x60] sm:$0xf]
    %v7778 = vld [vmem:[#allocation4 + $0x64] sm:$0xf]
    %v7779 = vld [vmem:[#allocation4 + $0x68] sm:$0xf]
    %v7780 = vld [vmem:[#allocation4 + $0x6c] sm:$0xf]
    %v7781 = vld [vmem:[#allocation4 + $0x70] sm:$0xf]
    %v7782 = vld [vmem:[#allocation4 + $0x74] sm:$0xf]
    %v7783 = vld [vmem:[#allocation4 + $0x78] sm:$0xf]
    %v7784 = vld [vmem:[#allocation4 + $0x7c] sm:$0xf]
    %v7785 = vld [vmem:[#allocation4 + $0x80] sm:$0xf]
    %v7786 = vld [vmem:[#allocation4 + $0x84] sm:$0xf]
    %v7787 = vld [vmem:[#allocation4 + $0x88] sm:$0xf]
    %v7788 = vld [vmem:[#allocation4 + $0x8c] sm:$0xf]
    %v7789 = vld [vmem:[#allocation4 + $0x90] sm:$0xf]
    %v7790 = vld [vmem:[#allocation4 + $0x94] sm:$0xf]
    %v7791 = vld [vmem:[#allocation4 + $0x98] sm:$0xf]
    %v7792 = vld [vmem:[#allocation4 + $0x9c] sm:$0xf]
    %v7793 = vld [vmem:[#allocation4 + $0xa0] sm:$0xf]
    %v7794 = vld [vmem:[#allocation4 + $0xa4] sm:$0xf]
    %v7795 = vld [vmem:[#allocation4 + $0xa8] sm:$0xf]
    %v7796 = vld [vmem:[#allocation4 + $0xac] sm:$0xf]
    %v7797 = vld [vmem:[#allocation4 + $0xb0] sm:$0xf]
    %v7798 = vld [vmem:[#allocation4 + $0xb4] sm:$0xf]
    %v7799 = vld [vmem:[#allocation4 + $0xb8] sm:$0xf]
    %v7800 = vld [vmem:[#allocation4 + $0xbc] sm:$0xf]
    %v7801 = vld [vmem:[#allocation4 + $0xc0] sm:$0xf]
    %v7802 = vld [vmem:[#allocation4 + $0xc4] sm:$0xf]
    %v7803 = vld [vmem:[#allocation4 + $0xc8] sm:$0xf]
    %v7804 = vld [vmem:[#allocation4 + $0xcc] sm:$0xf]
    %v7805 = vld [vmem:[#allocation4 + $0xd0] sm:$0xf]
    %v7806 = vld [vmem:[#allocation4 + $0xd4] sm:$0xf]
    %v7807 = vld [vmem:[#allocation4 + $0xd8] sm:$0xf]
    %v7808 = vld [vmem:[#allocation4 + $0xdc] sm:$0xf]
    %v7809 = vld [vmem:[#allocation4 + $0xe0] sm:$0xf]
    %v7810 = vld [vmem:[#allocation4 + $0xe4] sm:$0xf]
    %v7811 = vld [vmem:[#allocation4 + $0xe8] sm:$0xf]
    %v7812 = vld [vmem:[#allocation4 + $0xec] sm:$0xf]
    %v7813 = vld [vmem:[#allocation4 + $0xf0] sm:$0xf]
    %v7814 = vld [vmem:[#allocation4 + $0xf4] sm:$0xf]
    %v7815 = vld [vmem:[#allocation4 + $0xf8] sm:$0xf]
    %v7816 = vld [vmem:[#allocation4 + $0xfc] sm:$0xf]
    %v7817 = vld [vmem:[#allocation4 + $0x100] sm:$0xf]
    %v7818 = vld [vmem:[#allocation4 + $0x104] sm:$0xf]
    %v7819 = vld [vmem:[#allocation4 + $0x108] sm:$0xf]
    %v7820 = vld [vmem:[#allocation4 + $0x10c] sm:$0xf]
    %v7821 = vld [vmem:[#allocation4 + $0x110] sm:$0xf]
    %v7822 = vld [vmem:[#allocation4 + $0x114] sm:$0xf]
    %v7823 = vld [vmem:[#allocation4 + $0x118] sm:$0xf]
    %v7824 = vld [vmem:[#allocation4 + $0x11c] sm:$0xf]
    %v7825 = vld [vmem:[#allocation4 + $0x120] sm:$0xf]
    %v7826 = vld [vmem:[#allocation4 + $0x124] sm:$0xf]
    %v7827 = vld [vmem:[#allocation4 + $0x128] sm:$0xf]
    %v7828 = vld [vmem:[#allocation4 + $0x12c] sm:$0xf]
    %v7829 = vld [vmem:[#allocation4 + $0x130] sm:$0xf]
    %v7830 = vld [vmem:[#allocation4 + $0x134] sm:$0xf]
    %v7831 = vld [vmem:[#allocation4 + $0x138] sm:$0xf]
    %v7832 = vld [vmem:[#allocation4 + $0x13c] sm:$0xf]
    %v7833 = vld [vmem:[#allocation4 + $0x140] sm:$0xf]
    %v7834 = vld [vmem:[#allocation4 + $0x144] sm:$0xf]
    %v7835 = vld [vmem:[#allocation4 + $0x148] sm:$0xf]
    %v7836 = vld [vmem:[#allocation4 + $0x14c] sm:$0xf]
    %v7837 = vld [vmem:[#allocation4 + $0x150] sm:$0xf]
    %v7838 = vld [vmem:[#allocation4 + $0x154] sm:$0xf]
    %v7839 = vld [vmem:[#allocation4 + $0x158] sm:$0xf]
    %v7840 = vld [vmem:[#allocation4 + $0x15c] sm:$0xf]
    %v7841 = vld [vmem:[#allocation4 + $0x160] sm:$0xf]
    %v7842 = vld [vmem:[#allocation4 + $0x164] sm:$0xf]
    %v7843 = vld [vmem:[#allocation4 + $0x168] sm:$0xf]
    %v7844 = vld [vmem:[#allocation4 + $0x16c] sm:$0xf]
    %v7845 = vld [vmem:[#allocation4 + $0x170] sm:$0xf]
    %v7846 = vld [vmem:[#allocation4 + $0x174] sm:$0xf]
    %v7847 = vld [vmem:[#allocation4 + $0x178] sm:$0xf]
    %v7848 = vld [vmem:[#allocation4 + $0x17c] sm:$0xf]
    %v7849 = vld [vmem:[#allocation4 + $0x180] sm:$0xf]
    %v7850 = vld [vmem:[#allocation4 + $0x184] sm:$0xf]
    %v7851 = vld [vmem:[#allocation4 + $0x188] sm:$0xf]
    %v7852 = vld [vmem:[#allocation4 + $0x18c] sm:$0xf]
    %v7853 = vld [vmem:[#allocation4 + $0x190] sm:$0xf]
    %v7854 = vld [vmem:[#allocation4 + $0x194] sm:$0xf]
    %v7855 = vld [vmem:[#allocation4 + $0x198] sm:$0xf]
    %v7856 = vld [vmem:[#allocation4 + $0x19c] sm:$0xf]
    %v7857 = vld [vmem:[#allocation4 + $0x1a0] sm:$0xf]
    %v7858 = vld [vmem:[#allocation4 + $0x1a4] sm:$0xf]
    %v7859 = vld [vmem:[#allocation4 + $0x1a8] sm:$0xf]
    %v7860 = vld [vmem:[#allocation4 + $0x1ac] sm:$0xf]
    %v7861 = vld [vmem:[#allocation4 + $0x1b0] sm:$0xf]
    %v7862 = vld [vmem:[#allocation4 + $0x1b4] sm:$0xf]
    %v7863 = vld [vmem:[#allocation4 + $0x1b8] sm:$0xf]
    %v7864 = vld [vmem:[#allocation4 + $0x1bc] sm:$0xf]
    %v7865 = vld [vmem:[#allocation4 + $0x1c0] sm:$0xf]
    %v7866 = vld [vmem:[#allocation4 + $0x1c4] sm:$0xf]
    %v7867 = vld [vmem:[#allocation4 + $0x1c8] sm:$0xf]
    %v7868 = vld [vmem:[#allocation4 + $0x1cc] sm:$0xf]
    %v7869 = vld [vmem:[#allocation4 + $0x1d0] sm:$0xf]
    %v7870 = vld [vmem:[#allocation4 + $0x1d4] sm:$0xf]
    %v7871 = vld [vmem:[#allocation4 + $0x1d8] sm:$0xf]
    %v7872 = vld [vmem:[#allocation4 + $0x1dc] sm:$0xf]
    %v7873 = vld [vmem:[#allocation4 + $0x1e0] sm:$0xf]
    %v7874 = vld [vmem:[#allocation4 + $0x1e4] sm:$0xf]
    %v7875 = vld [vmem:[#allocation4 + $0x1e8] sm:$0xf]
    %v7876 = vld [vmem:[#allocation4 + $0x1ec] sm:$0xf]
    %v7877 = vld [vmem:[#allocation4 + $0x1f0] sm:$0xf]
    %v7878 = vld [vmem:[#allocation4 + $0x1f4] sm:$0xf]
    %v7879 = vld [vmem:[#allocation4 + $0x1f8] sm:$0xf]
    %v7880 = vld [vmem:[#allocation4 + $0x1fc] sm:$0xf]
    %v7881 = vld [vmem:[#allocation4 + $0x200] sm:$0xf]
    %v7882 = vld [vmem:[#allocation4 + $0x204] sm:$0xf]
    %v7883 = vld [vmem:[#allocation4 + $0x208] sm:$0xf]
    %v7884 = vld [vmem:[#allocation4 + $0x20c] sm:$0xf]
    %v7885 = vld [vmem:[#allocation4 + $0x210] sm:$0xf]
    %v7886 = vld [vmem:[#allocation4 + $0x214] sm:$0xf]
    %v7887 = vld [vmem:[#allocation4 + $0x218] sm:$0xf]
    %v7888 = vld [vmem:[#allocation4 + $0x21c] sm:$0xf]
    %v7889 = vld [vmem:[#allocation4 + $0x220] sm:$0xf]
    %v7890 = vld [vmem:[#allocation4 + $0x224] sm:$0xf]
    %v7891 = vld [vmem:[#allocation4 + $0x228] sm:$0xf]
    %v7892 = vld [vmem:[#allocation4 + $0x22c] sm:$0xf]
    %v7893 = vld [vmem:[#allocation4 + $0x230] sm:$0xf]
    %v7894 = vld [vmem:[#allocation4 + $0x234] sm:$0xf]
    %v7895 = vld [vmem:[#allocation4 + $0x238] sm:$0xf]
    %v7896 = vld [vmem:[#allocation4 + $0x23c] sm:$0xf]
    %v8217 = vunpack.c.l.b16 %v7433
    %v8218 = vunpack.c.h.b16 %v7433
    %v8219 = vunpack.c.l.b16 %v7434
    %v8220 = vunpack.c.h.b16 %v7434
    %v8221 = vunpack.c.l.b16 %v7435
    %v8222 = vunpack.c.h.b16 %v7435
    %v8223 = vunpack.c.l.b16 %v7436
    %v8224 = vunpack.c.h.b16 %v7436
    %v8225 = vunpack.c.l.b16 %v7437
    %v8226 = vunpack.c.l.b16 %v7438
    %v8227 = vunpack.c.h.b16 %v7438
    %v8228 = vunpack.c.l.b16 %v7439
    %v8229 = vunpack.c.h.b16 %v7439
    %v8230 = vunpack.c.l.b16 %v7440
    %v8231 = vunpack.c.h.b16 %v7440
    %v8232 = vunpack.c.l.b16 %v7441
    %v8233 = vunpack.c.h.b16 %v7441
    %v8234 = vunpack.c.l.b16 %v7442
    %v8235 = vunpack.c.l.b16 %v7443
    %v8236 = vunpack.c.h.b16 %v7443
    %v8237 = vunpack.c.l.b16 %v7444
    %v8238 = vunpack.c.h.b16 %v7444
    %v8239 = vunpack.c.l.b16 %v7445
    %v8240 = vunpack.c.h.b16 %v7445
    %v8241 = vunpack.c.l.b16 %v7446
    %v8242 = vunpack.c.h.b16 %v7446
    %v8243 = vunpack.c.l.b16 %v7447
    %v8244 = vunpack.c.l.b16 %v7448
    %v8245 = vunpack.c.h.b16 %v7448
    %v8246 = vunpack.c.l.b16 %v7449
    %v8247 = vunpack.c.h.b16 %v7449
    %v8248 = vunpack.c.l.b16 %v7450
    %v8249 = vunpack.c.h.b16 %v7450
    %v8250 = vunpack.c.l.b16 %v7451
    %v8251 = vunpack.c.h.b16 %v7451
    %v8252 = vunpack.c.l.b16 %v7452
    %v8253 = vunpack.c.l.b16 %v7453
    %v8254 = vunpack.c.h.b16 %v7453
    %v8255 = vunpack.c.l.b16 %v7454
    %v8256 = vunpack.c.h.b16 %v7454
    %v8257 = vunpack.c.l.b16 %v7455
    %v8258 = vunpack.c.h.b16 %v7455
    %v8259 = vunpack.c.l.b16 %v7456
    %v8260 = vunpack.c.h.b16 %v7456
    %v8261 = vunpack.c.l.b16 %v7457
    %v8262 = vunpack.c.l.b16 %v7458
    %v8263 = vunpack.c.h.b16 %v7458
    %v8264 = vunpack.c.l.b16 %v7459
    %v8265 = vunpack.c.h.b16 %v7459
    %v8266 = vunpack.c.l.b16 %v7460
    %v8267 = vunpack.c.h.b16 %v7460
    %v8268 = vunpack.c.l.b16 %v7461
    %v8269 = vunpack.c.h.b16 %v7461
    %v8270 = vunpack.c.l.b16 %v7462
    %v8271 = vunpack.c.l.b16 %v7463
    %v8272 = vunpack.c.h.b16 %v7463
    %v8273 = vunpack.c.l.b16 %v7464
    %v8274 = vunpack.c.h.b16 %v7464
    %v8275 = vunpack.c.l.b16 %v7465
    %v8276 = vunpack.c.h.b16 %v7465
    %v8277 = vunpack.c.l.b16 %v7466
    %v8278 = vunpack.c.h.b16 %v7466
    %v8279 = vunpack.c.l.b16 %v7467
    %v8280 = vunpack.c.l.b16 %v7468
    %v8281 = vunpack.c.h.b16 %v7468
    %v8282 = vunpack.c.l.b16 %v7469
    %v8283 = vunpack.c.h.b16 %v7469
    %v8284 = vunpack.c.l.b16 %v7470
    %v8285 = vunpack.c.h.b16 %v7470
    %v8286 = vunpack.c.l.b16 %v7471
    %v8287 = vunpack.c.h.b16 %v7471
    %v8288 = vunpack.c.l.b16 %v7472
    %v8289 = vunpack.c.l.b16 %v7473
    %v8290 = vunpack.c.h.b16 %v7473
    %v8291 = vunpack.c.l.b16 %v7474
    %v8292 = vunpack.c.h.b16 %v7474
    %v8293 = vunpack.c.l.b16 %v7475
    %v8294 = vunpack.c.h.b16 %v7475
    %v8295 = vunpack.c.l.b16 %v7476
    %v8296 = vunpack.c.h.b16 %v7476
    %v8297 = vunpack.c.l.b16 %v7477
    %v8298 = vunpack.c.l.b16 %v7478
    %v8299 = vunpack.c.h.b16 %v7478
    %v8300 = vunpack.c.l.b16 %v7479
    %v8301 = vunpack.c.h.b16 %v7479
    %v8302 = vunpack.c.l.b16 %v7480
    %v8303 = vunpack.c.h.b16 %v7480
    %v8304 = vunpack.c.l.b16 %v7481
    %v8305 = vunpack.c.h.b16 %v7481
    %v8306 = vunpack.c.l.b16 %v7482
    %v8307 = vunpack.c.l.b16 %v7483
    %v8308 = vunpack.c.h.b16 %v7483
    %v8309 = vunpack.c.l.b16 %v7484
    %v8310 = vunpack.c.h.b16 %v7484
    %v8311 = vunpack.c.l.b16 %v7485
    %v8312 = vunpack.c.h.b16 %v7485
    %v8313 = vunpack.c.l.b16 %v7486
    %v8314 = vunpack.c.h.b16 %v7486
    %v8315 = vunpack.c.l.b16 %v7487
    %v8316 = vunpack.c.l.b16 %v7488
    %v8317 = vunpack.c.h.b16 %v7488
    %v8318 = vunpack.c.l.b16 %v7489
    %v8319 = vunpack.c.h.b16 %v7489
    %v8320 = vunpack.c.l.b16 %v7490
    %v8321 = vunpack.c.h.b16 %v7490
    %v8322 = vunpack.c.l.b16 %v7491
    %v8323 = vunpack.c.h.b16 %v7491
    %v8324 = vunpack.c.l.b16 %v7492
    %v8325 = vunpack.c.l.b16 %v7493
    %v8326 = vunpack.c.h.b16 %v7493
    %v8327 = vunpack.c.l.b16 %v7494
    %v8328 = vunpack.c.h.b16 %v7494
    %v8329 = vunpack.c.l.b16 %v7495
    %v8330 = vunpack.c.h.b16 %v7495
    %v8331 = vunpack.c.l.b16 %v7496
    %v8332 = vunpack.c.h.b16 %v7496
    %v8333 = vunpack.c.l.b16 %v7497
    %v8334 = vunpack.c.l.b16 %v7498
    %v8335 = vunpack.c.h.b16 %v7498
    %v8336 = vunpack.c.l.b16 %v7499
    %v8337 = vunpack.c.h.b16 %v7499
    %v8338 = vunpack.c.l.b16 %v7500
    %v8339 = vunpack.c.h.b16 %v7500
    %v8340 = vunpack.c.l.b16 %v7501
    %v8341 = vunpack.c.h.b16 %v7501
    %v8342 = vunpack.c.l.b16 %v7502
    %v8343 = vunpack.c.l.b16 %v7503
    %v8344 = vunpack.c.h.b16 %v7503
    %v8345 = vunpack.c.l.b16 %v7504
    %v8346 = vunpack.c.h.b16 %v7504
    %v8347 = vunpack.c.l.b16 %v7505
    %v8348 = vunpack.c.h.b16 %v7505
    %v8349 = vunpack.c.l.b16 %v7506
    %v8350 = vunpack.c.h.b16 %v7506
    %v8351 = vunpack.c.l.b16 %v7507
    %v8352 = vunpack.c.l.b16 %v7508
    %v8353 = vunpack.c.h.b16 %v7508
    %v8354 = vunpack.c.l.b16 %v7509
    %v8355 = vunpack.c.h.b16 %v7509
    %v8356 = vunpack.c.l.b16 %v7510
    %v8357 = vunpack.c.h.b16 %v7510
    %v8358 = vunpack.c.l.b16 %v7511
    %v8359 = vunpack.c.h.b16 %v7511
    %v8360 = vunpack.c.l.b16 %v7512
    %v8361 = vunpack.c.l.b16 %v7513
    %v8362 = vunpack.c.h.b16 %v7513
    %v8363 = vunpack.c.l.b16 %v7514
    %v8364 = vunpack.c.h.b16 %v7514
    %v8365 = vunpack.c.l.b16 %v7515
    %v8366 = vunpack.c.h.b16 %v7515
    %v8367 = vunpack.c.l.b16 %v7516
    %v8368 = vunpack.c.h.b16 %v7516
    %v8369 = vunpack.c.l.b16 %v7517
    %v8370 = vunpack.c.l.b16 %v7518
    %v8371 = vunpack.c.h.b16 %v7518
    %v8372 = vunpack.c.l.b16 %v7519
    %v8373 = vunpack.c.h.b16 %v7519
    %v8374 = vunpack.c.l.b16 %v7520
    %v8375 = vunpack.c.h.b16 %v7520
    %v8376 = vunpack.c.l.b16 %v7521
    %v8377 = vunpack.c.h.b16 %v7521
    %v8378 = vunpack.c.l.b16 %v7522
    %v8379 = vunpack.c.l.b16 %v7523
    %v8380 = vunpack.c.h.b16 %v7523
    %v8381 = vunpack.c.l.b16 %v7524
    %v8382 = vunpack.c.h.b16 %v7524
    %v8383 = vunpack.c.l.b16 %v7525
    %v8384 = vunpack.c.h.b16 %v7525
    %v8385 = vunpack.c.l.b16 %v7526
    %v8386 = vunpack.c.h.b16 %v7526
    %v8387 = vunpack.c.l.b16 %v7527
    %v8388 = vunpack.c.l.b16 %v7528
    %v8389 = vunpack.c.h.b16 %v7528
    %v8390 = vunpack.c.l.b16 %v7529
    %v8391 = vunpack.c.h.b16 %v7529
    %v8392 = vunpack.c.l.b16 %v7530
    %v8393 = vunpack.c.h.b16 %v7530
    %v8394 = vunpack.c.l.b16 %v7531
    %v8395 = vunpack.c.h.b16 %v7531
    %v8396 = vunpack.c.l.b16 %v7532
    %v8397 = vunpack.c.l.b16 %v7533
    %v8398 = vunpack.c.h.b16 %v7533
    %v8399 = vunpack.c.l.b16 %v7534
    %v8400 = vunpack.c.h.b16 %v7534
    %v8401 = vunpack.c.l.b16 %v7535
    %v8402 = vunpack.c.h.b16 %v7535
    %v8403 = vunpack.c.l.b16 %v7536
    %v8404 = vunpack.c.h.b16 %v7536
    %v8405 = vunpack.c.l.b16 %v7537
    %v8406 = vunpack.c.l.b16 %v7538
    %v8407 = vunpack.c.h.b16 %v7538
    %v8408 = vunpack.c.l.b16 %v7539
    %v8409 = vunpack.c.h.b16 %v7539
    %v8410 = vunpack.c.l.b16 %v7540
    %v8411 = vunpack.c.h.b16 %v7540
    %v8412 = vunpack.c.l.b16 %v7541
    %v8413 = vunpack.c.h.b16 %v7541
    %v8414 = vunpack.c.l.b16 %v7542
    %v8415 = vunpack.c.l.b16 %v7543
    %v8416 = vunpack.c.h.b16 %v7543
    %v8417 = vunpack.c.l.b16 %v7544
    %v8418 = vunpack.c.h.b16 %v7544
    %v8419 = vunpack.c.l.b16 %v7545
    %v8420 = vunpack.c.h.b16 %v7545
    %v8421 = vunpack.c.l.b16 %v7546
    %v8422 = vunpack.c.h.b16 %v7546
    %v8423 = vunpack.c.l.b16 %v7547
    %v8424 = vunpack.c.l.b16 %v7548
    %v8425 = vunpack.c.h.b16 %v7548
    %v8426 = vunpack.c.l.b16 %v7549
    %v8427 = vunpack.c.h.b16 %v7549
    %v8428 = vunpack.c.l.b16 %v7550
    %v8429 = vunpack.c.h.b16 %v7550
    %v8430 = vunpack.c.l.b16 %v7551
    %v8431 = vunpack.c.h.b16 %v7551
    %v8432 = vunpack.c.l.b16 %v7552
    %v8433 = vunpack.c.l.b16 %v7553
    %v8434 = vunpack.c.h.b16 %v7553
    %v8435 = vunpack.c.l.b16 %v7554
    %v8436 = vunpack.c.h.b16 %v7554
    %v8437 = vunpack.c.l.b16 %v7555
    %v8438 = vunpack.c.h.b16 %v7555
    %v8439 = vunpack.c.l.b16 %v7556
    %v8440 = vunpack.c.h.b16 %v7556
    %v8441 = vunpack.c.l.b16 %v7557
    %v8442 = vunpack.c.l.b16 %v7558
    %v8443 = vunpack.c.h.b16 %v7558
    %v8444 = vunpack.c.l.b16 %v7559
    %v8445 = vunpack.c.h.b16 %v7559
    %v8446 = vunpack.c.l.b16 %v7560
    %v8447 = vunpack.c.h.b16 %v7560
    %v8448 = vunpack.c.l.b16 %v7561
    %v8449 = vunpack.c.h.b16 %v7561
    %v8450 = vunpack.c.l.b16 %v7562
    %v8451 = vunpack.c.l.b16 %v7563
    %v8452 = vunpack.c.h.b16 %v7563
    %v8453 = vunpack.c.l.b16 %v7564
    %v8454 = vunpack.c.h.b16 %v7564
    %v8455 = vunpack.c.l.b16 %v7565
    %v8456 = vunpack.c.h.b16 %v7565
    %v8457 = vunpack.c.l.b16 %v7566
    %v8458 = vunpack.c.h.b16 %v7566
    %v8459 = vunpack.c.l.b16 %v7567
    %v8460 = vunpack.c.l.b16 %v7568
    %v8461 = vunpack.c.h.b16 %v7568
    %v8462 = vunpack.c.l.b16 %v7569
    %v8463 = vunpack.c.h.b16 %v7569
    %v8464 = vunpack.c.l.b16 %v7570
    %v8465 = vunpack.c.h.b16 %v7570
    %v8466 = vunpack.c.l.b16 %v7571
    %v8467 = vunpack.c.h.b16 %v7571
    %v8468 = vunpack.c.l.b16 %v7572
    %v8469 = vunpack.c.l.b16 %v7573
    %v8470 = vunpack.c.h.b16 %v7573
    %v8471 = vunpack.c.l.b16 %v7574
    %v8472 = vunpack.c.h.b16 %v7574
    %v8473 = vunpack.c.l.b16 %v7575
    %v8474 = vunpack.c.h.b16 %v7575
    %v8475 = vunpack.c.l.b16 %v7576
    %v8476 = vunpack.c.h.b16 %v7576
    %v8477 = vunpack.c.l.b16 %v7577
    %v8478 = vunpack.c.l.b16 %v7578
    %v8479 = vunpack.c.h.b16 %v7578
    %v8480 = vunpack.c.l.b16 %v7579
    %v8481 = vunpack.c.h.b16 %v7579
    %v8482 = vunpack.c.l.b16 %v7580
    %v8483 = vunpack.c.h.b16 %v7580
    %v8484 = vunpack.c.l.b16 %v7581
    %v8485 = vunpack.c.h.b16 %v7581
    %v8486 = vunpack.c.l.b16 %v7582
    %v8487 = vunpack.c.l.b16 %v7583
    %v8488 = vunpack.c.h.b16 %v7583
    %v8489 = vunpack.c.l.b16 %v7584
    %v8490 = vunpack.c.h.b16 %v7584
    %v8491 = vunpack.c.l.b16 %v7585
    %v8492 = vunpack.c.h.b16 %v7585
    %v8493 = vunpack.c.l.b16 %v7586
    %v8494 = vunpack.c.h.b16 %v7586
    %v8495 = vunpack.c.l.b16 %v7587
    %v8496 = vunpack.c.l.b16 %v7588
    %v8497 = vunpack.c.h.b16 %v7588
    %v8498 = vunpack.c.l.b16 %v7589
    %v8499 = vunpack.c.h.b16 %v7589
    %v8500 = vunpack.c.l.b16 %v7590
    %v8501 = vunpack.c.h.b16 %v7590
    %v8502 = vunpack.c.l.b16 %v7591
    %v8503 = vunpack.c.h.b16 %v7591
    %v8504 = vunpack.c.l.b16 %v7592
    %v8505 = vunpack.c.l.b16 %v7593
    %v8506 = vunpack.c.h.b16 %v7593
    %v8507 = vunpack.c.l.b16 %v7594
    %v8508 = vunpack.c.h.b16 %v7594
    %v8509 = vunpack.c.l.b16 %v7595
    %v8510 = vunpack.c.h.b16 %v7595
    %v8511 = vunpack.c.l.b16 %v7596
    %v8512 = vunpack.c.h.b16 %v7596
    %v8513 = vunpack.c.l.b16 %v7597
    %v8514 = vunpack.c.l.b16 %v7598
    %v8515 = vunpack.c.h.b16 %v7598
    %v8516 = vunpack.c.l.b16 %v7599
    %v8517 = vunpack.c.h.b16 %v7599
    %v8518 = vunpack.c.l.b16 %v7600
    %v8519 = vunpack.c.h.b16 %v7600
    %v8520 = vunpack.c.l.b16 %v7601
    %v8521 = vunpack.c.h.b16 %v7601
    %v8522 = vunpack.c.l.b16 %v7602
    %v8523 = vunpack.c.l.b16 %v7603
    %v8524 = vunpack.c.h.b16 %v7603
    %v8525 = vunpack.c.l.b16 %v7604
    %v8526 = vunpack.c.h.b16 %v7604
    %v8527 = vunpack.c.l.b16 %v7605
    %v8528 = vunpack.c.h.b16 %v7605
    %v8529 = vunpack.c.l.b16 %v7606
    %v8530 = vunpack.c.h.b16 %v7606
    %v8531 = vunpack.c.l.b16 %v7607
    %v8532 = vunpack.c.l.b16 %v7608
    %v8533 = vunpack.c.h.b16 %v7608
    %v8534 = vunpack.c.l.b16 %v7609
    %v8535 = vunpack.c.h.b16 %v7609
    %v8536 = vunpack.c.l.b16 %v7610
    %v8537 = vunpack.c.h.b16 %v7610
    %v8538 = vunpack.c.l.b16 %v7611
    %v8539 = vunpack.c.h.b16 %v7611
    %v8540 = vunpack.c.l.b16 %v7612
    %v8541 = vunpack.c.l.b16 %v7613
    %v8542 = vunpack.c.h.b16 %v7613
    %v8543 = vunpack.c.l.b16 %v7614
    %v8544 = vunpack.c.h.b16 %v7614
    %v8545 = vunpack.c.l.b16 %v7615
    %v8546 = vunpack.c.h.b16 %v7615
    %v8547 = vunpack.c.l.b16 %v7616
    %v8548 = vunpack.c.h.b16 %v7616
    %v8549 = vunpack.c.l.b16 %v7617
    %v8550 = vunpack.c.l.b16 %v7618
    %v8551 = vunpack.c.h.b16 %v7618
    %v8552 = vunpack.c.l.b16 %v7619
    %v8553 = vunpack.c.h.b16 %v7619
    %v8554 = vunpack.c.l.b16 %v7620
    %v8555 = vunpack.c.h.b16 %v7620
    %v8556 = vunpack.c.l.b16 %v7621
    %v8557 = vunpack.c.h.b16 %v7621
    %v8558 = vunpack.c.l.b16 %v7622
    %v8559 = vunpack.c.l.b16 %v7623
    %v8560 = vunpack.c.h.b16 %v7623
    %v8561 = vunpack.c.l.b16 %v7624
    %v8562 = vunpack.c.h.b16 %v7624
    %v8563 = vunpack.c.l.b16 %v7625
    %v8564 = vunpack.c.h.b16 %v7625
    %v8565 = vunpack.c.l.b16 %v7626
    %v8566 = vunpack.c.h.b16 %v7626
    %v8567 = vunpack.c.l.b16 %v7627
    %v8568 = vunpack.c.l.b16 %v7628
    %v8569 = vunpack.c.h.b16 %v7628
    %v8570 = vunpack.c.l.b16 %v7629
    %v8571 = vunpack.c.h.b16 %v7629
    %v8572 = vunpack.c.l.b16 %v7630
    %v8573 = vunpack.c.h.b16 %v7630
    %v8574 = vunpack.c.l.b16 %v7631
    %v8575 = vunpack.c.h.b16 %v7631
    %v8576 = vunpack.c.l.b16 %v7632
    %v8577 = vunpack.c.l.b16 %v7633
    %v8578 = vunpack.c.h.b16 %v7633
    %v8579 = vunpack.c.l.b16 %v7634
    %v8580 = vunpack.c.h.b16 %v7634
    %v8581 = vunpack.c.l.b16 %v7635
    %v8582 = vunpack.c.h.b16 %v7635
    %v8583 = vunpack.c.l.b16 %v7636
    %v8584 = vunpack.c.h.b16 %v7636
    %v8585 = vunpack.c.l.b16 %v7637
    %v8586 = vunpack.c.l.b16 %v7638
    %v8587 = vunpack.c.h.b16 %v7638
    %v8588 = vunpack.c.l.b16 %v7639
    %v8589 = vunpack.c.h.b16 %v7639
    %v8590 = vunpack.c.l.b16 %v7640
    %v8591 = vunpack.c.h.b16 %v7640
    %v8592 = vunpack.c.l.b16 %v7641
    %v8593 = vunpack.c.h.b16 %v7641
    %v8594 = vunpack.c.l.b16 %v7642
    %v8595 = vunpack.c.l.b16 %v7643
    %v8596 = vunpack.c.h.b16 %v7643
    %v8597 = vunpack.c.l.b16 %v7644
    %v8598 = vunpack.c.h.b16 %v7644
    %v8599 = vunpack.c.l.b16 %v7645
    %v8600 = vunpack.c.h.b16 %v7645
    %v8601 = vunpack.c.l.b16 %v7646
    %v8602 = vunpack.c.h.b16 %v7646
    %v8603 = vunpack.c.l.b16 %v7647
    %v8604 = vunpack.c.l.b16 %v7648
    %v8605 = vunpack.c.h.b16 %v7648
    %v8606 = vunpack.c.l.b16 %v7649
    %v8607 = vunpack.c.h.b16 %v7649
    %v8608 = vunpack.c.l.b16 %v7650
    %v8609 = vunpack.c.h.b16 %v7650
    %v8610 = vunpack.c.l.b16 %v7651
    %v8611 = vunpack.c.h.b16 %v7651
    %v8612 = vunpack.c.l.b16 %v7652
    %v8613 = vunpack.c.l.b16 %v7653
    %v8614 = vunpack.c.h.b16 %v7653
    %v8615 = vunpack.c.l.b16 %v7654
    %v8616 = vunpack.c.h.b16 %v7654
    %v8617 = vunpack.c.l.b16 %v7655
    %v8618 = vunpack.c.h.b16 %v7655
    %v8619 = vunpack.c.l.b16 %v7656
    %v8620 = vunpack.c.h.b16 %v7656
    %v8621 = vunpack.c.l.b16 %v7657
    %v8622 = vunpack.c.l.b16 %v7658
    %v8623 = vunpack.c.h.b16 %v7658
    %v8624 = vunpack.c.l.b16 %v7659
    %v8625 = vunpack.c.h.b16 %v7659
    %v8626 = vunpack.c.l.b16 %v7660
    %v8627 = vunpack.c.h.b16 %v7660
    %v8628 = vunpack.c.l.b16 %v7661
    %v8629 = vunpack.c.h.b16 %v7661
    %v8630 = vunpack.c.l.b16 %v7662
    %v8631 = vunpack.c.l.b16 %v7663
    %v8632 = vunpack.c.h.b16 %v7663
    %v8633 = vunpack.c.l.b16 %v7664
    %v8634 = vunpack.c.h.b16 %v7664
    %v8635 = vunpack.c.l.b16 %v7665
    %v8636 = vunpack.c.h.b16 %v7665
    %v8637 = vunpack.c.l.b16 %v7666
    %v8638 = vunpack.c.h.b16 %v7666
    %v8639 = vunpack.c.l.b16 %v7667
    %v8640 = vunpack.c.l.b16 %v7668
    %v8641 = vunpack.c.h.b16 %v7668
    %v8642 = vunpack.c.l.b16 %v7669
    %v8643 = vunpack.c.h.b16 %v7669
    %v8644 = vunpack.c.l.b16 %v7670
    %v8645 = vunpack.c.h.b16 %v7670
    %v8646 = vunpack.c.l.b16 %v7671
    %v8647 = vunpack.c.h.b16 %v7671
    %v8648 = vunpack.c.l.b16 %v7672
    %v8649 = vunpack.c.l.b16 %v7673
    %v8650 = vunpack.c.h.b16 %v7673
    %v8651 = vunpack.c.l.b16 %v7674
    %v8652 = vunpack.c.h.b16 %v7674
    %v8653 = vunpack.c.l.b16 %v7675
    %v8654 = vunpack.c.h.b16 %v7675
    %v8655 = vunpack.c.l.b16 %v7676
    %v8656 = vunpack.c.h.b16 %v7676
    %v8657 = vunpack.c.l.b16 %v7677
    %v8658 = vunpack.c.l.b16 %v7678
    %v8659 = vunpack.c.h.b16 %v7678
    %v8660 = vunpack.c.l.b16 %v7679
    %v8661 = vunpack.c.h.b16 %v7679
    %v8662 = vunpack.c.l.b16 %v7680
    %v8663 = vunpack.c.h.b16 %v7680
    %v8664 = vunpack.c.l.b16 %v7681
    %v8665 = vunpack.c.h.b16 %v7681
    %v8666 = vunpack.c.l.b16 %v7682
    %v8667 = vunpack.c.l.b16 %v7683
    %v8668 = vunpack.c.h.b16 %v7683
    %v8669 = vunpack.c.l.b16 %v7684
    %v8670 = vunpack.c.h.b16 %v7684
    %v8671 = vunpack.c.l.b16 %v7685
    %v8672 = vunpack.c.h.b16 %v7685
    %v8673 = vunpack.c.l.b16 %v7686
    %v8674 = vunpack.c.h.b16 %v7686
    %v8675 = vunpack.c.l.b16 %v7687
    %v8676 = vunpack.c.l.b16 %v7688
    %v8677 = vunpack.c.h.b16 %v7688
    %v8678 = vunpack.c.l.b16 %v7689
    %v8679 = vunpack.c.h.b16 %v7689
    %v8680 = vunpack.c.l.b16 %v7690
    %v8681 = vunpack.c.h.b16 %v7690
    %v8682 = vunpack.c.l.b16 %v7691
    %v8683 = vunpack.c.h.b16 %v7691
    %v8684 = vunpack.c.l.b16 %v7692
    %v8685 = vunpack.c.l.b16 %v7693
    %v8686 = vunpack.c.h.b16 %v7693
    %v8687 = vunpack.c.l.b16 %v7694
    %v8688 = vunpack.c.h.b16 %v7694
    %v8689 = vunpack.c.l.b16 %v7695
    %v8690 = vunpack.c.h.b16 %v7695
    %v8691 = vunpack.c.l.b16 %v7696
    %v8692 = vunpack.c.h.b16 %v7696
    %v8693 = vunpack.c.l.b16 %v7697
    %v8694 = vunpack.c.l.b16 %v7698
    %v8695 = vunpack.c.h.b16 %v7698
    %v8696 = vunpack.c.l.b16 %v7699
    %v8697 = vunpack.c.h.b16 %v7699
    %v8698 = vunpack.c.l.b16 %v7700
    %v8699 = vunpack.c.h.b16 %v7700
    %v8700 = vunpack.c.l.b16 %v7701
    %v8701 = vunpack.c.h.b16 %v7701
    %v8702 = vunpack.c.l.b16 %v7702
    %v8703 = vunpack.c.l.b16 %v7703
    %v8704 = vunpack.c.h.b16 %v7703
    %v8705 = vunpack.c.l.b16 %v7704
    %v8706 = vunpack.c.h.b16 %v7704
    %v8707 = vunpack.c.l.b16 %v7705
    %v8708 = vunpack.c.h.b16 %v7705
    %v8709 = vunpack.c.l.b16 %v7706
    %v8710 = vunpack.c.h.b16 %v7706
    %v8711 = vunpack.c.l.b16 %v7707
    %v8712 = vunpack.c.l.b16 %v7708
    %v8713 = vunpack.c.h.b16 %v7708
    %v8714 = vunpack.c.l.b16 %v7709
    %v8715 = vunpack.c.h.b16 %v7709
    %v8716 = vunpack.c.l.b16 %v7710
    %v8717 = vunpack.c.h.b16 %v7710
    %v8718 = vunpack.c.l.b16 %v7711
    %v8719 = vunpack.c.h.b16 %v7711
    %v8720 = vunpack.c.l.b16 %v7712
    %v8721 = vunpack.c.l.b16 %v7713
    %v8722 = vunpack.c.h.b16 %v7713
    %v8723 = vunpack.c.l.b16 %v7714
    %v8724 = vunpack.c.h.b16 %v7714
    %v8725 = vunpack.c.l.b16 %v7715
    %v8726 = vunpack.c.h.b16 %v7715
    %v8727 = vunpack.c.l.b16 %v7716
    %v8728 = vunpack.c.h.b16 %v7716
    %v8729 = vunpack.c.l.b16 %v7717
    %v8730 = vunpack.c.l.b16 %v7718
    %v8731 = vunpack.c.h.b16 %v7718
    %v8732 = vunpack.c.l.b16 %v7719
    %v8733 = vunpack.c.h.b16 %v7719
    %v8734 = vunpack.c.l.b16 %v7720
    %v8735 = vunpack.c.h.b16 %v7720
    %v8736 = vunpack.c.l.b16 %v7721
    %v8737 = vunpack.c.h.b16 %v7721
    %v8738 = vunpack.c.l.b16 %v7722
    %v8739 = vunpack.c.l.b16 %v7723
    %v8740 = vunpack.c.h.b16 %v7723
    %v8741 = vunpack.c.l.b16 %v7724
    %v8742 = vunpack.c.h.b16 %v7724
    %v8743 = vunpack.c.l.b16 %v7725
    %v8744 = vunpack.c.h.b16 %v7725
    %v8745 = vunpack.c.l.b16 %v7726
    %v8746 = vunpack.c.h.b16 %v7726
    %v8747 = vunpack.c.l.b16 %v7727
    %v8748 = vunpack.c.l.b16 %v7728
    %v8749 = vunpack.c.h.b16 %v7728
    %v8750 = vunpack.c.l.b16 %v7729
    %v8751 = vunpack.c.h.b16 %v7729
    %v8752 = vunpack.c.l.b16 %v7730
    %v8753 = vunpack.c.h.b16 %v7730
    %v8754 = vunpack.c.l.b16 %v7731
    %v8755 = vunpack.c.h.b16 %v7731
    %v8756 = vunpack.c.l.b16 %v7732
    %v8757 = vunpack.c.l.b16 %v7733
    %v8758 = vunpack.c.h.b16 %v7733
    %v8759 = vunpack.c.l.b16 %v7734
    %v8760 = vunpack.c.h.b16 %v7734
    %v8761 = vunpack.c.l.b16 %v7735
    %v8762 = vunpack.c.h.b16 %v7735
    %v8763 = vunpack.c.l.b16 %v7736
    %v8764 = vunpack.c.h.b16 %v7736
    %v8765 = vunpack.c.l.b16 %v7737
    %v8766 = vunpack.c.l.b16 %v7738
    %v8767 = vunpack.c.h.b16 %v7738
    %v8768 = vunpack.c.l.b16 %v7739
    %v8769 = vunpack.c.h.b16 %v7739
    %v8770 = vunpack.c.l.b16 %v7740
    %v8771 = vunpack.c.h.b16 %v7740
    %v8772 = vunpack.c.l.b16 %v7741
    %v8773 = vunpack.c.h.b16 %v7741
    %v8774 = vunpack.c.l.b16 %v7742
    %v8775 = vunpack.c.l.b16 %v7743
    %v8776 = vunpack.c.h.b16 %v7743
    %v8777 = vunpack.c.l.b16 %v7744
    %v8778 = vunpack.c.h.b16 %v7744
    %v8779 = vunpack.c.l.b16 %v7745
    %v8780 = vunpack.c.h.b16 %v7745
    %v8781 = vunpack.c.l.b16 %v7746
    %v8782 = vunpack.c.h.b16 %v7746
    %v8783 = vunpack.c.l.b16 %v7747
    %v8784 = vunpack.c.l.b16 %v7748
    %v8785 = vunpack.c.h.b16 %v7748
    %v8786 = vunpack.c.l.b16 %v7749
    %v8787 = vunpack.c.h.b16 %v7749
    %v8788 = vunpack.c.l.b16 %v7750
    %v8789 = vunpack.c.h.b16 %v7750
    %v8790 = vunpack.c.l.b16 %v7751
    %v8791 = vunpack.c.h.b16 %v7751
    %v8792 = vunpack.c.l.b16 %v7752
    %v8793 = vpack.c.b16 %v8226, %v8217
    %v8794 = vpack.c.b16 %v8227, %v8218
    %v8795 = vpack.c.b16 %v8228, %v8219
    %v8796 = vpack.c.b16 %v8229, %v8220
    %v8797 = vpack.c.b16 %v8230, %v8221
    %v8798 = vpack.c.b16 %v8231, %v8222
    %v8799 = vpack.c.b16 %v8232, %v8223
    %v8800 = vpack.c.b16 %v8233, %v8224
    %v8801 = vpack.c.b16 %v8234, %v8225
    %v8802 = vpack.c.b16 %v8244, %v8235
    %v8803 = vpack.c.b16 %v8245, %v8236
    %v8804 = vpack.c.b16 %v8246, %v8237
    %v8805 = vpack.c.b16 %v8247, %v8238
    %v8806 = vpack.c.b16 %v8248, %v8239
    %v8807 = vpack.c.b16 %v8249, %v8240
    %v8808 = vpack.c.b16 %v8250, %v8241
    %v8809 = vpack.c.b16 %v8251, %v8242
    %v8810 = vpack.c.b16 %v8252, %v8243
    %v8811 = vpack.c.b16 %v8262, %v8253
    %v8812 = vpack.c.b16 %v8263, %v8254
    %v8813 = vpack.c.b16 %v8264, %v8255
    %v8814 = vpack.c.b16 %v8265, %v8256
    %v8815 = vpack.c.b16 %v8266, %v8257
    %v8816 = vpack.c.b16 %v8267, %v8258
    %v8817 = vpack.c.b16 %v8268, %v8259
    %v8818 = vpack.c.b16 %v8269, %v8260
    %v8819 = vpack.c.b16 %v8270, %v8261
    %v8820 = vpack.c.b16 %v8280, %v8271
    %v8821 = vpack.c.b16 %v8281, %v8272
    %v8822 = vpack.c.b16 %v8282, %v8273
    %v8823 = vpack.c.b16 %v8283, %v8274
    %v8824 = vpack.c.b16 %v8284, %v8275
    %v8825 = vpack.c.b16 %v8285, %v8276
    %v8826 = vpack.c.b16 %v8286, %v8277
    %v8827 = vpack.c.b16 %v8287, %v8278
    %v8828 = vpack.c.b16 %v8288, %v8279
    %v8829 = vpack.c.b16 %v8298, %v8289
    %v8830 = vpack.c.b16 %v8299, %v8290
    %v8831 = vpack.c.b16 %v8300, %v8291
    %v8832 = vpack.c.b16 %v8301, %v8292
    %v8833 = vpack.c.b16 %v8302, %v8293
    %v8834 = vpack.c.b16 %v8303, %v8294
    %v8835 = vpack.c.b16 %v8304, %v8295
    %v8836 = vpack.c.b16 %v8305, %v8296
    %v8837 = vpack.c.b16 %v8306, %v8297
    %v8838 = vpack.c.b16 %v8316, %v8307
    %v8839 = vpack.c.b16 %v8317, %v8308
    %v8840 = vpack.c.b16 %v8318, %v8309
    %v8841 = vpack.c.b16 %v8319, %v8310
    %v8842 = vpack.c.b16 %v8320, %v8311
    %v8843 = vpack.c.b16 %v8321, %v8312
    %v8844 = vpack.c.b16 %v8322, %v8313
    %v8845 = vpack.c.b16 %v8323, %v8314
    %v8846 = vpack.c.b16 %v8324, %v8315
    %v8847 = vpack.c.b16 %v8334, %v8325
    %v8848 = vpack.c.b16 %v8335, %v8326
    %v8849 = vpack.c.b16 %v8336, %v8327
    %v8850 = vpack.c.b16 %v8337, %v8328
    %v8851 = vpack.c.b16 %v8338, %v8329
    %v8852 = vpack.c.b16 %v8339, %v8330
    %v8853 = vpack.c.b16 %v8340, %v8331
    %v8854 = vpack.c.b16 %v8341, %v8332
    %v8855 = vpack.c.b16 %v8342, %v8333
    %v8856 = vpack.c.b16 %v8352, %v8343
    %v8857 = vpack.c.b16 %v8353, %v8344
    %v8858 = vpack.c.b16 %v8354, %v8345
    %v8859 = vpack.c.b16 %v8355, %v8346
    %v8860 = vpack.c.b16 %v8356, %v8347
    %v8861 = vpack.c.b16 %v8357, %v8348
    %v8862 = vpack.c.b16 %v8358, %v8349
    %v8863 = vpack.c.b16 %v8359, %v8350
    %v8864 = vpack.c.b16 %v8360, %v8351
    %v8865 = vpack.c.b16 %v8370, %v8361
    %v8866 = vpack.c.b16 %v8371, %v8362
    %v8867 = vpack.c.b16 %v8372, %v8363
    %v8868 = vpack.c.b16 %v8373, %v8364
    %v8869 = vpack.c.b16 %v8374, %v8365
    %v8870 = vpack.c.b16 %v8375, %v8366
    %v8871 = vpack.c.b16 %v8376, %v8367
    %v8872 = vpack.c.b16 %v8377, %v8368
    %v8873 = vpack.c.b16 %v8378, %v8369
    %v8874 = vpack.c.b16 %v8388, %v8379
    %v8875 = vpack.c.b16 %v8389, %v8380
    %v8876 = vpack.c.b16 %v8390, %v8381
    %v8877 = vpack.c.b16 %v8391, %v8382
    %v8878 = vpack.c.b16 %v8392, %v8383
    %v8879 = vpack.c.b16 %v8393, %v8384
    %v8880 = vpack.c.b16 %v8394, %v8385
    %v8881 = vpack.c.b16 %v8395, %v8386
    %v8882 = vpack.c.b16 %v8396, %v8387
    %v8883 = vpack.c.b16 %v8406, %v8397
    %v8884 = vpack.c.b16 %v8407, %v8398
    %v8885 = vpack.c.b16 %v8408, %v8399
    %v8886 = vpack.c.b16 %v8409, %v8400
    %v8887 = vpack.c.b16 %v8410, %v8401
    %v8888 = vpack.c.b16 %v8411, %v8402
    %v8889 = vpack.c.b16 %v8412, %v8403
    %v8890 = vpack.c.b16 %v8413, %v8404
    %v8891 = vpack.c.b16 %v8414, %v8405
    %v8892 = vpack.c.b16 %v8424, %v8415
    %v8893 = vpack.c.b16 %v8425, %v8416
    %v8894 = vpack.c.b16 %v8426, %v8417
    %v8895 = vpack.c.b16 %v8427, %v8418
    %v8896 = vpack.c.b16 %v8428, %v8419
    %v8897 = vpack.c.b16 %v8429, %v8420
    %v8898 = vpack.c.b16 %v8430, %v8421
    %v8899 = vpack.c.b16 %v8431, %v8422
    %v8900 = vpack.c.b16 %v8432, %v8423
    %v8901 = vpack.c.b16 %v8442, %v8433
    %v8902 = vpack.c.b16 %v8443, %v8434
    %v8903 = vpack.c.b16 %v8444, %v8435
    %v8904 = vpack.c.b16 %v8445, %v8436
    %v8905 = vpack.c.b16 %v8446, %v8437
    %v8906 = vpack.c.b16 %v8447, %v8438
    %v8907 = vpack.c.b16 %v8448, %v8439
    %v8908 = vpack.c.b16 %v8449, %v8440
    %v8909 = vpack.c.b16 %v8450, %v8441
    %v8910 = vpack.c.b16 %v8460, %v8451
    %v8911 = vpack.c.b16 %v8461, %v8452
    %v8912 = vpack.c.b16 %v8462, %v8453
    %v8913 = vpack.c.b16 %v8463, %v8454
    %v8914 = vpack.c.b16 %v8464, %v8455
    %v8915 = vpack.c.b16 %v8465, %v8456
    %v8916 = vpack.c.b16 %v8466, %v8457
    %v8917 = vpack.c.b16 %v8467, %v8458
    %v8918 = vpack.c.b16 %v8468, %v8459
    %v8919 = vpack.c.b16 %v8478, %v8469
    %v8920 = vpack.c.b16 %v8479, %v8470
    %v8921 = vpack.c.b16 %v8480, %v8471
    %v8922 = vpack.c.b16 %v8481, %v8472
    %v8923 = vpack.c.b16 %v8482, %v8473
    %v8924 = vpack.c.b16 %v8483, %v8474
    %v8925 = vpack.c.b16 %v8484, %v8475
    %v8926 = vpack.c.b16 %v8485, %v8476
    %v8927 = vpack.c.b16 %v8486, %v8477
    %v8928 = vpack.c.b16 %v8496, %v8487
    %v8929 = vpack.c.b16 %v8497, %v8488
    %v8930 = vpack.c.b16 %v8498, %v8489
    %v8931 = vpack.c.b16 %v8499, %v8490
    %v8932 = vpack.c.b16 %v8500, %v8491
    %v8933 = vpack.c.b16 %v8501, %v8492
    %v8934 = vpack.c.b16 %v8502, %v8493
    %v8935 = vpack.c.b16 %v8503, %v8494
    %v8936 = vpack.c.b16 %v8504, %v8495
    %v8937 = vpack.c.b16 %v8514, %v8505
    %v8938 = vpack.c.b16 %v8515, %v8506
    %v8939 = vpack.c.b16 %v8516, %v8507
    %v8940 = vpack.c.b16 %v8517, %v8508
    %v8941 = vpack.c.b16 %v8518, %v8509
    %v8942 = vpack.c.b16 %v8519, %v8510
    %v8943 = vpack.c.b16 %v8520, %v8511
    %v8944 = vpack.c.b16 %v8521, %v8512
    %v8945 = vpack.c.b16 %v8522, %v8513
    %v8946 = vpack.c.b16 %v8532, %v8523
    %v8947 = vpack.c.b16 %v8533, %v8524
    %v8948 = vpack.c.b16 %v8534, %v8525
    %v8949 = vpack.c.b16 %v8535, %v8526
    %v8950 = vpack.c.b16 %v8536, %v8527
    %v8951 = vpack.c.b16 %v8537, %v8528
    %v8952 = vpack.c.b16 %v8538, %v8529
    %v8953 = vpack.c.b16 %v8539, %v8530
    %v8954 = vpack.c.b16 %v8540, %v8531
    %v8955 = vpack.c.b16 %v8550, %v8541
    %v8956 = vpack.c.b16 %v8551, %v8542
    %v8957 = vpack.c.b16 %v8552, %v8543
    %v8958 = vpack.c.b16 %v8553, %v8544
    %v8959 = vpack.c.b16 %v8554, %v8545
    %v8960 = vpack.c.b16 %v8555, %v8546
    %v8961 = vpack.c.b16 %v8556, %v8547
    %v8962 = vpack.c.b16 %v8557, %v8548
    %v8963 = vpack.c.b16 %v8558, %v8549
    %v8964 = vpack.c.b16 %v8568, %v8559
    %v8965 = vpack.c.b16 %v8569, %v8560
    %v8966 = vpack.c.b16 %v8570, %v8561
    %v8967 = vpack.c.b16 %v8571, %v8562
    %v8968 = vpack.c.b16 %v8572, %v8563
    %v8969 = vpack.c.b16 %v8573, %v8564
    %v8970 = vpack.c.b16 %v8574, %v8565
    %v8971 = vpack.c.b16 %v8575, %v8566
    %v8972 = vpack.c.b16 %v8576, %v8567
    %v8973 = vpack.c.b16 %v8586, %v8577
    %v8974 = vpack.c.b16 %v8587, %v8578
    %v8975 = vpack.c.b16 %v8588, %v8579
    %v8976 = vpack.c.b16 %v8589, %v8580
    %v8977 = vpack.c.b16 %v8590, %v8581
    %v8978 = vpack.c.b16 %v8591, %v8582
    %v8979 = vpack.c.b16 %v8592, %v8583
    %v8980 = vpack.c.b16 %v8593, %v8584
    %v8981 = vpack.c.b16 %v8594, %v8585
    %v8982 = vpack.c.b16 %v8604, %v8595
    %v8983 = vpack.c.b16 %v8605, %v8596
    %v8984 = vpack.c.b16 %v8606, %v8597
    %v8985 = vpack.c.b16 %v8607, %v8598
    %v8986 = vpack.c.b16 %v8608, %v8599
    %v8987 = vpack.c.b16 %v8609, %v8600
    %v8988 = vpack.c.b16 %v8610, %v8601
    %v8989 = vpack.c.b16 %v8611, %v8602
    %v8990 = vpack.c.b16 %v8612, %v8603
    %v8991 = vpack.c.b16 %v8622, %v8613
    %v8992 = vpack.c.b16 %v8623, %v8614
    %v8993 = vpack.c.b16 %v8624, %v8615
    %v8994 = vpack.c.b16 %v8625, %v8616
    %v8995 = vpack.c.b16 %v8626, %v8617
    %v8996 = vpack.c.b16 %v8627, %v8618
    %v8997 = vpack.c.b16 %v8628, %v8619
    %v8998 = vpack.c.b16 %v8629, %v8620
    %v8999 = vpack.c.b16 %v8630, %v8621
    %v9000 = vpack.c.b16 %v8640, %v8631
    %v9001 = vpack.c.b16 %v8641, %v8632
    %v9002 = vpack.c.b16 %v8642, %v8633
    %v9003 = vpack.c.b16 %v8643, %v8634
    %v9004 = vpack.c.b16 %v8644, %v8635
    %v9005 = vpack.c.b16 %v8645, %v8636
    %v9006 = vpack.c.b16 %v8646, %v8637
    %v9007 = vpack.c.b16 %v8647, %v8638
    %v9008 = vpack.c.b16 %v8648, %v8639
    %v9009 = vpack.c.b16 %v8658, %v8649
    %v9010 = vpack.c.b16 %v8659, %v8650
    %v9011 = vpack.c.b16 %v8660, %v8651
    %v9012 = vpack.c.b16 %v8661, %v8652
    %v9013 = vpack.c.b16 %v8662, %v8653
    %v9014 = vpack.c.b16 %v8663, %v8654
    %v9015 = vpack.c.b16 %v8664, %v8655
    %v9016 = vpack.c.b16 %v8665, %v8656
    %v9017 = vpack.c.b16 %v8666, %v8657
    %v9018 = vpack.c.b16 %v8676, %v8667
    %v9019 = vpack.c.b16 %v8677, %v8668
    %v9020 = vpack.c.b16 %v8678, %v8669
    %v9021 = vpack.c.b16 %v8679, %v8670
    %v9022 = vpack.c.b16 %v8680, %v8671
    %v9023 = vpack.c.b16 %v8681, %v8672
    %v9024 = vpack.c.b16 %v8682, %v8673
    %v9025 = vpack.c.b16 %v8683, %v8674
    %v9026 = vpack.c.b16 %v8684, %v8675
    %v9027 = vpack.c.b16 %v8694, %v8685
    %v9028 = vpack.c.b16 %v8695, %v8686
    %v9029 = vpack.c.b16 %v8696, %v8687
    %v9030 = vpack.c.b16 %v8697, %v8688
    %v9031 = vpack.c.b16 %v8698, %v8689
    %v9032 = vpack.c.b16 %v8699, %v8690
    %v9033 = vpack.c.b16 %v8700, %v8691
    %v9034 = vpack.c.b16 %v8701, %v8692
    %v9035 = vpack.c.b16 %v8702, %v8693
    %v9036 = vpack.c.b16 %v8712, %v8703
    %v9037 = vpack.c.b16 %v8713, %v8704
    %v9038 = vpack.c.b16 %v8714, %v8705
    %v9039 = vpack.c.b16 %v8715, %v8706
    %v9040 = vpack.c.b16 %v8716, %v8707
    %v9041 = vpack.c.b16 %v8717, %v8708
    %v9042 = vpack.c.b16 %v8718, %v8709
    %v9043 = vpack.c.b16 %v8719, %v8710
    %v9044 = vpack.c.b16 %v8720, %v8711
    %v9045 = vpack.c.b16 %v8730, %v8721
    %v9046 = vpack.c.b16 %v8731, %v8722
    %v9047 = vpack.c.b16 %v8732, %v8723
    %v9048 = vpack.c.b16 %v8733, %v8724
    %v9049 = vpack.c.b16 %v8734, %v8725
    %v9050 = vpack.c.b16 %v8735, %v8726
    %v9051 = vpack.c.b16 %v8736, %v8727
    %v9052 = vpack.c.b16 %v8737, %v8728
    %v9053 = vpack.c.b16 %v8738, %v8729
    %v9054 = vpack.c.b16 %v8748, %v8739
    %v9055 = vpack.c.b16 %v8749, %v8740
    %v9056 = vpack.c.b16 %v8750, %v8741
    %v9057 = vpack.c.b16 %v8751, %v8742
    %v9058 = vpack.c.b16 %v8752, %v8743
    %v9059 = vpack.c.b16 %v8753, %v8744
    %v9060 = vpack.c.b16 %v8754, %v8745
    %v9061 = vpack.c.b16 %v8755, %v8746
    %v9062 = vpack.c.b16 %v8756, %v8747
    %v9063 = vpack.c.b16 %v8766, %v8757
    %v9064 = vpack.c.b16 %v8767, %v8758
    %v9065 = vpack.c.b16 %v8768, %v8759
    %v9066 = vpack.c.b16 %v8769, %v8760
    %v9067 = vpack.c.b16 %v8770, %v8761
    %v9068 = vpack.c.b16 %v8771, %v8762
    %v9069 = vpack.c.b16 %v8772, %v8763
    %v9070 = vpack.c.b16 %v8773, %v8764
    %v9071 = vpack.c.b16 %v8774, %v8765
    %v9072 = vpack.c.b16 %v8784, %v8775
    %v9073 = vpack.c.b16 %v8785, %v8776
    %v9074 = vpack.c.b16 %v8786, %v8777
    %v9075 = vpack.c.b16 %v8787, %v8778
    %v9076 = vpack.c.b16 %v8788, %v8779
    %v9077 = vpack.c.b16 %v8789, %v8780
    %v9078 = vpack.c.b16 %v8790, %v8781
    %v9079 = vpack.c.b16 %v8791, %v8782
    %v9080 = vpack.c.b16 %v8792, %v8783
    %v9513 = vunpack.c.l.b16 %v7753
    %v9514 = vunpack.c.l.b16 %v7754
    %v9515 = vunpack.c.l.b16 %v7755
    %v9516 = vunpack.c.l.b16 %v7756
    %v9517 = vunpack.c.l.b16 %v7757
    %v9518 = vunpack.c.l.b16 %v7758
    %v9519 = vunpack.c.l.b16 %v7759
    %v9520 = vunpack.c.l.b16 %v7760
    %v9521 = vunpack.c.l.b16 %v7761
    %v9522 = vunpack.c.l.b16 %v7762
    %v9523 = vunpack.c.l.b16 %v7763
    %v9524 = vunpack.c.l.b16 %v7764
    %v9525 = vunpack.c.l.b16 %v7765
    %v9526 = vunpack.c.l.b16 %v7766
    %v9527 = vunpack.c.l.b16 %v7767
    %v9528 = vunpack.c.l.b16 %v7768
    %v9529 = vunpack.c.l.b16 %v7769
    %v9530 = vunpack.c.l.b16 %v7770
    %v9531 = vunpack.c.l.b16 %v7771
    %v9532 = vunpack.c.l.b16 %v7772
    %v9533 = vunpack.c.l.b16 %v7773
    %v9534 = vunpack.c.l.b16 %v7774
    %v9535 = vunpack.c.l.b16 %v7775
    %v9536 = vunpack.c.l.b16 %v7776
    %v9537 = vunpack.c.l.b16 %v7777
    %v9538 = vunpack.c.l.b16 %v7778
    %v9539 = vunpack.c.l.b16 %v7779
    %v9540 = vunpack.c.l.b16 %v7780
    %v9541 = vunpack.c.l.b16 %v7781
    %v9542 = vunpack.c.l.b16 %v7782
    %v9543 = vunpack.c.l.b16 %v7783
    %v9544 = vunpack.c.l.b16 %v7784
    %v9545 = vunpack.c.l.b16 %v7785
    %v9546 = vunpack.c.l.b16 %v7786
    %v9547 = vunpack.c.l.b16 %v7787
    %v9548 = vunpack.c.l.b16 %v7788
    %v9549 = vunpack.c.l.b16 %v7789
    %v9550 = vunpack.c.l.b16 %v7790
    %v9551 = vunpack.c.l.b16 %v7791
    %v9552 = vunpack.c.l.b16 %v7792
    %v9553 = vunpack.c.l.b16 %v7793
    %v9554 = vunpack.c.l.b16 %v7794
    %v9555 = vunpack.c.l.b16 %v7795
    %v9556 = vunpack.c.l.b16 %v7796
    %v9557 = vunpack.c.l.b16 %v7797
    %v9558 = vunpack.c.l.b16 %v7798
    %v9559 = vunpack.c.l.b16 %v7799
    %v9560 = vunpack.c.l.b16 %v7800
    %v9561 = vunpack.c.l.b16 %v7801
    %v9562 = vunpack.c.l.b16 %v7802
    %v9563 = vunpack.c.l.b16 %v7803
    %v9564 = vunpack.c.l.b16 %v7804
    %v9565 = vunpack.c.l.b16 %v7805
    %v9566 = vunpack.c.l.b16 %v7806
    %v9567 = vunpack.c.l.b16 %v7807
    %v9568 = vunpack.c.l.b16 %v7808
    %v9569 = vunpack.c.l.b16 %v7809
    %v9570 = vunpack.c.l.b16 %v7810
    %v9571 = vunpack.c.l.b16 %v7811
    %v9572 = vunpack.c.l.b16 %v7812
    %v9573 = vunpack.c.l.b16 %v7813
    %v9574 = vunpack.c.l.b16 %v7814
    %v9575 = vunpack.c.l.b16 %v7815
    %v9576 = vunpack.c.l.b16 %v7816
    %v9577 = vunpack.c.l.b16 %v7817
    %v9578 = vunpack.c.l.b16 %v7818
    %v9579 = vunpack.c.l.b16 %v7819
    %v9580 = vunpack.c.l.b16 %v7820
    %v9581 = vunpack.c.l.b16 %v7821
    %v9582 = vunpack.c.l.b16 %v7822
    %v9583 = vunpack.c.l.b16 %v7823
    %v9584 = vunpack.c.l.b16 %v7824
    %v9585 = vunpack.c.l.b16 %v7825
    %v9586 = vunpack.c.l.b16 %v7826
    %v9587 = vunpack.c.l.b16 %v7827
    %v9588 = vunpack.c.l.b16 %v7828
    %v9589 = vunpack.c.l.b16 %v7829
    %v9590 = vunpack.c.l.b16 %v7830
    %v9591 = vunpack.c.l.b16 %v7831
    %v9592 = vunpack.c.l.b16 %v7832
    %v9593 = vunpack.c.l.b16 %v7833
    %v9594 = vunpack.c.l.b16 %v7834
    %v9595 = vunpack.c.l.b16 %v7835
    %v9596 = vunpack.c.l.b16 %v7836
    %v9597 = vunpack.c.l.b16 %v7837
    %v9598 = vunpack.c.l.b16 %v7838
    %v9599 = vunpack.c.l.b16 %v7839
    %v9600 = vunpack.c.l.b16 %v7840
    %v9601 = vunpack.c.l.b16 %v7841
    %v9602 = vunpack.c.l.b16 %v7842
    %v9603 = vunpack.c.l.b16 %v7843
    %v9604 = vunpack.c.l.b16 %v7844
    %v9605 = vunpack.c.l.b16 %v7845
    %v9606 = vunpack.c.l.b16 %v7846
    %v9607 = vunpack.c.l.b16 %v7847
    %v9608 = vunpack.c.l.b16 %v7848
    %v9609 = vunpack.c.l.b16 %v7849
    %v9610 = vunpack.c.l.b16 %v7850
    %v9611 = vunpack.c.l.b16 %v7851
    %v9612 = vunpack.c.l.b16 %v7852
    %v9613 = vunpack.c.l.b16 %v7853
    %v9614 = vunpack.c.l.b16 %v7854
    %v9615 = vunpack.c.l.b16 %v7855
    %v9616 = vunpack.c.l.b16 %v7856
    %v9617 = vunpack.c.l.b16 %v7857
    %v9618 = vunpack.c.l.b16 %v7858
    %v9619 = vunpack.c.l.b16 %v7859
    %v9620 = vunpack.c.l.b16 %v7860
    %v9621 = vunpack.c.l.b16 %v7861
    %v9622 = vunpack.c.l.b16 %v7862
    %v9623 = vunpack.c.l.b16 %v7863
    %v9624 = vunpack.c.l.b16 %v7864
    %v9625 = vunpack.c.l.b16 %v7865
    %v9626 = vunpack.c.l.b16 %v7866
    %v9627 = vunpack.c.l.b16 %v7867
    %v9628 = vunpack.c.l.b16 %v7868
    %v9629 = vunpack.c.l.b16 %v7869
    %v9630 = vunpack.c.l.b16 %v7870
    %v9631 = vunpack.c.l.b16 %v7871
    %v9632 = vunpack.c.l.b16 %v7872
    %v9633 = vunpack.c.l.b16 %v7873
    %v9634 = vunpack.c.l.b16 %v7874
    %v9635 = vunpack.c.l.b16 %v7875
    %v9636 = vunpack.c.l.b16 %v7876
    %v9637 = vunpack.c.l.b16 %v7877
    %v9638 = vunpack.c.l.b16 %v7878
    %v9639 = vunpack.c.l.b16 %v7879
    %v9640 = vunpack.c.l.b16 %v7880
    %v9641 = vunpack.c.l.b16 %v7881
    %v9642 = vunpack.c.l.b16 %v7882
    %v9643 = vunpack.c.l.b16 %v7883
    %v9644 = vunpack.c.l.b16 %v7884
    %v9645 = vunpack.c.l.b16 %v7885
    %v9646 = vunpack.c.l.b16 %v7886
    %v9647 = vunpack.c.l.b16 %v7887
    %v9648 = vunpack.c.l.b16 %v7888
    %v9649 = vunpack.c.l.b16 %v7889
    %v9650 = vunpack.c.l.b16 %v7890
    %v9651 = vunpack.c.l.b16 %v7891
    %v9652 = vunpack.c.l.b16 %v7892
    %v9653 = vunpack.c.l.b16 %v7893
    %v9654 = vunpack.c.l.b16 %v7894
    %v9655 = vunpack.c.l.b16 %v7895
    %v9656 = vunpack.c.l.b16 %v7896
    %v9657 = vpack.c.b16 %v9514, %v9513
    %v9658 = vpack.c.b16 %v9516, %v9515
    %v9659 = vpack.c.b16 %v9518, %v9517
    %v9660 = vpack.c.b16 %v9520, %v9519
    %v9661 = vpack.c.b16 %v9522, %v9521
    %v9662 = vpack.c.b16 %v9524, %v9523
    %v9663 = vpack.c.b16 %v9526, %v9525
    %v9664 = vpack.c.b16 %v9528, %v9527
    %v9665 = vpack.c.b16 %v9530, %v9529
    %v9666 = vpack.c.b16 %v9532, %v9531
    %v9667 = vpack.c.b16 %v9534, %v9533
    %v9668 = vpack.c.b16 %v9536, %v9535
    %v9669 = vpack.c.b16 %v9538, %v9537
    %v9670 = vpack.c.b16 %v9540, %v9539
    %v9671 = vpack.c.b16 %v9542, %v9541
    %v9672 = vpack.c.b16 %v9544, %v9543
    %v9673 = vpack.c.b16 %v9546, %v9545
    %v9674 = vpack.c.b16 %v9548, %v9547
    %v9675 = vpack.c.b16 %v9550, %v9549
    %v9676 = vpack.c.b16 %v9552, %v9551
    %v9677 = vpack.c.b16 %v9554, %v9553
    %v9678 = vpack.c.b16 %v9556, %v9555
    %v9679 = vpack.c.b16 %v9558, %v9557
    %v9680 = vpack.c.b16 %v9560, %v9559
    %v9681 = vpack.c.b16 %v9562, %v9561
    %v9682 = vpack.c.b16 %v9564, %v9563
    %v9683 = vpack.c.b16 %v9566, %v9565
    %v9684 = vpack.c.b16 %v9568, %v9567
    %v9685 = vpack.c.b16 %v9570, %v9569
    %v9686 = vpack.c.b16 %v9572, %v9571
    %v9687 = vpack.c.b16 %v9574, %v9573
    %v9688 = vpack.c.b16 %v9576, %v9575
    %v9689 = vpack.c.b16 %v9578, %v9577
    %v9690 = vpack.c.b16 %v9580, %v9579
    %v9691 = vpack.c.b16 %v9582, %v9581
    %v9692 = vpack.c.b16 %v9584, %v9583
    %v9693 = vpack.c.b16 %v9586, %v9585
    %v9694 = vpack.c.b16 %v9588, %v9587
    %v9695 = vpack.c.b16 %v9590, %v9589
    %v9696 = vpack.c.b16 %v9592, %v9591
    %v9697 = vpack.c.b16 %v9594, %v9593
    %v9698 = vpack.c.b16 %v9596, %v9595
    %v9699 = vpack.c.b16 %v9598, %v9597
    %v9700 = vpack.c.b16 %v9600, %v9599
    %v9701 = vpack.c.b16 %v9602, %v9601
    %v9702 = vpack.c.b16 %v9604, %v9603
    %v9703 = vpack.c.b16 %v9606, %v9605
    %v9704 = vpack.c.b16 %v9608, %v9607
    %v9705 = vpack.c.b16 %v9610, %v9609
    %v9706 = vpack.c.b16 %v9612, %v9611
    %v9707 = vpack.c.b16 %v9614, %v9613
    %v9708 = vpack.c.b16 %v9616, %v9615
    %v9709 = vpack.c.b16 %v9618, %v9617
    %v9710 = vpack.c.b16 %v9620, %v9619
    %v9711 = vpack.c.b16 %v9622, %v9621
    %v9712 = vpack.c.b16 %v9624, %v9623
    %v9713 = vpack.c.b16 %v9626, %v9625
    %v9714 = vpack.c.b16 %v9628, %v9627
    %v9715 = vpack.c.b16 %v9630, %v9629
    %v9716 = vpack.c.b16 %v9632, %v9631
    %v9717 = vpack.c.b16 %v9634, %v9633
    %v9718 = vpack.c.b16 %v9636, %v9635
    %v9719 = vpack.c.b16 %v9638, %v9637
    %v9720 = vpack.c.b16 %v9640, %v9639
    %v9721 = vpack.c.b16 %v9642, %v9641
    %v9722 = vpack.c.b16 %v9644, %v9643
    %v9723 = vpack.c.b16 %v9646, %v9645
    %v9724 = vpack.c.b16 %v9648, %v9647
    %v9725 = vpack.c.b16 %v9650, %v9649
    %v9726 = vpack.c.b16 %v9652, %v9651
    %v9727 = vpack.c.b16 %v9654, %v9653
    %v9728 = vpack.c.b16 %v9656, %v9655
    %9801 = vmatprep.subr.bf16.mxu0 0
    %9802 = vmatpush1.bf16.msra.mxu0 %v9664
    %9803 = vmatprep.subr.bf16.mxu0 0
    %9804 = vmatpush1.bf16.msra.mxu0 %v9663
    %9805 = vmatprep.subr.bf16.mxu0 0
    %9806 = vmatpush1.bf16.msra.mxu0 %v9662
    %9807 = vmatprep.subr.bf16.mxu0 0
    %9808 = vmatpush1.bf16.msra.mxu0 %v9661
    %9809 = vmatprep.subr.bf16.mxu0 0
    %9810 = vmatpush1.bf16.msra.mxu0 %v9660
    %9811 = vmatprep.subr.bf16.mxu0 0
    %9812 = vmatpush1.bf16.msra.mxu0 %v9659
    %9813 = vmatprep.subr.bf16.mxu0 0
    %9814 = vmatpush1.bf16.msra.mxu0 %v9658
    %9815 = vmatprep.subr.bf16.mxu0 0
    %9816 = vmatpush1.bf16.msra.mxu0 %v9657
    %9817 = vmatprep.subr.bf16.mxu0 0
    %9818 = vmatpush2.bf16.msra.mxu0 %v9672
    %9819 = vmatprep.subr.bf16.mxu0 0
    %9820 = vmatpush2.bf16.msra.mxu0 %v9671
    %9821 = vmatprep.subr.bf16.mxu0 0
    %9822 = vmatpush2.bf16.msra.mxu0 %v9670
    %9823 = vmatprep.subr.bf16.mxu0 0
    %9824 = vmatpush2.bf16.msra.mxu0 %v9669
    %9825 = vmatprep.subr.bf16.mxu0 0
    %9826 = vmatpush2.bf16.msra.mxu0 %v9668
    %9827 = vmatprep.subr.bf16.mxu0 0
    %9828 = vmatpush2.bf16.msra.mxu0 %v9667
    %9829 = vmatprep.subr.bf16.mxu0 0
    %9830 = vmatpush2.bf16.msra.mxu0 %v9666
    %9831 = vmatprep.subr.bf16.mxu0 0
    %9832 = vmatpush2.bf16.msra.mxu0 %v9665
    %9833 = vmatprep.mubr.bf16.mxu0 %v8794
    %9834 = vmatmul.mubr.bf16.gmra.mxu0 %v8793
    %v9835 = vpop.f32.mrf.mxu0
    %v9836 = vadd.f32 0.0, %v9835
    %v9837 = vpop.f32.mrf.mxu0
    %v9838 = vpop.f32.mrf.mxu0
    %v9839 = vadd.f32 0.0, %v9838
    %v9840 = vpop.f32.mrf.mxu0
    %9841 = vmatprep.mubr.bf16.mxu0 %v8803
    %9842 = vmatmul.mubr.bf16.gmra.mxu0 %v8802
    %v9843 = vpop.f32.mrf.mxu0
    %v9844 = vadd.f32 0.0, %v9843
    %v9845 = vpop.f32.mrf.mxu0
    %v9846 = vpop.f32.mrf.mxu0
    %v9847 = vadd.f32 0.0, %v9846
    %v9848 = vpop.f32.mrf.mxu0
    %9849 = vmatprep.mubr.bf16.mxu0 %v8812
    %9850 = vmatmul.mubr.bf16.gmra.mxu0 %v8811
    %v9851 = vpop.f32.mrf.mxu0
    %v9852 = vadd.f32 0.0, %v9851
    %v9853 = vpop.f32.mrf.mxu0
    %v9854 = vpop.f32.mrf.mxu0
    %v9855 = vadd.f32 0.0, %v9854
    %v9856 = vpop.f32.mrf.mxu0
    %9857 = vmatprep.mubr.bf16.mxu0 %v8821
    %9858 = vmatmul.mubr.bf16.gmra.mxu0 %v8820
    %v9859 = vpop.f32.mrf.mxu0
    %v9860 = vadd.f32 0.0, %v9859
    %v9861 = vpop.f32.mrf.mxu0
    %v9862 = vpop.f32.mrf.mxu0
    %v9863 = vadd.f32 0.0, %v9862
    %v9864 = vpop.f32.mrf.mxu0
    %9865 = vmatprep.mubr.bf16.mxu0 %v8830
    %9866 = vmatmul.mubr.bf16.gmra.mxu0 %v8829
    %v9867 = vpop.f32.mrf.mxu0
    %v9868 = vadd.f32 0.0, %v9867
    %v9869 = vpop.f32.mrf.mxu0
    %v9870 = vpop.f32.mrf.mxu0
    %v9871 = vadd.f32 0.0, %v9870
    %v9872 = vpop.f32.mrf.mxu0
    %9873 = vmatprep.mubr.bf16.mxu0 %v8839
    %9874 = vmatmul.mubr.bf16.gmra.mxu0 %v8838
    %v9875 = vpop.f32.mrf.mxu0
    %v9876 = vadd.f32 0.0, %v9875
    %v9877 = vpop.f32.mrf.mxu0
    %v9878 = vpop.f32.mrf.mxu0
    %v9879 = vadd.f32 0.0, %v9878
    %v9880 = vpop.f32.mrf.mxu0
    %9881 = vmatprep.mubr.bf16.mxu0 %v8848
    %9882 = vmatmul.mubr.bf16.gmra.mxu0 %v8847
    %v9883 = vpop.f32.mrf.mxu0
    %v9884 = vadd.f32 0.0, %v9883
    %v9885 = vpop.f32.mrf.mxu0
    %v9886 = vpop.f32.mrf.mxu0
    %v9887 = vadd.f32 0.0, %v9886
    %v9888 = vpop.f32.mrf.mxu0
    %9889 = vmatprep.mubr.bf16.mxu0 %v8857
    %9890 = vmatmul.mubr.bf16.gmra.mxu0 %v8856
    %v9891 = vpop.f32.mrf.mxu0
    %v9892 = vadd.f32 0.0, %v9891
    %v9893 = vpop.f32.mrf.mxu0
    %v9894 = vpop.f32.mrf.mxu0
    %v9895 = vadd.f32 0.0, %v9894
    %v9896 = vpop.f32.mrf.mxu0
    %9897 = vmatprep.mubr.bf16.mxu0 %v8866
    %9898 = vmatmul.mubr.bf16.gmra.mxu0 %v8865
    %v9899 = vpop.f32.mrf.mxu0
    %v9900 = vadd.f32 0.0, %v9899
    %v9901 = vpop.f32.mrf.mxu0
    %v9902 = vpop.f32.mrf.mxu0
    %v9903 = vadd.f32 0.0, %v9902
    %v9904 = vpop.f32.mrf.mxu0
    %9905 = vmatprep.mubr.bf16.mxu0 %v8875
    %9906 = vmatmul.mubr.bf16.gmra.mxu0 %v8874
    %v9907 = vpop.f32.mrf.mxu0
    %v9908 = vadd.f32 0.0, %v9907
    %v9909 = vpop.f32.mrf.mxu0
    %v9910 = vpop.f32.mrf.mxu0
    %v9911 = vadd.f32 0.0, %v9910
    %v9912 = vpop.f32.mrf.mxu0
    %9913 = vmatprep.mubr.bf16.mxu0 %v8884
    %9914 = vmatmul.mubr.bf16.gmra.mxu0 %v8883
    %v9915 = vpop.f32.mrf.mxu0
    %v9916 = vadd.f32 0.0, %v9915
    %v9917 = vpop.f32.mrf.mxu0
    %v9918 = vpop.f32.mrf.mxu0
    %v9919 = vadd.f32 0.0, %v9918
    %v9920 = vpop.f32.mrf.mxu0
    %9921 = vmatprep.mubr.bf16.mxu0 %v8893
    %9922 = vmatmul.mubr.bf16.gmra.mxu0 %v8892
    %v9923 = vpop.f32.mrf.mxu0
    %v9924 = vadd.f32 0.0, %v9923
    %v9925 = vpop.f32.mrf.mxu0
    %v9926 = vpop.f32.mrf.mxu0
    %v9927 = vadd.f32 0.0, %v9926
    %v9928 = vpop.f32.mrf.mxu0
    %9929 = vmatprep.mubr.bf16.mxu0 %v8902
    %9930 = vmatmul.mubr.bf16.gmra.mxu0 %v8901
    %v9931 = vpop.f32.mrf.mxu0
    %v9932 = vadd.f32 0.0, %v9931
    %v9933 = vpop.f32.mrf.mxu0
    %v9934 = vpop.f32.mrf.mxu0
    %v9935 = vadd.f32 0.0, %v9934
    %v9936 = vpop.f32.mrf.mxu0
    %9937 = vmatprep.mubr.bf16.mxu0 %v8911
    %9938 = vmatmul.mubr.bf16.gmra.mxu0 %v8910
    %v9939 = vpop.f32.mrf.mxu0
    %v9940 = vadd.f32 0.0, %v9939
    %v9941 = vpop.f32.mrf.mxu0
    %v9942 = vpop.f32.mrf.mxu0
    %v9943 = vadd.f32 0.0, %v9942
    %v9944 = vpop.f32.mrf.mxu0
    %9945 = vmatprep.mubr.bf16.mxu0 %v8920
    %9946 = vmatmul.mubr.bf16.gmra.mxu0 %v8919
    %v9947 = vpop.f32.mrf.mxu0
    %v9948 = vadd.f32 0.0, %v9947
    %v9949 = vpop.f32.mrf.mxu0
    %v9950 = vpop.f32.mrf.mxu0
    %v9951 = vadd.f32 0.0, %v9950
    %v9952 = vpop.f32.mrf.mxu0
    %9953 = vmatprep.mubr.bf16.mxu0 %v8929
    %9954 = vmatmul.mubr.bf16.gmra.mxu0 %v8928
    %v9955 = vpop.f32.mrf.mxu0
    %v9956 = vadd.f32 0.0, %v9955
    %v9957 = vpop.f32.mrf.mxu0
    %v9958 = vpop.f32.mrf.mxu0
    %v9959 = vadd.f32 0.0, %v9958
    %v9960 = vpop.f32.mrf.mxu0
    %9961 = vmatprep.mubr.bf16.mxu0 %v8938
    %9962 = vmatmul.mubr.bf16.gmra.mxu0 %v8937
    %v9963 = vpop.f32.mrf.mxu0
    %v9964 = vadd.f32 0.0, %v9963
    %v9965 = vpop.f32.mrf.mxu0
    %v9966 = vpop.f32.mrf.mxu0
    %v9967 = vadd.f32 0.0, %v9966
    %v9968 = vpop.f32.mrf.mxu0
    %9969 = vmatprep.mubr.bf16.mxu0 %v8947
    %9970 = vmatmul.mubr.bf16.gmra.mxu0 %v8946
    %v9971 = vpop.f32.mrf.mxu0
    %v9972 = vadd.f32 0.0, %v9971
    %v9973 = vpop.f32.mrf.mxu0
    %v9974 = vpop.f32.mrf.mxu0
    %v9975 = vadd.f32 0.0, %v9974
    %v9976 = vpop.f32.mrf.mxu0
    %9977 = vmatprep.mubr.bf16.mxu0 %v8956
    %9978 = vmatmul.mubr.bf16.gmra.mxu0 %v8955
    %v9979 = vpop.f32.mrf.mxu0
    %v9980 = vadd.f32 0.0, %v9979
    %v9981 = vpop.f32.mrf.mxu0
    %v9982 = vpop.f32.mrf.mxu0
    %v9983 = vadd.f32 0.0, %v9982
    %v9984 = vpop.f32.mrf.mxu0
    %9985 = vmatprep.mubr.bf16.mxu0 %v8965
    %9986 = vmatmul.mubr.bf16.gmra.mxu0 %v8964
    %v9987 = vpop.f32.mrf.mxu0
    %v9988 = vadd.f32 0.0, %v9987
    %v9989 = vpop.f32.mrf.mxu0
    %v9990 = vpop.f32.mrf.mxu0
    %v9991 = vadd.f32 0.0, %v9990
    %v9992 = vpop.f32.mrf.mxu0
    %9993 = vmatprep.mubr.bf16.mxu0 %v8974
    %9994 = vmatmul.mubr.bf16.gmra.mxu0 %v8973
    %v9995 = vpop.f32.mrf.mxu0
    %v9996 = vadd.f32 0.0, %v9995
    %v9997 = vpop.f32.mrf.mxu0
    %v9998 = vpop.f32.mrf.mxu0
    %v9999 = vadd.f32 0.0, %v9998
    %v10000 = vpop.f32.mrf.mxu0
    %10001 = vmatprep.mubr.bf16.mxu0 %v8983
    %10002 = vmatmul.mubr.bf16.gmra.mxu0 %v8982
    %v10003 = vpop.f32.mrf.mxu0
    %v10004 = vadd.f32 0.0, %v10003
    %v10005 = vpop.f32.mrf.mxu0
    %v10006 = vpop.f32.mrf.mxu0
    %v10007 = vadd.f32 0.0, %v10006
    %v10008 = vpop.f32.mrf.mxu0
    %10009 = vmatprep.mubr.bf16.mxu0 %v8992
    %10010 = vmatmul.mubr.bf16.gmra.mxu0 %v8991
    %v10011 = vpop.f32.mrf.mxu0
    %v10012 = vadd.f32 0.0, %v10011
    %v10013 = vpop.f32.mrf.mxu0
    %v10014 = vpop.f32.mrf.mxu0
    %v10015 = vadd.f32 0.0, %v10014
    %v10016 = vpop.f32.mrf.mxu0
    %10017 = vmatprep.mubr.bf16.mxu0 %v9001
    %10018 = vmatmul.mubr.bf16.gmra.mxu0 %v9000
    %v10019 = vpop.f32.mrf.mxu0
    %v10020 = vadd.f32 0.0, %v10019
    %v10021 = vpop.f32.mrf.mxu0
    %v10022 = vpop.f32.mrf.mxu0
    %v10023 = vadd.f32 0.0, %v10022
    %v10024 = vpop.f32.mrf.mxu0
    %10025 = vmatprep.mubr.bf16.mxu0 %v9010
    %10026 = vmatmul.mubr.bf16.gmra.mxu0 %v9009
    %v10027 = vpop.f32.mrf.mxu0
    %v10028 = vadd.f32 0.0, %v10027
    %v10029 = vpop.f32.mrf.mxu0
    %v10030 = vpop.f32.mrf.mxu0
    %v10031 = vadd.f32 0.0, %v10030
    %v10032 = vpop.f32.mrf.mxu0
    %10033 = vmatprep.mubr.bf16.mxu0 %v9019
    %10034 = vmatmul.mubr.bf16.gmra.mxu0 %v9018
    %v10035 = vpop.f32.mrf.mxu0
    %v10036 = vadd.f32 0.0, %v10035
    %v10037 = vpop.f32.mrf.mxu0
    %v10038 = vpop.f32.mrf.mxu0
    %v10039 = vadd.f32 0.0, %v10038
    %v10040 = vpop.f32.mrf.mxu0
    %10041 = vmatprep.mubr.bf16.mxu0 %v9028
    %10042 = vmatmul.mubr.bf16.gmra.mxu0 %v9027
    %v10043 = vpop.f32.mrf.mxu0
    %v10044 = vadd.f32 0.0, %v10043
    %v10045 = vpop.f32.mrf.mxu0
    %v10046 = vpop.f32.mrf.mxu0
    %v10047 = vadd.f32 0.0, %v10046
    %v10048 = vpop.f32.mrf.mxu0
    %10049 = vmatprep.mubr.bf16.mxu0 %v9037
    %10050 = vmatmul.mubr.bf16.gmra.mxu0 %v9036
    %v10051 = vpop.f32.mrf.mxu0
    %v10052 = vadd.f32 0.0, %v10051
    %v10053 = vpop.f32.mrf.mxu0
    %v10054 = vpop.f32.mrf.mxu0
    %v10055 = vadd.f32 0.0, %v10054
    %v10056 = vpop.f32.mrf.mxu0
    %10057 = vmatprep.mubr.bf16.mxu0 %v9046
    %10058 = vmatmul.mubr.bf16.gmra.mxu0 %v9045
    %v10059 = vpop.f32.mrf.mxu0
    %v10060 = vadd.f32 0.0, %v10059
    %v10061 = vpop.f32.mrf.mxu0
    %v10062 = vpop.f32.mrf.mxu0
    %v10063 = vadd.f32 0.0, %v10062
    %v10064 = vpop.f32.mrf.mxu0
    %10065 = vmatprep.mubr.bf16.mxu0 %v9055
    %10066 = vmatmul.mubr.bf16.gmra.mxu0 %v9054
    %v10067 = vpop.f32.mrf.mxu0
    %v10068 = vadd.f32 0.0, %v10067
    %v10069 = vpop.f32.mrf.mxu0
    %v10070 = vpop.f32.mrf.mxu0
    %v10071 = vadd.f32 0.0, %v10070
    %v10072 = vpop.f32.mrf.mxu0
    %10073 = vmatprep.mubr.bf16.mxu0 %v9064
    %10074 = vmatmul.mubr.bf16.gmra.mxu0 %v9063
    %v10075 = vpop.f32.mrf.mxu0
    %v10076 = vadd.f32 0.0, %v10075
    %v10077 = vpop.f32.mrf.mxu0
    %v10078 = vpop.f32.mrf.mxu0
    %v10079 = vadd.f32 0.0, %v10078
    %v10080 = vpop.f32.mrf.mxu0
    %10081 = vmatprep.mubr.bf16.mxu0 %v9073
    %10082 = vmatmul.mubr.bf16.gmra.mxu0 %v9072
    %v10083 = vpop.f32.mrf.mxu0
    %v10084 = vadd.f32 0.0, %v10083
    %v10085 = vpop.f32.mrf.mxu0
    %v10086 = vpop.f32.mrf.mxu0
    %v10087 = vadd.f32 0.0, %v10086
    %v10088 = vpop.f32.mrf.mxu0
    %10089 = vdwg.mxu0
    %10090 = vmatprep.subr.bf16.mxu0 0
    %10091 = vmatpush1.bf16.msra.mxu0 %v9680
    %10092 = vmatprep.subr.bf16.mxu0 0
    %10093 = vmatpush1.bf16.msra.mxu0 %v9679
    %10094 = vmatprep.subr.bf16.mxu0 0
    %10095 = vmatpush1.bf16.msra.mxu0 %v9678
    %10096 = vmatprep.subr.bf16.mxu0 0
    %10097 = vmatpush1.bf16.msra.mxu0 %v9677
    %10098 = vmatprep.subr.bf16.mxu0 0
    %10099 = vmatpush1.bf16.msra.mxu0 %v9676
    %10100 = vmatprep.subr.bf16.mxu0 0
    %10101 = vmatpush1.bf16.msra.mxu0 %v9675
    %10102 = vmatprep.subr.bf16.mxu0 0
    %10103 = vmatpush1.bf16.msra.mxu0 %v9674
    %10104 = vmatprep.subr.bf16.mxu0 0
    %10105 = vmatpush1.bf16.msra.mxu0 %v9673
    %10106 = vmatprep.subr.bf16.mxu0 0
    %10107 = vmatpush2.bf16.msra.mxu0 %v9688
    %10108 = vmatprep.subr.bf16.mxu0 0
    %10109 = vmatpush2.bf16.msra.mxu0 %v9687
    %10110 = vmatprep.subr.bf16.mxu0 0
    %10111 = vmatpush2.bf16.msra.mxu0 %v9686
    %10112 = vmatprep.subr.bf16.mxu0 0
    %10113 = vmatpush2.bf16.msra.mxu0 %v9685
    %10114 = vmatprep.subr.bf16.mxu0 0
    %10115 = vmatpush2.bf16.msra.mxu0 %v9684
    %10116 = vmatprep.subr.bf16.mxu0 0
    %10117 = vmatpush2.bf16.msra.mxu0 %v9683
    %10118 = vmatprep.subr.bf16.mxu0 0
    %10119 = vmatpush2.bf16.msra.mxu0 %v9682
    %10120 = vmatprep.subr.bf16.mxu0 0
    %10121 = vmatpush2.bf16.msra.mxu0 %v9681
    %10122 = vmatprep.mubr.bf16.mxu0 %v8796
    %10123 = vmatmul.mubr.bf16.gmra.mxu0 %v8795
    %v10124 = vpop.f32.mrf.mxu0
    %v10125 = vadd.f32 %v9836, %v10124
    %v10126 = vpop.f32.mrf.mxu0
    %v10127 = vpop.f32.mrf.mxu0
    %v10128 = vadd.f32 %v9839, %v10127
    %v10129 = vpop.f32.mrf.mxu0
    %10130 = vmatprep.mubr.bf16.mxu0 %v8805
    %10131 = vmatmul.mubr.bf16.gmra.mxu0 %v8804
    %v10132 = vpop.f32.mrf.mxu0
    %v10133 = vadd.f32 %v9844, %v10132
    %v10134 = vpop.f32.mrf.mxu0
    %v10135 = vpop.f32.mrf.mxu0
    %v10136 = vadd.f32 %v9847, %v10135
    %v10137 = vpop.f32.mrf.mxu0
    %10138 = vmatprep.mubr.bf16.mxu0 %v8814
    %10139 = vmatmul.mubr.bf16.gmra.mxu0 %v8813
    %v10140 = vpop.f32.mrf.mxu0
    %v10141 = vadd.f32 %v9852, %v10140
    %v10142 = vpop.f32.mrf.mxu0
    %v10143 = vpop.f32.mrf.mxu0
    %v10144 = vadd.f32 %v9855, %v10143
    %v10145 = vpop.f32.mrf.mxu0
    %10146 = vmatprep.mubr.bf16.mxu0 %v8823
    %10147 = vmatmul.mubr.bf16.gmra.mxu0 %v8822
    %v10148 = vpop.f32.mrf.mxu0
    %v10149 = vadd.f32 %v9860, %v10148
    %v10150 = vpop.f32.mrf.mxu0
    %v10151 = vpop.f32.mrf.mxu0
    %v10152 = vadd.f32 %v9863, %v10151
    %v10153 = vpop.f32.mrf.mxu0
    %10154 = vmatprep.mubr.bf16.mxu0 %v8832
    %10155 = vmatmul.mubr.bf16.gmra.mxu0 %v8831
    %v10156 = vpop.f32.mrf.mxu0
    %v10157 = vadd.f32 %v9868, %v10156
    %v10158 = vpop.f32.mrf.mxu0
    %v10159 = vpop.f32.mrf.mxu0
    %v10160 = vadd.f32 %v9871, %v10159
    %v10161 = vpop.f32.mrf.mxu0
    %10162 = vmatprep.mubr.bf16.mxu0 %v8841
    %10163 = vmatmul.mubr.bf16.gmra.mxu0 %v8840
    %v10164 = vpop.f32.mrf.mxu0
    %v10165 = vadd.f32 %v9876, %v10164
    %v10166 = vpop.f32.mrf.mxu0
    %v10167 = vpop.f32.mrf.mxu0
    %v10168 = vadd.f32 %v9879, %v10167
    %v10169 = vpop.f32.mrf.mxu0
    %10170 = vmatprep.mubr.bf16.mxu0 %v8850
    %10171 = vmatmul.mubr.bf16.gmra.mxu0 %v8849
    %v10172 = vpop.f32.mrf.mxu0
    %v10173 = vadd.f32 %v9884, %v10172
    %v10174 = vpop.f32.mrf.mxu0
    %v10175 = vpop.f32.mrf.mxu0
    %v10176 = vadd.f32 %v9887, %v10175
    %v10177 = vpop.f32.mrf.mxu0
    %10178 = vmatprep.mubr.bf16.mxu0 %v8859
    %10179 = vmatmul.mubr.bf16.gmra.mxu0 %v8858
    %v10180 = vpop.f32.mrf.mxu0
    %v10181 = vadd.f32 %v9892, %v10180
    %v10182 = vpop.f32.mrf.mxu0
    %v10183 = vpop.f32.mrf.mxu0
    %v10184 = vadd.f32 %v9895, %v10183
    %v10185 = vpop.f32.mrf.mxu0
    %10186 = vmatprep.mubr.bf16.mxu0 %v8868
    %10187 = vmatmul.mubr.bf16.gmra.mxu0 %v8867
    %v10188 = vpop.f32.mrf.mxu0
    %v10189 = vadd.f32 %v9900, %v10188
    %v10190 = vpop.f32.mrf.mxu0
    %v10191 = vpop.f32.mrf.mxu0
    %v10192 = vadd.f32 %v9903, %v10191
    %v10193 = vpop.f32.mrf.mxu0
    %10194 = vmatprep.mubr.bf16.mxu0 %v8877
    %10195 = vmatmul.mubr.bf16.gmra.mxu0 %v8876
    %v10196 = vpop.f32.mrf.mxu0
    %v10197 = vadd.f32 %v9908, %v10196
    %v10198 = vpop.f32.mrf.mxu0
    %v10199 = vpop.f32.mrf.mxu0
    %v10200 = vadd.f32 %v9911, %v10199
    %v10201 = vpop.f32.mrf.mxu0
    %10202 = vmatprep.mubr.bf16.mxu0 %v8886
    %10203 = vmatmul.mubr.bf16.gmra.mxu0 %v8885
    %v10204 = vpop.f32.mrf.mxu0
    %v10205 = vadd.f32 %v9916, %v10204
    %v10206 = vpop.f32.mrf.mxu0
    %v10207 = vpop.f32.mrf.mxu0
    %v10208 = vadd.f32 %v9919, %v10207
    %v10209 = vpop.f32.mrf.mxu0
    %10210 = vmatprep.mubr.bf16.mxu0 %v8895
    %10211 = vmatmul.mubr.bf16.gmra.mxu0 %v8894
    %v10212 = vpop.f32.mrf.mxu0
    %v10213 = vadd.f32 %v9924, %v10212
    %v10214 = vpop.f32.mrf.mxu0
    %v10215 = vpop.f32.mrf.mxu0
    %v10216 = vadd.f32 %v9927, %v10215
    %v10217 = vpop.f32.mrf.mxu0
    %10218 = vmatprep.mubr.bf16.mxu0 %v8904
    %10219 = vmatmul.mubr.bf16.gmra.mxu0 %v8903
    %v10220 = vpop.f32.mrf.mxu0
    %v10221 = vadd.f32 %v9932, %v10220
    %v10222 = vpop.f32.mrf.mxu0
    %v10223 = vpop.f32.mrf.mxu0
    %v10224 = vadd.f32 %v9935, %v10223
    %v10225 = vpop.f32.mrf.mxu0
    %10226 = vmatprep.mubr.bf16.mxu0 %v8913
    %10227 = vmatmul.mubr.bf16.gmra.mxu0 %v8912
    %v10228 = vpop.f32.mrf.mxu0
    %v10229 = vadd.f32 %v9940, %v10228
    %v10230 = vpop.f32.mrf.mxu0
    %v10231 = vpop.f32.mrf.mxu0
    %v10232 = vadd.f32 %v9943, %v10231
    %v10233 = vpop.f32.mrf.mxu0
    %10234 = vmatprep.mubr.bf16.mxu0 %v8922
    %10235 = vmatmul.mubr.bf16.gmra.mxu0 %v8921
    %v10236 = vpop.f32.mrf.mxu0
    %v10237 = vadd.f32 %v9948, %v10236
    %v10238 = vpop.f32.mrf.mxu0
    %v10239 = vpop.f32.mrf.mxu0
    %v10240 = vadd.f32 %v9951, %v10239
    %v10241 = vpop.f32.mrf.mxu0
    %10242 = vmatprep.mubr.bf16.mxu0 %v8931
    %10243 = vmatmul.mubr.bf16.gmra.mxu0 %v8930
    %v10244 = vpop.f32.mrf.mxu0
    %v10245 = vadd.f32 %v9956, %v10244
    %v10246 = vpop.f32.mrf.mxu0
    %v10247 = vpop.f32.mrf.mxu0
    %v10248 = vadd.f32 %v9959, %v10247
    %v10249 = vpop.f32.mrf.mxu0
    %10250 = vmatprep.mubr.bf16.mxu0 %v8940
    %10251 = vmatmul.mubr.bf16.gmra.mxu0 %v8939
    %v10252 = vpop.f32.mrf.mxu0
    %v10253 = vadd.f32 %v9964, %v10252
    %v10254 = vpop.f32.mrf.mxu0
    %v10255 = vpop.f32.mrf.mxu0
    %v10256 = vadd.f32 %v9967, %v10255
    %v10257 = vpop.f32.mrf.mxu0
    %10258 = vmatprep.mubr.bf16.mxu0 %v8949
    %10259 = vmatmul.mubr.bf16.gmra.mxu0 %v8948
    %v10260 = vpop.f32.mrf.mxu0
    %v10261 = vadd.f32 %v9972, %v10260
    %v10262 = vpop.f32.mrf.mxu0
    %v10263 = vpop.f32.mrf.mxu0
    %v10264 = vadd.f32 %v9975, %v10263
    %v10265 = vpop.f32.mrf.mxu0
    %10266 = vmatprep.mubr.bf16.mxu0 %v8958
    %10267 = vmatmul.mubr.bf16.gmra.mxu0 %v8957
    %v10268 = vpop.f32.mrf.mxu0
    %v10269 = vadd.f32 %v9980, %v10268
    %v10270 = vpop.f32.mrf.mxu0
    %v10271 = vpop.f32.mrf.mxu0
    %v10272 = vadd.f32 %v9983, %v10271
    %v10273 = vpop.f32.mrf.mxu0
    %10274 = vmatprep.mubr.bf16.mxu0 %v8967
    %10275 = vmatmul.mubr.bf16.gmra.mxu0 %v8966
    %v10276 = vpop.f32.mrf.mxu0
    %v10277 = vadd.f32 %v9988, %v10276
    %v10278 = vpop.f32.mrf.mxu0
    %v10279 = vpop.f32.mrf.mxu0
    %v10280 = vadd.f32 %v9991, %v10279
    %v10281 = vpop.f32.mrf.mxu0
    %10282 = vmatprep.mubr.bf16.mxu0 %v8976
    %10283 = vmatmul.mubr.bf16.gmra.mxu0 %v8975
    %v10284 = vpop.f32.mrf.mxu0
    %v10285 = vadd.f32 %v9996, %v10284
    %v10286 = vpop.f32.mrf.mxu0
    %v10287 = vpop.f32.mrf.mxu0
    %v10288 = vadd.f32 %v9999, %v10287
    %v10289 = vpop.f32.mrf.mxu0
    %10290 = vmatprep.mubr.bf16.mxu0 %v8985
    %10291 = vmatmul.mubr.bf16.gmra.mxu0 %v8984
    %v10292 = vpop.f32.mrf.mxu0
    %v10293 = vadd.f32 %v10004, %v10292
    %v10294 = vpop.f32.mrf.mxu0
    %v10295 = vpop.f32.mrf.mxu0
    %v10296 = vadd.f32 %v10007, %v10295
    %v10297 = vpop.f32.mrf.mxu0
    %10298 = vmatprep.mubr.bf16.mxu0 %v8994
    %10299 = vmatmul.mubr.bf16.gmra.mxu0 %v8993
    %v10300 = vpop.f32.mrf.mxu0
    %v10301 = vadd.f32 %v10012, %v10300
    %v10302 = vpop.f32.mrf.mxu0
    %v10303 = vpop.f32.mrf.mxu0
    %v10304 = vadd.f32 %v10015, %v10303
    %v10305 = vpop.f32.mrf.mxu0
    %10306 = vmatprep.mubr.bf16.mxu0 %v9003
    %10307 = vmatmul.mubr.bf16.gmra.mxu0 %v9002
    %v10308 = vpop.f32.mrf.mxu0
    %v10309 = vadd.f32 %v10020, %v10308
    %v10310 = vpop.f32.mrf.mxu0
    %v10311 = vpop.f32.mrf.mxu0
    %v10312 = vadd.f32 %v10023, %v10311
    %v10313 = vpop.f32.mrf.mxu0
    %10314 = vmatprep.mubr.bf16.mxu0 %v9012
    %10315 = vmatmul.mubr.bf16.gmra.mxu0 %v9011
    %v10316 = vpop.f32.mrf.mxu0
    %v10317 = vadd.f32 %v10028, %v10316
    %v10318 = vpop.f32.mrf.mxu0
    %v10319 = vpop.f32.mrf.mxu0
    %v10320 = vadd.f32 %v10031, %v10319
    %v10321 = vpop.f32.mrf.mxu0
    %10322 = vmatprep.mubr.bf16.mxu0 %v9021
    %10323 = vmatmul.mubr.bf16.gmra.mxu0 %v9020
    %v10324 = vpop.f32.mrf.mxu0
    %v10325 = vadd.f32 %v10036, %v10324
    %v10326 = vpop.f32.mrf.mxu0
    %v10327 = vpop.f32.mrf.mxu0
    %v10328 = vadd.f32 %v10039, %v10327
    %v10329 = vpop.f32.mrf.mxu0
    %10330 = vmatprep.mubr.bf16.mxu0 %v9030
    %10331 = vmatmul.mubr.bf16.gmra.mxu0 %v9029
    %v10332 = vpop.f32.mrf.mxu0
    %v10333 = vadd.f32 %v10044, %v10332
    %v10334 = vpop.f32.mrf.mxu0
    %v10335 = vpop.f32.mrf.mxu0
    %v10336 = vadd.f32 %v10047, %v10335
    %v10337 = vpop.f32.mrf.mxu0
    %10338 = vmatprep.mubr.bf16.mxu0 %v9039
    %10339 = vmatmul.mubr.bf16.gmra.mxu0 %v9038
    %v10340 = vpop.f32.mrf.mxu0
    %v10341 = vadd.f32 %v10052, %v10340
    %v10342 = vpop.f32.mrf.mxu0
    %v10343 = vpop.f32.mrf.mxu0
    %v10344 = vadd.f32 %v10055, %v10343
    %v10345 = vpop.f32.mrf.mxu0
    %10346 = vmatprep.mubr.bf16.mxu0 %v9048
    %10347 = vmatmul.mubr.bf16.gmra.mxu0 %v9047
    %v10348 = vpop.f32.mrf.mxu0
    %v10349 = vadd.f32 %v10060, %v10348
    %v10350 = vpop.f32.mrf.mxu0
    %v10351 = vpop.f32.mrf.mxu0
    %v10352 = vadd.f32 %v10063, %v10351
    %v10353 = vpop.f32.mrf.mxu0
    %10354 = vmatprep.mubr.bf16.mxu0 %v9057
    %10355 = vmatmul.mubr.bf16.gmra.mxu0 %v9056
    %v10356 = vpop.f32.mrf.mxu0
    %v10357 = vadd.f32 %v10068, %v10356
    %v10358 = vpop.f32.mrf.mxu0
    %v10359 = vpop.f32.mrf.mxu0
    %v10360 = vadd.f32 %v10071, %v10359
    %v10361 = vpop.f32.mrf.mxu0
    %10362 = vmatprep.mubr.bf16.mxu0 %v9066
    %10363 = vmatmul.mubr.bf16.gmra.mxu0 %v9065
    %v10364 = vpop.f32.mrf.mxu0
    %v10365 = vadd.f32 %v10076, %v10364
    %v10366 = vpop.f32.mrf.mxu0
    %v10367 = vpop.f32.mrf.mxu0
    %v10368 = vadd.f32 %v10079, %v10367
    %v10369 = vpop.f32.mrf.mxu0
    %10370 = vmatprep.mubr.bf16.mxu0 %v9075
    %10371 = vmatmul.mubr.bf16.gmra.mxu0 %v9074
    %v10372 = vpop.f32.mrf.mxu0
    %v10373 = vadd.f32 %v10084, %v10372
    %v10374 = vpop.f32.mrf.mxu0
    %v10375 = vpop.f32.mrf.mxu0
    %v10376 = vadd.f32 %v10087, %v10375
    %v10377 = vpop.f32.mrf.mxu0
    %10378 = vdwg.mxu0
    %10379 = vmatprep.subr.bf16.mxu0 0
    %10380 = vmatpush1.bf16.msra.mxu0 %v9696
    %10381 = vmatprep.subr.bf16.mxu0 0
    %10382 = vmatpush1.bf16.msra.mxu0 %v9695
    %10383 = vmatprep.subr.bf16.mxu0 0
    %10384 = vmatpush1.bf16.msra.mxu0 %v9694
    %10385 = vmatprep.subr.bf16.mxu0 0
    %10386 = vmatpush1.bf16.msra.mxu0 %v9693
    %10387 = vmatprep.subr.bf16.mxu0 0
    %10388 = vmatpush1.bf16.msra.mxu0 %v9692
    %10389 = vmatprep.subr.bf16.mxu0 0
    %10390 = vmatpush1.bf16.msra.mxu0 %v9691
    %10391 = vmatprep.subr.bf16.mxu0 0
    %10392 = vmatpush1.bf16.msra.mxu0 %v9690
    %10393 = vmatprep.subr.bf16.mxu0 0
    %10394 = vmatpush1.bf16.msra.mxu0 %v9689
    %10395 = vmatprep.subr.bf16.mxu0 0
    %10396 = vmatpush2.bf16.msra.mxu0 %v9704
    %10397 = vmatprep.subr.bf16.mxu0 0
    %10398 = vmatpush2.bf16.msra.mxu0 %v9703
    %10399 = vmatprep.subr.bf16.mxu0 0
    %10400 = vmatpush2.bf16.msra.mxu0 %v9702
    %10401 = vmatprep.subr.bf16.mxu0 0
    %10402 = vmatpush2.bf16.msra.mxu0 %v9701
    %10403 = vmatprep.subr.bf16.mxu0 0
    %10404 = vmatpush2.bf16.msra.mxu0 %v9700
    %10405 = vmatprep.subr.bf16.mxu0 0
    %10406 = vmatpush2.bf16.msra.mxu0 %v9699
    %10407 = vmatprep.subr.bf16.mxu0 0
    %10408 = vmatpush2.bf16.msra.mxu0 %v9698
    %10409 = vmatprep.subr.bf16.mxu0 0
    %10410 = vmatpush2.bf16.msra.mxu0 %v9697
    %10411 = vmatprep.mubr.bf16.mxu0 %v8798
    %10412 = vmatmul.mubr.bf16.gmra.mxu0 %v8797
    %v10413 = vpop.f32.mrf.mxu0
    %v10414 = vadd.f32 %v10125, %v10413
    %v10415 = vpop.f32.mrf.mxu0
    %v10416 = vpop.f32.mrf.mxu0
    %v10417 = vadd.f32 %v10128, %v10416
    %v10418 = vpop.f32.mrf.mxu0
    %10419 = vmatprep.mubr.bf16.mxu0 %v8807
    %10420 = vmatmul.mubr.bf16.gmra.mxu0 %v8806
    %v10421 = vpop.f32.mrf.mxu0
    %v10422 = vadd.f32 %v10133, %v10421
    %v10423 = vpop.f32.mrf.mxu0
    %v10424 = vpop.f32.mrf.mxu0
    %v10425 = vadd.f32 %v10136, %v10424
    %v10426 = vpop.f32.mrf.mxu0
    %10427 = vmatprep.mubr.bf16.mxu0 %v8816
    %10428 = vmatmul.mubr.bf16.gmra.mxu0 %v8815
    %v10429 = vpop.f32.mrf.mxu0
    %v10430 = vadd.f32 %v10141, %v10429
    %v10431 = vpop.f32.mrf.mxu0
    %v10432 = vpop.f32.mrf.mxu0
    %v10433 = vadd.f32 %v10144, %v10432
    %v10434 = vpop.f32.mrf.mxu0
    %10435 = vmatprep.mubr.bf16.mxu0 %v8825
    %10436 = vmatmul.mubr.bf16.gmra.mxu0 %v8824
    %v10437 = vpop.f32.mrf.mxu0
    %v10438 = vadd.f32 %v10149, %v10437
    %v10439 = vpop.f32.mrf.mxu0
    %v10440 = vpop.f32.mrf.mxu0
    %v10441 = vadd.f32 %v10152, %v10440
    %v10442 = vpop.f32.mrf.mxu0
    %10443 = vmatprep.mubr.bf16.mxu0 %v8834
    %10444 = vmatmul.mubr.bf16.gmra.mxu0 %v8833
    %v10445 = vpop.f32.mrf.mxu0
    %v10446 = vadd.f32 %v10157, %v10445
    %v10447 = vpop.f32.mrf.mxu0
    %v10448 = vpop.f32.mrf.mxu0
    %v10449 = vadd.f32 %v10160, %v10448
    %v10450 = vpop.f32.mrf.mxu0
    %10451 = vmatprep.mubr.bf16.mxu0 %v8843
    %10452 = vmatmul.mubr.bf16.gmra.mxu0 %v8842
    %v10453 = vpop.f32.mrf.mxu0
    %v10454 = vadd.f32 %v10165, %v10453
    %v10455 = vpop.f32.mrf.mxu0
    %v10456 = vpop.f32.mrf.mxu0
    %v10457 = vadd.f32 %v10168, %v10456
    %v10458 = vpop.f32.mrf.mxu0
    %10459 = vmatprep.mubr.bf16.mxu0 %v8852
    %10460 = vmatmul.mubr.bf16.gmra.mxu0 %v8851
    %v10461 = vpop.f32.mrf.mxu0
    %v10462 = vadd.f32 %v10173, %v10461
    %v10463 = vpop.f32.mrf.mxu0
    %v10464 = vpop.f32.mrf.mxu0
    %v10465 = vadd.f32 %v10176, %v10464
    %v10466 = vpop.f32.mrf.mxu0
    %10467 = vmatprep.mubr.bf16.mxu0 %v8861
    %10468 = vmatmul.mubr.bf16.gmra.mxu0 %v8860
    %v10469 = vpop.f32.mrf.mxu0
    %v10470 = vadd.f32 %v10181, %v10469
    %v10471 = vpop.f32.mrf.mxu0
    %v10472 = vpop.f32.mrf.mxu0
    %v10473 = vadd.f32 %v10184, %v10472
    %v10474 = vpop.f32.mrf.mxu0
    %10475 = vmatprep.mubr.bf16.mxu0 %v8870
    %10476 = vmatmul.mubr.bf16.gmra.mxu0 %v8869
    %v10477 = vpop.f32.mrf.mxu0
    %v10478 = vadd.f32 %v10189, %v10477
    %v10479 = vpop.f32.mrf.mxu0
    %v10480 = vpop.f32.mrf.mxu0
    %v10481 = vadd.f32 %v10192, %v10480
    %v10482 = vpop.f32.mrf.mxu0
    %10483 = vmatprep.mubr.bf16.mxu0 %v8879
    %10484 = vmatmul.mubr.bf16.gmra.mxu0 %v8878
    %v10485 = vpop.f32.mrf.mxu0
    %v10486 = vadd.f32 %v10197, %v10485
    %v10487 = vpop.f32.mrf.mxu0
    %v10488 = vpop.f32.mrf.mxu0
    %v10489 = vadd.f32 %v10200, %v10488
    %v10490 = vpop.f32.mrf.mxu0
    %10491 = vmatprep.mubr.bf16.mxu0 %v8888
    %10492 = vmatmul.mubr.bf16.gmra.mxu0 %v8887
    %v10493 = vpop.f32.mrf.mxu0
    %v10494 = vadd.f32 %v10205, %v10493
    %v10495 = vpop.f32.mrf.mxu0
    %v10496 = vpop.f32.mrf.mxu0
    %v10497 = vadd.f32 %v10208, %v10496
    %v10498 = vpop.f32.mrf.mxu0
    %10499 = vmatprep.mubr.bf16.mxu0 %v8897
    %10500 = vmatmul.mubr.bf16.gmra.mxu0 %v8896
    %v10501 = vpop.f32.mrf.mxu0
    %v10502 = vadd.f32 %v10213, %v10501
    %v10503 = vpop.f32.mrf.mxu0
    %v10504 = vpop.f32.mrf.mxu0
    %v10505 = vadd.f32 %v10216, %v10504
    %v10506 = vpop.f32.mrf.mxu0
    %10507 = vmatprep.mubr.bf16.mxu0 %v8906
    %10508 = vmatmul.mubr.bf16.gmra.mxu0 %v8905
    %v10509 = vpop.f32.mrf.mxu0
    %v10510 = vadd.f32 %v10221, %v10509
    %v10511 = vpop.f32.mrf.mxu0
    %v10512 = vpop.f32.mrf.mxu0
    %v10513 = vadd.f32 %v10224, %v10512
    %v10514 = vpop.f32.mrf.mxu0
    %10515 = vmatprep.mubr.bf16.mxu0 %v8915
    %10516 = vmatmul.mubr.bf16.gmra.mxu0 %v8914
    %v10517 = vpop.f32.mrf.mxu0
    %v10518 = vadd.f32 %v10229, %v10517
    %v10519 = vpop.f32.mrf.mxu0
    %v10520 = vpop.f32.mrf.mxu0
    %v10521 = vadd.f32 %v10232, %v10520
    %v10522 = vpop.f32.mrf.mxu0
    %10523 = vmatprep.mubr.bf16.mxu0 %v8924
    %10524 = vmatmul.mubr.bf16.gmra.mxu0 %v8923
    %v10525 = vpop.f32.mrf.mxu0
    %v10526 = vadd.f32 %v10237, %v10525
    %v10527 = vpop.f32.mrf.mxu0
    %v10528 = vpop.f32.mrf.mxu0
    %v10529 = vadd.f32 %v10240, %v10528
    %v10530 = vpop.f32.mrf.mxu0
    %10531 = vmatprep.mubr.bf16.mxu0 %v8933
    %10532 = vmatmul.mubr.bf16.gmra.mxu0 %v8932
    %v10533 = vpop.f32.mrf.mxu0
    %v10534 = vadd.f32 %v10245, %v10533
    %v10535 = vpop.f32.mrf.mxu0
    %v10536 = vpop.f32.mrf.mxu0
    %v10537 = vadd.f32 %v10248, %v10536
    %v10538 = vpop.f32.mrf.mxu0
    %10539 = vmatprep.mubr.bf16.mxu0 %v8942
    %10540 = vmatmul.mubr.bf16.gmra.mxu0 %v8941
    %v10541 = vpop.f32.mrf.mxu0
    %v10542 = vadd.f32 %v10253, %v10541
    %v10543 = vpop.f32.mrf.mxu0
    %v10544 = vpop.f32.mrf.mxu0
    %v10545 = vadd.f32 %v10256, %v10544
    %v10546 = vpop.f32.mrf.mxu0
    %10547 = vmatprep.mubr.bf16.mxu0 %v8951
    %10548 = vmatmul.mubr.bf16.gmra.mxu0 %v8950
    %v10549 = vpop.f32.mrf.mxu0
    %v10550 = vadd.f32 %v10261, %v10549
    %v10551 = vpop.f32.mrf.mxu0
    %v10552 = vpop.f32.mrf.mxu0
    %v10553 = vadd.f32 %v10264, %v10552
    %v10554 = vpop.f32.mrf.mxu0
    %10555 = vmatprep.mubr.bf16.mxu0 %v8960
    %10556 = vmatmul.mubr.bf16.gmra.mxu0 %v8959
    %v10557 = vpop.f32.mrf.mxu0
    %v10558 = vadd.f32 %v10269, %v10557
    %v10559 = vpop.f32.mrf.mxu0
    %v10560 = vpop.f32.mrf.mxu0
    %v10561 = vadd.f32 %v10272, %v10560
    %v10562 = vpop.f32.mrf.mxu0
    %10563 = vmatprep.mubr.bf16.mxu0 %v8969
    %10564 = vmatmul.mubr.bf16.gmra.mxu0 %v8968
    %v10565 = vpop.f32.mrf.mxu0
    %v10566 = vadd.f32 %v10277, %v10565
    %v10567 = vpop.f32.mrf.mxu0
    %v10568 = vpop.f32.mrf.mxu0
    %v10569 = vadd.f32 %v10280, %v10568
    %v10570 = vpop.f32.mrf.mxu0
    %10571 = vmatprep.mubr.bf16.mxu0 %v8978
    %10572 = vmatmul.mubr.bf16.gmra.mxu0 %v8977
    %v10573 = vpop.f32.mrf.mxu0
    %v10574 = vadd.f32 %v10285, %v10573
    %v10575 = vpop.f32.mrf.mxu0
    %v10576 = vpop.f32.mrf.mxu0
    %v10577 = vadd.f32 %v10288, %v10576
    %v10578 = vpop.f32.mrf.mxu0
    %10579 = vmatprep.mubr.bf16.mxu0 %v8987
    %10580 = vmatmul.mubr.bf16.gmra.mxu0 %v8986
    %v10581 = vpop.f32.mrf.mxu0
    %v10582 = vadd.f32 %v10293, %v10581
    %v10583 = vpop.f32.mrf.mxu0
    %v10584 = vpop.f32.mrf.mxu0
    %v10585 = vadd.f32 %v10296, %v10584
    %v10586 = vpop.f32.mrf.mxu0
    %10587 = vmatprep.mubr.bf16.mxu0 %v8996
    %10588 = vmatmul.mubr.bf16.gmra.mxu0 %v8995
    %v10589 = vpop.f32.mrf.mxu0
    %v10590 = vadd.f32 %v10301, %v10589
    %v10591 = vpop.f32.mrf.mxu0
    %v10592 = vpop.f32.mrf.mxu0
    %v10593 = vadd.f32 %v10304, %v10592
    %v10594 = vpop.f32.mrf.mxu0
    %10595 = vmatprep.mubr.bf16.mxu0 %v9005
    %10596 = vmatmul.mubr.bf16.gmra.mxu0 %v9004
    %v10597 = vpop.f32.mrf.mxu0
    %v10598 = vadd.f32 %v10309, %v10597
    %v10599 = vpop.f32.mrf.mxu0
    %v10600 = vpop.f32.mrf.mxu0
    %v10601 = vadd.f32 %v10312, %v10600
    %v10602 = vpop.f32.mrf.mxu0
    %10603 = vmatprep.mubr.bf16.mxu0 %v9014
    %10604 = vmatmul.mubr.bf16.gmra.mxu0 %v9013
    %v10605 = vpop.f32.mrf.mxu0
    %v10606 = vadd.f32 %v10317, %v10605
    %v10607 = vpop.f32.mrf.mxu0
    %v10608 = vpop.f32.mrf.mxu0
    %v10609 = vadd.f32 %v10320, %v10608
    %v10610 = vpop.f32.mrf.mxu0
    %10611 = vmatprep.mubr.bf16.mxu0 %v9023
    %10612 = vmatmul.mubr.bf16.gmra.mxu0 %v9022
    %v10613 = vpop.f32.mrf.mxu0
    %v10614 = vadd.f32 %v10325, %v10613
    %v10615 = vpop.f32.mrf.mxu0
    %v10616 = vpop.f32.mrf.mxu0
    %v10617 = vadd.f32 %v10328, %v10616
    %v10618 = vpop.f32.mrf.mxu0
    %10619 = vmatprep.mubr.bf16.mxu0 %v9032
    %10620 = vmatmul.mubr.bf16.gmra.mxu0 %v9031
    %v10621 = vpop.f32.mrf.mxu0
    %v10622 = vadd.f32 %v10333, %v10621
    %v10623 = vpop.f32.mrf.mxu0
    %v10624 = vpop.f32.mrf.mxu0
    %v10625 = vadd.f32 %v10336, %v10624
    %v10626 = vpop.f32.mrf.mxu0
    %10627 = vmatprep.mubr.bf16.mxu0 %v9041
    %10628 = vmatmul.mubr.bf16.gmra.mxu0 %v9040
    %v10629 = vpop.f32.mrf.mxu0
    %v10630 = vadd.f32 %v10341, %v10629
    %v10631 = vpop.f32.mrf.mxu0
    %v10632 = vpop.f32.mrf.mxu0
    %v10633 = vadd.f32 %v10344, %v10632
    %v10634 = vpop.f32.mrf.mxu0
    %10635 = vmatprep.mubr.bf16.mxu0 %v9050
    %10636 = vmatmul.mubr.bf16.gmra.mxu0 %v9049
    %v10637 = vpop.f32.mrf.mxu0
    %v10638 = vadd.f32 %v10349, %v10637
    %v10639 = vpop.f32.mrf.mxu0
    %v10640 = vpop.f32.mrf.mxu0
    %v10641 = vadd.f32 %v10352, %v10640
    %v10642 = vpop.f32.mrf.mxu0
    %10643 = vmatprep.mubr.bf16.mxu0 %v9059
    %10644 = vmatmul.mubr.bf16.gmra.mxu0 %v9058
    %v10645 = vpop.f32.mrf.mxu0
    %v10646 = vadd.f32 %v10357, %v10645
    %v10647 = vpop.f32.mrf.mxu0
    %v10648 = vpop.f32.mrf.mxu0
    %v10649 = vadd.f32 %v10360, %v10648
    %v10650 = vpop.f32.mrf.mxu0
    %10651 = vmatprep.mubr.bf16.mxu0 %v9068
    %10652 = vmatmul.mubr.bf16.gmra.mxu0 %v9067
    %v10653 = vpop.f32.mrf.mxu0
    %v10654 = vadd.f32 %v10365, %v10653
    %v10655 = vpop.f32.mrf.mxu0
    %v10656 = vpop.f32.mrf.mxu0
    %v10657 = vadd.f32 %v10368, %v10656
    %v10658 = vpop.f32.mrf.mxu0
    %10659 = vmatprep.mubr.bf16.mxu0 %v9077
    %10660 = vmatmul.mubr.bf16.gmra.mxu0 %v9076
    %v10661 = vpop.f32.mrf.mxu0
    %v10662 = vadd.f32 %v10373, %v10661
    %v10663 = vpop.f32.mrf.mxu0
    %v10664 = vpop.f32.mrf.mxu0
    %v10665 = vadd.f32 %v10376, %v10664
    %v10666 = vpop.f32.mrf.mxu0
    %10667 = vdwg.mxu0
    %10668 = vmatprep.subr.bf16.mxu0 0
    %10669 = vmatpush1.bf16.msra.mxu0 %v9712
    %10670 = vmatprep.subr.bf16.mxu0 0
    %10671 = vmatpush1.bf16.msra.mxu0 %v9711
    %10672 = vmatprep.subr.bf16.mxu0 0
    %10673 = vmatpush1.bf16.msra.mxu0 %v9710
    %10674 = vmatprep.subr.bf16.mxu0 0
    %10675 = vmatpush1.bf16.msra.mxu0 %v9709
    %10676 = vmatprep.subr.bf16.mxu0 0
    %10677 = vmatpush1.bf16.msra.mxu0 %v9708
    %10678 = vmatprep.subr.bf16.mxu0 0
    %10679 = vmatpush1.bf16.msra.mxu0 %v9707
    %10680 = vmatprep.subr.bf16.mxu0 0
    %10681 = vmatpush1.bf16.msra.mxu0 %v9706
    %10682 = vmatprep.subr.bf16.mxu0 0
    %10683 = vmatpush1.bf16.msra.mxu0 %v9705
    %10684 = vmatprep.subr.bf16.mxu0 0
    %10685 = vmatpush2.bf16.msra.mxu0 %v9720
    %10686 = vmatprep.subr.bf16.mxu0 0
    %10687 = vmatpush2.bf16.msra.mxu0 %v9719
    %10688 = vmatprep.subr.bf16.mxu0 0
    %10689 = vmatpush2.bf16.msra.mxu0 %v9718
    %10690 = vmatprep.subr.bf16.mxu0 0
    %10691 = vmatpush2.bf16.msra.mxu0 %v9717
    %10692 = vmatprep.subr.bf16.mxu0 0
    %10693 = vmatpush2.bf16.msra.mxu0 %v9716
    %10694 = vmatprep.subr.bf16.mxu0 0
    %10695 = vmatpush2.bf16.msra.mxu0 %v9715
    %10696 = vmatprep.subr.bf16.mxu0 0
    %10697 = vmatpush2.bf16.msra.mxu0 %v9714
    %10698 = vmatprep.subr.bf16.mxu0 0
    %10699 = vmatpush2.bf16.msra.mxu0 %v9713
    %10700 = vmatprep.mubr.bf16.mxu0 %v8800
    %10701 = vmatmul.mubr.bf16.gmra.mxu0 %v8799
    %v10702 = vpop.f32.mrf.mxu0
    %v10703 = vadd.f32 %v10414, %v10702
    %v10704 = vpop.f32.mrf.mxu0
    %v10705 = vpop.f32.mrf.mxu0
    %v10706 = vadd.f32 %v10417, %v10705
    %v10707 = vpop.f32.mrf.mxu0
    %10708 = vmatprep.mubr.bf16.mxu0 %v8809
    %10709 = vmatmul.mubr.bf16.gmra.mxu0 %v8808
    %v10710 = vpop.f32.mrf.mxu0
    %v10711 = vadd.f32 %v10422, %v10710
    %v10712 = vpop.f32.mrf.mxu0
    %v10713 = vpop.f32.mrf.mxu0
    %v10714 = vadd.f32 %v10425, %v10713
    %v10715 = vpop.f32.mrf.mxu0
    %10716 = vmatprep.mubr.bf16.mxu0 %v8818
    %10717 = vmatmul.mubr.bf16.gmra.mxu0 %v8817
    %v10718 = vpop.f32.mrf.mxu0
    %v10719 = vadd.f32 %v10430, %v10718
    %v10720 = vpop.f32.mrf.mxu0
    %v10721 = vpop.f32.mrf.mxu0
    %v10722 = vadd.f32 %v10433, %v10721
    %v10723 = vpop.f32.mrf.mxu0
    %10724 = vmatprep.mubr.bf16.mxu0 %v8827
    %10725 = vmatmul.mubr.bf16.gmra.mxu0 %v8826
    %v10726 = vpop.f32.mrf.mxu0
    %v10727 = vadd.f32 %v10438, %v10726
    %v10728 = vpop.f32.mrf.mxu0
    %v10729 = vpop.f32.mrf.mxu0
    %v10730 = vadd.f32 %v10441, %v10729
    %v10731 = vpop.f32.mrf.mxu0
    %10732 = vmatprep.mubr.bf16.mxu0 %v8836
    %10733 = vmatmul.mubr.bf16.gmra.mxu0 %v8835
    %v10734 = vpop.f32.mrf.mxu0
    %v10735 = vadd.f32 %v10446, %v10734
    %v10736 = vpop.f32.mrf.mxu0
    %v10737 = vpop.f32.mrf.mxu0
    %v10738 = vadd.f32 %v10449, %v10737
    %v10739 = vpop.f32.mrf.mxu0
    %10740 = vmatprep.mubr.bf16.mxu0 %v8845
    %10741 = vmatmul.mubr.bf16.gmra.mxu0 %v8844
    %v10742 = vpop.f32.mrf.mxu0
    %v10743 = vadd.f32 %v10454, %v10742
    %v10744 = vpop.f32.mrf.mxu0
    %v10745 = vpop.f32.mrf.mxu0
    %v10746 = vadd.f32 %v10457, %v10745
    %v10747 = vpop.f32.mrf.mxu0
    %10748 = vmatprep.mubr.bf16.mxu0 %v8854
    %10749 = vmatmul.mubr.bf16.gmra.mxu0 %v8853
    %v10750 = vpop.f32.mrf.mxu0
    %v10751 = vadd.f32 %v10462, %v10750
    %v10752 = vpop.f32.mrf.mxu0
    %v10753 = vpop.f32.mrf.mxu0
    %v10754 = vadd.f32 %v10465, %v10753
    %v10755 = vpop.f32.mrf.mxu0
    %10756 = vmatprep.mubr.bf16.mxu0 %v8863
    %10757 = vmatmul.mubr.bf16.gmra.mxu0 %v8862
    %v10758 = vpop.f32.mrf.mxu0
    %v10759 = vadd.f32 %v10470, %v10758
    %v10760 = vpop.f32.mrf.mxu0
    %v10761 = vpop.f32.mrf.mxu0
    %v10762 = vadd.f32 %v10473, %v10761
    %v10763 = vpop.f32.mrf.mxu0
    %10764 = vmatprep.mubr.bf16.mxu0 %v8872
    %10765 = vmatmul.mubr.bf16.gmra.mxu0 %v8871
    %v10766 = vpop.f32.mrf.mxu0
    %v10767 = vadd.f32 %v10478, %v10766
    %v10768 = vpop.f32.mrf.mxu0
    %v10769 = vpop.f32.mrf.mxu0
    %v10770 = vadd.f32 %v10481, %v10769
    %v10771 = vpop.f32.mrf.mxu0
    %10772 = vmatprep.mubr.bf16.mxu0 %v8881
    %10773 = vmatmul.mubr.bf16.gmra.mxu0 %v8880
    %v10774 = vpop.f32.mrf.mxu0
    %v10775 = vadd.f32 %v10486, %v10774
    %v10776 = vpop.f32.mrf.mxu0
    %v10777 = vpop.f32.mrf.mxu0
    %v10778 = vadd.f32 %v10489, %v10777
    %v10779 = vpop.f32.mrf.mxu0
    %10780 = vmatprep.mubr.bf16.mxu0 %v8890
    %10781 = vmatmul.mubr.bf16.gmra.mxu0 %v8889
    %v10782 = vpop.f32.mrf.mxu0
    %v10783 = vadd.f32 %v10494, %v10782
    %v10784 = vpop.f32.mrf.mxu0
    %v10785 = vpop.f32.mrf.mxu0
    %v10786 = vadd.f32 %v10497, %v10785
    %v10787 = vpop.f32.mrf.mxu0
    %10788 = vmatprep.mubr.bf16.mxu0 %v8899
    %10789 = vmatmul.mubr.bf16.gmra.mxu0 %v8898
    %v10790 = vpop.f32.mrf.mxu0
    %v10791 = vadd.f32 %v10502, %v10790
    %v10792 = vpop.f32.mrf.mxu0
    %v10793 = vpop.f32.mrf.mxu0
    %v10794 = vadd.f32 %v10505, %v10793
    %v10795 = vpop.f32.mrf.mxu0
    %10796 = vmatprep.mubr.bf16.mxu0 %v8908
    %10797 = vmatmul.mubr.bf16.gmra.mxu0 %v8907
    %v10798 = vpop.f32.mrf.mxu0
    %v10799 = vadd.f32 %v10510, %v10798
    %v10800 = vpop.f32.mrf.mxu0
    %v10801 = vpop.f32.mrf.mxu0
    %v10802 = vadd.f32 %v10513, %v10801
    %v10803 = vpop.f32.mrf.mxu0
    %10804 = vmatprep.mubr.bf16.mxu0 %v8917
    %10805 = vmatmul.mubr.bf16.gmra.mxu0 %v8916
    %v10806 = vpop.f32.mrf.mxu0
    %v10807 = vadd.f32 %v10518, %v10806
    %v10808 = vpop.f32.mrf.mxu0
    %v10809 = vpop.f32.mrf.mxu0
    %v10810 = vadd.f32 %v10521, %v10809
    %v10811 = vpop.f32.mrf.mxu0
    %10812 = vmatprep.mubr.bf16.mxu0 %v8926
    %10813 = vmatmul.mubr.bf16.gmra.mxu0 %v8925
    %v10814 = vpop.f32.mrf.mxu0
    %v10815 = vadd.f32 %v10526, %v10814
    %v10816 = vpop.f32.mrf.mxu0
    %v10817 = vpop.f32.mrf.mxu0
    %v10818 = vadd.f32 %v10529, %v10817
    %v10819 = vpop.f32.mrf.mxu0
    %10820 = vmatprep.mubr.bf16.mxu0 %v8935
    %10821 = vmatmul.mubr.bf16.gmra.mxu0 %v8934
    %v10822 = vpop.f32.mrf.mxu0
    %v10823 = vadd.f32 %v10534, %v10822
    %v10824 = vpop.f32.mrf.mxu0
    %v10825 = vpop.f32.mrf.mxu0
    %v10826 = vadd.f32 %v10537, %v10825
    %v10827 = vpop.f32.mrf.mxu0
    %10828 = vmatprep.mubr.bf16.mxu0 %v8944
    %10829 = vmatmul.mubr.bf16.gmra.mxu0 %v8943
    %v10830 = vpop.f32.mrf.mxu0
    %v10831 = vadd.f32 %v10542, %v10830
    %v10832 = vpop.f32.mrf.mxu0
    %v10833 = vpop.f32.mrf.mxu0
    %v10834 = vadd.f32 %v10545, %v10833
    %v10835 = vpop.f32.mrf.mxu0
    %10836 = vmatprep.mubr.bf16.mxu0 %v8953
    %10837 = vmatmul.mubr.bf16.gmra.mxu0 %v8952
    %v10838 = vpop.f32.mrf.mxu0
    %v10839 = vadd.f32 %v10550, %v10838
    %v10840 = vpop.f32.mrf.mxu0
    %v10841 = vpop.f32.mrf.mxu0
    %v10842 = vadd.f32 %v10553, %v10841
    %v10843 = vpop.f32.mrf.mxu0
    %10844 = vmatprep.mubr.bf16.mxu0 %v8962
    %10845 = vmatmul.mubr.bf16.gmra.mxu0 %v8961
    %v10846 = vpop.f32.mrf.mxu0
    %v10847 = vadd.f32 %v10558, %v10846
    %v10848 = vpop.f32.mrf.mxu0
    %v10849 = vpop.f32.mrf.mxu0
    %v10850 = vadd.f32 %v10561, %v10849
    %v10851 = vpop.f32.mrf.mxu0
    %10852 = vmatprep.mubr.bf16.mxu0 %v8971
    %10853 = vmatmul.mubr.bf16.gmra.mxu0 %v8970
    %v10854 = vpop.f32.mrf.mxu0
    %v10855 = vadd.f32 %v10566, %v10854
    %v10856 = vpop.f32.mrf.mxu0
    %v10857 = vpop.f32.mrf.mxu0
    %v10858 = vadd.f32 %v10569, %v10857
    %v10859 = vpop.f32.mrf.mxu0
    %10860 = vmatprep.mubr.bf16.mxu0 %v8980
    %10861 = vmatmul.mubr.bf16.gmra.mxu0 %v8979
    %v10862 = vpop.f32.mrf.mxu0
    %v10863 = vadd.f32 %v10574, %v10862
    %v10864 = vpop.f32.mrf.mxu0
    %v10865 = vpop.f32.mrf.mxu0
    %v10866 = vadd.f32 %v10577, %v10865
    %v10867 = vpop.f32.mrf.mxu0
    %10868 = vmatprep.mubr.bf16.mxu0 %v8989
    %10869 = vmatmul.mubr.bf16.gmra.mxu0 %v8988
    %v10870 = vpop.f32.mrf.mxu0
    %v10871 = vadd.f32 %v10582, %v10870
    %v10872 = vpop.f32.mrf.mxu0
    %v10873 = vpop.f32.mrf.mxu0
    %v10874 = vadd.f32 %v10585, %v10873
    %v10875 = vpop.f32.mrf.mxu0
    %10876 = vmatprep.mubr.bf16.mxu0 %v8998
    %10877 = vmatmul.mubr.bf16.gmra.mxu0 %v8997
    %v10878 = vpop.f32.mrf.mxu0
    %v10879 = vadd.f32 %v10590, %v10878
    %v10880 = vpop.f32.mrf.mxu0
    %v10881 = vpop.f32.mrf.mxu0
    %v10882 = vadd.f32 %v10593, %v10881
    %v10883 = vpop.f32.mrf.mxu0
    %10884 = vmatprep.mubr.bf16.mxu0 %v9007
    %10885 = vmatmul.mubr.bf16.gmra.mxu0 %v9006
    %v10886 = vpop.f32.mrf.mxu0
    %v10887 = vadd.f32 %v10598, %v10886
    %v10888 = vpop.f32.mrf.mxu0
    %v10889 = vpop.f32.mrf.mxu0
    %v10890 = vadd.f32 %v10601, %v10889
    %v10891 = vpop.f32.mrf.mxu0
    %10892 = vmatprep.mubr.bf16.mxu0 %v9016
    %10893 = vmatmul.mubr.bf16.gmra.mxu0 %v9015
    %v10894 = vpop.f32.mrf.mxu0
    %v10895 = vadd.f32 %v10606, %v10894
    %v10896 = vpop.f32.mrf.mxu0
    %v10897 = vpop.f32.mrf.mxu0
    %v10898 = vadd.f32 %v10609, %v10897
    %v10899 = vpop.f32.mrf.mxu0
    %10900 = vmatprep.mubr.bf16.mxu0 %v9025
    %10901 = vmatmul.mubr.bf16.gmra.mxu0 %v9024
    %v10902 = vpop.f32.mrf.mxu0
    %v10903 = vadd.f32 %v10614, %v10902
    %v10904 = vpop.f32.mrf.mxu0
    %v10905 = vpop.f32.mrf.mxu0
    %v10906 = vadd.f32 %v10617, %v10905
    %v10907 = vpop.f32.mrf.mxu0
    %10908 = vmatprep.mubr.bf16.mxu0 %v9034
    %10909 = vmatmul.mubr.bf16.gmra.mxu0 %v9033
    %v10910 = vpop.f32.mrf.mxu0
    %v10911 = vadd.f32 %v10622, %v10910
    %v10912 = vpop.f32.mrf.mxu0
    %v10913 = vpop.f32.mrf.mxu0
    %v10914 = vadd.f32 %v10625, %v10913
    %v10915 = vpop.f32.mrf.mxu0
    %10916 = vmatprep.mubr.bf16.mxu0 %v9043
    %10917 = vmatmul.mubr.bf16.gmra.mxu0 %v9042
    %v10918 = vpop.f32.mrf.mxu0
    %v10919 = vadd.f32 %v10630, %v10918
    %v10920 = vpop.f32.mrf.mxu0
    %v10921 = vpop.f32.mrf.mxu0
    %v10922 = vadd.f32 %v10633, %v10921
    %v10923 = vpop.f32.mrf.mxu0
    %10924 = vmatprep.mubr.bf16.mxu0 %v9052
    %10925 = vmatmul.mubr.bf16.gmra.mxu0 %v9051
    %v10926 = vpop.f32.mrf.mxu0
    %v10927 = vadd.f32 %v10638, %v10926
    %v10928 = vpop.f32.mrf.mxu0
    %v10929 = vpop.f32.mrf.mxu0
    %v10930 = vadd.f32 %v10641, %v10929
    %v10931 = vpop.f32.mrf.mxu0
    %10932 = vmatprep.mubr.bf16.mxu0 %v9061
    %10933 = vmatmul.mubr.bf16.gmra.mxu0 %v9060
    %v10934 = vpop.f32.mrf.mxu0
    %v10935 = vadd.f32 %v10646, %v10934
    %v10936 = vpop.f32.mrf.mxu0
    %v10937 = vpop.f32.mrf.mxu0
    %v10938 = vadd.f32 %v10649, %v10937
    %v10939 = vpop.f32.mrf.mxu0
    %10940 = vmatprep.mubr.bf16.mxu0 %v9070
    %10941 = vmatmul.mubr.bf16.gmra.mxu0 %v9069
    %v10942 = vpop.f32.mrf.mxu0
    %v10943 = vadd.f32 %v10654, %v10942
    %v10944 = vpop.f32.mrf.mxu0
    %v10945 = vpop.f32.mrf.mxu0
    %v10946 = vadd.f32 %v10657, %v10945
    %v10947 = vpop.f32.mrf.mxu0
    %10948 = vmatprep.mubr.bf16.mxu0 %v9079
    %10949 = vmatmul.mubr.bf16.gmra.mxu0 %v9078
    %v10950 = vpop.f32.mrf.mxu0
    %v10951 = vadd.f32 %v10662, %v10950
    %v10952 = vpop.f32.mrf.mxu0
    %v10953 = vpop.f32.mrf.mxu0
    %v10954 = vadd.f32 %v10665, %v10953
    %v10955 = vpop.f32.mrf.mxu0
    %10956 = vdwg.mxu0
    %10957 = vmatprep.subr.bf16.mxu0 0
    %10958 = vmatpush1.bf16.msra.mxu0 %v9728
    %10959 = vmatprep.subr.bf16.mxu0 0
    %10960 = vmatpush1.bf16.msra.mxu0 %v9727
    %10961 = vmatprep.subr.bf16.mxu0 0
    %10962 = vmatpush1.bf16.msra.mxu0 %v9726
    %10963 = vmatprep.subr.bf16.mxu0 0
    %10964 = vmatpush1.bf16.msra.mxu0 %v9725
    %10965 = vmatprep.subr.bf16.mxu0 0
    %10966 = vmatpush1.bf16.msra.mxu0 %v9724
    %10967 = vmatprep.subr.bf16.mxu0 0
    %10968 = vmatpush1.bf16.msra.mxu0 %v9723
    %10969 = vmatprep.subr.bf16.mxu0 0
    %10970 = vmatpush1.bf16.msra.mxu0 %v9722
    %10971 = vmatprep.subr.bf16.mxu0 0
    %10972 = vmatpush1.bf16.msra.mxu0 %v9721
    %10973 = vmatprep.subr.bf16.mxu0 0
    %10974 = vmatpush2.bf16.msra.mxu0 0
    %10975 = vmatprep.subr.bf16.mxu0 0
    %10976 = vmatpush2.bf16.msra.mxu0 0
    %10977 = vmatprep.subr.bf16.mxu0 0
    %10978 = vmatpush2.bf16.msra.mxu0 0
    %10979 = vmatprep.subr.bf16.mxu0 0
    %10980 = vmatpush2.bf16.msra.mxu0 0
    %10981 = vmatprep.subr.bf16.mxu0 0
    %10982 = vmatpush2.bf16.msra.mxu0 0
    %10983 = vmatprep.subr.bf16.mxu0 0
    %10984 = vmatpush2.bf16.msra.mxu0 0
    %10985 = vmatprep.subr.bf16.mxu0 0
    %10986 = vmatpush2.bf16.msra.mxu0 0
    %10987 = vmatprep.subr.bf16.mxu0 0
    %10988 = vmatpush2.bf16.msra.mxu0 0
    %10989 = vmatprep.mubr.bf16.mxu0 0
    %10990 = vmatmul.mubr.bf16.gmra.mxu0 %v8801
    %v10991 = vpop.f32.mrf.mxu0
    %v10992 = vadd.f32 %v10703, %v10991
    %v10993 = vpop.f32.mrf.mxu0
    %v10994 = vpop.f32.mrf.mxu0
    %v10995 = vadd.f32 %v10706, %v10994
    %v10996 = vpop.f32.mrf.mxu0
    %10997 = vmatprep.mubr.bf16.mxu0 0
    %10998 = vmatmul.mubr.bf16.gmra.mxu0 %v8810
    %v10999 = vpop.f32.mrf.mxu0
    %v11000 = vadd.f32 %v10711, %v10999
    %v11001 = vpop.f32.mrf.mxu0
    %v11002 = vpop.f32.mrf.mxu0
    %v11003 = vadd.f32 %v10714, %v11002
    %v11004 = vpop.f32.mrf.mxu0
    %11005 = vmatprep.mubr.bf16.mxu0 0
    %11006 = vmatmul.mubr.bf16.gmra.mxu0 %v8819
    %v11007 = vpop.f32.mrf.mxu0
    %v11008 = vadd.f32 %v10719, %v11007
    %v11009 = vpop.f32.mrf.mxu0
    %v11010 = vpop.f32.mrf.mxu0
    %v11011 = vadd.f32 %v10722, %v11010
    %v11012 = vpop.f32.mrf.mxu0
    %11013 = vmatprep.mubr.bf16.mxu0 0
    %11014 = vmatmul.mubr.bf16.gmra.mxu0 %v8828
    %v11015 = vpop.f32.mrf.mxu0
    %v11016 = vadd.f32 %v10727, %v11015
    %v11017 = vpop.f32.mrf.mxu0
    %v11018 = vpop.f32.mrf.mxu0
    %v11019 = vadd.f32 %v10730, %v11018
    %v11020 = vpop.f32.mrf.mxu0
    %11021 = vmatprep.mubr.bf16.mxu0 0
    %11022 = vmatmul.mubr.bf16.gmra.mxu0 %v8837
    %v11023 = vpop.f32.mrf.mxu0
    %v11024 = vadd.f32 %v10735, %v11023
    %v11025 = vpop.f32.mrf.mxu0
    %v11026 = vpop.f32.mrf.mxu0
    %v11027 = vadd.f32 %v10738, %v11026
    %v11028 = vpop.f32.mrf.mxu0
    %11029 = vmatprep.mubr.bf16.mxu0 0
    %11030 = vmatmul.mubr.bf16.gmra.mxu0 %v8846
    %v11031 = vpop.f32.mrf.mxu0
    %v11032 = vadd.f32 %v10743, %v11031
    %v11033 = vpop.f32.mrf.mxu0
    %v11034 = vpop.f32.mrf.mxu0
    %v11035 = vadd.f32 %v10746, %v11034
    %v11036 = vpop.f32.mrf.mxu0
    %11037 = vmatprep.mubr.bf16.mxu0 0
    %11038 = vmatmul.mubr.bf16.gmra.mxu0 %v8855
    %v11039 = vpop.f32.mrf.mxu0
    %v11040 = vadd.f32 %v10751, %v11039
    %v11041 = vpop.f32.mrf.mxu0
    %v11042 = vpop.f32.mrf.mxu0
    %v11043 = vadd.f32 %v10754, %v11042
    %v11044 = vpop.f32.mrf.mxu0
    %11045 = vmatprep.mubr.bf16.mxu0 0
    %11046 = vmatmul.mubr.bf16.gmra.mxu0 %v8864
    %v11047 = vpop.f32.mrf.mxu0
    %v11048 = vadd.f32 %v10759, %v11047
    %v11049 = vpop.f32.mrf.mxu0
    %v11050 = vpop.f32.mrf.mxu0
    %v11051 = vadd.f32 %v10762, %v11050
    %v11052 = vpop.f32.mrf.mxu0
    %11053 = vmatprep.mubr.bf16.mxu0 0
    %11054 = vmatmul.mubr.bf16.gmra.mxu0 %v8873
    %v11055 = vpop.f32.mrf.mxu0
    %v11056 = vadd.f32 %v10767, %v11055
    %v11057 = vpop.f32.mrf.mxu0
    %v11058 = vpop.f32.mrf.mxu0
    %v11059 = vadd.f32 %v10770, %v11058
    %v11060 = vpop.f32.mrf.mxu0
    %11061 = vmatprep.mubr.bf16.mxu0 0
    %11062 = vmatmul.mubr.bf16.gmra.mxu0 %v8882
    %v11063 = vpop.f32.mrf.mxu0
    %v11064 = vadd.f32 %v10775, %v11063
    %v11065 = vpop.f32.mrf.mxu0
    %v11066 = vpop.f32.mrf.mxu0
    %v11067 = vadd.f32 %v10778, %v11066
    %v11068 = vpop.f32.mrf.mxu0
    %11069 = vmatprep.mubr.bf16.mxu0 0
    %11070 = vmatmul.mubr.bf16.gmra.mxu0 %v8891
    %v11071 = vpop.f32.mrf.mxu0
    %v11072 = vadd.f32 %v10783, %v11071
    %v11073 = vpop.f32.mrf.mxu0
    %v11074 = vpop.f32.mrf.mxu0
    %v11075 = vadd.f32 %v10786, %v11074
    %v11076 = vpop.f32.mrf.mxu0
    %11077 = vmatprep.mubr.bf16.mxu0 0
    %11078 = vmatmul.mubr.bf16.gmra.mxu0 %v8900
    %v11079 = vpop.f32.mrf.mxu0
    %v11080 = vadd.f32 %v10791, %v11079
    %v11081 = vpop.f32.mrf.mxu0
    %v11082 = vpop.f32.mrf.mxu0
    %v11083 = vadd.f32 %v10794, %v11082
    %v11084 = vpop.f32.mrf.mxu0
    %11085 = vmatprep.mubr.bf16.mxu0 0
    %11086 = vmatmul.mubr.bf16.gmra.mxu0 %v8909
    %v11087 = vpop.f32.mrf.mxu0
    %v11088 = vadd.f32 %v10799, %v11087
    %v11089 = vpop.f32.mrf.mxu0
    %v11090 = vpop.f32.mrf.mxu0
    %v11091 = vadd.f32 %v10802, %v11090
    %v11092 = vpop.f32.mrf.mxu0
    %11093 = vmatprep.mubr.bf16.mxu0 0
    %11094 = vmatmul.mubr.bf16.gmra.mxu0 %v8918
    %v11095 = vpop.f32.mrf.mxu0
    %v11096 = vadd.f32 %v10807, %v11095
    %v11097 = vpop.f32.mrf.mxu0
    %v11098 = vpop.f32.mrf.mxu0
    %v11099 = vadd.f32 %v10810, %v11098
    %v11100 = vpop.f32.mrf.mxu0
    %11101 = vmatprep.mubr.bf16.mxu0 0
    %11102 = vmatmul.mubr.bf16.gmra.mxu0 %v8927
    %v11103 = vpop.f32.mrf.mxu0
    %v11104 = vadd.f32 %v10815, %v11103
    %v11105 = vpop.f32.mrf.mxu0
    %v11106 = vpop.f32.mrf.mxu0
    %v11107 = vadd.f32 %v10818, %v11106
    %v11108 = vpop.f32.mrf.mxu0
    %11109 = vmatprep.mubr.bf16.mxu0 0
    %11110 = vmatmul.mubr.bf16.gmra.mxu0 %v8936
    %v11111 = vpop.f32.mrf.mxu0
    %v11112 = vadd.f32 %v10823, %v11111
    %v11113 = vpop.f32.mrf.mxu0
    %v11114 = vpop.f32.mrf.mxu0
    %v11115 = vadd.f32 %v10826, %v11114
    %v11116 = vpop.f32.mrf.mxu0
    %11117 = vmatprep.mubr.bf16.mxu0 0
    %11118 = vmatmul.mubr.bf16.gmra.mxu0 %v8945
    %v11119 = vpop.f32.mrf.mxu0
    %v11120 = vadd.f32 %v10831, %v11119
    %v11121 = vpop.f32.mrf.mxu0
    %v11122 = vpop.f32.mrf.mxu0
    %v11123 = vadd.f32 %v10834, %v11122
    %v11124 = vpop.f32.mrf.mxu0
    %11125 = vmatprep.mubr.bf16.mxu0 0
    %11126 = vmatmul.mubr.bf16.gmra.mxu0 %v8954
    %v11127 = vpop.f32.mrf.mxu0
    %v11128 = vadd.f32 %v10839, %v11127
    %v11129 = vpop.f32.mrf.mxu0
    %v11130 = vpop.f32.mrf.mxu0
    %v11131 = vadd.f32 %v10842, %v11130
    %v11132 = vpop.f32.mrf.mxu0
    %11133 = vmatprep.mubr.bf16.mxu0 0
    %11134 = vmatmul.mubr.bf16.gmra.mxu0 %v8963
    %v11135 = vpop.f32.mrf.mxu0
    %v11136 = vadd.f32 %v10847, %v11135
    %v11137 = vpop.f32.mrf.mxu0
    %v11138 = vpop.f32.mrf.mxu0
    %v11139 = vadd.f32 %v10850, %v11138
    %v11140 = vpop.f32.mrf.mxu0
    %11141 = vmatprep.mubr.bf16.mxu0 0
    %11142 = vmatmul.mubr.bf16.gmra.mxu0 %v8972
    %v11143 = vpop.f32.mrf.mxu0
    %v11144 = vadd.f32 %v10855, %v11143
    %v11145 = vpop.f32.mrf.mxu0
    %v11146 = vpop.f32.mrf.mxu0
    %v11147 = vadd.f32 %v10858, %v11146
    %v11148 = vpop.f32.mrf.mxu0
    %11149 = vmatprep.mubr.bf16.mxu0 0
    %11150 = vmatmul.mubr.bf16.gmra.mxu0 %v8981
    %v11151 = vpop.f32.mrf.mxu0
    %v11152 = vadd.f32 %v10863, %v11151
    %v11153 = vpop.f32.mrf.mxu0
    %v11154 = vpop.f32.mrf.mxu0
    %v11155 = vadd.f32 %v10866, %v11154
    %v11156 = vpop.f32.mrf.mxu0
    %11157 = vmatprep.mubr.bf16.mxu0 0
    %11158 = vmatmul.mubr.bf16.gmra.mxu0 %v8990
    %v11159 = vpop.f32.mrf.mxu0
    %v11160 = vadd.f32 %v10871, %v11159
    %v11161 = vpop.f32.mrf.mxu0
    %v11162 = vpop.f32.mrf.mxu0
    %v11163 = vadd.f32 %v10874, %v11162
    %v11164 = vpop.f32.mrf.mxu0
    %11165 = vmatprep.mubr.bf16.mxu0 0
    %11166 = vmatmul.mubr.bf16.gmra.mxu0 %v8999
    %v11167 = vpop.f32.mrf.mxu0
    %v11168 = vadd.f32 %v10879, %v11167
    %v11169 = vpop.f32.mrf.mxu0
    %v11170 = vpop.f32.mrf.mxu0
    %v11171 = vadd.f32 %v10882, %v11170
    %v11172 = vpop.f32.mrf.mxu0
    %11173 = vmatprep.mubr.bf16.mxu0 0
    %11174 = vmatmul.mubr.bf16.gmra.mxu0 %v9008
    %v11175 = vpop.f32.mrf.mxu0
    %v11176 = vadd.f32 %v10887, %v11175
    %v11177 = vpop.f32.mrf.mxu0
    %v11178 = vpop.f32.mrf.mxu0
    %v11179 = vadd.f32 %v10890, %v11178
    %v11180 = vpop.f32.mrf.mxu0
    %11181 = vmatprep.mubr.bf16.mxu0 0
    %11182 = vmatmul.mubr.bf16.gmra.mxu0 %v9017
    %v11183 = vpop.f32.mrf.mxu0
    %v11184 = vadd.f32 %v10895, %v11183
    %v11185 = vpop.f32.mrf.mxu0
    %v11186 = vpop.f32.mrf.mxu0
    %v11187 = vadd.f32 %v10898, %v11186
    %v11188 = vpop.f32.mrf.mxu0
    %11189 = vmatprep.mubr.bf16.mxu0 0
    %11190 = vmatmul.mubr.bf16.gmra.mxu0 %v9026
    %v11191 = vpop.f32.mrf.mxu0
    %v11192 = vadd.f32 %v10903, %v11191
    %v11193 = vpop.f32.mrf.mxu0
    %v11194 = vpop.f32.mrf.mxu0
    %v11195 = vadd.f32 %v10906, %v11194
    %v11196 = vpop.f32.mrf.mxu0
    %11197 = vmatprep.mubr.bf16.mxu0 0
    %11198 = vmatmul.mubr.bf16.gmra.mxu0 %v9035
    %v11199 = vpop.f32.mrf.mxu0
    %v11200 = vadd.f32 %v10911, %v11199
    %v11201 = vpop.f32.mrf.mxu0
    %v11202 = vpop.f32.mrf.mxu0
    %v11203 = vadd.f32 %v10914, %v11202
    %v11204 = vpop.f32.mrf.mxu0
    %11205 = vmatprep.mubr.bf16.mxu0 0
    %11206 = vmatmul.mubr.bf16.gmra.mxu0 %v9044
    %v11207 = vpop.f32.mrf.mxu0
    %v11208 = vadd.f32 %v10919, %v11207
    %v11209 = vpop.f32.mrf.mxu0
    %v11210 = vpop.f32.mrf.mxu0
    %v11211 = vadd.f32 %v10922, %v11210
    %v11212 = vpop.f32.mrf.mxu0
    %11213 = vmatprep.mubr.bf16.mxu0 0
    %11214 = vmatmul.mubr.bf16.gmra.mxu0 %v9053
    %v11215 = vpop.f32.mrf.mxu0
    %v11216 = vadd.f32 %v10927, %v11215
    %v11217 = vpop.f32.mrf.mxu0
    %v11218 = vpop.f32.mrf.mxu0
    %v11219 = vadd.f32 %v10930, %v11218
    %v11220 = vpop.f32.mrf.mxu0
    %11221 = vmatprep.mubr.bf16.mxu0 0
    %11222 = vmatmul.mubr.bf16.gmra.mxu0 %v9062
    %v11223 = vpop.f32.mrf.mxu0
    %v11224 = vadd.f32 %v10935, %v11223
    %v11225 = vpop.f32.mrf.mxu0
    %v11226 = vpop.f32.mrf.mxu0
    %v11227 = vadd.f32 %v10938, %v11226
    %v11228 = vpop.f32.mrf.mxu0
    %11229 = vmatprep.mubr.bf16.mxu0 0
    %11230 = vmatmul.mubr.bf16.gmra.mxu0 %v9071
    %v11231 = vpop.f32.mrf.mxu0
    %v11232 = vadd.f32 %v10943, %v11231
    %v11233 = vpop.f32.mrf.mxu0
    %v11234 = vpop.f32.mrf.mxu0
    %v11235 = vadd.f32 %v10946, %v11234
    %v11236 = vpop.f32.mrf.mxu0
    %11237 = vmatprep.mubr.bf16.mxu0 0
    %11238 = vmatmul.mubr.bf16.gmra.mxu0 %v9080
    %v11239 = vpop.f32.mrf.mxu0
    %v11240 = vadd.f32 %v10951, %v11239
    %v11241 = vpop.f32.mrf.mxu0
    %v11242 = vpop.f32.mrf.mxu0
    %v11243 = vadd.f32 %v10954, %v11242
    %v11244 = vpop.f32.mrf.mxu0
    %11245 = vdwg.mxu0
    %v11246 = vmax.f32 %v10992, 0.0
    %v11247 = vmax.f32 %v10995, 0.0
    %v11248 = vmax.f32 %v11000, 0.0
    %v11249 = vmax.f32 %v11003, 0.0
    %v11250 = vmax.f32 %v11008, 0.0
    %v11251 = vmax.f32 %v11011, 0.0
    %v11252 = vmax.f32 %v11016, 0.0
    %v11253 = vmax.f32 %v11019, 0.0
    %v11254 = vmax.f32 %v11024, 0.0
    %v11255 = vmax.f32 %v11027, 0.0
    %v11256 = vmax.f32 %v11032, 0.0
    %v11257 = vmax.f32 %v11035, 0.0
    %v11258 = vmax.f32 %v11040, 0.0
    %v11259 = vmax.f32 %v11043, 0.0
    %v11260 = vmax.f32 %v11048, 0.0
    %v11261 = vmax.f32 %v11051, 0.0
    %v11262 = vmax.f32 %v11056, 0.0
    %v11263 = vmax.f32 %v11059, 0.0
    %v11264 = vmax.f32 %v11064, 0.0
    %v11265 = vmax.f32 %v11067, 0.0
    %v11266 = vmax.f32 %v11072, 0.0
    %v11267 = vmax.f32 %v11075, 0.0
    %v11268 = vmax.f32 %v11080, 0.0
    %v11269 = vmax.f32 %v11083, 0.0
    %v11270 = vmax.f32 %v11088, 0.0
    %v11271 = vmax.f32 %v11091, 0.0
    %v11272 = vmax.f32 %v11096, 0.0
    %v11273 = vmax.f32 %v11099, 0.0
    %v11274 = vmax.f32 %v11104, 0.0
    %v11275 = vmax.f32 %v11107, 0.0
    %v11276 = vmax.f32 %v11112, 0.0
    %v11277 = vmax.f32 %v11115, 0.0
    %v11278 = vmax.f32 %v11120, 0.0
    %v11279 = vmax.f32 %v11123, 0.0
    %v11280 = vmax.f32 %v11128, 0.0
    %v11281 = vmax.f32 %v11131, 0.0
    %v11282 = vmax.f32 %v11136, 0.0
    %v11283 = vmax.f32 %v11139, 0.0
    %v11284 = vmax.f32 %v11144, 0.0
    %v11285 = vmax.f32 %v11147, 0.0
    %v11286 = vmax.f32 %v11152, 0.0
    %v11287 = vmax.f32 %v11155, 0.0
    %v11288 = vmax.f32 %v11160, 0.0
    %v11289 = vmax.f32 %v11163, 0.0
    %v11290 = vmax.f32 %v11168, 0.0
    %v11291 = vmax.f32 %v11171, 0.0
    %v11292 = vmax.f32 %v11176, 0.0
    %v11293 = vmax.f32 %v11179, 0.0
    %v11294 = vmax.f32 %v11184, 0.0
    %v11295 = vmax.f32 %v11187, 0.0
    %v11296 = vmax.f32 %v11192, 0.0
    %v11297 = vmax.f32 %v11195, 0.0
    %v11298 = vmax.f32 %v11200, 0.0
    %v11299 = vmax.f32 %v11203, 0.0
    %v11300 = vmax.f32 %v11208, 0.0
    %v11301 = vmax.f32 %v11211, 0.0
    %v11302 = vmax.f32 %v11216, 0.0
    %v11303 = vmax.f32 %v11219, 0.0
    %v11304 = vmax.f32 %v11224, 0.0
    %v11305 = vmax.f32 %v11227, 0.0
    %v11306 = vmax.f32 %v11232, 0.0
    %v11307 = vmax.f32 %v11235, 0.0
    %v11308 = vmax.f32 %v11240, 0.0
    %v11309 = vmax.f32 %v11243, 0.0
    %v11310 = vmul.f32 %v11246, %v782
    %v11311 = vmul.f32 %v11247, %v787
    %v11312 = vmul.f32 %v11248, %v792
    %v11313 = vmul.f32 %v11249, %v797
    %v11314 = vmul.f32 %v11250, %v802
    %v11315 = vmul.f32 %v11251, %v807
    %v11316 = vmul.f32 %v11252, %v812
    %v11317 = vmul.f32 %v11253, %v817
    %v11318 = vmul.f32 %v11254, %v822
    %v11319 = vmul.f32 %v11255, %v827
    %v11320 = vmul.f32 %v11256, %v832
    %v11321 = vmul.f32 %v11257, %v837
    %v11322 = vmul.f32 %v11258, %v842
    %v11323 = vmul.f32 %v11259, %v847
    %v11324 = vmul.f32 %v11260, %v852
    %v11325 = vmul.f32 %v11261, %v857
    %v11326 = vmul.f32 %v11262, %v862
    %v11327 = vmul.f32 %v11263, %v867
    %v11328 = vmul.f32 %v11264, %v872
    %v11329 = vmul.f32 %v11265, %v877
    %v11330 = vmul.f32 %v11266, %v882
    %v11331 = vmul.f32 %v11267, %v887
    %v11332 = vmul.f32 %v11268, %v892
    %v11333 = vmul.f32 %v11269, %v897
    %v11334 = vmul.f32 %v11270, %v902
    %v11335 = vmul.f32 %v11271, %v907
    %v11336 = vmul.f32 %v11272, %v912
    %v11337 = vmul.f32 %v11273, %v917
    %v11338 = vmul.f32 %v11274, %v922
    %v11339 = vmul.f32 %v11275, %v927
    %v11340 = vmul.f32 %v11276, %v932
    %v11341 = vmul.f32 %v11277, %v937
    %v11342 = vmul.f32 %v11278, %v942
    %v11343 = vmul.f32 %v11279, %v947
    %v11344 = vmul.f32 %v11280, %v952
    %v11345 = vmul.f32 %v11281, %v957
    %v11346 = vmul.f32 %v11282, %v962
    %v11347 = vmul.f32 %v11283, %v967
    %v11348 = vmul.f32 %v11284, %v972
    %v11349 = vmul.f32 %v11285, %v977
    %v11350 = vmul.f32 %v11286, %v982
    %v11351 = vmul.f32 %v11287, %v987
    %v11352 = vmul.f32 %v11288, %v992
    %v11353 = vmul.f32 %v11289, %v997
    %v11354 = vmul.f32 %v11290, %v1002
    %v11355 = vmul.f32 %v11291, %v1007
    %v11356 = vmul.f32 %v11292, %v1012
    %v11357 = vmul.f32 %v11293, %v1017
    %v11358 = vmul.f32 %v11294, %v1022
    %v11359 = vmul.f32 %v11295, %v1027
    %v11360 = vmul.f32 %v11296, %v1032
    %v11361 = vmul.f32 %v11297, %v1037
    %v11362 = vmul.f32 %v11298, %v1042
    %v11363 = vmul.f32 %v11299, %v1047
    %v11364 = vmul.f32 %v11300, %v1052
    %v11365 = vmul.f32 %v11301, %v1057
    %v11366 = vmul.f32 %v11302, %v1062
    %v11367 = vmul.f32 %v11303, %v1067
    %v11368 = vmul.f32 %v11304, %v1072
    %v11369 = vmul.f32 %v11305, %v1077
    %v11370 = vmul.f32 %v11306, %v1082
    %v11371 = vmul.f32 %v11307, %v1087
    %v11372 = vmul.f32 %v11308, %v1092
    %v11373 = vmul.f32 %v11309, %v1097
    %v11374 = vadd.f32 %v11310, %v11311
    %v11375 = vadd.f32 %v11374, %v11312
    %v11376 = vadd.f32 %v11375, %v11313
    %v11377 = vadd.f32 %v11376, %v11314
    %v11378 = vadd.f32 %v11377, %v11315
    %v11379 = vadd.f32 %v11378, %v11316
    %v11380 = vadd.f32 %v11379, %v11317
    %v11381 = vadd.f32 %v11380, %v11318
    %v11382 = vadd.f32 %v11381, %v11319
    %v11383 = vadd.f32 %v11382, %v11320
    %v11384 = vadd.f32 %v11383, %v11321
    %v11385 = vadd.f32 %v11384, %v11322
    %v11386 = vadd.f32 %v11385, %v11323
    %v11387 = vadd.f32 %v11386, %v11324
    %v11388 = vadd.f32 %v11387, %v11325
    %v11389 = vadd.f32 %v11388, %v11326
    %v11390 = vadd.f32 %v11389, %v11327
    %v11391 = vadd.f32 %v11390, %v11328
    %v11392 = vadd.f32 %v11391, %v11329
    %v11393 = vadd.f32 %v11392, %v11330
    %v11394 = vadd.f32 %v11393, %v11331
    %v11395 = vadd.f32 %v11394, %v11332
    %v11396 = vadd.f32 %v11395, %v11333
    %v11397 = vadd.f32 %v11396, %v11334
    %v11398 = vadd.f32 %v11397, %v11335
    %v11399 = vadd.f32 %v11398, %v11336
    %v11400 = vadd.f32 %v11399, %v11337
    %v11401 = vadd.f32 %v11400, %v11338
    %v11402 = vadd.f32 %v11401, %v11339
    %v11403 = vadd.f32 %v11402, %v11340
    %v11404 = vadd.f32 %v11403, %v11341
    %v11405 = vrot.slane %v11404, 4
    %v11406 = vadd.f32 %v11404, %v11405
    %v11407 = vrot.slane %v11406, 2
    %v11408 = vadd.f32 %v11406, %v11407
    %v11409 = vrot.slane %v11408, 1
    %v11410 = vadd.f32 %v11408, %v11409
    %v11411 = vadd.f32 %v11342, %v11343
    %v11412 = vadd.f32 %v11411, %v11344
    %v11413 = vadd.f32 %v11412, %v11345
    %v11414 = vadd.f32 %v11413, %v11346
    %v11415 = vadd.f32 %v11414, %v11347
    %v11416 = vadd.f32 %v11415, %v11348
    %v11417 = vadd.f32 %v11416, %v11349
    %v11418 = vadd.f32 %v11417, %v11350
    %v11419 = vadd.f32 %v11418, %v11351
    %v11420 = vadd.f32 %v11419, %v11352
    %v11421 = vadd.f32 %v11420, %v11353
    %v11422 = vadd.f32 %v11421, %v11354
    %v11423 = vadd.f32 %v11422, %v11355
    %v11424 = vadd.f32 %v11423, %v11356
    %v11425 = vadd.f32 %v11424, %v11357
    %v11426 = vadd.f32 %v11425, %v11358
    %v11427 = vadd.f32 %v11426, %v11359
    %v11428 = vadd.f32 %v11427, %v11360
    %v11429 = vadd.f32 %v11428, %v11361
    %v11430 = vadd.f32 %v11429, %v11362
    %v11431 = vadd.f32 %v11430, %v11363
    %v11432 = vadd.f32 %v11431, %v11364
    %v11433 = vadd.f32 %v11432, %v11365
    %v11434 = vadd.f32 %v11433, %v11366
    %v11435 = vadd.f32 %v11434, %v11367
    %v11436 = vadd.f32 %v11435, %v11368
    %v11437 = vadd.f32 %v11436, %v11369
    %v11438 = vadd.f32 %v11437, %v11370
    %v11439 = vadd.f32 %v11438, %v11371
    %v11440 = vadd.f32 %v11439, %v11372
    %v11441 = vadd.f32 %v11440, %v11373
    %v11442 = vrot.slane %v11441, 4
    %v11443 = vadd.f32 %v11441, %v11442
    %v11444 = vrot.slane %v11443, 2
    %v11445 = vadd.f32 %v11443, %v11444
    %v11446 = vrot.slane %v11445, 1
    %v11447 = vadd.f32 %v11445, %v11446
    %vm11448 = vcmask 1040384
    %v11449 = vsel %vm11448, %v11410, %v11447
    %v11450 = vld [vmem:[%s2] sm:$0x3]
    %v11451 = vmul.f32 %v11449, %v11450
    %v11452 = vpack.c.bf16 %v11451, %v11451
    %v11453 = vld [vmem:[%s5] sm:$0xf]
    %v11454 = vld [vmem:[%s5 + $0x4] sm:$0xf]
    %v11455 = vld [vmem:[%s5 + $0x8] sm:$0xf]
    %v11456 = vld [vmem:[%s5 + $0xc] sm:$0xf]
    %v11457 = vld [vmem:[%s5 + $0x10] sm:$0xf]
    %v11458 = vld [vmem:[%s5 + $0x14] sm:$0xf]
    %v11459 = vld [vmem:[%s5 + $0x18] sm:$0xf]
    %v11460 = vld [vmem:[%s5 + $0x1c] sm:$0xf]
    %v11461 = vld [vmem:[%s5 + $0x20] sm:$0xf]
    %v11462 = vld [vmem:[%s5 + $0x24] sm:$0xf]
    %v11463 = vld [vmem:[%s5 + $0x28] sm:$0xf]
    %v11464 = vld [vmem:[%s5 + $0x2c] sm:$0xf]
    %v11465 = vld [vmem:[%s5 + $0x30] sm:$0xf]
    %v11466 = vld [vmem:[%s5 + $0x34] sm:$0xf]
    %v11467 = vld [vmem:[%s5 + $0x38] sm:$0xf]
    %v11468 = vld [vmem:[%s5 + $0x3c] sm:$0xf]
    %v11469 = vld [vmem:[%s6] sm:$0x1]
    %v11471 = vlaneseq
    %v11472 = vshrl.u32 %v11471, 7
    %v11473 = vsub.s32 0, %v11472
    %v11474 = vrot.slane %v11469, %v11473
    %v11492 = vunpack.c.l.b16 %v11453
    %v11493 = vunpack.c.l.b16 %v11454
    %v11494 = vunpack.c.l.b16 %v11455
    %v11495 = vunpack.c.l.b16 %v11456
    %v11496 = vunpack.c.l.b16 %v11457
    %v11497 = vunpack.c.l.b16 %v11458
    %v11498 = vunpack.c.l.b16 %v11459
    %v11499 = vunpack.c.l.b16 %v11460
    %v11500 = vunpack.c.l.b16 %v11461
    %v11501 = vunpack.c.l.b16 %v11462
    %v11502 = vunpack.c.l.b16 %v11463
    %v11503 = vunpack.c.l.b16 %v11464
    %v11504 = vunpack.c.l.b16 %v11465
    %v11505 = vunpack.c.l.b16 %v11466
    %v11506 = vunpack.c.l.b16 %v11467
    %v11507 = vunpack.c.l.b16 %v11468
    %v11508 = vpack.c.b16 %v11493, %v11492
    %v11509 = vpack.c.b16 %v11495, %v11494
    %v11510 = vpack.c.b16 %v11497, %v11496
    %v11511 = vpack.c.b16 %v11499, %v11498
    %v11512 = vpack.c.b16 %v11501, %v11500
    %v11513 = vpack.c.b16 %v11503, %v11502
    %v11514 = vpack.c.b16 %v11505, %v11504
    %v11515 = vpack.c.b16 %v11507, %v11506
    %11524 = vmatprep.subr.bf16.mxu0 0
    %11525 = vmatpush1.bf16.msra.mxu0 %v11515
    %11526 = vmatprep.subr.bf16.mxu0 0
    %11527 = vmatpush1.bf16.msra.mxu0 %v11514
    %11528 = vmatprep.subr.bf16.mxu0 0
    %11529 = vmatpush1.bf16.msra.mxu0 %v11513
    %11530 = vmatprep.subr.bf16.mxu0 0
    %11531 = vmatpush1.bf16.msra.mxu0 %v11512
    %11532 = vmatprep.subr.bf16.mxu0 0
    %11533 = vmatpush1.bf16.msra.mxu0 %v11511
    %11534 = vmatprep.subr.bf16.mxu0 0
    %11535 = vmatpush1.bf16.msra.mxu0 %v11510
    %11536 = vmatprep.subr.bf16.mxu0 0
    %11537 = vmatpush1.bf16.msra.mxu0 %v11509
    %11538 = vmatprep.subr.bf16.mxu0 0
    %11539 = vmatpush1.bf16.msra.mxu0 %v11508
    %11540 = vmatprep.subr.bf16.mxu0 0
    %11541 = vmatpush2.bf16.msra.mxu0 0
    %11542 = vmatprep.subr.bf16.mxu0 0
    %11543 = vmatpush2.bf16.msra.mxu0 0
    %11544 = vmatprep.subr.bf16.mxu0 0
    %11545 = vmatpush2.bf16.msra.mxu0 0
    %11546 = vmatprep.subr.bf16.mxu0 0
    %11547 = vmatpush2.bf16.msra.mxu0 0
    %11548 = vmatprep.subr.bf16.mxu0 0
    %11549 = vmatpush2.bf16.msra.mxu0 0
    %11550 = vmatprep.subr.bf16.mxu0 0
    %11551 = vmatpush2.bf16.msra.mxu0 0
    %11552 = vmatprep.subr.bf16.mxu0 0
    %11553 = vmatpush2.bf16.msra.mxu0 0
    %11554 = vmatprep.subr.bf16.mxu0 0
    %11555 = vmatpush2.bf16.msra.mxu0 0
    %11556 = vmatprep.mubr.bf16.mxu0 0
    %11557 = vmatmul.mubr.bf16.gmra.mxu0 %v11452
    %v11558 = vpop.f32.mrf.mxu0
    %v11559 = vadd.f32 %v11474, %v11558
    %v11560 = vpop.f32.mrf.mxu0
    %v11561 = vpop.f32.mrf.mxu0
    %v11562 = vpop.f32.mrf.mxu0
    %11563 = vdwg.mxu0
    %11564 = vst [vmem:[#allocation7] sm:$0x3] %v11559
    // Predicated region
    $region34: #{tpu_custom_call.1} parent=1 // pred_check
      _
    $region35: #{tpu_custom_call.1} parent=1 // pred_check_branch
      %11566 = sbr.rel (0) target = $region37
    $region36: #{tpu_custom_call.1} parent=1 // pred_region
      %s11568 = ssub.s32 32, 32
      %11569 = vsyncadd [#allocation6], %s11568
      %s11571 = sshll.u32 [#allocation7], 4
      %s11572 = int_to_ptr.vmem [resolvable:$true] %s11571
      %11574 = dma.vmem_to_hbm [thread:$0]  %s11572, 32, %s7, [#allocation6]
    $region37: #{tpu_custom_call.1} parent=1 // pred_fallthru
      _
    // Predicated region
    $region38: #{tpu_custom_call.1} parent=1 // pred_check
      _
    $region39: #{tpu_custom_call.1} parent=1 // pred_check_branch
      %11576 = sbr.rel (0) target = $region41
    $region40: #{tpu_custom_call.1} parent=1 // pred_region
      %11577 = dma.done [#allocation6], 32
    $region41: #{tpu_custom_call.1} parent=1 // pred_fallthru
      _
    %11578 = vsyncpa [#allocation5], 1
    %11579 = vsyncpa [#allocation6], 1

</llo_original>
